<compile_context>
chip_gen: v7x
topology: tpu7x:2x2x1
jax: 0.10.0
libtpu: 0.0.40
codegen_flags: <defaults>
</compile_context>

<pallas_src>
import functools

import numpy as np

import jax
import jax.numpy as jnp
from jax.experimental import pallas as pl
from jax.experimental.pallas import tpu as pltpu


# ----------------------------------------------------------------------------
# Model constants (synthetic config, same as the previous version)
# ----------------------------------------------------------------------------
C1, C2 = 16, 32          # backbone channels (backbone.out_channels = 32)
P = 2                    # RoI pool output size
D = 64                   # roi feature dim
NC, NR = 8, 4            # num classes / num "reason" outputs

CPAD = 128               # padded channel width for conv1/conv2 outputs
DPAD = 128               # padded RoI feature dim
HPAD = 128               # padded fused head output (NC + NR -> 128 lanes)
K1PAD = 32               # conv1 im2col K: 27 -> 32 (multiple of 8)


def _round_up(x, m):
    return -(-x // m) * m


def _pg_matrix_np(imgs):
    """Block-diag pooling + global-mean matrix, [round8(17*imgs), 64*imgs].

    Rows [0, 16*imgs): pooled cell (bin, image, roi)-major, each row averages
    4 cells of that image's 8x8 conv2 map (fixed 2x2-grid proposals, adaptive
    2x2 avg pooling).  Rows [16*imgs, 17*imgs): per-image spatial mean (1/64).
    Columns index (image, 8*i + j).
    """
    rows = _round_up(17 * imgs, 8)
    pg = np.zeros((rows, 64 * imgs), np.float32)
    for by in range(2):
        for bx in range(2):
            b = 2 * by + bx
            for ry in range(2):
                for rx in range(2):
                    r = 2 * ry + rx
                    for m in range(imgs):
                        q = 4 * imgs * b + 4 * m + r
                        for di in range(2):
                            for dj in range(2):
                                i = 4 * ry + 2 * by + di
                                j = 4 * rx + 2 * bx + dj
                                pg[q, 64 * m + 8 * i + j] = 0.25
    for m in range(imgs):
        pg[16 * imgs + m, 64 * m:64 * (m + 1)] = 1.0 / 64.0
    return pg


def _att_matrix_np(imgs):
    """Segment-sum matrix [round8(imgs), 4*imgs]: row m sums that image's 4 RoIs."""
    rows = max(8, _round_up(imgs, 8))
    s = np.zeros((rows, 4 * imgs), np.float32)
    for m in range(imgs):
        s[m, 4 * m:4 * m + 4] = 1.0
    return s


# ----------------------------------------------------------------------------
# The fused forward kernel (IMGS images per grid step)
# ----------------------------------------------------------------------------
def _fused_forward_kernel(col1_ref, w1_ref, w2_ref, pg_ref, wfc_ref,
                          att_ref, wh_ref, vecs_ref, out_ref, *, imgs):
    f32 = jnp.float32
    bf16 = jnp.bfloat16
    n64 = 64 * imgs                       # rows per parity plane (all images)

    b1 = vecs_ref[0:1, :]
    b2 = vecs_ref[1:2, :]
    bfc = vecs_ref[2:3, :]
    selw = vecs_ref[3:4, :]
    bh = vecs_ref[4:5, :]
    onehot_d = vecs_ref[5:6, :]           # 1.0 at lane D, else 0

    # ---- conv1 (3x3, stride 2, ReLU): one [256*imgs, 32] x [32, 128] matmul.
    h1 = jnp.dot(col1_ref[...], w1_ref[...], preferred_element_type=f32)
    h1 = jnp.maximum(h1 + b1, 0.0)
    h1b = h1.astype(bf16)
    # Rows ordered (row-parity, col-parity, image, i, j): each stride-2 parity
    # plane of all images is one contiguous 8-aligned sublane slice.
    ee = h1b[0 * n64:1 * n64, :]          # y1[2i,   2j  ]
    eo = h1b[1 * n64:2 * n64, :]          # y1[2i,   2j+1]
    oe = h1b[2 * n64:3 * n64, :]          # y1[2i+1, 2j  ]
    oo = h1b[3 * n64:4 * n64, :]          # y1[2i+1, 2j+1]

    # ---- conv2 (3x3, stride 2, pad 1, ReLU).  Spatial -1 shifts are done as
    #      zero-padded sublane slices + per-image boundary masks (no MXU shift
    #      matmuls), then one K-concatenated [64*imgs, 1152] x [1152, 128] dot.
    ridx = jax.lax.broadcasted_iota(jnp.int32, (n64, 1), 0)
    i_ok = ((ridx % 64) >= 8).astype(bf16)     # plane row i >= 1
    j_ok = ((ridx % 8) != 0).astype(bf16)      # plane col j >= 1
    ij_ok = i_ok * j_ok

    def shift_i(x):      # (m, i, j) <- (m, i-1, j), zero at i == 0
        z = jnp.zeros((8, CPAD), bf16)
        return jnp.concatenate([z, x[:-8, :]], axis=0) * i_ok

    def shift_j(x):      # (m, i, j) <- (m, i, j-1), zero at j == 0
        z = jnp.zeros((1, CPAD), bf16)
        return jnp.concatenate([z, x[:-1, :]], axis=0) * j_ok

    def shift_ij(x):     # (m, i, j) <- (m, i-1, j-1)
        z = jnp.zeros((9, CPAD), bf16)
        return jnp.concatenate([z, x[:-9, :]], axis=0) * ij_ok

    lhs = jnp.concatenate([
        shift_ij(oo),    # tap (0, 0)
        shift_i(oe),     # tap (0, 1)
        shift_i(oo),     # tap (0, 2)
        shift_j(eo),     # tap (1, 0)
        ee,              # tap (1, 1)
        eo,              # tap (1, 2)
        shift_j(oo),     # tap (2, 0)
        oe,              # tap (2, 1)
        oo,              # tap (2, 2)
    ], axis=1)                                           # [64*imgs, 9*CPAD]
    h2 = jnp.dot(lhs, w2_ref[...], preferred_element_type=f32)
    h2 = jnp.maximum(h2 + b2, 0.0)                       # [64*imgs, CPAD] f32
    h2b = h2.astype(bf16)

    # ---- fixed-grid RoI pooling + global spatial mean: one block-diag matmul.
    pgm = jnp.dot(pg_ref[...], h2b, preferred_element_type=f32)
    # rows [0, 16*imgs): pooled cells (bin, image, roi)-major
    # rows [16*imgs, 17*imgs): per-image global mean of the conv2 feature map

    # ---- roi_fc: lane-concat the 4 bin blocks (8-aligned, 128-lane offsets)
    #      into one K=512 matmul, then ReLU.
    q = 4 * imgs
    fc_lhs = jnp.concatenate(
        [pgm[b * q:(b + 1) * q, :].astype(bf16) for b in range(P * P)], axis=1)
    roi = jnp.maximum(
        jnp.dot(fc_lhs, wfc_ref[...], preferred_element_type=f32) + bfc, 0.0)

    # ---- predictor: softmax attention over each image's 4 RoIs.
    scores = jnp.sum(roi * selw, axis=1, keepdims=True)   # [4*imgs, 1]
    # selector bias omitted (softmax shift invariance); one global max shift
    # is valid for every per-image group for the same reason.
    mx = jnp.max(scores, axis=0, keepdims=True)
    e = jnp.exp(scores - mx)                               # [4*imgs, 1]
    # Lane D of `weighted` carries e itself, so a single segment-sum matmul
    # produces both the attention-weighted numerator and the per-image Z.
    weighted = (roi + onehot_d) * e                        # [4*imgs, DPAD] f32
    seg = jnp.dot(att_ref[...], weighted, preferred_element_type=f32)
    z = seg[:, D:D + 1] + 1e-20
    pooled = (seg * pl.reciprocal(z, approx=True))[0:imgs, :]   # [imgs, DPAD]

    glob = pgm[16 * imgs:17 * imgs, :]                     # [imgs, CPAD]

    # ---- fused classification + reason heads: one K=256 matmul.
    head_lhs = jnp.concatenate([pooled.astype(bf16), glob.astype(bf16)], axis=1)
    out = jnp.dot(head_lhs, wh_ref[...], preferred_element_type=f32) + bh
    out_ref[...] = out.astype(out_ref.dtype)


# ----------------------------------------------------------------------------
# Wrapper-side glue (tiny, static): conv1 im2col + weight packing
# ----------------------------------------------------------------------------
def _conv1_im2col(images, imgs):
    """NCHW images -> [B*256, 32] bf16 conv1 patches.

    Global row order is (step, row-parity, col-parity, local_image, i, j) of
    the 16x16 conv1 output grid; per-row K layout is (tap_r, tap_c, cin),
    zero padded 27 -> 32.
    """
    B = images.shape[0]
    nsteps = B // imgs
    x = jnp.transpose(images, (0, 2, 3, 1))                  # NHWC [B,32,32,3]
    xp = jnp.pad(x, ((0, 0), (1, 1), (1, 1), (0, 0)))        # [B,34,34,3]
    taps = [xp[:, tr:tr + 32:2, tc:tc + 32:2, :]
            for tr in range(3) for tc in range(3)]           # each [B,16,16,3]
    col = jnp.stack(taps, axis=3)                            # [B,16,16,9,3]
    col = col.reshape(B, 8, 2, 8, 2, 27)                     # (B,i,rp,j,cp,K)
    col = col.reshape(nsteps, imgs, 8, 2, 8, 2, 27)
    col = col.transpose(0, 3, 5, 1, 2, 4, 6)                 # (s,rp,cp,m,i,j,K)
    col = col.reshape(nsteps * imgs * 256, 27)
    col = jnp.pad(col, ((0, 0), (0, K1PAD - 27)))
    return col.astype(jnp.bfloat16)


def _build_operands(params, imgs):
    bf16 = jnp.bfloat16
    f32 = jnp.float32

    # conv1 weight: [C1,3,3,3] -> [(kh,kw,cin)=27, C1] -> pad [32, 128]
    w1 = params["conv1_w"].transpose(2, 3, 1, 0).reshape(27, C1)
    w1 = jnp.pad(w1, ((0, K1PAD - 27), (0, CPAD - C1))).astype(bf16)

    # conv2 weight: [C2,C1,3,3] -> 9 tap blocks [C1pad, C2pad] -> [1152, 128]
    w2 = params["conv2_w"].transpose(2, 3, 1, 0).reshape(9, C1, C2)
    w2 = jnp.pad(w2, ((0, 0), (0, CPAD - C1), (0, CPAD - C2)))
    w2 = w2.reshape(9 * CPAD, CPAD).astype(bf16)

    # roi_fc weight: rows ordered (c, bin); regroup bin-major -> [512, 128]
    rfc = params["roi_fc_w"].reshape(C2, P * P, D).transpose(1, 0, 2)
    wfc = jnp.pad(rfc, ((0, 0), (0, CPAD - C2), (0, DPAD - D)))
    wfc = wfc.reshape(P * P * CPAD, DPAD).astype(bf16)

    # fused heads, stacked over [pooled | glob] input features -> [256, 128]
    whr = jnp.concatenate([params["cls_w_roi"], params["rsn_w_roi"]], axis=1)
    whr = jnp.pad(whr, ((0, DPAD - D), (0, HPAD - (NC + NR))))
    whg = jnp.concatenate([params["cls_w_glob"], params["rsn_w_glob"]], axis=1)
    whg = jnp.pad(whg, ((0, CPAD - C2), (0, HPAD - (NC + NR))))
    wh = jnp.concatenate([whr, whg], axis=0).astype(bf16)

    # tiny per-row operands packed into a single (8, 128) f32 tile
    b1 = jnp.pad(params["conv1_b"], (0, CPAD - C1))
    b2 = jnp.pad(params["conv2_b"], (0, CPAD - C2))
    bfc = jnp.pad(params["roi_fc_b"], (0, DPAD - D))
    # selector bias dropped: softmax is invariant to a constant score shift.
    selw = jnp.pad(params["sel_w"][:, 0], (0, DPAD - D))
    bh = jnp.concatenate([params["cls_b"], params["rsn_b"]], axis=1)[0]
    bh = jnp.pad(bh, (0, HPAD - (NC + NR)))
    onehot = jnp.zeros((HPAD,), f32).at[D].set(1.0)
    zeros = jnp.zeros((HPAD,), f32)
    vecs = jnp.stack([b1, b2, bfc, selw, bh, onehot, zeros, zeros],
                     axis=0).astype(f32)

    pg = jnp.asarray(_pg_matrix_np(imgs), dtype=bf16)
    att = jnp.asarray(_att_matrix_np(imgs), dtype=f32)
    return w1, w2, pg, wfc, att, wh, vecs


# ----------------------------------------------------------------------------
# Baseline.forward (side=True path)
# ----------------------------------------------------------------------------
def baseline_forward(images, params, side=True, imgs_per_step=8):
    B = images.shape[0]

    # Images per grid step: full batch (rounded to even) for small batches,
    # otherwise a multiple of 8 so every block stays (8,128)-tile aligned and
    # the grid keeps >= 2 steps for v7x megacore when B >= 2*imgs_per_step.
    imgs = int(imgs_per_step)
    if B <= imgs:
        imgs = B + (B % 2)
    else:
        imgs = max(8, (imgs // 8) * 8)
    b_pad = _round_up(B, imgs)
    if b_pad != B:
        images = jnp.pad(images, ((0, b_pad - B), (0, 0), (0, 0), (0, 0)))
    nsteps = b_pad // imgs

    col1 = _conv1_im2col(images, imgs)                     # [b_pad*256, 32]
    w1, w2, pg, wfc, att, wh, vecs = _build_operands(params, imgs)

    # NOTE: the RPN objectness conv of the original graph is dead w.r.t. the
    # returned predictions (proposals are a fixed 2x2 grid here) and is elided.
    kernel = functools.partial(_fused_forward_kernel, imgs=imgs)
    out = pl.pallas_call(
        kernel,
        out_shape=jax.ShapeDtypeStruct((b_pad, HPAD), jnp.float32),
        grid=(nsteps,),
        in_specs=[
            pl.BlockSpec((imgs * 256, K1PAD), lambda b: (b, 0)),     # col1
            pl.BlockSpec(w1.shape, lambda b: (0, 0)),                # w1
            pl.BlockSpec(w2.shape, lambda b: (0, 0)),                # w2
            pl.BlockSpec(pg.shape, lambda b: (0, 0)),                # pool+glob
            pl.BlockSpec(wfc.shape, lambda b: (0, 0)),               # wfc
            pl.BlockSpec(att.shape, lambda b: (0, 0)),               # attn seg
            pl.BlockSpec(wh.shape, lambda b: (0, 0)),                # heads
            pl.BlockSpec(vecs.shape, lambda b: (0, 0)),              # biases
        ],
        out_specs=pl.BlockSpec((imgs, HPAD), lambda b: (b, 0)),
        compiler_params=pltpu.CompilerParams(
            dimension_semantics=("parallel",),
            vmem_limit_bytes=32 * 1024 * 1024),
    )(col1, w1, w2, pg, wfc, att, wh, vecs)

    # mirrors torch.stack(preds, dim=0).squeeze(1)
    preds = out[:B, :NC]
    preds_reason = out[:B, NC:NC + NR]
    return (preds, preds_reason) if side else preds


# ----------------------------------------------------------------------------
# Deterministic parameter initialization (synthetic weights, PyTorch layouts)
# ----------------------------------------------------------------------------
def init_params(key):
    ks = jax.random.split(key, 9)
    s = 0.05
    return dict(
        conv1_w=s * jax.random.normal(ks[0], (C1, 3, 3, 3), jnp.float32),
        conv1_b=jnp.zeros((C1,), jnp.float32),
        conv2_w=s * jax.random.normal(ks[1], (C2, C1, 3, 3), jnp.float32),
        conv2_b=jnp.zeros((C2,), jnp.float32),
        # RPN params kept for interface fidelity; objectness output is unused
        # in this simplified (fixed-grid proposals) forward, so it is elided.
        rpn_w=s * jax.random.normal(ks[2], (C2, 3), jnp.float32),
        rpn_b=jnp.zeros((3,), jnp.float32),
        roi_fc_w=s * jax.random.normal(ks[3], (C2 * P * P, D), jnp.float32),
        roi_fc_b=jnp.zeros((D,), jnp.float32),
        sel_w=s * jax.random.normal(ks[4], (D, 1), jnp.float32),
        sel_b=jnp.zeros((1, 1), jnp.float32),
        cls_w_roi=s * jax.random.normal(ks[5], (D, NC), jnp.float32),
        cls_w_glob=s * jax.random.normal(ks[6], (C2, NC), jnp.float32),
        cls_b=jnp.zeros((1, NC), jnp.float32),
        rsn_w_roi=s * jax.random.normal(ks[7], (D, NR), jnp.float32),
        rsn_w_glob=s * jax.random.normal(ks[8], (C2, NR), jnp.float32),
        rsn_b=jnp.zeros((1, NR), jnp.float32),
    )


if __name__ == "__main__":
    key = jax.random.PRNGKey(0)
    k_img, k_par = jax.random.split(key)
    B = 16                                                    # 2 grid steps
    images = jax.random.normal(k_img, (B, 3, 32, 32), jnp.float32)  # NCHW
    params = init_params(k_par)

    fwd = jax.jit(functools.partial(baseline_forward, side=True))
    preds, preds_reason = fwd(images, params)
    preds = jax.block_until_ready(preds)
    preds_reason = jax.block_until_ready(preds_reason)

    assert preds.shape == (B, NC) and preds_reason.shape == (B, NR)
    assert bool(jnp.all(jnp.isfinite(preds)))
    assert bool(jnp.all(jnp.isfinite(preds_reason)))
    print("KERNEL_OK")
</pallas_src>

<mosaic_0001>
module attributes {stable_mosaic.version = 11 : i64} {
  func.func @_fused_forward_kernel(%arg0: i32, %arg1: memref<2048x32xbf16, #tpu.memory_space<vmem>>, %arg2: memref<32x128xbf16, #tpu.memory_space<vmem>>, %arg3: memref<1152x128xbf16, #tpu.memory_space<vmem>>, %arg4: memref<136x512xbf16, #tpu.memory_space<vmem>>, %arg5: memref<512x128xbf16, #tpu.memory_space<vmem>>, %arg6: memref<8x32xf32, #tpu.memory_space<vmem>>, %arg7: memref<256x128xbf16, #tpu.memory_space<vmem>>, %arg8: memref<8x128xf32, #tpu.memory_space<vmem>>, %arg9: memref<8x128xf32, #tpu.memory_space<vmem>>) attributes {dimension_semantics = [#tpu.dimension_semantics<parallel>], iteration_bounds = array<i64: 2>, scalar_prefetch = 0 : i64, scratch_operands = 0 : i64, tpu.core_type = #tpu.core_type<tc>, window_params = [{transform_indices = @transform_0, window_bounds = array<i64: 2048, 32>}, {pipeline_mode = #tpu.pipeline_mode<synchronous>, transform_indices = @transform_1, window_bounds = array<i64: 32, 128>}, {pipeline_mode = #tpu.pipeline_mode<synchronous>, transform_indices = @transform_2, window_bounds = array<i64: 1152, 128>}, {pipeline_mode = #tpu.pipeline_mode<synchronous>, transform_indices = @transform_3, window_bounds = array<i64: 136, 512>}, {pipeline_mode = #tpu.pipeline_mode<synchronous>, transform_indices = @transform_4, window_bounds = array<i64: 512, 128>}, {pipeline_mode = #tpu.pipeline_mode<synchronous>, transform_indices = @transform_5, window_bounds = array<i64: 8, 32>}, {pipeline_mode = #tpu.pipeline_mode<synchronous>, transform_indices = @transform_6, window_bounds = array<i64: 256, 128>}, {pipeline_mode = #tpu.pipeline_mode<synchronous>, transform_indices = @transform_7, window_bounds = array<i64: 8, 128>}, {transform_indices = @transform_8, window_bounds = array<i64: 8, 128>}]} {
    %c0 = arith.constant 0 : index
    %c0_0 = arith.constant 0 : index
    %0 = vector.load %arg8[%c0, %c0_0] : memref<8x128xf32, #tpu.memory_space<vmem>>, vector<1x128xf32>
    %c1 = arith.constant 1 : index
    %c0_1 = arith.constant 0 : index
    %1 = vector.load %arg8[%c1, %c0_1] : memref<8x128xf32, #tpu.memory_space<vmem>>, vector<1x128xf32>
    %c2 = arith.constant 2 : index
    %c0_2 = arith.constant 0 : index
    %2 = vector.load %arg8[%c2, %c0_2] : memref<8x128xf32, #tpu.memory_space<vmem>>, vector<1x128xf32>
    %c3 = arith.constant 3 : index
    %c0_3 = arith.constant 0 : index
    %3 = vector.load %arg8[%c3, %c0_3] : memref<8x128xf32, #tpu.memory_space<vmem>>, vector<1x128xf32>
    %c4 = arith.constant 4 : index
    %c0_4 = arith.constant 0 : index
    %4 = vector.load %arg8[%c4, %c0_4] : memref<8x128xf32, #tpu.memory_space<vmem>>, vector<1x128xf32>
    %c5 = arith.constant 5 : index
    %c0_5 = arith.constant 0 : index
    %5 = vector.load %arg8[%c5, %c0_5] : memref<8x128xf32, #tpu.memory_space<vmem>>, vector<1x128xf32>
    %c0_6 = arith.constant 0 : index
    %c0_7 = arith.constant 0 : index
    %6 = vector.load %arg1[%c0_6, %c0_7] : memref<2048x32xbf16, #tpu.memory_space<vmem>>, vector<2048x32xbf16>
    %c0_8 = arith.constant 0 : index
    %c0_9 = arith.constant 0 : index
    %7 = vector.load %arg2[%c0_8, %c0_9] : memref<32x128xbf16, #tpu.memory_space<vmem>>, vector<32x128xbf16>
    %cst = arith.constant dense<0.000000e+00> : vector<2048x128xf32>
    %8 = tpu.matmul %6, %7, %cst {dimension_numbers = #tpu.dot_dimension_numbers<[1], [0], [0], [1], [0, 0, 1, 1], [], []>} : vector<2048x32xbf16>, vector<32x128xbf16>, vector<2048x128xf32> -> vector<2048x128xf32>
    %9 = vector.broadcast %0 : vector<1x128xf32> to vector<2048x128xf32>
    %10 = arith.addf %8, %9 : vector<2048x128xf32>
    %cst_10 = arith.constant 0.000000e+00 : f32
    %11 = vector.broadcast %cst_10 : f32 to vector<2048x128xf32>
    %12 = arith.maximumf %10, %11 : vector<2048x128xf32>
    %13 = arith.truncf %12 : vector<2048x128xf32> to vector<2048x128xbf16>
    %14 = vector.extract_strided_slice %13 {offsets = [0, 0], sizes = [512, 128], strides = [1, 1]} : vector<2048x128xbf16> to vector<512x128xbf16>
    %15 = vector.extract_strided_slice %13 {offsets = [512, 0], sizes = [512, 128], strides = [1, 1]} : vector<2048x128xbf16> to vector<512x128xbf16>
    %16 = vector.extract_strided_slice %13 {offsets = [1024, 0], sizes = [512, 128], strides = [1, 1]} : vector<2048x128xbf16> to vector<512x128xbf16>
    %17 = vector.extract_strided_slice %13 {offsets = [1536, 0], sizes = [512, 128], strides = [1, 1]} : vector<2048x128xbf16> to vector<512x128xbf16>
    %18 = tpu.iota {dimensions = array<i32: 0>} : vector<512x1xi32>
    %c64_i32 = arith.constant 64 : i32
    %c0_i32 = arith.constant 0 : i32
    %19 = arith.cmpi eq, %c64_i32, %c0_i32 : i32
    %c1_i32 = arith.constant 1 : i32
    %20 = arith.select %19, %c1_i32, %c64_i32 : i32
    %21 = vector.broadcast %20 : i32 to vector<512x1xi32>
    %22 = arith.remsi %18, %21 : vector<512x1xi32>
    %c0_i32_11 = arith.constant 0 : i32
    %23 = vector.broadcast %c0_i32_11 : i32 to vector<512x1xi32>
    %24 = arith.cmpi ne, %22, %23 : vector<512x1xi32>
    %c0_i32_12 = arith.constant 0 : i32
    %25 = vector.broadcast %c0_i32_12 : i32 to vector<512x1xi32>
    %26 = arith.cmpi slt, %22, %25 : vector<512x1xi32>
    %c0_i32_13 = arith.constant 0 : i32
    %27 = arith.cmpi slt, %20, %c0_i32_13 : i32
    %28 = vector.broadcast %27 : i1 to vector<512x1xi1>
    %29 = vector.broadcast %28 : vector<512x1xi1> to vector<512x1xi1>
    %30 = arith.xori %26, %29 : vector<512x1xi1>
    %31 = arith.andi %30, %24 : vector<512x1xi1>
    %32 = vector.broadcast %20 : i32 to vector<512x1xi32>
    %33 = arith.addi %22, %32 : vector<512x1xi32>
    %34 = arith.select %31, %33, %22 : vector<512x1xi1>, vector<512x1xi32>
    %c8_i32 = arith.constant 8 : i32
    %35 = vector.broadcast %c8_i32 : i32 to vector<512x1xi32>
    %36 = arith.cmpi sge, %34, %35 : vector<512x1xi32>
    %37 = arith.extui %36 : vector<512x1xi1> to vector<512x1xi32>
    %38 = arith.sitofp %37 : vector<512x1xi32> to vector<512x1xf32>
    %39 = arith.truncf %38 : vector<512x1xf32> to vector<512x1xbf16>
    %c8_i32_14 = arith.constant 8 : i32
    %c0_i32_15 = arith.constant 0 : i32
    %40 = arith.cmpi eq, %c8_i32_14, %c0_i32_15 : i32
    %c1_i32_16 = arith.constant 1 : i32
    %41 = arith.select %40, %c1_i32_16, %c8_i32_14 : i32
    %42 = vector.broadcast %41 : i32 to vector<512x1xi32>
    %43 = arith.remsi %18, %42 : vector<512x1xi32>
    %c0_i32_17 = arith.constant 0 : i32
    %44 = vector.broadcast %c0_i32_17 : i32 to vector<512x1xi32>
    %45 = arith.cmpi ne, %43, %44 : vector<512x1xi32>
    %c0_i32_18 = arith.constant 0 : i32
    %46 = vector.broadcast %c0_i32_18 : i32 to vector<512x1xi32>
    %47 = arith.cmpi slt, %43, %46 : vector<512x1xi32>
    %c0_i32_19 = arith.constant 0 : i32
    %48 = arith.cmpi slt, %41, %c0_i32_19 : i32
    %49 = vector.broadcast %48 : i1 to vector<512x1xi1>
    %50 = vector.broadcast %49 : vector<512x1xi1> to vector<512x1xi1>
    %51 = arith.xori %47, %50 : vector<512x1xi1>
    %52 = arith.andi %51, %45 : vector<512x1xi1>
    %53 = vector.broadcast %41 : i32 to vector<512x1xi32>
    %54 = arith.addi %43, %53 : vector<512x1xi32>
    %55 = arith.select %52, %54, %43 : vector<512x1xi1>, vector<512x1xi32>
    %c0_i32_20 = arith.constant 0 : i32
    %56 = vector.broadcast %c0_i32_20 : i32 to vector<512x1xi32>
    %57 = arith.cmpi ne, %55, %56 : vector<512x1xi32>
    %58 = arith.extui %57 : vector<512x1xi1> to vector<512x1xi32>
    %59 = arith.sitofp %58 : vector<512x1xi32> to vector<512x1xf32>
    %60 = arith.truncf %59 : vector<512x1xf32> to vector<512x1xbf16>
    %61 = arith.mulf %39, %60 : vector<512x1xbf16>
    %cst_21 = arith.constant 0.000000e+00 : bf16
    %62 = vector.broadcast %cst_21 : bf16 to vector<9x128xbf16>
    %63 = vector.extract_strided_slice %17 {offsets = [0, 0], sizes = [503, 128], strides = [1, 1]} : vector<512x128xbf16> to vector<503x128xbf16>
    %64 = tpu.concatenate %62, %63 in 0 : vector<9x128xbf16>, vector<503x128xbf16> -> vector<512x128xbf16>
    %65 = vector.broadcast %61 : vector<512x1xbf16> to vector<512x128xbf16>
    %66 = arith.mulf %64, %65 : vector<512x128xbf16>
    %cst_22 = arith.constant 0.000000e+00 : bf16
    %67 = vector.broadcast %cst_22 : bf16 to vector<8x128xbf16>
    %68 = vector.extract_strided_slice %16 {offsets = [0, 0], sizes = [504, 128], strides = [1, 1]} : vector<512x128xbf16> to vector<504x128xbf16>
    %69 = tpu.concatenate %67, %68 in 0 : vector<8x128xbf16>, vector<504x128xbf16> -> vector<512x128xbf16>
    %70 = vector.broadcast %39 : vector<512x1xbf16> to vector<512x128xbf16>
    %71 = arith.mulf %69, %70 : vector<512x128xbf16>
    %cst_23 = arith.constant 0.000000e+00 : bf16
    %72 = vector.broadcast %cst_23 : bf16 to vector<8x128xbf16>
    %73 = vector.extract_strided_slice %17 {offsets = [0, 0], sizes = [504, 128], strides = [1, 1]} : vector<512x128xbf16> to vector<504x128xbf16>
    %74 = tpu.concatenate %72, %73 in 0 : vector<8x128xbf16>, vector<504x128xbf16> -> vector<512x128xbf16>
    %75 = vector.broadcast %39 : vector<512x1xbf16> to vector<512x128xbf16>
    %76 = arith.mulf %74, %75 : vector<512x128xbf16>
    %cst_24 = arith.constant 0.000000e+00 : bf16
    %77 = vector.broadcast %cst_24 : bf16 to vector<1x128xbf16>
    %78 = vector.extract_strided_slice %15 {offsets = [0, 0], sizes = [511, 128], strides = [1, 1]} : vector<512x128xbf16> to vector<511x128xbf16>
    %79 = tpu.concatenate %77, %78 in 0 : vector<1x128xbf16>, vector<511x128xbf16> -> vector<512x128xbf16>
    %80 = vector.broadcast %60 : vector<512x1xbf16> to vector<512x128xbf16>
    %81 = arith.mulf %79, %80 : vector<512x128xbf16>
    %cst_25 = arith.constant 0.000000e+00 : bf16
    %82 = vector.broadcast %cst_25 : bf16 to vector<1x128xbf16>
    %83 = vector.extract_strided_slice %17 {offsets = [0, 0], sizes = [511, 128], strides = [1, 1]} : vector<512x128xbf16> to vector<511x128xbf16>
    %84 = tpu.concatenate %82, %83 in 0 : vector<1x128xbf16>, vector<511x128xbf16> -> vector<512x128xbf16>
    %85 = vector.broadcast %60 : vector<512x1xbf16> to vector<512x128xbf16>
    %86 = arith.mulf %84, %85 : vector<512x128xbf16>
    %87 = tpu.concatenate %66, %71, %76, %81, %14, %15, %86, %16, %17 in 1 : vector<512x128xbf16>, vector<512x128xbf16>, vector<512x128xbf16>, vector<512x128xbf16>, vector<512x128xbf16>, vector<512x128xbf16>, vector<512x128xbf16>, vector<512x128xbf16>, vector<512x128xbf16> -> vector<512x1152xbf16>
    %c0_26 = arith.constant 0 : index
    %c0_27 = arith.constant 0 : index
    %88 = vector.load %arg3[%c0_26, %c0_27] : memref<1152x128xbf16, #tpu.memory_space<vmem>>, vector<1152x128xbf16>
    %cst_28 = arith.constant dense<0.000000e+00> : vector<512x128xf32>
    %89 = tpu.matmul %87, %88, %cst_28 {dimension_numbers = #tpu.dot_dimension_numbers<[1], [0], [0], [1], [0, 0, 1, 1], [], []>} : vector<512x1152xbf16>, vector<1152x128xbf16>, vector<512x128xf32> -> vector<512x128xf32>
    %90 = vector.broadcast %1 : vector<1x128xf32> to vector<512x128xf32>
    %91 = arith.addf %89, %90 : vector<512x128xf32>
    %cst_29 = arith.constant 0.000000e+00 : f32
    %92 = vector.broadcast %cst_29 : f32 to vector<512x128xf32>
    %93 = arith.maximumf %91, %92 : vector<512x128xf32>
    %94 = arith.truncf %93 : vector<512x128xf32> to vector<512x128xbf16>
    %c0_30 = arith.constant 0 : index
    %c0_31 = arith.constant 0 : index
    %95 = vector.load %arg4[%c0_30, %c0_31] : memref<136x512xbf16, #tpu.memory_space<vmem>>, vector<136x512xbf16>
    %cst_32 = arith.constant dense<0.000000e+00> : vector<136x128xf32>
    %96 = tpu.matmul %95, %94, %cst_32 {dimension_numbers = #tpu.dot_dimension_numbers<[1], [0], [0], [1], [0, 0, 1, 1], [], []>} : vector<136x512xbf16>, vector<512x128xbf16>, vector<136x128xf32> -> vector<136x128xf32>
    %97 = vector.extract_strided_slice %96 {offsets = [0, 0], sizes = [32, 128], strides = [1, 1]} : vector<136x128xf32> to vector<32x128xf32>
    %98 = arith.truncf %97 : vector<32x128xf32> to vector<32x128xbf16>
    %99 = vector.extract_strided_slice %96 {offsets = [32, 0], sizes = [32, 128], strides = [1, 1]} : vector<136x128xf32> to vector<32x128xf32>
    %100 = arith.truncf %99 : vector<32x128xf32> to vector<32x128xbf16>
    %101 = vector.extract_strided_slice %96 {offsets = [64, 0], sizes = [32, 128], strides = [1, 1]} : vector<136x128xf32> to vector<32x128xf32>
    %102 = arith.truncf %101 : vector<32x128xf32> to vector<32x128xbf16>
    %103 = vector.extract_strided_slice %96 {offsets = [96, 0], sizes = [32, 128], strides = [1, 1]} : vector<136x128xf32> to vector<32x128xf32>
    %104 = arith.truncf %103 : vector<32x128xf32> to vector<32x128xbf16>
    %105 = tpu.concatenate %98, %100, %102, %104 in 1 : vector<32x128xbf16>, vector<32x128xbf16>, vector<32x128xbf16>, vector<32x128xbf16> -> vector<32x512xbf16>
    %c0_33 = arith.constant 0 : index
    %c0_34 = arith.constant 0 : index
    %106 = vector.load %arg5[%c0_33, %c0_34] : memref<512x128xbf16, #tpu.memory_space<vmem>>, vector<512x128xbf16>
    %cst_35 = arith.constant dense<0.000000e+00> : vector<32x128xf32>
    %107 = tpu.matmul %105, %106, %cst_35 {dimension_numbers = #tpu.dot_dimension_numbers<[1], [0], [0], [1], [0, 0, 1, 1], [], []>} : vector<32x512xbf16>, vector<512x128xbf16>, vector<32x128xf32> -> vector<32x128xf32>
    %108 = vector.broadcast %2 : vector<1x128xf32> to vector<32x128xf32>
    %109 = arith.addf %107, %108 : vector<32x128xf32>
    %cst_36 = arith.constant 0.000000e+00 : f32
    %110 = vector.broadcast %cst_36 : f32 to vector<32x128xf32>
    %111 = arith.maximumf %109, %110 : vector<32x128xf32>
    %112 = vector.broadcast %3 : vector<1x128xf32> to vector<32x128xf32>
    %113 = arith.mulf %111, %112 : vector<32x128xf32>
    %cst_37 = arith.constant dense<0.000000e+00> : vector<32xf32>
    %114 = vector.multi_reduction <add>, %113, %cst_37 [1] : vector<32x128xf32> to vector<32xf32>
    %115 = vector.shape_cast %114 : vector<32xf32> to vector<32x1xf32>
    %cst_38 = arith.constant dense<0xFF800000> : vector<1xf32>
    %116 = vector.multi_reduction <maximumf>, %115, %cst_38 [0] : vector<32x1xf32> to vector<1xf32>
    %117 = vector.shape_cast %116 : vector<1xf32> to vector<1x1xf32>
    %118 = vector.broadcast %117 : vector<1x1xf32> to vector<32x1xf32>
    %119 = arith.subf %115, %118 : vector<32x1xf32>
    %120 = math.exp %119 : vector<32x1xf32>
    %121 = vector.broadcast %5 : vector<1x128xf32> to vector<32x128xf32>
    %122 = arith.addf %111, %121 : vector<32x128xf32>
    %123 = vector.broadcast %120 : vector<32x1xf32> to vector<32x128xf32>
    %124 = arith.mulf %122, %123 : vector<32x128xf32>
    %c0_39 = arith.constant 0 : index
    %c0_40 = arith.constant 0 : index
    %125 = vector.load %arg6[%c0_39, %c0_40] : memref<8x32xf32, #tpu.memory_space<vmem>>, vector<8x32xf32>
    %cst_41 = arith.constant dense<0.000000e+00> : vector<8x128xf32>
    %126 = tpu.matmul %125, %124, %cst_41 {dimension_numbers = #tpu.dot_dimension_numbers<[1], [0], [0], [1], [0, 0, 1, 1], [], []>} : vector<8x32xf32>, vector<32x128xf32>, vector<8x128xf32> -> vector<8x128xf32>
    %127 = vector.extract_strided_slice %126 {offsets = [0, 64], sizes = [8, 1], strides = [1, 1]} : vector<8x128xf32> to vector<8x1xf32>
    %cst_42 = arith.constant 9.99999968E-21 : f32
    %128 = vector.broadcast %cst_42 : f32 to vector<8x1xf32>
    %129 = arith.addf %127, %128 : vector<8x1xf32>
    %130 = tpu.reciprocal %129 {approx = true} : vector<8x1xf32> -> vector<8x1xf32>
    %131 = vector.broadcast %130 : vector<8x1xf32> to vector<8x128xf32>
    %132 = arith.mulf %126, %131 : vector<8x128xf32>
    %133 = vector.extract_strided_slice %96 {offsets = [128, 0], sizes = [8, 128], strides = [1, 1]} : vector<136x128xf32> to vector<8x128xf32>
    %134 = arith.truncf %132 : vector<8x128xf32> to vector<8x128xbf16>
    %135 = arith.truncf %133 : vector<8x128xf32> to vector<8x128xbf16>
    %136 = tpu.concatenate %134, %135 in 1 : vector<8x128xbf16>, vector<8x128xbf16> -> vector<8x256xbf16>
    %c0_43 = arith.constant 0 : index
    %c0_44 = arith.constant 0 : index
    %137 = vector.load %arg7[%c0_43, %c0_44] : memref<256x128xbf16, #tpu.memory_space<vmem>>, vector<256x128xbf16>
    %cst_45 = arith.constant dense<0.000000e+00> : vector<8x128xf32>
    %138 = tpu.matmul %136, %137, %cst_45 {dimension_numbers = #tpu.dot_dimension_numbers<[1], [0], [0], [1], [0, 0, 1, 1], [], []>} : vector<8x256xbf16>, vector<256x128xbf16>, vector<8x128xf32> -> vector<8x128xf32>
    %139 = vector.broadcast %4 : vector<1x128xf32> to vector<8x128xf32>
    %140 = arith.addf %138, %139 : vector<8x128xf32>
    %c0_46 = arith.constant 0 : index
    %c0_47 = arith.constant 0 : index
    %141 = vector.load %arg9[%c0_46, %c0_47] : memref<8x128xf32, #tpu.memory_space<vmem>>, vector<8x128xf32>
    tpu.vector_store %arg9[%c0_46, %c0_47], %140 {strides = array<i32>} : memref<8x128xf32, #tpu.memory_space<vmem>>, vector<8x128xf32>,
    return
  }
  func.func @transform_0(%arg0: i32) -> (i32, i32) {
    %c0_i32 = arith.constant 0 : i32
    %c0_i32_0 = arith.constant 0 : i32
    return %arg0, %c0_i32 : i32, i32
  }
  func.func @transform_1(%arg0: i32) -> (i32, i32) {
    %c0_i32 = arith.constant 0 : i32
    %c0_i32_0 = arith.constant 0 : i32
    %c0_i32_1 = arith.constant 0 : i32
    return %c0_i32, %c0_i32_0 : i32, i32
  }
  func.func @transform_2(%arg0: i32) -> (i32, i32) {
    %c0_i32 = arith.constant 0 : i32
    %c0_i32_0 = arith.constant 0 : i32
    %c0_i32_1 = arith.constant 0 : i32
    return %c0_i32, %c0_i32_0 : i32, i32
  }
  func.func @transform_3(%arg0: i32) -> (i32, i32) {
    %c0_i32 = arith.constant 0 : i32
    %c0_i32_0 = arith.constant 0 : i32
    %c0_i32_1 = arith.constant 0 : i32
    return %c0_i32, %c0_i32_0 : i32, i32
  }
  func.func @transform_4(%arg0: i32) -> (i32, i32) {
    %c0_i32 = arith.constant 0 : i32
    %c0_i32_0 = arith.constant 0 : i32
    %c0_i32_1 = arith.constant 0 : i32
    return %c0_i32, %c0_i32_0 : i32, i32
  }
  func.func @transform_5(%arg0: i32) -> (i32, i32) {
    %c0_i32 = arith.constant 0 : i32
    %c0_i32_0 = arith.constant 0 : i32
    %c0_i32_1 = arith.constant 0 : i32
    return %c0_i32, %c0_i32_0 : i32, i32
  }
  func.func @transform_6(%arg0: i32) -> (i32, i32) {
    %c0_i32 = arith.constant 0 : i32
    %c0_i32_0 = arith.constant 0 : i32
    %c0_i32_1 = arith.constant 0 : i32
    return %c0_i32, %c0_i32_0 : i32, i32
  }
  func.func @transform_7(%arg0: i32) -> (i32, i32) {
    %c0_i32 = arith.constant 0 : i32
    %c0_i32_0 = arith.constant 0 : i32
    %c0_i32_1 = arith.constant 0 : i32
    return %c0_i32, %c0_i32_0 : i32, i32
  }
  func.func @transform_8(%arg0: i32) -> (i32, i32) {
    %c0_i32 = arith.constant 0 : i32
    %c0_i32_0 = arith.constant 0 : i32
    return %arg0, %c0_i32 : i32, i32
  }
}

</mosaic_0001>

<llo_original>
// kernel: baseline_forward.1
$region0: #{baseline_forward.1}
  #allocation0 [shape = 'u32[]', space=smem, size = 0x4, offset = 0x4, fixed_abs, tag = 'smem constant byte address 0x4 - core index']
  #allocation1 [shape = 'u32[144,128]{1,0:T(1,128)}', space=vmem, size = 0x12000, scoped, tag = 'internal scratch']
  %s0 = inlined_call_operand.vmem [shape: bf16[4096,32], index: 0, kind: input, shape index: {}]
  %s1 = inlined_call_operand.vmem [shape: bf16[32,128], index: 1, kind: input, shape index: {}]
  %s2 = inlined_call_operand.vmem [shape: bf16[1152,128], index: 2, kind: input, shape index: {}]
  %s3 = inlined_call_operand.vmem [shape: bf16[136,512], index: 3, kind: input, shape index: {}]
  %s4 = inlined_call_operand.vmem [shape: bf16[512,128], index: 4, kind: input, shape index: {}]
  %s5 = inlined_call_operand.vmem [shape: f32[8,32], index: 5, kind: input, shape index: {}]
  %s6 = inlined_call_operand.vmem [shape: bf16[256,128], index: 6, kind: input, shape index: {}]
  %s7 = inlined_call_operand.vmem [shape: f32[8,128], index: 7, kind: input, shape index: {}]
  %s8 = inlined_call_operand.vmem [shape: f32[16,128], index: 8, kind: output, shape index: {}]
  %s9 = sld [smem:[#allocation0]]
  $region65: #{baseline_forward.1} parent=0
    _
  %s11 = ssub.s32 1, %s9
  %s12 = scalar_select 0, %s11, %s9
  loop: start=0, step=1, limit=4
  $region2: #{baseline_forward.1} parent=0 // loop_pre_header
    _
  $region3: #{baseline_forward.1} parent=0 // loop_header
    %s14 = sphi 0, %s18
    %p15 = scmp.ge.s32.totalorder %s14, 4
    %s24 = sphi 0, %s26
    %s27 = sphi 0, %s24
    %s28 = sphi 0, %s27
    %s44 = sphi 0, %s28
    %s48 = sphi 0, %s48
    %s50 = sphi 0, %s48
    %s51 = sphi 0, %s50
    %s65 = sphi 0, %s51
    %s69 = sphi 0, %s69
    %s71 = sphi 0, %s69
    %s72 = sphi 0, %s71
    %s86 = sphi 0, %s72
    %s90 = sphi 0, %s90
    %s92 = sphi 0, %s90
    %s93 = sphi 0, %s92
    %s107 = sphi 0, %s93
    %s111 = sphi 0, %s111
    %s113 = sphi 0, %s111
    %s114 = sphi 0, %s113
    %s128 = sphi 0, %s114
    %s132 = sphi 0, %s132
    %s134 = sphi 0, %s132
    %s135 = sphi 0, %s134
    %s149 = sphi 0, %s135
    %s153 = sphi 0, %s153
    %s155 = sphi 0, %s153
    %s156 = sphi 0, %s155
    %s170 = sphi 0, %s156
    %s174 = sphi 0, %s174
    %s176 = sphi 0, %s174
    %s177 = sphi 0, %s176
    %s191 = sphi 0, %s177
    %s197 = sphi 0, %s199
    %s200 = sphi 0, %s197
    %s201 = sphi 0, %s200
    %s217 = sphi 0, %s201
  $region4: #{baseline_forward.1} parent=0 // loop_header_branch
    %17 = sbr.rel (%p15) target = $region8
  $region5: #{baseline_forward.1} parent=0 // loop_body
    %s19 = ssub.s32 %s14, 1
    %s20 = ssub.s32 %s14, 2
    %s21 = sadd.s32 %s14, 1
    %s22 = ssub.s32 %s14, %s21
    %p23 = scmp.eq.s32.totalorder %s22, 0
    %s25 = sadd.s32 %s24, 1
    %s26 = scalar_select %p23, %s24, %s25
    %p29 = pneg %p23
    %p30 = scmp.eq.s32.totalorder %s14, 1
    %p31 = por %p29, %p30
    %p32 = scmp.ne.s32.totalorder %s24, %s27
    %p33 = scmp.eq.s32.totalorder %s14, 0
    %p34 = por %p32, %p33
    %p35 = scmp.ne.s32.totalorder %s24, %s27
    %p36 = scmp.eq.s32.totalorder %s19, 1
    %p37 = por %p35, %p36
    %p38 = scmp.ne.s32.totalorder %s27, %s28
    %p39 = scmp.eq.s32.totalorder %s19, 0
    %p40 = por %p38, %p39
    %p41 = scmp.ne.s32.totalorder %s27, %s28
    %p42 = scmp.eq.s32.totalorder %s20, 1
    %p43 = por %p41, %p42
    %p45 = scmp.ne.s32.totalorder %s28, %s44
    %p46 = scmp.eq.s32.totalorder %s20, 0
    %p47 = por %p45, %p46
    %s49 = sadd.s32 %s48, 1
    %p52 = scmp.eq.s32.totalorder %s14, 1
    %p53 = scmp.ne.s32.totalorder %s48, %s50
    %p54 = scmp.eq.s32.totalorder %s14, 0
    %p55 = por %p53, %p54
    %p56 = scmp.ne.s32.totalorder %s48, %s50
    %p57 = scmp.eq.s32.totalorder %s19, 1
    %p58 = por %p56, %p57
    %p59 = scmp.ne.s32.totalorder %s50, %s51
    %p60 = scmp.eq.s32.totalorder %s19, 0
    %p61 = por %p59, %p60
    %p62 = scmp.ne.s32.totalorder %s50, %s51
    %p63 = scmp.eq.s32.totalorder %s20, 1
    %p64 = por %p62, %p63
    %p66 = scmp.ne.s32.totalorder %s51, %s65
    %p67 = scmp.eq.s32.totalorder %s20, 0
    %p68 = por %p66, %p67
    %s70 = sadd.s32 %s69, 1
    %p73 = scmp.eq.s32.totalorder %s14, 1
    %p74 = scmp.ne.s32.totalorder %s69, %s71
    %p75 = scmp.eq.s32.totalorder %s14, 0
    %p76 = por %p74, %p75
    %p77 = scmp.ne.s32.totalorder %s69, %s71
    %p78 = scmp.eq.s32.totalorder %s19, 1
    %p79 = por %p77, %p78
    %p80 = scmp.ne.s32.totalorder %s71, %s72
    %p81 = scmp.eq.s32.totalorder %s19, 0
    %p82 = por %p80, %p81
    %p83 = scmp.ne.s32.totalorder %s71, %s72
    %p84 = scmp.eq.s32.totalorder %s20, 1
    %p85 = por %p83, %p84
    %p87 = scmp.ne.s32.totalorder %s72, %s86
    %p88 = scmp.eq.s32.totalorder %s20, 0
    %p89 = por %p87, %p88
    %s91 = sadd.s32 %s90, 1
    %p94 = scmp.eq.s32.totalorder %s14, 1
    %p95 = scmp.ne.s32.totalorder %s90, %s92
    %p96 = scmp.eq.s32.totalorder %s14, 0
    %p97 = por %p95, %p96
    %p98 = scmp.ne.s32.totalorder %s90, %s92
    %p99 = scmp.eq.s32.totalorder %s19, 1
    %p100 = por %p98, %p99
    %p101 = scmp.ne.s32.totalorder %s92, %s93
    %p102 = scmp.eq.s32.totalorder %s19, 0
    %p103 = por %p101, %p102
    %p104 = scmp.ne.s32.totalorder %s92, %s93
    %p105 = scmp.eq.s32.totalorder %s20, 1
    %p106 = por %p104, %p105
    %p108 = scmp.ne.s32.totalorder %s93, %s107
    %p109 = scmp.eq.s32.totalorder %s20, 0
    %p110 = por %p108, %p109
    %s112 = sadd.s32 %s111, 1
    %p115 = scmp.eq.s32.totalorder %s14, 1
    %p116 = scmp.ne.s32.totalorder %s111, %s113
    %p117 = scmp.eq.s32.totalorder %s14, 0
    %p118 = por %p116, %p117
    %p119 = scmp.ne.s32.totalorder %s111, %s113
    %p120 = scmp.eq.s32.totalorder %s19, 1
    %p121 = por %p119, %p120
    %p122 = scmp.ne.s32.totalorder %s113, %s114
    %p123 = scmp.eq.s32.totalorder %s19, 0
    %p124 = por %p122, %p123
    %p125 = scmp.ne.s32.totalorder %s113, %s114
    %p126 = scmp.eq.s32.totalorder %s20, 1
    %p127 = por %p125, %p126
    %p129 = scmp.ne.s32.totalorder %s114, %s128
    %p130 = scmp.eq.s32.totalorder %s20, 0
    %p131 = por %p129, %p130
    %s133 = sadd.s32 %s132, 1
    %p136 = scmp.eq.s32.totalorder %s14, 1
    %p137 = scmp.ne.s32.totalorder %s132, %s134
    %p138 = scmp.eq.s32.totalorder %s14, 0
    %p139 = por %p137, %p138
    %p140 = scmp.ne.s32.totalorder %s132, %s134
    %p141 = scmp.eq.s32.totalorder %s19, 1
    %p142 = por %p140, %p141
    %p143 = scmp.ne.s32.totalorder %s134, %s135
    %p144 = scmp.eq.s32.totalorder %s19, 0
    %p145 = por %p143, %p144
    %p146 = scmp.ne.s32.totalorder %s134, %s135
    %p147 = scmp.eq.s32.totalorder %s20, 1
    %p148 = por %p146, %p147
    %p150 = scmp.ne.s32.totalorder %s135, %s149
    %p151 = scmp.eq.s32.totalorder %s20, 0
    %p152 = por %p150, %p151
    %s154 = sadd.s32 %s153, 1
    %p157 = scmp.eq.s32.totalorder %s14, 1
    %p158 = scmp.ne.s32.totalorder %s153, %s155
    %p159 = scmp.eq.s32.totalorder %s14, 0
    %p160 = por %p158, %p159
    %p161 = scmp.ne.s32.totalorder %s153, %s155
    %p162 = scmp.eq.s32.totalorder %s19, 1
    %p163 = por %p161, %p162
    %p164 = scmp.ne.s32.totalorder %s155, %s156
    %p165 = scmp.eq.s32.totalorder %s19, 0
    %p166 = por %p164, %p165
    %p167 = scmp.ne.s32.totalorder %s155, %s156
    %p168 = scmp.eq.s32.totalorder %s20, 1
    %p169 = por %p167, %p168
    %p171 = scmp.ne.s32.totalorder %s156, %s170
    %p172 = scmp.eq.s32.totalorder %s20, 0
    %p173 = por %p171, %p172
    %s175 = sadd.s32 %s174, 1
    %p178 = scmp.eq.s32.totalorder %s14, 1
    %p179 = scmp.ne.s32.totalorder %s174, %s176
    %p180 = scmp.eq.s32.totalorder %s14, 0
    %p181 = por %p179, %p180
    %p182 = scmp.ne.s32.totalorder %s174, %s176
    %p183 = scmp.eq.s32.totalorder %s19, 1
    %p184 = por %p182, %p183
    %p185 = scmp.ne.s32.totalorder %s176, %s177
    %p186 = scmp.eq.s32.totalorder %s19, 0
    %p187 = por %p185, %p186
    %p188 = scmp.ne.s32.totalorder %s176, %s177
    %p189 = scmp.eq.s32.totalorder %s20, 1
    %p190 = por %p188, %p189
    %p192 = scmp.ne.s32.totalorder %s177, %s191
    %p193 = scmp.eq.s32.totalorder %s20, 0
    %p194 = por %p192, %p193
    %s195 = ssub.s32 %s14, %s21
    %p196 = scmp.eq.s32.totalorder %s195, 0
    %s198 = sadd.s32 %s197, 1
    %s199 = scalar_select %p196, %s197, %s198
    %p202 = pneg %p196
    %p203 = scmp.eq.s32.totalorder %s14, 1
    %p204 = por %p202, %p203
    %p205 = scmp.ne.s32.totalorder %s197, %s200
    %p206 = scmp.eq.s32.totalorder %s14, 0
    %p207 = por %p205, %p206
    %p208 = scmp.ne.s32.totalorder %s197, %s200
    %p209 = scmp.eq.s32.totalorder %s19, 1
    %p210 = por %p208, %p209
    %p211 = scmp.ne.s32.totalorder %s200, %s201
    %p212 = scmp.eq.s32.totalorder %s19, 0
    %p213 = por %p211, %p212
    %p214 = scmp.ne.s32.totalorder %s200, %s201
    %p215 = scmp.eq.s32.totalorder %s20, 1
    %p216 = por %p214, %p215
    %p218 = scmp.ne.s32.totalorder %s201, %s217
    %p219 = scmp.eq.s32.totalorder %s20, 0
    %p220 = por %p218, %p219
    %p221 = scmp.le.s32.totalorder 1, %s14
    %p222 = scmp.lt.s32.totalorder %s14, 3
    %p223 = pnand %p221, %p222
    %p224 = pneg %p223
    // Predicated region
    $region9: #{baseline_forward.1} parent=5 // pred_check
      _
    $region10: #{baseline_forward.1} parent=5 // pred_check_branch
      %226 = sbr.rel (%p223) target = $region12
    $region11: #{baseline_forward.1} parent=5 // pred_region
      %s227 = ssub.s32 %s14, 1
      // Predicated region
      $region13: #{baseline_forward.1} parent=11 // pred_check
        %p228 = pneg %p61
      $region14: #{baseline_forward.1} parent=11 // pred_check_branch
        %230 = sbr.rel (%p228) target = $region16
      $region15: #{baseline_forward.1} parent=11 // pred_region
        _
      $region16: #{baseline_forward.1} parent=11 // pred_fallthru
        _
      // Predicated region
      $region17: #{baseline_forward.1} parent=11 // pred_check
        %p231 = pneg %p82
      $region18: #{baseline_forward.1} parent=11 // pred_check_branch
        %233 = sbr.rel (%p231) target = $region20
      $region19: #{baseline_forward.1} parent=11 // pred_region
        _
      $region20: #{baseline_forward.1} parent=11 // pred_fallthru
        _
      // Predicated region
      $region21: #{baseline_forward.1} parent=11 // pred_check
        %p234 = pneg %p103
      $region22: #{baseline_forward.1} parent=11 // pred_check_branch
        %236 = sbr.rel (%p234) target = $region24
      $region23: #{baseline_forward.1} parent=11 // pred_region
        _
      $region24: #{baseline_forward.1} parent=11 // pred_fallthru
        _
      // Predicated region
      $region25: #{baseline_forward.1} parent=11 // pred_check
        %p237 = pneg %p124
      $region26: #{baseline_forward.1} parent=11 // pred_check_branch
        %239 = sbr.rel (%p237) target = $region28
      $region27: #{baseline_forward.1} parent=11 // pred_region
        _
      $region28: #{baseline_forward.1} parent=11 // pred_fallthru
        _
      // Predicated region
      $region29: #{baseline_forward.1} parent=11 // pred_check
        %p240 = pneg %p145
      $region30: #{baseline_forward.1} parent=11 // pred_check_branch
        %242 = sbr.rel (%p240) target = $region32
      $region31: #{baseline_forward.1} parent=11 // pred_region
        _
      $region32: #{baseline_forward.1} parent=11 // pred_fallthru
        _
      // Predicated region
      $region33: #{baseline_forward.1} parent=11 // pred_check
        %p243 = pneg %p166
      $region34: #{baseline_forward.1} parent=11 // pred_check_branch
        %245 = sbr.rel (%p243) target = $region36
      $region35: #{baseline_forward.1} parent=11 // pred_region
        _
      $region36: #{baseline_forward.1} parent=11 // pred_fallthru
        _
      // Predicated region
      $region37: #{baseline_forward.1} parent=11 // pred_check
        %p246 = pneg %p187
      $region38: #{baseline_forward.1} parent=11 // pred_check_branch
        %248 = sbr.rel (%p246) target = $region40
      $region39: #{baseline_forward.1} parent=11 // pred_region
        _
      $region40: #{baseline_forward.1} parent=11 // pred_fallthru
        _
    $region12: #{baseline_forward.1} parent=5 // pred_fallthru
      _
    %p249 = scmp.lt.s32.totalorder %s14, 2
    // Predicated region
    $region41: #{baseline_forward.1} parent=5 // pred_check
      %p250 = pneg %p249
    $region42: #{baseline_forward.1} parent=5 // pred_check_branch
      %252 = sbr.rel (%p250) target = $region44
    $region43: #{baseline_forward.1} parent=5 // pred_region
      // Predicated region
      $region45: #{baseline_forward.1} parent=43 // pred_check
        %p253 = pneg %p34
      $region46: #{baseline_forward.1} parent=43 // pred_check_branch
        %255 = sbr.rel (%p253) target = $region48
      $region47: #{baseline_forward.1} parent=43 // pred_region
        %s256 = smul.u32 256, %s14
        %p257 = scmp.lt.s32.totalorder %s256, 511
        %s258 = scalar_select %p257, %s256, 511
        %s259 = smul.addr %s258, 4
        %s260 = scalar_lea.vmem %s0, %s259
        %s261 = smul.u32 256, %s14
      $region48: #{baseline_forward.1} parent=43 // pred_fallthru
        _
    $region44: #{baseline_forward.1} parent=5 // pred_fallthru
      _
    %p262 = scmp.le.s32.totalorder 1, %s14
    %p263 = scmp.lt.s32.totalorder %s14, 3
    %p264 = pnand %p262, %p263
    %p265 = pneg %p264
    // Predicated region
    $region49: #{baseline_forward.1} parent=5 // pred_check
      _
    $region50: #{baseline_forward.1} parent=5 // pred_check_branch
      %267 = sbr.rel (%p264) target = $region52
    $region51: #{baseline_forward.1} parent=5 // pred_region
      %s268 = ssub.s32 %s14, 1
      %s269 = smul.u32 256, %s19
      %p270 = scmp.lt.s32.totalorder %s269, 511
      %s271 = scalar_select %p270, %s269, 511
      %s272 = smul.addr %s271, 4
      %s273 = scalar_lea.vmem %s0, %s272
      %p274 = pneg %p40
      %p275 = pneg %p37
      %p276 = pneg %p61
      %p277 = pneg %p58
      %p278 = pneg %p82
      %p279 = pneg %p79
      %p280 = pneg %p103
      %p281 = pneg %p100
      %p282 = pneg %p124
      %p283 = pneg %p121
      %p284 = pneg %p145
      %p285 = pneg %p142
      %p286 = pneg %p166
      %p287 = pneg %p163
      %p288 = pneg %p187
      %p289 = pneg %p184
      %p290 = pneg %p213
      %p291 = pneg %p210
      %p292 = scmp.lt.s32.totalorder %s19, 1
      %s293 = scalar_select %p292, %s19, 1
      %s294 = smul.addr %s293, 8
      %s295 = scalar_lea.vmem %s8, %s294
      %s296 = smul.u32 256, %s19
      %p297 = scmp.lt.s32.totalorder %s296, 511
      %s298 = scalar_select %p297, %s296, 511
      %s299 = smul.addr %s298, 4
      %s300 = scalar_lea.vmem %s0, %s299
      %s301 = smul.u32 256, %s19
      %p302 = scmp.lt.s32.totalorder %s19, 1
      %s303 = scalar_select %p302, %s19, 1
      %s304 = smul.addr %s303, 8
      %s305 = scalar_lea.vmem %s8, %s304
      %v307 = vld [vmem:[%s7] sm:$0x1]
      %v308 = vld [vmem:[%s7 + $0x1] sm:$0x1]
      %v309 = vld [vmem:[%s7 + $0x2] sm:$0x1]
      %v310 = vld [vmem:[%s7 + $0x3] sm:$0x1]
      %v311 = vld [vmem:[%s7 + $0x4] sm:$0x1]
      %v312 = vld [vmem:[%s7 + $0x5] sm:$0x1]
      %v313 = vld [vmem:[%s300] sm:$0xf]
      %v314 = vld [vmem:[%s300 + $0x4] sm:$0xf]
      %v315 = vld [vmem:[%s300 + $0x8] sm:$0xf]
      %v316 = vld [vmem:[%s300 + $0xc] sm:$0xf]
      %v317 = vld [vmem:[%s300 + $0x10] sm:$0xf]
      %v318 = vld [vmem:[%s300 + $0x14] sm:$0xf]
      %v319 = vld [vmem:[%s300 + $0x18] sm:$0xf]
      %v320 = vld [vmem:[%s300 + $0x1c] sm:$0xf]
      %v321 = vld [vmem:[%s300 + $0x20] sm:$0xf]
      %v322 = vld [vmem:[%s300 + $0x24] sm:$0xf]
      %v323 = vld [vmem:[%s300 + $0x28] sm:$0xf]
      %v324 = vld [vmem:[%s300 + $0x2c] sm:$0xf]
      %v325 = vld [vmem:[%s300 + $0x30] sm:$0xf]
      %v326 = vld [vmem:[%s300 + $0x34] sm:$0xf]
      %v327 = vld [vmem:[%s300 + $0x38] sm:$0xf]
      %v328 = vld [vmem:[%s300 + $0x3c] sm:$0xf]
      %v329 = vld [vmem:[%s300 + $0x40] sm:$0xf]
      %v330 = vld [vmem:[%s300 + $0x44] sm:$0xf]
      %v331 = vld [vmem:[%s300 + $0x48] sm:$0xf]
      %v332 = vld [vmem:[%s300 + $0x4c] sm:$0xf]
      %v333 = vld [vmem:[%s300 + $0x50] sm:$0xf]
      %v334 = vld [vmem:[%s300 + $0x54] sm:$0xf]
      %v335 = vld [vmem:[%s300 + $0x58] sm:$0xf]
      %v336 = vld [vmem:[%s300 + $0x5c] sm:$0xf]
      %v337 = vld [vmem:[%s300 + $0x60] sm:$0xf]
      %v338 = vld [vmem:[%s300 + $0x64] sm:$0xf]
      %v339 = vld [vmem:[%s300 + $0x68] sm:$0xf]
      %v340 = vld [vmem:[%s300 + $0x6c] sm:$0xf]
      %v341 = vld [vmem:[%s300 + $0x70] sm:$0xf]
      %v342 = vld [vmem:[%s300 + $0x74] sm:$0xf]
      %v343 = vld [vmem:[%s300 + $0x78] sm:$0xf]
      %v344 = vld [vmem:[%s300 + $0x7c] sm:$0xf]
      %v345 = vld [vmem:[%s300 + $0x80] sm:$0xf]
      %v346 = vld [vmem:[%s300 + $0x84] sm:$0xf]
      %v347 = vld [vmem:[%s300 + $0x88] sm:$0xf]
      %v348 = vld [vmem:[%s300 + $0x8c] sm:$0xf]
      %v349 = vld [vmem:[%s300 + $0x90] sm:$0xf]
      %v350 = vld [vmem:[%s300 + $0x94] sm:$0xf]
      %v351 = vld [vmem:[%s300 + $0x98] sm:$0xf]
      %v352 = vld [vmem:[%s300 + $0x9c] sm:$0xf]
      %v353 = vld [vmem:[%s300 + $0xa0] sm:$0xf]
      %v354 = vld [vmem:[%s300 + $0xa4] sm:$0xf]
      %v355 = vld [vmem:[%s300 + $0xa8] sm:$0xf]
      %v356 = vld [vmem:[%s300 + $0xac] sm:$0xf]
      %v357 = vld [vmem:[%s300 + $0xb0] sm:$0xf]
      %v358 = vld [vmem:[%s300 + $0xb4] sm:$0xf]
      %v359 = vld [vmem:[%s300 + $0xb8] sm:$0xf]
      %v360 = vld [vmem:[%s300 + $0xbc] sm:$0xf]
      %v361 = vld [vmem:[%s300 + $0xc0] sm:$0xf]
      %v362 = vld [vmem:[%s300 + $0xc4] sm:$0xf]
      %v363 = vld [vmem:[%s300 + $0xc8] sm:$0xf]
      %v364 = vld [vmem:[%s300 + $0xcc] sm:$0xf]
      %v365 = vld [vmem:[%s300 + $0xd0] sm:$0xf]
      %v366 = vld [vmem:[%s300 + $0xd4] sm:$0xf]
      %v367 = vld [vmem:[%s300 + $0xd8] sm:$0xf]
      %v368 = vld [vmem:[%s300 + $0xdc] sm:$0xf]
      %v369 = vld [vmem:[%s300 + $0xe0] sm:$0xf]
      %v370 = vld [vmem:[%s300 + $0xe4] sm:$0xf]
      %v371 = vld [vmem:[%s300 + $0xe8] sm:$0xf]
      %v372 = vld [vmem:[%s300 + $0xec] sm:$0xf]
      %v373 = vld [vmem:[%s300 + $0xf0] sm:$0xf]
      %v374 = vld [vmem:[%s300 + $0xf4] sm:$0xf]
      %v375 = vld [vmem:[%s300 + $0xf8] sm:$0xf]
      %v376 = vld [vmem:[%s300 + $0xfc] sm:$0xf]
      %v377 = vld [vmem:[%s300 + $0x100] sm:$0xf]
      %v378 = vld [vmem:[%s300 + $0x104] sm:$0xf]
      %v379 = vld [vmem:[%s300 + $0x108] sm:$0xf]
      %v380 = vld [vmem:[%s300 + $0x10c] sm:$0xf]
      %v381 = vld [vmem:[%s300 + $0x110] sm:$0xf]
      %v382 = vld [vmem:[%s300 + $0x114] sm:$0xf]
      %v383 = vld [vmem:[%s300 + $0x118] sm:$0xf]
      %v384 = vld [vmem:[%s300 + $0x11c] sm:$0xf]
      %v385 = vld [vmem:[%s300 + $0x120] sm:$0xf]
      %v386 = vld [vmem:[%s300 + $0x124] sm:$0xf]
      %v387 = vld [vmem:[%s300 + $0x128] sm:$0xf]
      %v388 = vld [vmem:[%s300 + $0x12c] sm:$0xf]
      %v389 = vld [vmem:[%s300 + $0x130] sm:$0xf]
      %v390 = vld [vmem:[%s300 + $0x134] sm:$0xf]
      %v391 = vld [vmem:[%s300 + $0x138] sm:$0xf]
      %v392 = vld [vmem:[%s300 + $0x13c] sm:$0xf]
      %v393 = vld [vmem:[%s300 + $0x140] sm:$0xf]
      %v394 = vld [vmem:[%s300 + $0x144] sm:$0xf]
      %v395 = vld [vmem:[%s300 + $0x148] sm:$0xf]
      %v396 = vld [vmem:[%s300 + $0x14c] sm:$0xf]
      %v397 = vld [vmem:[%s300 + $0x150] sm:$0xf]
      %v398 = vld [vmem:[%s300 + $0x154] sm:$0xf]
      %v399 = vld [vmem:[%s300 + $0x158] sm:$0xf]
      %v400 = vld [vmem:[%s300 + $0x15c] sm:$0xf]
      %v401 = vld [vmem:[%s300 + $0x160] sm:$0xf]
      %v402 = vld [vmem:[%s300 + $0x164] sm:$0xf]
      %v403 = vld [vmem:[%s300 + $0x168] sm:$0xf]
      %v404 = vld [vmem:[%s300 + $0x16c] sm:$0xf]
      %v405 = vld [vmem:[%s300 + $0x170] sm:$0xf]
      %v406 = vld [vmem:[%s300 + $0x174] sm:$0xf]
      %v407 = vld [vmem:[%s300 + $0x178] sm:$0xf]
      %v408 = vld [vmem:[%s300 + $0x17c] sm:$0xf]
      %v409 = vld [vmem:[%s300 + $0x180] sm:$0xf]
      %v410 = vld [vmem:[%s300 + $0x184] sm:$0xf]
      %v411 = vld [vmem:[%s300 + $0x188] sm:$0xf]
      %v412 = vld [vmem:[%s300 + $0x18c] sm:$0xf]
      %v413 = vld [vmem:[%s300 + $0x190] sm:$0xf]
      %v414 = vld [vmem:[%s300 + $0x194] sm:$0xf]
      %v415 = vld [vmem:[%s300 + $0x198] sm:$0xf]
      %v416 = vld [vmem:[%s300 + $0x19c] sm:$0xf]
      %v417 = vld [vmem:[%s300 + $0x1a0] sm:$0xf]
      %v418 = vld [vmem:[%s300 + $0x1a4] sm:$0xf]
      %v419 = vld [vmem:[%s300 + $0x1a8] sm:$0xf]
      %v420 = vld [vmem:[%s300 + $0x1ac] sm:$0xf]
      %v421 = vld [vmem:[%s300 + $0x1b0] sm:$0xf]
      %v422 = vld [vmem:[%s300 + $0x1b4] sm:$0xf]
      %v423 = vld [vmem:[%s300 + $0x1b8] sm:$0xf]
      %v424 = vld [vmem:[%s300 + $0x1bc] sm:$0xf]
      %v425 = vld [vmem:[%s300 + $0x1c0] sm:$0xf]
      %v426 = vld [vmem:[%s300 + $0x1c4] sm:$0xf]
      %v427 = vld [vmem:[%s300 + $0x1c8] sm:$0xf]
      %v428 = vld [vmem:[%s300 + $0x1cc] sm:$0xf]
      %v429 = vld [vmem:[%s300 + $0x1d0] sm:$0xf]
      %v430 = vld [vmem:[%s300 + $0x1d4] sm:$0xf]
      %v431 = vld [vmem:[%s300 + $0x1d8] sm:$0xf]
      %v432 = vld [vmem:[%s300 + $0x1dc] sm:$0xf]
      %v433 = vld [vmem:[%s300 + $0x1e0] sm:$0xf]
      %v434 = vld [vmem:[%s300 + $0x1e4] sm:$0xf]
      %v435 = vld [vmem:[%s300 + $0x1e8] sm:$0xf]
      %v436 = vld [vmem:[%s300 + $0x1ec] sm:$0xf]
      %v437 = vld [vmem:[%s300 + $0x1f0] sm:$0xf]
      %v438 = vld [vmem:[%s300 + $0x1f4] sm:$0xf]
      %v439 = vld [vmem:[%s300 + $0x1f8] sm:$0xf]
      %v440 = vld [vmem:[%s300 + $0x1fc] sm:$0xf]
      %v441 = vld [vmem:[%s300 + $0x200] sm:$0xf]
      %v442 = vld [vmem:[%s300 + $0x204] sm:$0xf]
      %v443 = vld [vmem:[%s300 + $0x208] sm:$0xf]
      %v444 = vld [vmem:[%s300 + $0x20c] sm:$0xf]
      %v445 = vld [vmem:[%s300 + $0x210] sm:$0xf]
      %v446 = vld [vmem:[%s300 + $0x214] sm:$0xf]
      %v447 = vld [vmem:[%s300 + $0x218] sm:$0xf]
      %v448 = vld [vmem:[%s300 + $0x21c] sm:$0xf]
      %v449 = vld [vmem:[%s300 + $0x220] sm:$0xf]
      %v450 = vld [vmem:[%s300 + $0x224] sm:$0xf]
      %v451 = vld [vmem:[%s300 + $0x228] sm:$0xf]
      %v452 = vld [vmem:[%s300 + $0x22c] sm:$0xf]
      %v453 = vld [vmem:[%s300 + $0x230] sm:$0xf]
      %v454 = vld [vmem:[%s300 + $0x234] sm:$0xf]
      %v455 = vld [vmem:[%s300 + $0x238] sm:$0xf]
      %v456 = vld [vmem:[%s300 + $0x23c] sm:$0xf]
      %v457 = vld [vmem:[%s300 + $0x240] sm:$0xf]
      %v458 = vld [vmem:[%s300 + $0x244] sm:$0xf]
      %v459 = vld [vmem:[%s300 + $0x248] sm:$0xf]
      %v460 = vld [vmem:[%s300 + $0x24c] sm:$0xf]
      %v461 = vld [vmem:[%s300 + $0x250] sm:$0xf]
      %v462 = vld [vmem:[%s300 + $0x254] sm:$0xf]
      %v463 = vld [vmem:[%s300 + $0x258] sm:$0xf]
      %v464 = vld [vmem:[%s300 + $0x25c] sm:$0xf]
      %v465 = vld [vmem:[%s300 + $0x260] sm:$0xf]
      %v466 = vld [vmem:[%s300 + $0x264] sm:$0xf]
      %v467 = vld [vmem:[%s300 + $0x268] sm:$0xf]
      %v468 = vld [vmem:[%s300 + $0x26c] sm:$0xf]
      %v469 = vld [vmem:[%s300 + $0x270] sm:$0xf]
      %v470 = vld [vmem:[%s300 + $0x274] sm:$0xf]
      %v471 = vld [vmem:[%s300 + $0x278] sm:$0xf]
      %v472 = vld [vmem:[%s300 + $0x27c] sm:$0xf]
      %v473 = vld [vmem:[%s300 + $0x280] sm:$0xf]
      %v474 = vld [vmem:[%s300 + $0x284] sm:$0xf]
      %v475 = vld [vmem:[%s300 + $0x288] sm:$0xf]
      %v476 = vld [vmem:[%s300 + $0x28c] sm:$0xf]
      %v477 = vld [vmem:[%s300 + $0x290] sm:$0xf]
      %v478 = vld [vmem:[%s300 + $0x294] sm:$0xf]
      %v479 = vld [vmem:[%s300 + $0x298] sm:$0xf]
      %v480 = vld [vmem:[%s300 + $0x29c] sm:$0xf]
      %v481 = vld [vmem:[%s300 + $0x2a0] sm:$0xf]
      %v482 = vld [vmem:[%s300 + $0x2a4] sm:$0xf]
      %v483 = vld [vmem:[%s300 + $0x2a8] sm:$0xf]
      %v484 = vld [vmem:[%s300 + $0x2ac] sm:$0xf]
      %v485 = vld [vmem:[%s300 + $0x2b0] sm:$0xf]
      %v486 = vld [vmem:[%s300 + $0x2b4] sm:$0xf]
      %v487 = vld [vmem:[%s300 + $0x2b8] sm:$0xf]
      %v488 = vld [vmem:[%s300 + $0x2bc] sm:$0xf]
      %v489 = vld [vmem:[%s300 + $0x2c0] sm:$0xf]
      %v490 = vld [vmem:[%s300 + $0x2c4] sm:$0xf]
      %v491 = vld [vmem:[%s300 + $0x2c8] sm:$0xf]
      %v492 = vld [vmem:[%s300 + $0x2cc] sm:$0xf]
      %v493 = vld [vmem:[%s300 + $0x2d0] sm:$0xf]
      %v494 = vld [vmem:[%s300 + $0x2d4] sm:$0xf]
      %v495 = vld [vmem:[%s300 + $0x2d8] sm:$0xf]
      %v496 = vld [vmem:[%s300 + $0x2dc] sm:$0xf]
      %v497 = vld [vmem:[%s300 + $0x2e0] sm:$0xf]
      %v498 = vld [vmem:[%s300 + $0x2e4] sm:$0xf]
      %v499 = vld [vmem:[%s300 + $0x2e8] sm:$0xf]
      %v500 = vld [vmem:[%s300 + $0x2ec] sm:$0xf]
      %v501 = vld [vmem:[%s300 + $0x2f0] sm:$0xf]
      %v502 = vld [vmem:[%s300 + $0x2f4] sm:$0xf]
      %v503 = vld [vmem:[%s300 + $0x2f8] sm:$0xf]
      %v504 = vld [vmem:[%s300 + $0x2fc] sm:$0xf]
      %v505 = vld [vmem:[%s300 + $0x300] sm:$0xf]
      %v506 = vld [vmem:[%s300 + $0x304] sm:$0xf]
      %v507 = vld [vmem:[%s300 + $0x308] sm:$0xf]
      %v508 = vld [vmem:[%s300 + $0x30c] sm:$0xf]
      %v509 = vld [vmem:[%s300 + $0x310] sm:$0xf]
      %v510 = vld [vmem:[%s300 + $0x314] sm:$0xf]
      %v511 = vld [vmem:[%s300 + $0x318] sm:$0xf]
      %v512 = vld [vmem:[%s300 + $0x31c] sm:$0xf]
      %v513 = vld [vmem:[%s300 + $0x320] sm:$0xf]
      %v514 = vld [vmem:[%s300 + $0x324] sm:$0xf]
      %v515 = vld [vmem:[%s300 + $0x328] sm:$0xf]
      %v516 = vld [vmem:[%s300 + $0x32c] sm:$0xf]
      %v517 = vld [vmem:[%s300 + $0x330] sm:$0xf]
      %v518 = vld [vmem:[%s300 + $0x334] sm:$0xf]
      %v519 = vld [vmem:[%s300 + $0x338] sm:$0xf]
      %v520 = vld [vmem:[%s300 + $0x33c] sm:$0xf]
      %v521 = vld [vmem:[%s300 + $0x340] sm:$0xf]
      %v522 = vld [vmem:[%s300 + $0x344] sm:$0xf]
      %v523 = vld [vmem:[%s300 + $0x348] sm:$0xf]
      %v524 = vld [vmem:[%s300 + $0x34c] sm:$0xf]
      %v525 = vld [vmem:[%s300 + $0x350] sm:$0xf]
      %v526 = vld [vmem:[%s300 + $0x354] sm:$0xf]
      %v527 = vld [vmem:[%s300 + $0x358] sm:$0xf]
      %v528 = vld [vmem:[%s300 + $0x35c] sm:$0xf]
      %v529 = vld [vmem:[%s300 + $0x360] sm:$0xf]
      %v530 = vld [vmem:[%s300 + $0x364] sm:$0xf]
      %v531 = vld [vmem:[%s300 + $0x368] sm:$0xf]
      %v532 = vld [vmem:[%s300 + $0x36c] sm:$0xf]
      %v533 = vld [vmem:[%s300 + $0x370] sm:$0xf]
      %v534 = vld [vmem:[%s300 + $0x374] sm:$0xf]
      %v535 = vld [vmem:[%s300 + $0x378] sm:$0xf]
      %v536 = vld [vmem:[%s300 + $0x37c] sm:$0xf]
      %v537 = vld [vmem:[%s300 + $0x380] sm:$0xf]
      %v538 = vld [vmem:[%s300 + $0x384] sm:$0xf]
      %v539 = vld [vmem:[%s300 + $0x388] sm:$0xf]
      %v540 = vld [vmem:[%s300 + $0x38c] sm:$0xf]
      %v541 = vld [vmem:[%s300 + $0x390] sm:$0xf]
      %v542 = vld [vmem:[%s300 + $0x394] sm:$0xf]
      %v543 = vld [vmem:[%s300 + $0x398] sm:$0xf]
      %v544 = vld [vmem:[%s300 + $0x39c] sm:$0xf]
      %v545 = vld [vmem:[%s300 + $0x3a0] sm:$0xf]
      %v546 = vld [vmem:[%s300 + $0x3a4] sm:$0xf]
      %v547 = vld [vmem:[%s300 + $0x3a8] sm:$0xf]
      %v548 = vld [vmem:[%s300 + $0x3ac] sm:$0xf]
      %v549 = vld [vmem:[%s300 + $0x3b0] sm:$0xf]
      %v550 = vld [vmem:[%s300 + $0x3b4] sm:$0xf]
      %v551 = vld [vmem:[%s300 + $0x3b8] sm:$0xf]
      %v552 = vld [vmem:[%s300 + $0x3bc] sm:$0xf]
      %v553 = vld [vmem:[%s300 + $0x3c0] sm:$0xf]
      %v554 = vld [vmem:[%s300 + $0x3c4] sm:$0xf]
      %v555 = vld [vmem:[%s300 + $0x3c8] sm:$0xf]
      %v556 = vld [vmem:[%s300 + $0x3cc] sm:$0xf]
      %v557 = vld [vmem:[%s300 + $0x3d0] sm:$0xf]
      %v558 = vld [vmem:[%s300 + $0x3d4] sm:$0xf]
      %v559 = vld [vmem:[%s300 + $0x3d8] sm:$0xf]
      %v560 = vld [vmem:[%s300 + $0x3dc] sm:$0xf]
      %v561 = vld [vmem:[%s300 + $0x3e0] sm:$0xf]
      %v562 = vld [vmem:[%s300 + $0x3e4] sm:$0xf]
      %v563 = vld [vmem:[%s300 + $0x3e8] sm:$0xf]
      %v564 = vld [vmem:[%s300 + $0x3ec] sm:$0xf]
      %v565 = vld [vmem:[%s300 + $0x3f0] sm:$0xf]
      %v566 = vld [vmem:[%s300 + $0x3f4] sm:$0xf]
      %v567 = vld [vmem:[%s300 + $0x3f8] sm:$0xf]
      %v568 = vld [vmem:[%s300 + $0x3fc] sm:$0xf]
      %v569 = vld [vmem:[%s1] sm:$0xf]
      %v570 = vld [vmem:[%s1 + $0x4] sm:$0xf]
      %v571 = vld [vmem:[%s1 + $0x8] sm:$0xf]
      %v572 = vld [vmem:[%s1 + $0xc] sm:$0xf]
      %v573 = vlaneseq
      %v574 = vshrl.u32 %v573, 7
      %v575 = vsub.s32 0, %v574
      %v576 = vrot.slane %v307, %v575
      %v833 = vunpack.c.l.b16 %v313
      %v834 = vunpack.c.l.b16 %v314
      %v835 = vunpack.c.l.b16 %v315
      %v836 = vunpack.c.l.b16 %v316
      %v837 = vunpack.c.l.b16 %v317
      %v838 = vunpack.c.l.b16 %v318
      %v839 = vunpack.c.l.b16 %v319
      %v840 = vunpack.c.l.b16 %v320
      %v841 = vunpack.c.l.b16 %v321
      %v842 = vunpack.c.l.b16 %v322
      %v843 = vunpack.c.l.b16 %v323
      %v844 = vunpack.c.l.b16 %v324
      %v845 = vunpack.c.l.b16 %v325
      %v846 = vunpack.c.l.b16 %v326
      %v847 = vunpack.c.l.b16 %v327
      %v848 = vunpack.c.l.b16 %v328
      %v849 = vunpack.c.l.b16 %v329
      %v850 = vunpack.c.l.b16 %v330
      %v851 = vunpack.c.l.b16 %v331
      %v852 = vunpack.c.l.b16 %v332
      %v853 = vunpack.c.l.b16 %v333
      %v854 = vunpack.c.l.b16 %v334
      %v855 = vunpack.c.l.b16 %v335
      %v856 = vunpack.c.l.b16 %v336
      %v857 = vunpack.c.l.b16 %v337
      %v858 = vunpack.c.l.b16 %v338
      %v859 = vunpack.c.l.b16 %v339
      %v860 = vunpack.c.l.b16 %v340
      %v861 = vunpack.c.l.b16 %v341
      %v862 = vunpack.c.l.b16 %v342
      %v863 = vunpack.c.l.b16 %v343
      %v864 = vunpack.c.l.b16 %v344
      %v865 = vunpack.c.l.b16 %v345
      %v866 = vunpack.c.l.b16 %v346
      %v867 = vunpack.c.l.b16 %v347
      %v868 = vunpack.c.l.b16 %v348
      %v869 = vunpack.c.l.b16 %v349
      %v870 = vunpack.c.l.b16 %v350
      %v871 = vunpack.c.l.b16 %v351
      %v872 = vunpack.c.l.b16 %v352
      %v873 = vunpack.c.l.b16 %v353
      %v874 = vunpack.c.l.b16 %v354
      %v875 = vunpack.c.l.b16 %v355
      %v876 = vunpack.c.l.b16 %v356
      %v877 = vunpack.c.l.b16 %v357
      %v878 = vunpack.c.l.b16 %v358
      %v879 = vunpack.c.l.b16 %v359
      %v880 = vunpack.c.l.b16 %v360
      %v881 = vunpack.c.l.b16 %v361
      %v882 = vunpack.c.l.b16 %v362
      %v883 = vunpack.c.l.b16 %v363
      %v884 = vunpack.c.l.b16 %v364
      %v885 = vunpack.c.l.b16 %v365
      %v886 = vunpack.c.l.b16 %v366
      %v887 = vunpack.c.l.b16 %v367
      %v888 = vunpack.c.l.b16 %v368
      %v889 = vunpack.c.l.b16 %v369
      %v890 = vunpack.c.l.b16 %v370
      %v891 = vunpack.c.l.b16 %v371
      %v892 = vunpack.c.l.b16 %v372
      %v893 = vunpack.c.l.b16 %v373
      %v894 = vunpack.c.l.b16 %v374
      %v895 = vunpack.c.l.b16 %v375
      %v896 = vunpack.c.l.b16 %v376
      %v897 = vunpack.c.l.b16 %v377
      %v898 = vunpack.c.l.b16 %v378
      %v899 = vunpack.c.l.b16 %v379
      %v900 = vunpack.c.l.b16 %v380
      %v901 = vunpack.c.l.b16 %v381
      %v902 = vunpack.c.l.b16 %v382
      %v903 = vunpack.c.l.b16 %v383
      %v904 = vunpack.c.l.b16 %v384
      %v905 = vunpack.c.l.b16 %v385
      %v906 = vunpack.c.l.b16 %v386
      %v907 = vunpack.c.l.b16 %v387
      %v908 = vunpack.c.l.b16 %v388
      %v909 = vunpack.c.l.b16 %v389
      %v910 = vunpack.c.l.b16 %v390
      %v911 = vunpack.c.l.b16 %v391
      %v912 = vunpack.c.l.b16 %v392
      %v913 = vunpack.c.l.b16 %v393
      %v914 = vunpack.c.l.b16 %v394
      %v915 = vunpack.c.l.b16 %v395
      %v916 = vunpack.c.l.b16 %v396
      %v917 = vunpack.c.l.b16 %v397
      %v918 = vunpack.c.l.b16 %v398
      %v919 = vunpack.c.l.b16 %v399
      %v920 = vunpack.c.l.b16 %v400
      %v921 = vunpack.c.l.b16 %v401
      %v922 = vunpack.c.l.b16 %v402
      %v923 = vunpack.c.l.b16 %v403
      %v924 = vunpack.c.l.b16 %v404
      %v925 = vunpack.c.l.b16 %v405
      %v926 = vunpack.c.l.b16 %v406
      %v927 = vunpack.c.l.b16 %v407
      %v928 = vunpack.c.l.b16 %v408
      %v929 = vunpack.c.l.b16 %v409
      %v930 = vunpack.c.l.b16 %v410
      %v931 = vunpack.c.l.b16 %v411
      %v932 = vunpack.c.l.b16 %v412
      %v933 = vunpack.c.l.b16 %v413
      %v934 = vunpack.c.l.b16 %v414
      %v935 = vunpack.c.l.b16 %v415
      %v936 = vunpack.c.l.b16 %v416
      %v937 = vunpack.c.l.b16 %v417
      %v938 = vunpack.c.l.b16 %v418
      %v939 = vunpack.c.l.b16 %v419
      %v940 = vunpack.c.l.b16 %v420
      %v941 = vunpack.c.l.b16 %v421
      %v942 = vunpack.c.l.b16 %v422
      %v943 = vunpack.c.l.b16 %v423
      %v944 = vunpack.c.l.b16 %v424
      %v945 = vunpack.c.l.b16 %v425
      %v946 = vunpack.c.l.b16 %v426
      %v947 = vunpack.c.l.b16 %v427
      %v948 = vunpack.c.l.b16 %v428
      %v949 = vunpack.c.l.b16 %v429
      %v950 = vunpack.c.l.b16 %v430
      %v951 = vunpack.c.l.b16 %v431
      %v952 = vunpack.c.l.b16 %v432
      %v953 = vunpack.c.l.b16 %v433
      %v954 = vunpack.c.l.b16 %v434
      %v955 = vunpack.c.l.b16 %v435
      %v956 = vunpack.c.l.b16 %v436
      %v957 = vunpack.c.l.b16 %v437
      %v958 = vunpack.c.l.b16 %v438
      %v959 = vunpack.c.l.b16 %v439
      %v960 = vunpack.c.l.b16 %v440
      %v961 = vunpack.c.l.b16 %v441
      %v962 = vunpack.c.l.b16 %v442
      %v963 = vunpack.c.l.b16 %v443
      %v964 = vunpack.c.l.b16 %v444
      %v965 = vunpack.c.l.b16 %v445
      %v966 = vunpack.c.l.b16 %v446
      %v967 = vunpack.c.l.b16 %v447
      %v968 = vunpack.c.l.b16 %v448
      %v969 = vunpack.c.l.b16 %v449
      %v970 = vunpack.c.l.b16 %v450
      %v971 = vunpack.c.l.b16 %v451
      %v972 = vunpack.c.l.b16 %v452
      %v973 = vunpack.c.l.b16 %v453
      %v974 = vunpack.c.l.b16 %v454
      %v975 = vunpack.c.l.b16 %v455
      %v976 = vunpack.c.l.b16 %v456
      %v977 = vunpack.c.l.b16 %v457
      %v978 = vunpack.c.l.b16 %v458
      %v979 = vunpack.c.l.b16 %v459
      %v980 = vunpack.c.l.b16 %v460
      %v981 = vunpack.c.l.b16 %v461
      %v982 = vunpack.c.l.b16 %v462
      %v983 = vunpack.c.l.b16 %v463
      %v984 = vunpack.c.l.b16 %v464
      %v985 = vunpack.c.l.b16 %v465
      %v986 = vunpack.c.l.b16 %v466
      %v987 = vunpack.c.l.b16 %v467
      %v988 = vunpack.c.l.b16 %v468
      %v989 = vunpack.c.l.b16 %v469
      %v990 = vunpack.c.l.b16 %v470
      %v991 = vunpack.c.l.b16 %v471
      %v992 = vunpack.c.l.b16 %v472
      %v993 = vunpack.c.l.b16 %v473
      %v994 = vunpack.c.l.b16 %v474
      %v995 = vunpack.c.l.b16 %v475
      %v996 = vunpack.c.l.b16 %v476
      %v997 = vunpack.c.l.b16 %v477
      %v998 = vunpack.c.l.b16 %v478
      %v999 = vunpack.c.l.b16 %v479
      %v1000 = vunpack.c.l.b16 %v480
      %v1001 = vunpack.c.l.b16 %v481
      %v1002 = vunpack.c.l.b16 %v482
      %v1003 = vunpack.c.l.b16 %v483
      %v1004 = vunpack.c.l.b16 %v484
      %v1005 = vunpack.c.l.b16 %v485
      %v1006 = vunpack.c.l.b16 %v486
      %v1007 = vunpack.c.l.b16 %v487
      %v1008 = vunpack.c.l.b16 %v488
      %v1009 = vunpack.c.l.b16 %v489
      %v1010 = vunpack.c.l.b16 %v490
      %v1011 = vunpack.c.l.b16 %v491
      %v1012 = vunpack.c.l.b16 %v492
      %v1013 = vunpack.c.l.b16 %v493
      %v1014 = vunpack.c.l.b16 %v494
      %v1015 = vunpack.c.l.b16 %v495
      %v1016 = vunpack.c.l.b16 %v496
      %v1017 = vunpack.c.l.b16 %v497
      %v1018 = vunpack.c.l.b16 %v498
      %v1019 = vunpack.c.l.b16 %v499
      %v1020 = vunpack.c.l.b16 %v500
      %v1021 = vunpack.c.l.b16 %v501
      %v1022 = vunpack.c.l.b16 %v502
      %v1023 = vunpack.c.l.b16 %v503
      %v1024 = vunpack.c.l.b16 %v504
      %v1025 = vunpack.c.l.b16 %v505
      %v1026 = vunpack.c.l.b16 %v506
      %v1027 = vunpack.c.l.b16 %v507
      %v1028 = vunpack.c.l.b16 %v508
      %v1029 = vunpack.c.l.b16 %v509
      %v1030 = vunpack.c.l.b16 %v510
      %v1031 = vunpack.c.l.b16 %v511
      %v1032 = vunpack.c.l.b16 %v512
      %v1033 = vunpack.c.l.b16 %v513
      %v1034 = vunpack.c.l.b16 %v514
      %v1035 = vunpack.c.l.b16 %v515
      %v1036 = vunpack.c.l.b16 %v516
      %v1037 = vunpack.c.l.b16 %v517
      %v1038 = vunpack.c.l.b16 %v518
      %v1039 = vunpack.c.l.b16 %v519
      %v1040 = vunpack.c.l.b16 %v520
      %v1041 = vunpack.c.l.b16 %v521
      %v1042 = vunpack.c.l.b16 %v522
      %v1043 = vunpack.c.l.b16 %v523
      %v1044 = vunpack.c.l.b16 %v524
      %v1045 = vunpack.c.l.b16 %v525
      %v1046 = vunpack.c.l.b16 %v526
      %v1047 = vunpack.c.l.b16 %v527
      %v1048 = vunpack.c.l.b16 %v528
      %v1049 = vunpack.c.l.b16 %v529
      %v1050 = vunpack.c.l.b16 %v530
      %v1051 = vunpack.c.l.b16 %v531
      %v1052 = vunpack.c.l.b16 %v532
      %v1053 = vunpack.c.l.b16 %v533
      %v1054 = vunpack.c.l.b16 %v534
      %v1055 = vunpack.c.l.b16 %v535
      %v1056 = vunpack.c.l.b16 %v536
      %v1057 = vunpack.c.l.b16 %v537
      %v1058 = vunpack.c.l.b16 %v538
      %v1059 = vunpack.c.l.b16 %v539
      %v1060 = vunpack.c.l.b16 %v540
      %v1061 = vunpack.c.l.b16 %v541
      %v1062 = vunpack.c.l.b16 %v542
      %v1063 = vunpack.c.l.b16 %v543
      %v1064 = vunpack.c.l.b16 %v544
      %v1065 = vunpack.c.l.b16 %v545
      %v1066 = vunpack.c.l.b16 %v546
      %v1067 = vunpack.c.l.b16 %v547
      %v1068 = vunpack.c.l.b16 %v548
      %v1069 = vunpack.c.l.b16 %v549
      %v1070 = vunpack.c.l.b16 %v550
      %v1071 = vunpack.c.l.b16 %v551
      %v1072 = vunpack.c.l.b16 %v552
      %v1073 = vunpack.c.l.b16 %v553
      %v1074 = vunpack.c.l.b16 %v554
      %v1075 = vunpack.c.l.b16 %v555
      %v1076 = vunpack.c.l.b16 %v556
      %v1077 = vunpack.c.l.b16 %v557
      %v1078 = vunpack.c.l.b16 %v558
      %v1079 = vunpack.c.l.b16 %v559
      %v1080 = vunpack.c.l.b16 %v560
      %v1081 = vunpack.c.l.b16 %v561
      %v1082 = vunpack.c.l.b16 %v562
      %v1083 = vunpack.c.l.b16 %v563
      %v1084 = vunpack.c.l.b16 %v564
      %v1085 = vunpack.c.l.b16 %v565
      %v1086 = vunpack.c.l.b16 %v566
      %v1087 = vunpack.c.l.b16 %v567
      %v1088 = vunpack.c.l.b16 %v568
      %v1089 = vpack.c.b16 %v834, %v833
      %v1090 = vpack.c.b16 %v836, %v835
      %v1091 = vpack.c.b16 %v838, %v837
      %v1092 = vpack.c.b16 %v840, %v839
      %v1093 = vpack.c.b16 %v842, %v841
      %v1094 = vpack.c.b16 %v844, %v843
      %v1095 = vpack.c.b16 %v846, %v845
      %v1096 = vpack.c.b16 %v848, %v847
      %v1097 = vpack.c.b16 %v850, %v849
      %v1098 = vpack.c.b16 %v852, %v851
      %v1099 = vpack.c.b16 %v854, %v853
      %v1100 = vpack.c.b16 %v856, %v855
      %v1101 = vpack.c.b16 %v858, %v857
      %v1102 = vpack.c.b16 %v860, %v859
      %v1103 = vpack.c.b16 %v862, %v861
      %v1104 = vpack.c.b16 %v864, %v863
      %v1105 = vpack.c.b16 %v866, %v865
      %v1106 = vpack.c.b16 %v868, %v867
      %v1107 = vpack.c.b16 %v870, %v869
      %v1108 = vpack.c.b16 %v872, %v871
      %v1109 = vpack.c.b16 %v874, %v873
      %v1110 = vpack.c.b16 %v876, %v875
      %v1111 = vpack.c.b16 %v878, %v877
      %v1112 = vpack.c.b16 %v880, %v879
      %v1113 = vpack.c.b16 %v882, %v881
      %v1114 = vpack.c.b16 %v884, %v883
      %v1115 = vpack.c.b16 %v886, %v885
      %v1116 = vpack.c.b16 %v888, %v887
      %v1117 = vpack.c.b16 %v890, %v889
      %v1118 = vpack.c.b16 %v892, %v891
      %v1119 = vpack.c.b16 %v894, %v893
      %v1120 = vpack.c.b16 %v896, %v895
      %v1121 = vpack.c.b16 %v898, %v897
      %v1122 = vpack.c.b16 %v900, %v899
      %v1123 = vpack.c.b16 %v902, %v901
      %v1124 = vpack.c.b16 %v904, %v903
      %v1125 = vpack.c.b16 %v906, %v905
      %v1126 = vpack.c.b16 %v908, %v907
      %v1127 = vpack.c.b16 %v910, %v909
      %v1128 = vpack.c.b16 %v912, %v911
      %v1129 = vpack.c.b16 %v914, %v913
      %v1130 = vpack.c.b16 %v916, %v915
      %v1131 = vpack.c.b16 %v918, %v917
      %v1132 = vpack.c.b16 %v920, %v919
      %v1133 = vpack.c.b16 %v922, %v921
      %v1134 = vpack.c.b16 %v924, %v923
      %v1135 = vpack.c.b16 %v926, %v925
      %v1136 = vpack.c.b16 %v928, %v927
      %v1137 = vpack.c.b16 %v930, %v929
      %v1138 = vpack.c.b16 %v932, %v931
      %v1139 = vpack.c.b16 %v934, %v933
      %v1140 = vpack.c.b16 %v936, %v935
      %v1141 = vpack.c.b16 %v938, %v937
      %v1142 = vpack.c.b16 %v940, %v939
      %v1143 = vpack.c.b16 %v942, %v941
      %v1144 = vpack.c.b16 %v944, %v943
      %v1145 = vpack.c.b16 %v946, %v945
      %v1146 = vpack.c.b16 %v948, %v947
      %v1147 = vpack.c.b16 %v950, %v949
      %v1148 = vpack.c.b16 %v952, %v951
      %v1149 = vpack.c.b16 %v954, %v953
      %v1150 = vpack.c.b16 %v956, %v955
      %v1151 = vpack.c.b16 %v958, %v957
      %v1152 = vpack.c.b16 %v960, %v959
      %v1153 = vpack.c.b16 %v962, %v961
      %v1154 = vpack.c.b16 %v964, %v963
      %v1155 = vpack.c.b16 %v966, %v965
      %v1156 = vpack.c.b16 %v968, %v967
      %v1157 = vpack.c.b16 %v970, %v969
      %v1158 = vpack.c.b16 %v972, %v971
      %v1159 = vpack.c.b16 %v974, %v973
      %v1160 = vpack.c.b16 %v976, %v975
      %v1161 = vpack.c.b16 %v978, %v977
      %v1162 = vpack.c.b16 %v980, %v979
      %v1163 = vpack.c.b16 %v982, %v981
      %v1164 = vpack.c.b16 %v984, %v983
      %v1165 = vpack.c.b16 %v986, %v985
      %v1166 = vpack.c.b16 %v988, %v987
      %v1167 = vpack.c.b16 %v990, %v989
      %v1168 = vpack.c.b16 %v992, %v991
      %v1169 = vpack.c.b16 %v994, %v993
      %v1170 = vpack.c.b16 %v996, %v995
      %v1171 = vpack.c.b16 %v998, %v997
      %v1172 = vpack.c.b16 %v1000, %v999
      %v1173 = vpack.c.b16 %v1002, %v1001
      %v1174 = vpack.c.b16 %v1004, %v1003
      %v1175 = vpack.c.b16 %v1006, %v1005
      %v1176 = vpack.c.b16 %v1008, %v1007
      %v1177 = vpack.c.b16 %v1010, %v1009
      %v1178 = vpack.c.b16 %v1012, %v1011
      %v1179 = vpack.c.b16 %v1014, %v1013
      %v1180 = vpack.c.b16 %v1016, %v1015
      %v1181 = vpack.c.b16 %v1018, %v1017
      %v1182 = vpack.c.b16 %v1020, %v1019
      %v1183 = vpack.c.b16 %v1022, %v1021
      %v1184 = vpack.c.b16 %v1024, %v1023
      %v1185 = vpack.c.b16 %v1026, %v1025
      %v1186 = vpack.c.b16 %v1028, %v1027
      %v1187 = vpack.c.b16 %v1030, %v1029
      %v1188 = vpack.c.b16 %v1032, %v1031
      %v1189 = vpack.c.b16 %v1034, %v1033
      %v1190 = vpack.c.b16 %v1036, %v1035
      %v1191 = vpack.c.b16 %v1038, %v1037
      %v1192 = vpack.c.b16 %v1040, %v1039
      %v1193 = vpack.c.b16 %v1042, %v1041
      %v1194 = vpack.c.b16 %v1044, %v1043
      %v1195 = vpack.c.b16 %v1046, %v1045
      %v1196 = vpack.c.b16 %v1048, %v1047
      %v1197 = vpack.c.b16 %v1050, %v1049
      %v1198 = vpack.c.b16 %v1052, %v1051
      %v1199 = vpack.c.b16 %v1054, %v1053
      %v1200 = vpack.c.b16 %v1056, %v1055
      %v1201 = vpack.c.b16 %v1058, %v1057
      %v1202 = vpack.c.b16 %v1060, %v1059
      %v1203 = vpack.c.b16 %v1062, %v1061
      %v1204 = vpack.c.b16 %v1064, %v1063
      %v1205 = vpack.c.b16 %v1066, %v1065
      %v1206 = vpack.c.b16 %v1068, %v1067
      %v1207 = vpack.c.b16 %v1070, %v1069
      %v1208 = vpack.c.b16 %v1072, %v1071
      %v1209 = vpack.c.b16 %v1074, %v1073
      %v1210 = vpack.c.b16 %v1076, %v1075
      %v1211 = vpack.c.b16 %v1078, %v1077
      %v1212 = vpack.c.b16 %v1080, %v1079
      %v1213 = vpack.c.b16 %v1082, %v1081
      %v1214 = vpack.c.b16 %v1084, %v1083
      %v1215 = vpack.c.b16 %v1086, %v1085
      %v1216 = vpack.c.b16 %v1088, %v1087
      %v1221 = vunpack.c.l.b16 %v569
      %v1222 = vunpack.c.l.b16 %v570
      %v1223 = vunpack.c.l.b16 %v571
      %v1224 = vunpack.c.l.b16 %v572
      %v1225 = vpack.c.b16 %v1222, %v1221
      %v1226 = vpack.c.b16 %v1224, %v1223
      %vm1229 = vcmask 261120
      %v1231 = vsel %vm1229, %v1089, 0
      %v1234 = vsel %vm1229, %v1090, 0
      %v1237 = vsel %vm1229, %v1091, 0
      %v1240 = vsel %vm1229, %v1092, 0
      %v1243 = vsel %vm1229, %v1093, 0
      %v1246 = vsel %vm1229, %v1094, 0
      %v1249 = vsel %vm1229, %v1095, 0
      %v1252 = vsel %vm1229, %v1096, 0
      %v1255 = vsel %vm1229, %v1097, 0
      %v1258 = vsel %vm1229, %v1098, 0
      %v1261 = vsel %vm1229, %v1099, 0
      %v1264 = vsel %vm1229, %v1100, 0
      %v1267 = vsel %vm1229, %v1101, 0
      %v1270 = vsel %vm1229, %v1102, 0
      %v1273 = vsel %vm1229, %v1103, 0
      %v1276 = vsel %vm1229, %v1104, 0
      %v1279 = vsel %vm1229, %v1105, 0
      %v1282 = vsel %vm1229, %v1106, 0
      %v1285 = vsel %vm1229, %v1107, 0
      %v1288 = vsel %vm1229, %v1108, 0
      %v1291 = vsel %vm1229, %v1109, 0
      %v1294 = vsel %vm1229, %v1110, 0
      %v1297 = vsel %vm1229, %v1111, 0
      %v1300 = vsel %vm1229, %v1112, 0
      %v1303 = vsel %vm1229, %v1113, 0
      %v1306 = vsel %vm1229, %v1114, 0
      %v1309 = vsel %vm1229, %v1115, 0
      %v1312 = vsel %vm1229, %v1116, 0
      %v1315 = vsel %vm1229, %v1117, 0
      %v1318 = vsel %vm1229, %v1118, 0
      %v1321 = vsel %vm1229, %v1119, 0
      %v1324 = vsel %vm1229, %v1120, 0
      %v1327 = vsel %vm1229, %v1121, 0
      %v1330 = vsel %vm1229, %v1122, 0
      %v1333 = vsel %vm1229, %v1123, 0
      %v1336 = vsel %vm1229, %v1124, 0
      %v1339 = vsel %vm1229, %v1125, 0
      %v1342 = vsel %vm1229, %v1126, 0
      %v1345 = vsel %vm1229, %v1127, 0
      %v1348 = vsel %vm1229, %v1128, 0
      %v1351 = vsel %vm1229, %v1129, 0
      %v1354 = vsel %vm1229, %v1130, 0
      %v1357 = vsel %vm1229, %v1131, 0
      %v1360 = vsel %vm1229, %v1132, 0
      %v1363 = vsel %vm1229, %v1133, 0
      %v1366 = vsel %vm1229, %v1134, 0
      %v1369 = vsel %vm1229, %v1135, 0
      %v1372 = vsel %vm1229, %v1136, 0
      %v1375 = vsel %vm1229, %v1137, 0
      %v1378 = vsel %vm1229, %v1138, 0
      %v1381 = vsel %vm1229, %v1139, 0
      %v1384 = vsel %vm1229, %v1140, 0
      %v1387 = vsel %vm1229, %v1141, 0
      %v1390 = vsel %vm1229, %v1142, 0
      %v1393 = vsel %vm1229, %v1143, 0
      %v1396 = vsel %vm1229, %v1144, 0
      %v1399 = vsel %vm1229, %v1145, 0
      %v1402 = vsel %vm1229, %v1146, 0
      %v1405 = vsel %vm1229, %v1147, 0
      %v1408 = vsel %vm1229, %v1148, 0
      %v1411 = vsel %vm1229, %v1149, 0
      %v1414 = vsel %vm1229, %v1150, 0
      %v1417 = vsel %vm1229, %v1151, 0
      %v1420 = vsel %vm1229, %v1152, 0
      %v1423 = vsel %vm1229, %v1153, 0
      %v1426 = vsel %vm1229, %v1154, 0
      %v1429 = vsel %vm1229, %v1155, 0
      %v1432 = vsel %vm1229, %v1156, 0
      %v1435 = vsel %vm1229, %v1157, 0
      %v1438 = vsel %vm1229, %v1158, 0
      %v1441 = vsel %vm1229, %v1159, 0
      %v1444 = vsel %vm1229, %v1160, 0
      %v1447 = vsel %vm1229, %v1161, 0
      %v1450 = vsel %vm1229, %v1162, 0
      %v1453 = vsel %vm1229, %v1163, 0
      %v1456 = vsel %vm1229, %v1164, 0
      %v1459 = vsel %vm1229, %v1165, 0
      %v1462 = vsel %vm1229, %v1166, 0
      %v1465 = vsel %vm1229, %v1167, 0
      %v1468 = vsel %vm1229, %v1168, 0
      %v1471 = vsel %vm1229, %v1169, 0
      %v1474 = vsel %vm1229, %v1170, 0
      %v1477 = vsel %vm1229, %v1171, 0
      %v1480 = vsel %vm1229, %v1172, 0
      %v1483 = vsel %vm1229, %v1173, 0
      %v1486 = vsel %vm1229, %v1174, 0
      %v1489 = vsel %vm1229, %v1175, 0
      %v1492 = vsel %vm1229, %v1176, 0
      %v1495 = vsel %vm1229, %v1177, 0
      %v1498 = vsel %vm1229, %v1178, 0
      %v1501 = vsel %vm1229, %v1179, 0
      %v1504 = vsel %vm1229, %v1180, 0
      %v1507 = vsel %vm1229, %v1181, 0
      %v1510 = vsel %vm1229, %v1182, 0
      %v1513 = vsel %vm1229, %v1183, 0
      %v1516 = vsel %vm1229, %v1184, 0
      %v1519 = vsel %vm1229, %v1185, 0
      %v1522 = vsel %vm1229, %v1186, 0
      %v1525 = vsel %vm1229, %v1187, 0
      %v1528 = vsel %vm1229, %v1188, 0
      %v1531 = vsel %vm1229, %v1189, 0
      %v1534 = vsel %vm1229, %v1190, 0
      %v1537 = vsel %vm1229, %v1191, 0
      %v1540 = vsel %vm1229, %v1192, 0
      %v1543 = vsel %vm1229, %v1193, 0
      %v1546 = vsel %vm1229, %v1194, 0
      %v1549 = vsel %vm1229, %v1195, 0
      %v1552 = vsel %vm1229, %v1196, 0
      %v1555 = vsel %vm1229, %v1197, 0
      %v1558 = vsel %vm1229, %v1198, 0
      %v1561 = vsel %vm1229, %v1199, 0
      %v1564 = vsel %vm1229, %v1200, 0
      %v1567 = vsel %vm1229, %v1201, 0
      %v1570 = vsel %vm1229, %v1202, 0
      %v1573 = vsel %vm1229, %v1203, 0
      %v1576 = vsel %vm1229, %v1204, 0
      %v1579 = vsel %vm1229, %v1205, 0
      %v1582 = vsel %vm1229, %v1206, 0
      %v1585 = vsel %vm1229, %v1207, 0
      %v1588 = vsel %vm1229, %v1208, 0
      %v1591 = vsel %vm1229, %v1209, 0
      %v1594 = vsel %vm1229, %v1210, 0
      %v1597 = vsel %vm1229, %v1211, 0
      %v1600 = vsel %vm1229, %v1212, 0
      %v1603 = vsel %vm1229, %v1213, 0
      %v1606 = vsel %vm1229, %v1214, 0
      %v1609 = vsel %vm1229, %v1215, 0
      %v1612 = vsel %vm1229, %v1216, 0
      %1614 = vmatprep.subr.bf16.mxu0 0
      %1615 = vmatpush1.bf16.msra.mxu0 %v1225
      %1616 = vmatprep.subr.bf16.mxu0 0
      %1617 = vmatpush1.bf16.msra.mxu0 %v1226
      %1618 = vmatprep.subr.bf16.mxu0 0
      %1619 = vmatpush1.bf16.msra.mxu0 0
      %1620 = vmatprep.subr.bf16.mxu0 0
      %1621 = vmatpush1.bf16.msra.mxu0 0
      %1622 = vmatprep.subr.bf16.mxu0 0
      %1623 = vmatpush1.bf16.msra.mxu0 0
      %1624 = vmatprep.subr.bf16.mxu0 0
      %1625 = vmatpush1.bf16.msra.mxu0 0
      %1626 = vmatprep.subr.bf16.mxu0 0
      %1627 = vmatpush1.bf16.msra.mxu0 0
      %1628 = vmatprep.subr.bf16.mxu0 0
      %1629 = vmatpush1.bf16.msra.mxu0 0
      %1630 = vmatprep.subr.bf16.mxu0 0
      %1631 = vmatpush1.bf16.msra.mxu0 0
      %1632 = vmatprep.subr.bf16.mxu0 0
      %1633 = vmatpush1.bf16.msra.mxu0 0
      %1634 = vmatprep.subr.bf16.mxu0 0
      %1635 = vmatpush1.bf16.msra.mxu0 0
      %1636 = vmatprep.subr.bf16.mxu0 0
      %1637 = vmatpush1.bf16.msra.mxu0 0
      %1638 = vmatprep.subr.bf16.mxu0 0
      %1639 = vmatpush1.bf16.msra.mxu0 0
      %1640 = vmatprep.subr.bf16.mxu0 0
      %1641 = vmatpush1.bf16.msra.mxu0 0
      %1642 = vmatprep.subr.bf16.mxu0 0
      %1643 = vmatpush1.bf16.msra.mxu0 0
      %1644 = vmatprep.subr.bf16.mxu0 0
      %1645 = vmatpush1.bf16.msra.mxu0 0
      %1646 = vmatprep.mubr.bf16.mxu0 0
      %1647 = vmatmul.mubr.bf16.gmra.mrb[0].mxu0 %v1231
      %v1648 = vpop.f32.mrb[0].mxu0
      %v1649 = vadd.f32 %v576, %v1648
      %v1650 = vpop.f32.mrb[0].mxu0
      %v1651 = vpop.f32.mrb[0].mxu0
      %v1652 = vadd.f32 %v576, %v1651
      %v1653 = vpop.f32.mrb[0].mxu0
      %1654 = vmatprep.mubr.bf16.mxu0 0
      %1655 = vmatmul.mubr.bf16.gmra.mrb[0].mxu0 %v1234
      %v1656 = vpop.f32.mrb[0].mxu0
      %v1657 = vadd.f32 %v576, %v1656
      %v1658 = vpop.f32.mrb[0].mxu0
      %v1659 = vpop.f32.mrb[0].mxu0
      %v1660 = vadd.f32 %v576, %v1659
      %v1661 = vpop.f32.mrb[0].mxu0
      %1662 = vmatprep.mubr.bf16.mxu0 0
      %1663 = vmatmul.mubr.bf16.gmra.mrb[0].mxu0 %v1237
      %v1664 = vpop.f32.mrb[0].mxu0
      %v1665 = vadd.f32 %v576, %v1664
      %v1666 = vpop.f32.mrb[0].mxu0
      %v1667 = vpop.f32.mrb[0].mxu0
      %v1668 = vadd.f32 %v576, %v1667
      %v1669 = vpop.f32.mrb[0].mxu0
      %1670 = vmatprep.mubr.bf16.mxu0 0
      %1671 = vmatmul.mubr.bf16.gmra.mrb[0].mxu0 %v1240
      %v1672 = vpop.f32.mrb[0].mxu0
      %v1673 = vadd.f32 %v576, %v1672
      %v1674 = vpop.f32.mrb[0].mxu0
      %v1675 = vpop.f32.mrb[0].mxu0
      %v1676 = vadd.f32 %v576, %v1675
      %v1677 = vpop.f32.mrb[0].mxu0
      %1678 = vmatprep.mubr.bf16.mxu0 0
      %1679 = vmatmul.mubr.bf16.gmra.mrb[0].mxu0 %v1243
      %v1680 = vpop.f32.mrb[0].mxu0
      %v1681 = vadd.f32 %v576, %v1680
      %v1682 = vpop.f32.mrb[0].mxu0
      %v1683 = vpop.f32.mrb[0].mxu0
      %v1684 = vadd.f32 %v576, %v1683
      %v1685 = vpop.f32.mrb[0].mxu0
      %1686 = vmatprep.mubr.bf16.mxu0 0
      %1687 = vmatmul.mubr.bf16.gmra.mrb[0].mxu0 %v1246
      %v1688 = vpop.f32.mrb[0].mxu0
      %v1689 = vadd.f32 %v576, %v1688
      %v1690 = vpop.f32.mrb[0].mxu0
      %v1691 = vpop.f32.mrb[0].mxu0
      %v1692 = vadd.f32 %v576, %v1691
      %v1693 = vpop.f32.mrb[0].mxu0
      %1694 = vmatprep.mubr.bf16.mxu0 0
      %1695 = vmatmul.mubr.bf16.gmra.mrb[0].mxu0 %v1249
      %v1696 = vpop.f32.mrb[0].mxu0
      %v1697 = vadd.f32 %v576, %v1696
      %v1698 = vpop.f32.mrb[0].mxu0
      %v1699 = vpop.f32.mrb[0].mxu0
      %v1700 = vadd.f32 %v576, %v1699
      %v1701 = vpop.f32.mrb[0].mxu0
      %1702 = vmatprep.mubr.bf16.mxu0 0
      %1703 = vmatmul.mubr.bf16.gmra.mrb[0].mxu0 %v1252
      %v1704 = vpop.f32.mrb[0].mxu0
      %v1705 = vadd.f32 %v576, %v1704
      %v1706 = vpop.f32.mrb[0].mxu0
      %v1707 = vpop.f32.mrb[0].mxu0
      %v1708 = vadd.f32 %v576, %v1707
      %v1709 = vpop.f32.mrb[0].mxu0
      %1710 = vmatprep.mubr.bf16.mxu0 0
      %1711 = vmatmul.mubr.bf16.gmra.mrb[0].mxu0 %v1255
      %v1712 = vpop.f32.mrb[0].mxu0
      %v1713 = vadd.f32 %v576, %v1712
      %v1714 = vpop.f32.mrb[0].mxu0
      %v1715 = vpop.f32.mrb[0].mxu0
      %v1716 = vadd.f32 %v576, %v1715
      %v1717 = vpop.f32.mrb[0].mxu0
      %1718 = vmatprep.mubr.bf16.mxu0 0
      %1719 = vmatmul.mubr.bf16.gmra.mrb[0].mxu0 %v1258
      %v1720 = vpop.f32.mrb[0].mxu0
      %v1721 = vadd.f32 %v576, %v1720
      %v1722 = vpop.f32.mrb[0].mxu0
      %v1723 = vpop.f32.mrb[0].mxu0
      %v1724 = vadd.f32 %v576, %v1723
      %v1725 = vpop.f32.mrb[0].mxu0
      %1726 = vmatprep.mubr.bf16.mxu0 0
      %1727 = vmatmul.mubr.bf16.gmra.mrb[0].mxu0 %v1261
      %v1728 = vpop.f32.mrb[0].mxu0
      %v1729 = vadd.f32 %v576, %v1728
      %v1730 = vpop.f32.mrb[0].mxu0
      %v1731 = vpop.f32.mrb[0].mxu0
      %v1732 = vadd.f32 %v576, %v1731
      %v1733 = vpop.f32.mrb[0].mxu0
      %1734 = vmatprep.mubr.bf16.mxu0 0
      %1735 = vmatmul.mubr.bf16.gmra.mrb[0].mxu0 %v1264
      %v1736 = vpop.f32.mrb[0].mxu0
      %v1737 = vadd.f32 %v576, %v1736
      %v1738 = vpop.f32.mrb[0].mxu0
      %v1739 = vpop.f32.mrb[0].mxu0
      %v1740 = vadd.f32 %v576, %v1739
      %v1741 = vpop.f32.mrb[0].mxu0
      %1742 = vmatprep.mubr.bf16.mxu0 0
      %1743 = vmatmul.mubr.bf16.gmra.mrb[0].mxu0 %v1267
      %v1744 = vpop.f32.mrb[0].mxu0
      %v1745 = vadd.f32 %v576, %v1744
      %v1746 = vpop.f32.mrb[0].mxu0
      %v1747 = vpop.f32.mrb[0].mxu0
      %v1748 = vadd.f32 %v576, %v1747
      %v1749 = vpop.f32.mrb[0].mxu0
      %1750 = vmatprep.mubr.bf16.mxu0 0
      %1751 = vmatmul.mubr.bf16.gmra.mrb[0].mxu0 %v1270
      %v1752 = vpop.f32.mrb[0].mxu0
      %v1753 = vadd.f32 %v576, %v1752
      %v1754 = vpop.f32.mrb[0].mxu0
      %v1755 = vpop.f32.mrb[0].mxu0
      %v1756 = vadd.f32 %v576, %v1755
      %v1757 = vpop.f32.mrb[0].mxu0
      %1758 = vmatprep.mubr.bf16.mxu0 0
      %1759 = vmatmul.mubr.bf16.gmra.mrb[0].mxu0 %v1273
      %v1760 = vpop.f32.mrb[0].mxu0
      %v1761 = vadd.f32 %v576, %v1760
      %v1762 = vpop.f32.mrb[0].mxu0
      %v1763 = vpop.f32.mrb[0].mxu0
      %v1764 = vadd.f32 %v576, %v1763
      %v1765 = vpop.f32.mrb[0].mxu0
      %1766 = vmatprep.mubr.bf16.mxu0 0
      %1767 = vmatmul.mubr.bf16.gmra.mrb[0].mxu0 %v1276
      %v1768 = vpop.f32.mrb[0].mxu0
      %v1769 = vadd.f32 %v576, %v1768
      %v1770 = vpop.f32.mrb[0].mxu0
      %v1771 = vpop.f32.mrb[0].mxu0
      %v1772 = vadd.f32 %v576, %v1771
      %v1773 = vpop.f32.mrb[0].mxu0
      %1774 = vmatprep.mubr.bf16.mxu0 0
      %1775 = vmatmul.mubr.bf16.gmra.mrb[0].mxu0 %v1279
      %v1776 = vpop.f32.mrb[0].mxu0
      %v1777 = vadd.f32 %v576, %v1776
      %v1778 = vpop.f32.mrb[0].mxu0
      %v1779 = vpop.f32.mrb[0].mxu0
      %v1780 = vadd.f32 %v576, %v1779
      %v1781 = vpop.f32.mrb[0].mxu0
      %1782 = vmatprep.mubr.bf16.mxu0 0
      %1783 = vmatmul.mubr.bf16.gmra.mrb[0].mxu0 %v1282
      %v1784 = vpop.f32.mrb[0].mxu0
      %v1785 = vadd.f32 %v576, %v1784
      %v1786 = vpop.f32.mrb[0].mxu0
      %v1787 = vpop.f32.mrb[0].mxu0
      %v1788 = vadd.f32 %v576, %v1787
      %v1789 = vpop.f32.mrb[0].mxu0
      %1790 = vmatprep.mubr.bf16.mxu0 0
      %1791 = vmatmul.mubr.bf16.gmra.mrb[0].mxu0 %v1285
      %v1792 = vpop.f32.mrb[0].mxu0
      %v1793 = vadd.f32 %v576, %v1792
      %v1794 = vpop.f32.mrb[0].mxu0
      %v1795 = vpop.f32.mrb[0].mxu0
      %v1796 = vadd.f32 %v576, %v1795
      %v1797 = vpop.f32.mrb[0].mxu0
      %1798 = vmatprep.mubr.bf16.mxu0 0
      %1799 = vmatmul.mubr.bf16.gmra.mrb[0].mxu0 %v1288
      %v1800 = vpop.f32.mrb[0].mxu0
      %v1801 = vadd.f32 %v576, %v1800
      %v1802 = vpop.f32.mrb[0].mxu0
      %v1803 = vpop.f32.mrb[0].mxu0
      %v1804 = vadd.f32 %v576, %v1803
      %v1805 = vpop.f32.mrb[0].mxu0
      %1806 = vmatprep.mubr.bf16.mxu0 0
      %1807 = vmatmul.mubr.bf16.gmra.mrb[0].mxu0 %v1291
      %v1808 = vpop.f32.mrb[0].mxu0
      %v1809 = vadd.f32 %v576, %v1808
      %v1810 = vpop.f32.mrb[0].mxu0
      %v1811 = vpop.f32.mrb[0].mxu0
      %v1812 = vadd.f32 %v576, %v1811
      %v1813 = vpop.f32.mrb[0].mxu0
      %1814 = vmatprep.mubr.bf16.mxu0 0
      %1815 = vmatmul.mubr.bf16.gmra.mrb[0].mxu0 %v1294
      %v1816 = vpop.f32.mrb[0].mxu0
      %v1817 = vadd.f32 %v576, %v1816
      %v1818 = vpop.f32.mrb[0].mxu0
      %v1819 = vpop.f32.mrb[0].mxu0
      %v1820 = vadd.f32 %v576, %v1819
      %v1821 = vpop.f32.mrb[0].mxu0
      %1822 = vmatprep.mubr.bf16.mxu0 0
      %1823 = vmatmul.mubr.bf16.gmra.mrb[0].mxu0 %v1297
      %v1824 = vpop.f32.mrb[0].mxu0
      %v1825 = vadd.f32 %v576, %v1824
      %v1826 = vpop.f32.mrb[0].mxu0
      %v1827 = vpop.f32.mrb[0].mxu0
      %v1828 = vadd.f32 %v576, %v1827
      %v1829 = vpop.f32.mrb[0].mxu0
      %1830 = vmatprep.mubr.bf16.mxu0 0
      %1831 = vmatmul.mubr.bf16.gmra.mrb[0].mxu0 %v1300
      %v1832 = vpop.f32.mrb[0].mxu0
      %v1833 = vadd.f32 %v576, %v1832
      %v1834 = vpop.f32.mrb[0].mxu0
      %v1835 = vpop.f32.mrb[0].mxu0
      %v1836 = vadd.f32 %v576, %v1835
      %v1837 = vpop.f32.mrb[0].mxu0
      %1838 = vmatprep.mubr.bf16.mxu0 0
      %1839 = vmatmul.mubr.bf16.gmra.mrb[0].mxu0 %v1303
      %v1840 = vpop.f32.mrb[0].mxu0
      %v1841 = vadd.f32 %v576, %v1840
      %v1842 = vpop.f32.mrb[0].mxu0
      %v1843 = vpop.f32.mrb[0].mxu0
      %v1844 = vadd.f32 %v576, %v1843
      %v1845 = vpop.f32.mrb[0].mxu0
      %1846 = vmatprep.mubr.bf16.mxu0 0
      %1847 = vmatmul.mubr.bf16.gmra.mrb[0].mxu0 %v1306
      %v1848 = vpop.f32.mrb[0].mxu0
      %v1849 = vadd.f32 %v576, %v1848
      %v1850 = vpop.f32.mrb[0].mxu0
      %v1851 = vpop.f32.mrb[0].mxu0
      %v1852 = vadd.f32 %v576, %v1851
      %v1853 = vpop.f32.mrb[0].mxu0
      %1854 = vmatprep.mubr.bf16.mxu0 0
      %1855 = vmatmul.mubr.bf16.gmra.mrb[0].mxu0 %v1309
      %v1856 = vpop.f32.mrb[0].mxu0
      %v1857 = vadd.f32 %v576, %v1856
      %v1858 = vpop.f32.mrb[0].mxu0
      %v1859 = vpop.f32.mrb[0].mxu0
      %v1860 = vadd.f32 %v576, %v1859
      %v1861 = vpop.f32.mrb[0].mxu0
      %1862 = vmatprep.mubr.bf16.mxu0 0
      %1863 = vmatmul.mubr.bf16.gmra.mrb[0].mxu0 %v1312
      %v1864 = vpop.f32.mrb[0].mxu0
      %v1865 = vadd.f32 %v576, %v1864
      %v1866 = vpop.f32.mrb[0].mxu0
      %v1867 = vpop.f32.mrb[0].mxu0
      %v1868 = vadd.f32 %v576, %v1867
      %v1869 = vpop.f32.mrb[0].mxu0
      %1870 = vmatprep.mubr.bf16.mxu0 0
      %1871 = vmatmul.mubr.bf16.gmra.mrb[0].mxu0 %v1315
      %v1872 = vpop.f32.mrb[0].mxu0
      %v1873 = vadd.f32 %v576, %v1872
      %v1874 = vpop.f32.mrb[0].mxu0
      %v1875 = vpop.f32.mrb[0].mxu0
      %v1876 = vadd.f32 %v576, %v1875
      %v1877 = vpop.f32.mrb[0].mxu0
      %1878 = vmatprep.mubr.bf16.mxu0 0
      %1879 = vmatmul.mubr.bf16.gmra.mrb[0].mxu0 %v1318
      %v1880 = vpop.f32.mrb[0].mxu0
      %v1881 = vadd.f32 %v576, %v1880
      %v1882 = vpop.f32.mrb[0].mxu0
      %v1883 = vpop.f32.mrb[0].mxu0
      %v1884 = vadd.f32 %v576, %v1883
      %v1885 = vpop.f32.mrb[0].mxu0
      %1886 = vmatprep.mubr.bf16.mxu0 0
      %1887 = vmatmul.mubr.bf16.gmra.mrb[0].mxu0 %v1321
      %v1888 = vpop.f32.mrb[0].mxu0
      %v1889 = vadd.f32 %v576, %v1888
      %v1890 = vpop.f32.mrb[0].mxu0
      %v1891 = vpop.f32.mrb[0].mxu0
      %v1892 = vadd.f32 %v576, %v1891
      %v1893 = vpop.f32.mrb[0].mxu0
      %1894 = vmatprep.mubr.bf16.mxu0 0
      %1895 = vmatmul.mubr.bf16.gmra.mrb[0].mxu0 %v1324
      %v1896 = vpop.f32.mrb[0].mxu0
      %v1897 = vadd.f32 %v576, %v1896
      %v1898 = vpop.f32.mrb[0].mxu0
      %v1899 = vpop.f32.mrb[0].mxu0
      %v1900 = vadd.f32 %v576, %v1899
      %v1901 = vpop.f32.mrb[0].mxu0
      %1902 = vmatprep.mubr.bf16.mxu0 0
      %1903 = vmatmul.mubr.bf16.gmra.mrb[0].mxu0 %v1327
      %v1904 = vpop.f32.mrb[0].mxu0
      %v1905 = vadd.f32 %v576, %v1904
      %v1906 = vpop.f32.mrb[0].mxu0
      %v1907 = vpop.f32.mrb[0].mxu0
      %v1908 = vadd.f32 %v576, %v1907
      %v1909 = vpop.f32.mrb[0].mxu0
      %1910 = vmatprep.mubr.bf16.mxu0 0
      %1911 = vmatmul.mubr.bf16.gmra.mrb[0].mxu0 %v1330
      %v1912 = vpop.f32.mrb[0].mxu0
      %v1913 = vadd.f32 %v576, %v1912
      %v1914 = vpop.f32.mrb[0].mxu0
      %v1915 = vpop.f32.mrb[0].mxu0
      %v1916 = vadd.f32 %v576, %v1915
      %v1917 = vpop.f32.mrb[0].mxu0
      %1918 = vmatprep.mubr.bf16.mxu0 0
      %1919 = vmatmul.mubr.bf16.gmra.mrb[0].mxu0 %v1333
      %v1920 = vpop.f32.mrb[0].mxu0
      %v1921 = vadd.f32 %v576, %v1920
      %v1922 = vpop.f32.mrb[0].mxu0
      %v1923 = vpop.f32.mrb[0].mxu0
      %v1924 = vadd.f32 %v576, %v1923
      %v1925 = vpop.f32.mrb[0].mxu0
      %1926 = vmatprep.mubr.bf16.mxu0 0
      %1927 = vmatmul.mubr.bf16.gmra.mrb[0].mxu0 %v1336
      %v1928 = vpop.f32.mrb[0].mxu0
      %v1929 = vadd.f32 %v576, %v1928
      %v1930 = vpop.f32.mrb[0].mxu0
      %v1931 = vpop.f32.mrb[0].mxu0
      %v1932 = vadd.f32 %v576, %v1931
      %v1933 = vpop.f32.mrb[0].mxu0
      %1934 = vmatprep.mubr.bf16.mxu0 0
      %1935 = vmatmul.mubr.bf16.gmra.mrb[0].mxu0 %v1339
      %v1936 = vpop.f32.mrb[0].mxu0
      %v1937 = vadd.f32 %v576, %v1936
      %v1938 = vpop.f32.mrb[0].mxu0
      %v1939 = vpop.f32.mrb[0].mxu0
      %v1940 = vadd.f32 %v576, %v1939
      %v1941 = vpop.f32.mrb[0].mxu0
      %1942 = vmatprep.mubr.bf16.mxu0 0
      %1943 = vmatmul.mubr.bf16.gmra.mrb[0].mxu0 %v1342
      %v1944 = vpop.f32.mrb[0].mxu0
      %v1945 = vadd.f32 %v576, %v1944
      %v1946 = vpop.f32.mrb[0].mxu0
      %v1947 = vpop.f32.mrb[0].mxu0
      %v1948 = vadd.f32 %v576, %v1947
      %v1949 = vpop.f32.mrb[0].mxu0
      %1950 = vmatprep.mubr.bf16.mxu0 0
      %1951 = vmatmul.mubr.bf16.gmra.mrb[0].mxu0 %v1345
      %v1952 = vpop.f32.mrb[0].mxu0
      %v1953 = vadd.f32 %v576, %v1952
      %v1954 = vpop.f32.mrb[0].mxu0
      %v1955 = vpop.f32.mrb[0].mxu0
      %v1956 = vadd.f32 %v576, %v1955
      %v1957 = vpop.f32.mrb[0].mxu0
      %1958 = vmatprep.mubr.bf16.mxu0 0
      %1959 = vmatmul.mubr.bf16.gmra.mrb[0].mxu0 %v1348
      %v1960 = vpop.f32.mrb[0].mxu0
      %v1961 = vadd.f32 %v576, %v1960
      %v1962 = vpop.f32.mrb[0].mxu0
      %v1963 = vpop.f32.mrb[0].mxu0
      %v1964 = vadd.f32 %v576, %v1963
      %v1965 = vpop.f32.mrb[0].mxu0
      %1966 = vmatprep.mubr.bf16.mxu0 0
      %1967 = vmatmul.mubr.bf16.gmra.mrb[0].mxu0 %v1351
      %v1968 = vpop.f32.mrb[0].mxu0
      %v1969 = vadd.f32 %v576, %v1968
      %v1970 = vpop.f32.mrb[0].mxu0
      %v1971 = vpop.f32.mrb[0].mxu0
      %v1972 = vadd.f32 %v576, %v1971
      %v1973 = vpop.f32.mrb[0].mxu0
      %1974 = vmatprep.mubr.bf16.mxu0 0
      %1975 = vmatmul.mubr.bf16.gmra.mrb[0].mxu0 %v1354
      %v1976 = vpop.f32.mrb[0].mxu0
      %v1977 = vadd.f32 %v576, %v1976
      %v1978 = vpop.f32.mrb[0].mxu0
      %v1979 = vpop.f32.mrb[0].mxu0
      %v1980 = vadd.f32 %v576, %v1979
      %v1981 = vpop.f32.mrb[0].mxu0
      %1982 = vmatprep.mubr.bf16.mxu0 0
      %1983 = vmatmul.mubr.bf16.gmra.mrb[0].mxu0 %v1357
      %v1984 = vpop.f32.mrb[0].mxu0
      %v1985 = vadd.f32 %v576, %v1984
      %v1986 = vpop.f32.mrb[0].mxu0
      %v1987 = vpop.f32.mrb[0].mxu0
      %v1988 = vadd.f32 %v576, %v1987
      %v1989 = vpop.f32.mrb[0].mxu0
      %1990 = vmatprep.mubr.bf16.mxu0 0
      %1991 = vmatmul.mubr.bf16.gmra.mrb[0].mxu0 %v1360
      %v1992 = vpop.f32.mrb[0].mxu0
      %v1993 = vadd.f32 %v576, %v1992
      %v1994 = vpop.f32.mrb[0].mxu0
      %v1995 = vpop.f32.mrb[0].mxu0
      %v1996 = vadd.f32 %v576, %v1995
      %v1997 = vpop.f32.mrb[0].mxu0
      %1998 = vmatprep.mubr.bf16.mxu0 0
      %1999 = vmatmul.mubr.bf16.gmra.mrb[0].mxu0 %v1363
      %v2000 = vpop.f32.mrb[0].mxu0
      %v2001 = vadd.f32 %v576, %v2000
      %v2002 = vpop.f32.mrb[0].mxu0
      %v2003 = vpop.f32.mrb[0].mxu0
      %v2004 = vadd.f32 %v576, %v2003
      %v2005 = vpop.f32.mrb[0].mxu0
      %2006 = vmatprep.mubr.bf16.mxu0 0
      %2007 = vmatmul.mubr.bf16.gmra.mrb[0].mxu0 %v1366
      %v2008 = vpop.f32.mrb[0].mxu0
      %v2009 = vadd.f32 %v576, %v2008
      %v2010 = vpop.f32.mrb[0].mxu0
      %v2011 = vpop.f32.mrb[0].mxu0
      %v2012 = vadd.f32 %v576, %v2011
      %v2013 = vpop.f32.mrb[0].mxu0
      %2014 = vmatprep.mubr.bf16.mxu0 0
      %2015 = vmatmul.mubr.bf16.gmra.mrb[0].mxu0 %v1369
      %v2016 = vpop.f32.mrb[0].mxu0
      %v2017 = vadd.f32 %v576, %v2016
      %v2018 = vpop.f32.mrb[0].mxu0
      %v2019 = vpop.f32.mrb[0].mxu0
      %v2020 = vadd.f32 %v576, %v2019
      %v2021 = vpop.f32.mrb[0].mxu0
      %2022 = vmatprep.mubr.bf16.mxu0 0
      %2023 = vmatmul.mubr.bf16.gmra.mrb[0].mxu0 %v1372
      %v2024 = vpop.f32.mrb[0].mxu0
      %v2025 = vadd.f32 %v576, %v2024
      %v2026 = vpop.f32.mrb[0].mxu0
      %v2027 = vpop.f32.mrb[0].mxu0
      %v2028 = vadd.f32 %v576, %v2027
      %v2029 = vpop.f32.mrb[0].mxu0
      %2030 = vmatprep.mubr.bf16.mxu0 0
      %2031 = vmatmul.mubr.bf16.gmra.mrb[0].mxu0 %v1375
      %v2032 = vpop.f32.mrb[0].mxu0
      %v2033 = vadd.f32 %v576, %v2032
      %v2034 = vpop.f32.mrb[0].mxu0
      %v2035 = vpop.f32.mrb[0].mxu0
      %v2036 = vadd.f32 %v576, %v2035
      %v2037 = vpop.f32.mrb[0].mxu0
      %2038 = vmatprep.mubr.bf16.mxu0 0
      %2039 = vmatmul.mubr.bf16.gmra.mrb[0].mxu0 %v1378
      %v2040 = vpop.f32.mrb[0].mxu0
      %v2041 = vadd.f32 %v576, %v2040
      %v2042 = vpop.f32.mrb[0].mxu0
      %v2043 = vpop.f32.mrb[0].mxu0
      %v2044 = vadd.f32 %v576, %v2043
      %v2045 = vpop.f32.mrb[0].mxu0
      %2046 = vmatprep.mubr.bf16.mxu0 0
      %2047 = vmatmul.mubr.bf16.gmra.mrb[0].mxu0 %v1381
      %v2048 = vpop.f32.mrb[0].mxu0
      %v2049 = vadd.f32 %v576, %v2048
      %v2050 = vpop.f32.mrb[0].mxu0
      %v2051 = vpop.f32.mrb[0].mxu0
      %v2052 = vadd.f32 %v576, %v2051
      %v2053 = vpop.f32.mrb[0].mxu0
      %2054 = vmatprep.mubr.bf16.mxu0 0
      %2055 = vmatmul.mubr.bf16.gmra.mrb[0].mxu0 %v1384
      %v2056 = vpop.f32.mrb[0].mxu0
      %v2057 = vadd.f32 %v576, %v2056
      %v2058 = vpop.f32.mrb[0].mxu0
      %v2059 = vpop.f32.mrb[0].mxu0
      %v2060 = vadd.f32 %v576, %v2059
      %v2061 = vpop.f32.mrb[0].mxu0
      %2062 = vmatprep.mubr.bf16.mxu0 0
      %2063 = vmatmul.mubr.bf16.gmra.mrb[0].mxu0 %v1387
      %v2064 = vpop.f32.mrb[0].mxu0
      %v2065 = vadd.f32 %v576, %v2064
      %v2066 = vpop.f32.mrb[0].mxu0
      %v2067 = vpop.f32.mrb[0].mxu0
      %v2068 = vadd.f32 %v576, %v2067
      %v2069 = vpop.f32.mrb[0].mxu0
      %2070 = vmatprep.mubr.bf16.mxu0 0
      %2071 = vmatmul.mubr.bf16.gmra.mrb[0].mxu0 %v1390
      %v2072 = vpop.f32.mrb[0].mxu0
      %v2073 = vadd.f32 %v576, %v2072
      %v2074 = vpop.f32.mrb[0].mxu0
      %v2075 = vpop.f32.mrb[0].mxu0
      %v2076 = vadd.f32 %v576, %v2075
      %v2077 = vpop.f32.mrb[0].mxu0
      %2078 = vmatprep.mubr.bf16.mxu0 0
      %2079 = vmatmul.mubr.bf16.gmra.mrb[0].mxu0 %v1393
      %v2080 = vpop.f32.mrb[0].mxu0
      %v2081 = vadd.f32 %v576, %v2080
      %v2082 = vpop.f32.mrb[0].mxu0
      %v2083 = vpop.f32.mrb[0].mxu0
      %v2084 = vadd.f32 %v576, %v2083
      %v2085 = vpop.f32.mrb[0].mxu0
      %2086 = vmatprep.mubr.bf16.mxu0 0
      %2087 = vmatmul.mubr.bf16.gmra.mrb[0].mxu0 %v1396
      %v2088 = vpop.f32.mrb[0].mxu0
      %v2089 = vadd.f32 %v576, %v2088
      %v2090 = vpop.f32.mrb[0].mxu0
      %v2091 = vpop.f32.mrb[0].mxu0
      %v2092 = vadd.f32 %v576, %v2091
      %v2093 = vpop.f32.mrb[0].mxu0
      %2094 = vmatprep.mubr.bf16.mxu0 0
      %2095 = vmatmul.mubr.bf16.gmra.mrb[0].mxu0 %v1399
      %v2096 = vpop.f32.mrb[0].mxu0
      %v2097 = vadd.f32 %v576, %v2096
      %v2098 = vpop.f32.mrb[0].mxu0
      %v2099 = vpop.f32.mrb[0].mxu0
      %v2100 = vadd.f32 %v576, %v2099
      %v2101 = vpop.f32.mrb[0].mxu0
      %2102 = vmatprep.mubr.bf16.mxu0 0
      %2103 = vmatmul.mubr.bf16.gmra.mrb[0].mxu0 %v1402
      %v2104 = vpop.f32.mrb[0].mxu0
      %v2105 = vadd.f32 %v576, %v2104
      %v2106 = vpop.f32.mrb[0].mxu0
      %v2107 = vpop.f32.mrb[0].mxu0
      %v2108 = vadd.f32 %v576, %v2107
      %v2109 = vpop.f32.mrb[0].mxu0
      %2110 = vmatprep.mubr.bf16.mxu0 0
      %2111 = vmatmul.mubr.bf16.gmra.mrb[0].mxu0 %v1405
      %v2112 = vpop.f32.mrb[0].mxu0
      %v2113 = vadd.f32 %v576, %v2112
      %v2114 = vpop.f32.mrb[0].mxu0
      %v2115 = vpop.f32.mrb[0].mxu0
      %v2116 = vadd.f32 %v576, %v2115
      %v2117 = vpop.f32.mrb[0].mxu0
      %2118 = vmatprep.mubr.bf16.mxu0 0
      %2119 = vmatmul.mubr.bf16.gmra.mrb[0].mxu0 %v1408
      %v2120 = vpop.f32.mrb[0].mxu0
      %v2121 = vadd.f32 %v576, %v2120
      %v2122 = vpop.f32.mrb[0].mxu0
      %v2123 = vpop.f32.mrb[0].mxu0
      %v2124 = vadd.f32 %v576, %v2123
      %v2125 = vpop.f32.mrb[0].mxu0
      %2126 = vmatprep.mubr.bf16.mxu0 0
      %2127 = vmatmul.mubr.bf16.gmra.mrb[0].mxu0 %v1411
      %v2128 = vpop.f32.mrb[0].mxu0
      %v2129 = vadd.f32 %v576, %v2128
      %v2130 = vpop.f32.mrb[0].mxu0
      %v2131 = vpop.f32.mrb[0].mxu0
      %v2132 = vadd.f32 %v576, %v2131
      %v2133 = vpop.f32.mrb[0].mxu0
      %2134 = vmatprep.mubr.bf16.mxu0 0
      %2135 = vmatmul.mubr.bf16.gmra.mrb[0].mxu0 %v1414
      %v2136 = vpop.f32.mrb[0].mxu0
      %v2137 = vadd.f32 %v576, %v2136
      %v2138 = vpop.f32.mrb[0].mxu0
      %v2139 = vpop.f32.mrb[0].mxu0
      %v2140 = vadd.f32 %v576, %v2139
      %v2141 = vpop.f32.mrb[0].mxu0
      %2142 = vmatprep.mubr.bf16.mxu0 0
      %2143 = vmatmul.mubr.bf16.gmra.mrb[0].mxu0 %v1417
      %v2144 = vpop.f32.mrb[0].mxu0
      %v2145 = vadd.f32 %v576, %v2144
      %v2146 = vpop.f32.mrb[0].mxu0
      %v2147 = vpop.f32.mrb[0].mxu0
      %v2148 = vadd.f32 %v576, %v2147
      %v2149 = vpop.f32.mrb[0].mxu0
      %2150 = vmatprep.mubr.bf16.mxu0 0
      %2151 = vmatmul.mubr.bf16.gmra.mrb[0].mxu0 %v1420
      %v2152 = vpop.f32.mrb[0].mxu0
      %v2153 = vadd.f32 %v576, %v2152
      %v2154 = vpop.f32.mrb[0].mxu0
      %v2155 = vpop.f32.mrb[0].mxu0
      %v2156 = vadd.f32 %v576, %v2155
      %v2157 = vpop.f32.mrb[0].mxu0
      %2158 = vmatprep.mubr.bf16.mxu0 0
      %2159 = vmatmul.mubr.bf16.gmra.mrb[0].mxu0 %v1423
      %v2160 = vpop.f32.mrb[0].mxu0
      %v2161 = vadd.f32 %v576, %v2160
      %v2162 = vpop.f32.mrb[0].mxu0
      %v2163 = vpop.f32.mrb[0].mxu0
      %v2164 = vadd.f32 %v576, %v2163
      %v2165 = vpop.f32.mrb[0].mxu0
      %2166 = vmatprep.mubr.bf16.mxu0 0
      %2167 = vmatmul.mubr.bf16.gmra.mrb[0].mxu0 %v1426
      %v2168 = vpop.f32.mrb[0].mxu0
      %v2169 = vadd.f32 %v576, %v2168
      %v2170 = vpop.f32.mrb[0].mxu0
      %v2171 = vpop.f32.mrb[0].mxu0
      %v2172 = vadd.f32 %v576, %v2171
      %v2173 = vpop.f32.mrb[0].mxu0
      %2174 = vmatprep.mubr.bf16.mxu0 0
      %2175 = vmatmul.mubr.bf16.gmra.mrb[0].mxu0 %v1429
      %v2176 = vpop.f32.mrb[0].mxu0
      %v2177 = vadd.f32 %v576, %v2176
      %v2178 = vpop.f32.mrb[0].mxu0
      %v2179 = vpop.f32.mrb[0].mxu0
      %v2180 = vadd.f32 %v576, %v2179
      %v2181 = vpop.f32.mrb[0].mxu0
      %2182 = vmatprep.mubr.bf16.mxu0 0
      %2183 = vmatmul.mubr.bf16.gmra.mrb[0].mxu0 %v1432
      %v2184 = vpop.f32.mrb[0].mxu0
      %v2185 = vadd.f32 %v576, %v2184
      %v2186 = vpop.f32.mrb[0].mxu0
      %v2187 = vpop.f32.mrb[0].mxu0
      %v2188 = vadd.f32 %v576, %v2187
      %v2189 = vpop.f32.mrb[0].mxu0
      %2190 = vmatprep.mubr.bf16.mxu0 0
      %2191 = vmatmul.mubr.bf16.gmra.mrb[0].mxu0 %v1435
      %v2192 = vpop.f32.mrb[0].mxu0
      %v2193 = vadd.f32 %v576, %v2192
      %v2194 = vpop.f32.mrb[0].mxu0
      %v2195 = vpop.f32.mrb[0].mxu0
      %v2196 = vadd.f32 %v576, %v2195
      %v2197 = vpop.f32.mrb[0].mxu0
      %2198 = vmatprep.mubr.bf16.mxu0 0
      %2199 = vmatmul.mubr.bf16.gmra.mrb[0].mxu0 %v1438
      %v2200 = vpop.f32.mrb[0].mxu0
      %v2201 = vadd.f32 %v576, %v2200
      %v2202 = vpop.f32.mrb[0].mxu0
      %v2203 = vpop.f32.mrb[0].mxu0
      %v2204 = vadd.f32 %v576, %v2203
      %v2205 = vpop.f32.mrb[0].mxu0
      %2206 = vmatprep.mubr.bf16.mxu0 0
      %2207 = vmatmul.mubr.bf16.gmra.mrb[0].mxu0 %v1441
      %v2208 = vpop.f32.mrb[0].mxu0
      %v2209 = vadd.f32 %v576, %v2208
      %v2210 = vpop.f32.mrb[0].mxu0
      %v2211 = vpop.f32.mrb[0].mxu0
      %v2212 = vadd.f32 %v576, %v2211
      %v2213 = vpop.f32.mrb[0].mxu0
      %2214 = vmatprep.mubr.bf16.mxu0 0
      %2215 = vmatmul.mubr.bf16.gmra.mrb[0].mxu0 %v1444
      %v2216 = vpop.f32.mrb[0].mxu0
      %v2217 = vadd.f32 %v576, %v2216
      %v2218 = vpop.f32.mrb[0].mxu0
      %v2219 = vpop.f32.mrb[0].mxu0
      %v2220 = vadd.f32 %v576, %v2219
      %v2221 = vpop.f32.mrb[0].mxu0
      %2222 = vmatprep.mubr.bf16.mxu0 0
      %2223 = vmatmul.mubr.bf16.gmra.mrb[0].mxu0 %v1447
      %v2224 = vpop.f32.mrb[0].mxu0
      %v2225 = vadd.f32 %v576, %v2224
      %v2226 = vpop.f32.mrb[0].mxu0
      %v2227 = vpop.f32.mrb[0].mxu0
      %v2228 = vadd.f32 %v576, %v2227
      %v2229 = vpop.f32.mrb[0].mxu0
      %2230 = vmatprep.mubr.bf16.mxu0 0
      %2231 = vmatmul.mubr.bf16.gmra.mrb[0].mxu0 %v1450
      %v2232 = vpop.f32.mrb[0].mxu0
      %v2233 = vadd.f32 %v576, %v2232
      %v2234 = vpop.f32.mrb[0].mxu0
      %v2235 = vpop.f32.mrb[0].mxu0
      %v2236 = vadd.f32 %v576, %v2235
      %v2237 = vpop.f32.mrb[0].mxu0
      %2238 = vmatprep.mubr.bf16.mxu0 0
      %2239 = vmatmul.mubr.bf16.gmra.mrb[0].mxu0 %v1453
      %v2240 = vpop.f32.mrb[0].mxu0
      %v2241 = vadd.f32 %v576, %v2240
      %v2242 = vpop.f32.mrb[0].mxu0
      %v2243 = vpop.f32.mrb[0].mxu0
      %v2244 = vadd.f32 %v576, %v2243
      %v2245 = vpop.f32.mrb[0].mxu0
      %2246 = vmatprep.mubr.bf16.mxu0 0
      %2247 = vmatmul.mubr.bf16.gmra.mrb[0].mxu0 %v1456
      %v2248 = vpop.f32.mrb[0].mxu0
      %v2249 = vadd.f32 %v576, %v2248
      %v2250 = vpop.f32.mrb[0].mxu0
      %v2251 = vpop.f32.mrb[0].mxu0
      %v2252 = vadd.f32 %v576, %v2251
      %v2253 = vpop.f32.mrb[0].mxu0
      %2254 = vmatprep.mubr.bf16.mxu0 0
      %2255 = vmatmul.mubr.bf16.gmra.mrb[0].mxu0 %v1459
      %v2256 = vpop.f32.mrb[0].mxu0
      %v2257 = vadd.f32 %v576, %v2256
      %v2258 = vpop.f32.mrb[0].mxu0
      %v2259 = vpop.f32.mrb[0].mxu0
      %v2260 = vadd.f32 %v576, %v2259
      %v2261 = vpop.f32.mrb[0].mxu0
      %2262 = vmatprep.mubr.bf16.mxu0 0
      %2263 = vmatmul.mubr.bf16.gmra.mrb[0].mxu0 %v1462
      %v2264 = vpop.f32.mrb[0].mxu0
      %v2265 = vadd.f32 %v576, %v2264
      %v2266 = vpop.f32.mrb[0].mxu0
      %v2267 = vpop.f32.mrb[0].mxu0
      %v2268 = vadd.f32 %v576, %v2267
      %v2269 = vpop.f32.mrb[0].mxu0
      %2270 = vmatprep.mubr.bf16.mxu0 0
      %2271 = vmatmul.mubr.bf16.gmra.mrb[0].mxu0 %v1465
      %v2272 = vpop.f32.mrb[0].mxu0
      %v2273 = vadd.f32 %v576, %v2272
      %v2274 = vpop.f32.mrb[0].mxu0
      %v2275 = vpop.f32.mrb[0].mxu0
      %v2276 = vadd.f32 %v576, %v2275
      %v2277 = vpop.f32.mrb[0].mxu0
      %2278 = vmatprep.mubr.bf16.mxu0 0
      %2279 = vmatmul.mubr.bf16.gmra.mrb[0].mxu0 %v1468
      %v2280 = vpop.f32.mrb[0].mxu0
      %v2281 = vadd.f32 %v576, %v2280
      %v2282 = vpop.f32.mrb[0].mxu0
      %v2283 = vpop.f32.mrb[0].mxu0
      %v2284 = vadd.f32 %v576, %v2283
      %v2285 = vpop.f32.mrb[0].mxu0
      %2286 = vmatprep.mubr.bf16.mxu0 0
      %2287 = vmatmul.mubr.bf16.gmra.mrb[0].mxu0 %v1471
      %v2288 = vpop.f32.mrb[0].mxu0
      %v2289 = vadd.f32 %v576, %v2288
      %v2290 = vpop.f32.mrb[0].mxu0
      %v2291 = vpop.f32.mrb[0].mxu0
      %v2292 = vadd.f32 %v576, %v2291
      %v2293 = vpop.f32.mrb[0].mxu0
      %2294 = vmatprep.mubr.bf16.mxu0 0
      %2295 = vmatmul.mubr.bf16.gmra.mrb[0].mxu0 %v1474
      %v2296 = vpop.f32.mrb[0].mxu0
      %v2297 = vadd.f32 %v576, %v2296
      %v2298 = vpop.f32.mrb[0].mxu0
      %v2299 = vpop.f32.mrb[0].mxu0
      %v2300 = vadd.f32 %v576, %v2299
      %v2301 = vpop.f32.mrb[0].mxu0
      %2302 = vmatprep.mubr.bf16.mxu0 0
      %2303 = vmatmul.mubr.bf16.gmra.mrb[0].mxu0 %v1477
      %v2304 = vpop.f32.mrb[0].mxu0
      %v2305 = vadd.f32 %v576, %v2304
      %v2306 = vpop.f32.mrb[0].mxu0
      %v2307 = vpop.f32.mrb[0].mxu0
      %v2308 = vadd.f32 %v576, %v2307
      %v2309 = vpop.f32.mrb[0].mxu0
      %2310 = vmatprep.mubr.bf16.mxu0 0
      %2311 = vmatmul.mubr.bf16.gmra.mrb[0].mxu0 %v1480
      %v2312 = vpop.f32.mrb[0].mxu0
      %v2313 = vadd.f32 %v576, %v2312
      %v2314 = vpop.f32.mrb[0].mxu0
      %v2315 = vpop.f32.mrb[0].mxu0
      %v2316 = vadd.f32 %v576, %v2315
      %v2317 = vpop.f32.mrb[0].mxu0
      %2318 = vmatprep.mubr.bf16.mxu0 0
      %2319 = vmatmul.mubr.bf16.gmra.mrb[0].mxu0 %v1483
      %v2320 = vpop.f32.mrb[0].mxu0
      %v2321 = vadd.f32 %v576, %v2320
      %v2322 = vpop.f32.mrb[0].mxu0
      %v2323 = vpop.f32.mrb[0].mxu0
      %v2324 = vadd.f32 %v576, %v2323
      %v2325 = vpop.f32.mrb[0].mxu0
      %2326 = vmatprep.mubr.bf16.mxu0 0
      %2327 = vmatmul.mubr.bf16.gmra.mrb[0].mxu0 %v1486
      %v2328 = vpop.f32.mrb[0].mxu0
      %v2329 = vadd.f32 %v576, %v2328
      %v2330 = vpop.f32.mrb[0].mxu0
      %v2331 = vpop.f32.mrb[0].mxu0
      %v2332 = vadd.f32 %v576, %v2331
      %v2333 = vpop.f32.mrb[0].mxu0
      %2334 = vmatprep.mubr.bf16.mxu0 0
      %2335 = vmatmul.mubr.bf16.gmra.mrb[0].mxu0 %v1489
      %v2336 = vpop.f32.mrb[0].mxu0
      %v2337 = vadd.f32 %v576, %v2336
      %v2338 = vpop.f32.mrb[0].mxu0
      %v2339 = vpop.f32.mrb[0].mxu0
      %v2340 = vadd.f32 %v576, %v2339
      %v2341 = vpop.f32.mrb[0].mxu0
      %2342 = vmatprep.mubr.bf16.mxu0 0
      %2343 = vmatmul.mubr.bf16.gmra.mrb[0].mxu0 %v1492
      %v2344 = vpop.f32.mrb[0].mxu0
      %v2345 = vadd.f32 %v576, %v2344
      %v2346 = vpop.f32.mrb[0].mxu0
      %v2347 = vpop.f32.mrb[0].mxu0
      %v2348 = vadd.f32 %v576, %v2347
      %v2349 = vpop.f32.mrb[0].mxu0
      %2350 = vmatprep.mubr.bf16.mxu0 0
      %2351 = vmatmul.mubr.bf16.gmra.mrb[0].mxu0 %v1495
      %v2352 = vpop.f32.mrb[0].mxu0
      %v2353 = vadd.f32 %v576, %v2352
      %v2354 = vpop.f32.mrb[0].mxu0
      %v2355 = vpop.f32.mrb[0].mxu0
      %v2356 = vadd.f32 %v576, %v2355
      %v2357 = vpop.f32.mrb[0].mxu0
      %2358 = vmatprep.mubr.bf16.mxu0 0
      %2359 = vmatmul.mubr.bf16.gmra.mrb[0].mxu0 %v1498
      %v2360 = vpop.f32.mrb[0].mxu0
      %v2361 = vadd.f32 %v576, %v2360
      %v2362 = vpop.f32.mrb[0].mxu0
      %v2363 = vpop.f32.mrb[0].mxu0
      %v2364 = vadd.f32 %v576, %v2363
      %v2365 = vpop.f32.mrb[0].mxu0
      %2366 = vmatprep.mubr.bf16.mxu0 0
      %2367 = vmatmul.mubr.bf16.gmra.mrb[0].mxu0 %v1501
      %v2368 = vpop.f32.mrb[0].mxu0
      %v2369 = vadd.f32 %v576, %v2368
      %v2370 = vpop.f32.mrb[0].mxu0
      %v2371 = vpop.f32.mrb[0].mxu0
      %v2372 = vadd.f32 %v576, %v2371
      %v2373 = vpop.f32.mrb[0].mxu0
      %2374 = vmatprep.mubr.bf16.mxu0 0
      %2375 = vmatmul.mubr.bf16.gmra.mrb[0].mxu0 %v1504
      %v2376 = vpop.f32.mrb[0].mxu0
      %v2377 = vadd.f32 %v576, %v2376
      %v2378 = vpop.f32.mrb[0].mxu0
      %v2379 = vpop.f32.mrb[0].mxu0
      %v2380 = vadd.f32 %v576, %v2379
      %v2381 = vpop.f32.mrb[0].mxu0
      %2382 = vmatprep.mubr.bf16.mxu0 0
      %2383 = vmatmul.mubr.bf16.gmra.mrb[0].mxu0 %v1507
      %v2384 = vpop.f32.mrb[0].mxu0
      %v2385 = vadd.f32 %v576, %v2384
      %v2386 = vpop.f32.mrb[0].mxu0
      %v2387 = vpop.f32.mrb[0].mxu0
      %v2388 = vadd.f32 %v576, %v2387
      %v2389 = vpop.f32.mrb[0].mxu0
      %2390 = vmatprep.mubr.bf16.mxu0 0
      %2391 = vmatmul.mubr.bf16.gmra.mrb[0].mxu0 %v1510
      %v2392 = vpop.f32.mrb[0].mxu0
      %v2393 = vadd.f32 %v576, %v2392
      %v2394 = vpop.f32.mrb[0].mxu0
      %v2395 = vpop.f32.mrb[0].mxu0
      %v2396 = vadd.f32 %v576, %v2395
      %v2397 = vpop.f32.mrb[0].mxu0
      %2398 = vmatprep.mubr.bf16.mxu0 0
      %2399 = vmatmul.mubr.bf16.gmra.mrb[0].mxu0 %v1513
      %v2400 = vpop.f32.mrb[0].mxu0
      %v2401 = vadd.f32 %v576, %v2400
      %v2402 = vpop.f32.mrb[0].mxu0
      %v2403 = vpop.f32.mrb[0].mxu0
      %v2404 = vadd.f32 %v576, %v2403
      %v2405 = vpop.f32.mrb[0].mxu0
      %2406 = vmatprep.mubr.bf16.mxu0 0
      %2407 = vmatmul.mubr.bf16.gmra.mrb[0].mxu0 %v1516
      %v2408 = vpop.f32.mrb[0].mxu0
      %v2409 = vadd.f32 %v576, %v2408
      %v2410 = vpop.f32.mrb[0].mxu0
      %v2411 = vpop.f32.mrb[0].mxu0
      %v2412 = vadd.f32 %v576, %v2411
      %v2413 = vpop.f32.mrb[0].mxu0
      %2414 = vmatprep.mubr.bf16.mxu0 0
      %2415 = vmatmul.mubr.bf16.gmra.mrb[0].mxu0 %v1519
      %v2416 = vpop.f32.mrb[0].mxu0
      %v2417 = vadd.f32 %v576, %v2416
      %v2418 = vpop.f32.mrb[0].mxu0
      %v2419 = vpop.f32.mrb[0].mxu0
      %v2420 = vadd.f32 %v576, %v2419
      %v2421 = vpop.f32.mrb[0].mxu0
      %2422 = vmatprep.mubr.bf16.mxu0 0
      %2423 = vmatmul.mubr.bf16.gmra.mrb[0].mxu0 %v1522
      %v2424 = vpop.f32.mrb[0].mxu0
      %v2425 = vadd.f32 %v576, %v2424
      %v2426 = vpop.f32.mrb[0].mxu0
      %v2427 = vpop.f32.mrb[0].mxu0
      %v2428 = vadd.f32 %v576, %v2427
      %v2429 = vpop.f32.mrb[0].mxu0
      %2430 = vmatprep.mubr.bf16.mxu0 0
      %2431 = vmatmul.mubr.bf16.gmra.mrb[0].mxu0 %v1525
      %v2432 = vpop.f32.mrb[0].mxu0
      %v2433 = vadd.f32 %v576, %v2432
      %v2434 = vpop.f32.mrb[0].mxu0
      %v2435 = vpop.f32.mrb[0].mxu0
      %v2436 = vadd.f32 %v576, %v2435
      %v2437 = vpop.f32.mrb[0].mxu0
      %2438 = vmatprep.mubr.bf16.mxu0 0
      %2439 = vmatmul.mubr.bf16.gmra.mrb[0].mxu0 %v1528
      %v2440 = vpop.f32.mrb[0].mxu0
      %v2441 = vadd.f32 %v576, %v2440
      %v2442 = vpop.f32.mrb[0].mxu0
      %v2443 = vpop.f32.mrb[0].mxu0
      %v2444 = vadd.f32 %v576, %v2443
      %v2445 = vpop.f32.mrb[0].mxu0
      %2446 = vmatprep.mubr.bf16.mxu0 0
      %2447 = vmatmul.mubr.bf16.gmra.mrb[0].mxu0 %v1531
      %v2448 = vpop.f32.mrb[0].mxu0
      %v2449 = vadd.f32 %v576, %v2448
      %v2450 = vpop.f32.mrb[0].mxu0
      %v2451 = vpop.f32.mrb[0].mxu0
      %v2452 = vadd.f32 %v576, %v2451
      %v2453 = vpop.f32.mrb[0].mxu0
      %2454 = vmatprep.mubr.bf16.mxu0 0
      %2455 = vmatmul.mubr.bf16.gmra.mrb[0].mxu0 %v1534
      %v2456 = vpop.f32.mrb[0].mxu0
      %v2457 = vadd.f32 %v576, %v2456
      %v2458 = vpop.f32.mrb[0].mxu0
      %v2459 = vpop.f32.mrb[0].mxu0
      %v2460 = vadd.f32 %v576, %v2459
      %v2461 = vpop.f32.mrb[0].mxu0
      %2462 = vmatprep.mubr.bf16.mxu0 0
      %2463 = vmatmul.mubr.bf16.gmra.mrb[0].mxu0 %v1537
      %v2464 = vpop.f32.mrb[0].mxu0
      %v2465 = vadd.f32 %v576, %v2464
      %v2466 = vpop.f32.mrb[0].mxu0
      %v2467 = vpop.f32.mrb[0].mxu0
      %v2468 = vadd.f32 %v576, %v2467
      %v2469 = vpop.f32.mrb[0].mxu0
      %2470 = vmatprep.mubr.bf16.mxu0 0
      %2471 = vmatmul.mubr.bf16.gmra.mrb[0].mxu0 %v1540
      %v2472 = vpop.f32.mrb[0].mxu0
      %v2473 = vadd.f32 %v576, %v2472
      %v2474 = vpop.f32.mrb[0].mxu0
      %v2475 = vpop.f32.mrb[0].mxu0
      %v2476 = vadd.f32 %v576, %v2475
      %v2477 = vpop.f32.mrb[0].mxu0
      %2478 = vmatprep.mubr.bf16.mxu0 0
      %2479 = vmatmul.mubr.bf16.gmra.mrb[0].mxu0 %v1543
      %v2480 = vpop.f32.mrb[0].mxu0
      %v2481 = vadd.f32 %v576, %v2480
      %v2482 = vpop.f32.mrb[0].mxu0
      %v2483 = vpop.f32.mrb[0].mxu0
      %v2484 = vadd.f32 %v576, %v2483
      %v2485 = vpop.f32.mrb[0].mxu0
      %2486 = vmatprep.mubr.bf16.mxu0 0
      %2487 = vmatmul.mubr.bf16.gmra.mrb[0].mxu0 %v1546
      %v2488 = vpop.f32.mrb[0].mxu0
      %v2489 = vadd.f32 %v576, %v2488
      %v2490 = vpop.f32.mrb[0].mxu0
      %v2491 = vpop.f32.mrb[0].mxu0
      %v2492 = vadd.f32 %v576, %v2491
      %v2493 = vpop.f32.mrb[0].mxu0
      %2494 = vmatprep.mubr.bf16.mxu0 0
      %2495 = vmatmul.mubr.bf16.gmra.mrb[0].mxu0 %v1549
      %v2496 = vpop.f32.mrb[0].mxu0
      %v2497 = vadd.f32 %v576, %v2496
      %v2498 = vpop.f32.mrb[0].mxu0
      %v2499 = vpop.f32.mrb[0].mxu0
      %v2500 = vadd.f32 %v576, %v2499
      %v2501 = vpop.f32.mrb[0].mxu0
      %2502 = vmatprep.mubr.bf16.mxu0 0
      %2503 = vmatmul.mubr.bf16.gmra.mrb[0].mxu0 %v1552
      %v2504 = vpop.f32.mrb[0].mxu0
      %v2505 = vadd.f32 %v576, %v2504
      %v2506 = vpop.f32.mrb[0].mxu0
      %v2507 = vpop.f32.mrb[0].mxu0
      %v2508 = vadd.f32 %v576, %v2507
      %v2509 = vpop.f32.mrb[0].mxu0
      %2510 = vmatprep.mubr.bf16.mxu0 0
      %2511 = vmatmul.mubr.bf16.gmra.mrb[0].mxu0 %v1555
      %v2512 = vpop.f32.mrb[0].mxu0
      %v2513 = vadd.f32 %v576, %v2512
      %v2514 = vpop.f32.mrb[0].mxu0
      %v2515 = vpop.f32.mrb[0].mxu0
      %v2516 = vadd.f32 %v576, %v2515
      %v2517 = vpop.f32.mrb[0].mxu0
      %2518 = vmatprep.mubr.bf16.mxu0 0
      %2519 = vmatmul.mubr.bf16.gmra.mrb[0].mxu0 %v1558
      %v2520 = vpop.f32.mrb[0].mxu0
      %v2521 = vadd.f32 %v576, %v2520
      %v2522 = vpop.f32.mrb[0].mxu0
      %v2523 = vpop.f32.mrb[0].mxu0
      %v2524 = vadd.f32 %v576, %v2523
      %v2525 = vpop.f32.mrb[0].mxu0
      %2526 = vmatprep.mubr.bf16.mxu0 0
      %2527 = vmatmul.mubr.bf16.gmra.mrb[0].mxu0 %v1561
      %v2528 = vpop.f32.mrb[0].mxu0
      %v2529 = vadd.f32 %v576, %v2528
      %v2530 = vpop.f32.mrb[0].mxu0
      %v2531 = vpop.f32.mrb[0].mxu0
      %v2532 = vadd.f32 %v576, %v2531
      %v2533 = vpop.f32.mrb[0].mxu0
      %2534 = vmatprep.mubr.bf16.mxu0 0
      %2535 = vmatmul.mubr.bf16.gmra.mrb[0].mxu0 %v1564
      %v2536 = vpop.f32.mrb[0].mxu0
      %v2537 = vadd.f32 %v576, %v2536
      %v2538 = vpop.f32.mrb[0].mxu0
      %v2539 = vpop.f32.mrb[0].mxu0
      %v2540 = vadd.f32 %v576, %v2539
      %v2541 = vpop.f32.mrb[0].mxu0
      %2542 = vmatprep.mubr.bf16.mxu0 0
      %2543 = vmatmul.mubr.bf16.gmra.mrb[0].mxu0 %v1567
      %v2544 = vpop.f32.mrb[0].mxu0
      %v2545 = vadd.f32 %v576, %v2544
      %v2546 = vpop.f32.mrb[0].mxu0
      %v2547 = vpop.f32.mrb[0].mxu0
      %v2548 = vadd.f32 %v576, %v2547
      %v2549 = vpop.f32.mrb[0].mxu0
      %2550 = vmatprep.mubr.bf16.mxu0 0
      %2551 = vmatmul.mubr.bf16.gmra.mrb[0].mxu0 %v1570
      %v2552 = vpop.f32.mrb[0].mxu0
      %v2553 = vadd.f32 %v576, %v2552
      %v2554 = vpop.f32.mrb[0].mxu0
      %v2555 = vpop.f32.mrb[0].mxu0
      %v2556 = vadd.f32 %v576, %v2555
      %v2557 = vpop.f32.mrb[0].mxu0
      %2558 = vmatprep.mubr.bf16.mxu0 0
      %2559 = vmatmul.mubr.bf16.gmra.mrb[0].mxu0 %v1573
      %v2560 = vpop.f32.mrb[0].mxu0
      %v2561 = vadd.f32 %v576, %v2560
      %v2562 = vpop.f32.mrb[0].mxu0
      %v2563 = vpop.f32.mrb[0].mxu0
      %v2564 = vadd.f32 %v576, %v2563
      %v2565 = vpop.f32.mrb[0].mxu0
      %2566 = vmatprep.mubr.bf16.mxu0 0
      %2567 = vmatmul.mubr.bf16.gmra.mrb[0].mxu0 %v1576
      %v2568 = vpop.f32.mrb[0].mxu0
      %v2569 = vadd.f32 %v576, %v2568
      %v2570 = vpop.f32.mrb[0].mxu0
      %v2571 = vpop.f32.mrb[0].mxu0
      %v2572 = vadd.f32 %v576, %v2571
      %v2573 = vpop.f32.mrb[0].mxu0
      %2574 = vmatprep.mubr.bf16.mxu0 0
      %2575 = vmatmul.mubr.bf16.gmra.mrb[0].mxu0 %v1579
      %v2576 = vpop.f32.mrb[0].mxu0
      %v2577 = vadd.f32 %v576, %v2576
      %v2578 = vpop.f32.mrb[0].mxu0
      %v2579 = vpop.f32.mrb[0].mxu0
      %v2580 = vadd.f32 %v576, %v2579
      %v2581 = vpop.f32.mrb[0].mxu0
      %2582 = vmatprep.mubr.bf16.mxu0 0
      %2583 = vmatmul.mubr.bf16.gmra.mrb[0].mxu0 %v1582
      %v2584 = vpop.f32.mrb[0].mxu0
      %v2585 = vadd.f32 %v576, %v2584
      %v2586 = vpop.f32.mrb[0].mxu0
      %v2587 = vpop.f32.mrb[0].mxu0
      %v2588 = vadd.f32 %v576, %v2587
      %v2589 = vpop.f32.mrb[0].mxu0
      %2590 = vmatprep.mubr.bf16.mxu0 0
      %2591 = vmatmul.mubr.bf16.gmra.mrb[0].mxu0 %v1585
      %v2592 = vpop.f32.mrb[0].mxu0
      %v2593 = vadd.f32 %v576, %v2592
      %v2594 = vpop.f32.mrb[0].mxu0
      %v2595 = vpop.f32.mrb[0].mxu0
      %v2596 = vadd.f32 %v576, %v2595
      %v2597 = vpop.f32.mrb[0].mxu0
      %2598 = vmatprep.mubr.bf16.mxu0 0
      %2599 = vmatmul.mubr.bf16.gmra.mrb[0].mxu0 %v1588
      %v2600 = vpop.f32.mrb[0].mxu0
      %v2601 = vadd.f32 %v576, %v2600
      %v2602 = vpop.f32.mrb[0].mxu0
      %v2603 = vpop.f32.mrb[0].mxu0
      %v2604 = vadd.f32 %v576, %v2603
      %v2605 = vpop.f32.mrb[0].mxu0
      %2606 = vmatprep.mubr.bf16.mxu0 0
      %2607 = vmatmul.mubr.bf16.gmra.mrb[0].mxu0 %v1591
      %v2608 = vpop.f32.mrb[0].mxu0
      %v2609 = vadd.f32 %v576, %v2608
      %v2610 = vpop.f32.mrb[0].mxu0
      %v2611 = vpop.f32.mrb[0].mxu0
      %v2612 = vadd.f32 %v576, %v2611
      %v2613 = vpop.f32.mrb[0].mxu0
      %2614 = vmatprep.mubr.bf16.mxu0 0
      %2615 = vmatmul.mubr.bf16.gmra.mrb[0].mxu0 %v1594
      %v2616 = vpop.f32.mrb[0].mxu0
      %v2617 = vadd.f32 %v576, %v2616
      %v2618 = vpop.f32.mrb[0].mxu0
      %v2619 = vpop.f32.mrb[0].mxu0
      %v2620 = vadd.f32 %v576, %v2619
      %v2621 = vpop.f32.mrb[0].mxu0
      %2622 = vmatprep.mubr.bf16.mxu0 0
      %2623 = vmatmul.mubr.bf16.gmra.mrb[0].mxu0 %v1597
      %v2624 = vpop.f32.mrb[0].mxu0
      %v2625 = vadd.f32 %v576, %v2624
      %v2626 = vpop.f32.mrb[0].mxu0
      %v2627 = vpop.f32.mrb[0].mxu0
      %v2628 = vadd.f32 %v576, %v2627
      %v2629 = vpop.f32.mrb[0].mxu0
      %2630 = vmatprep.mubr.bf16.mxu0 0
      %2631 = vmatmul.mubr.bf16.gmra.mrb[0].mxu0 %v1600
      %v2632 = vpop.f32.mrb[0].mxu0
      %v2633 = vadd.f32 %v576, %v2632
      %v2634 = vpop.f32.mrb[0].mxu0
      %v2635 = vpop.f32.mrb[0].mxu0
      %v2636 = vadd.f32 %v576, %v2635
      %v2637 = vpop.f32.mrb[0].mxu0
      %2638 = vmatprep.mubr.bf16.mxu0 0
      %2639 = vmatmul.mubr.bf16.gmra.mrb[0].mxu0 %v1603
      %v2640 = vpop.f32.mrb[0].mxu0
      %v2641 = vadd.f32 %v576, %v2640
      %v2642 = vpop.f32.mrb[0].mxu0
      %v2643 = vpop.f32.mrb[0].mxu0
      %v2644 = vadd.f32 %v576, %v2643
      %v2645 = vpop.f32.mrb[0].mxu0
      %2646 = vmatprep.mubr.bf16.mxu0 0
      %2647 = vmatmul.mubr.bf16.gmra.mrb[0].mxu0 %v1606
      %v2648 = vpop.f32.mrb[0].mxu0
      %v2649 = vadd.f32 %v576, %v2648
      %v2650 = vpop.f32.mrb[0].mxu0
      %v2651 = vpop.f32.mrb[0].mxu0
      %v2652 = vadd.f32 %v576, %v2651
      %v2653 = vpop.f32.mrb[0].mxu0
      %2654 = vmatprep.mubr.bf16.mxu0 0
      %2655 = vmatmul.mubr.bf16.gmra.mrb[0].mxu0 %v1609
      %v2656 = vpop.f32.mrb[0].mxu0
      %v2657 = vadd.f32 %v576, %v2656
      %v2658 = vpop.f32.mrb[0].mxu0
      %v2659 = vpop.f32.mrb[0].mxu0
      %v2660 = vadd.f32 %v576, %v2659
      %v2661 = vpop.f32.mrb[0].mxu0
      %2662 = vmatprep.mubr.bf16.mxu0 0
      %2663 = vmatmul.mubr.bf16.gmra.mrb[0].mxu0 %v1612
      %v2664 = vpop.f32.mrb[0].mxu0
      %v2665 = vadd.f32 %v576, %v2664
      %v2666 = vpop.f32.mrb[0].mxu0
      %v2667 = vpop.f32.mrb[0].mxu0
      %v2668 = vadd.f32 %v576, %v2667
      %v2669 = vpop.f32.mrb[0].mxu0
      %2670 = vdwg.mxu0
      %v2671 = vmax.f32 %v1649, 0.0
      %v2672 = vmax.f32 %v1652, 0.0
      %v2673 = vmax.f32 %v1657, 0.0
      %v2674 = vmax.f32 %v1660, 0.0
      %v2675 = vmax.f32 %v1665, 0.0
      %v2676 = vmax.f32 %v1668, 0.0
      %v2677 = vmax.f32 %v1673, 0.0
      %v2678 = vmax.f32 %v1676, 0.0
      %v2679 = vmax.f32 %v1681, 0.0
      %v2680 = vmax.f32 %v1684, 0.0
      %v2681 = vmax.f32 %v1689, 0.0
      %v2682 = vmax.f32 %v1692, 0.0
      %v2683 = vmax.f32 %v1697, 0.0
      %v2684 = vmax.f32 %v1700, 0.0
      %v2685 = vmax.f32 %v1705, 0.0
      %v2686 = vmax.f32 %v1708, 0.0
      %v2687 = vmax.f32 %v1713, 0.0
      %v2688 = vmax.f32 %v1716, 0.0
      %v2689 = vmax.f32 %v1721, 0.0
      %v2690 = vmax.f32 %v1724, 0.0
      %v2691 = vmax.f32 %v1729, 0.0
      %v2692 = vmax.f32 %v1732, 0.0
      %v2693 = vmax.f32 %v1737, 0.0
      %v2694 = vmax.f32 %v1740, 0.0
      %v2695 = vmax.f32 %v1745, 0.0
      %v2696 = vmax.f32 %v1748, 0.0
      %v2697 = vmax.f32 %v1753, 0.0
      %v2698 = vmax.f32 %v1756, 0.0
      %v2699 = vmax.f32 %v1761, 0.0
      %v2700 = vmax.f32 %v1764, 0.0
      %v2701 = vmax.f32 %v1769, 0.0
      %v2702 = vmax.f32 %v1772, 0.0
      %v2703 = vmax.f32 %v1777, 0.0
      %v2704 = vmax.f32 %v1780, 0.0
      %v2705 = vmax.f32 %v1785, 0.0
      %v2706 = vmax.f32 %v1788, 0.0
      %v2707 = vmax.f32 %v1793, 0.0
      %v2708 = vmax.f32 %v1796, 0.0
      %v2709 = vmax.f32 %v1801, 0.0
      %v2710 = vmax.f32 %v1804, 0.0
      %v2711 = vmax.f32 %v1809, 0.0
      %v2712 = vmax.f32 %v1812, 0.0
      %v2713 = vmax.f32 %v1817, 0.0
      %v2714 = vmax.f32 %v1820, 0.0
      %v2715 = vmax.f32 %v1825, 0.0
      %v2716 = vmax.f32 %v1828, 0.0
      %v2717 = vmax.f32 %v1833, 0.0
      %v2718 = vmax.f32 %v1836, 0.0
      %v2719 = vmax.f32 %v1841, 0.0
      %v2720 = vmax.f32 %v1844, 0.0
      %v2721 = vmax.f32 %v1849, 0.0
      %v2722 = vmax.f32 %v1852, 0.0
      %v2723 = vmax.f32 %v1857, 0.0
      %v2724 = vmax.f32 %v1860, 0.0
      %v2725 = vmax.f32 %v1865, 0.0
      %v2726 = vmax.f32 %v1868, 0.0
      %v2727 = vmax.f32 %v1873, 0.0
      %v2728 = vmax.f32 %v1876, 0.0
      %v2729 = vmax.f32 %v1881, 0.0
      %v2730 = vmax.f32 %v1884, 0.0
      %v2731 = vmax.f32 %v1889, 0.0
      %v2732 = vmax.f32 %v1892, 0.0
      %v2733 = vmax.f32 %v1897, 0.0
      %v2734 = vmax.f32 %v1900, 0.0
      %v2735 = vmax.f32 %v1905, 0.0
      %v2736 = vmax.f32 %v1908, 0.0
      %v2737 = vmax.f32 %v1913, 0.0
      %v2738 = vmax.f32 %v1916, 0.0
      %v2739 = vmax.f32 %v1921, 0.0
      %v2740 = vmax.f32 %v1924, 0.0
      %v2741 = vmax.f32 %v1929, 0.0
      %v2742 = vmax.f32 %v1932, 0.0
      %v2743 = vmax.f32 %v1937, 0.0
      %v2744 = vmax.f32 %v1940, 0.0
      %v2745 = vmax.f32 %v1945, 0.0
      %v2746 = vmax.f32 %v1948, 0.0
      %v2747 = vmax.f32 %v1953, 0.0
      %v2748 = vmax.f32 %v1956, 0.0
      %v2749 = vmax.f32 %v1961, 0.0
      %v2750 = vmax.f32 %v1964, 0.0
      %v2751 = vmax.f32 %v1969, 0.0
      %v2752 = vmax.f32 %v1972, 0.0
      %v2753 = vmax.f32 %v1977, 0.0
      %v2754 = vmax.f32 %v1980, 0.0
      %v2755 = vmax.f32 %v1985, 0.0
      %v2756 = vmax.f32 %v1988, 0.0
      %v2757 = vmax.f32 %v1993, 0.0
      %v2758 = vmax.f32 %v1996, 0.0
      %v2759 = vmax.f32 %v2001, 0.0
      %v2760 = vmax.f32 %v2004, 0.0
      %v2761 = vmax.f32 %v2009, 0.0
      %v2762 = vmax.f32 %v2012, 0.0
      %v2763 = vmax.f32 %v2017, 0.0
      %v2764 = vmax.f32 %v2020, 0.0
      %v2765 = vmax.f32 %v2025, 0.0
      %v2766 = vmax.f32 %v2028, 0.0
      %v2767 = vmax.f32 %v2033, 0.0
      %v2768 = vmax.f32 %v2036, 0.0
      %v2769 = vmax.f32 %v2041, 0.0
      %v2770 = vmax.f32 %v2044, 0.0
      %v2771 = vmax.f32 %v2049, 0.0
      %v2772 = vmax.f32 %v2052, 0.0
      %v2773 = vmax.f32 %v2057, 0.0
      %v2774 = vmax.f32 %v2060, 0.0
      %v2775 = vmax.f32 %v2065, 0.0
      %v2776 = vmax.f32 %v2068, 0.0
      %v2777 = vmax.f32 %v2073, 0.0
      %v2778 = vmax.f32 %v2076, 0.0
      %v2779 = vmax.f32 %v2081, 0.0
      %v2780 = vmax.f32 %v2084, 0.0
      %v2781 = vmax.f32 %v2089, 0.0
      %v2782 = vmax.f32 %v2092, 0.0
      %v2783 = vmax.f32 %v2097, 0.0
      %v2784 = vmax.f32 %v2100, 0.0
      %v2785 = vmax.f32 %v2105, 0.0
      %v2786 = vmax.f32 %v2108, 0.0
      %v2787 = vmax.f32 %v2113, 0.0
      %v2788 = vmax.f32 %v2116, 0.0
      %v2789 = vmax.f32 %v2121, 0.0
      %v2790 = vmax.f32 %v2124, 0.0
      %v2791 = vmax.f32 %v2129, 0.0
      %v2792 = vmax.f32 %v2132, 0.0
      %v2793 = vmax.f32 %v2137, 0.0
      %v2794 = vmax.f32 %v2140, 0.0
      %v2795 = vmax.f32 %v2145, 0.0
      %v2796 = vmax.f32 %v2148, 0.0
      %v2797 = vmax.f32 %v2153, 0.0
      %v2798 = vmax.f32 %v2156, 0.0
      %v2799 = vmax.f32 %v2161, 0.0
      %v2800 = vmax.f32 %v2164, 0.0
      %v2801 = vmax.f32 %v2169, 0.0
      %v2802 = vmax.f32 %v2172, 0.0
      %v2803 = vmax.f32 %v2177, 0.0
      %v2804 = vmax.f32 %v2180, 0.0
      %v2805 = vmax.f32 %v2185, 0.0
      %v2806 = vmax.f32 %v2188, 0.0
      %v2807 = vmax.f32 %v2193, 0.0
      %v2808 = vmax.f32 %v2196, 0.0
      %v2809 = vmax.f32 %v2201, 0.0
      %v2810 = vmax.f32 %v2204, 0.0
      %v2811 = vmax.f32 %v2209, 0.0
      %v2812 = vmax.f32 %v2212, 0.0
      %v2813 = vmax.f32 %v2217, 0.0
      %v2814 = vmax.f32 %v2220, 0.0
      %v2815 = vmax.f32 %v2225, 0.0
      %v2816 = vmax.f32 %v2228, 0.0
      %v2817 = vmax.f32 %v2233, 0.0
      %v2818 = vmax.f32 %v2236, 0.0
      %v2819 = vmax.f32 %v2241, 0.0
      %v2820 = vmax.f32 %v2244, 0.0
      %v2821 = vmax.f32 %v2249, 0.0
      %v2822 = vmax.f32 %v2252, 0.0
      %v2823 = vmax.f32 %v2257, 0.0
      %v2824 = vmax.f32 %v2260, 0.0
      %v2825 = vmax.f32 %v2265, 0.0
      %v2826 = vmax.f32 %v2268, 0.0
      %v2827 = vmax.f32 %v2273, 0.0
      %v2828 = vmax.f32 %v2276, 0.0
      %v2829 = vmax.f32 %v2281, 0.0
      %v2830 = vmax.f32 %v2284, 0.0
      %v2831 = vmax.f32 %v2289, 0.0
      %v2832 = vmax.f32 %v2292, 0.0
      %v2833 = vmax.f32 %v2297, 0.0
      %v2834 = vmax.f32 %v2300, 0.0
      %v2835 = vmax.f32 %v2305, 0.0
      %v2836 = vmax.f32 %v2308, 0.0
      %v2837 = vmax.f32 %v2313, 0.0
      %v2838 = vmax.f32 %v2316, 0.0
      %v2839 = vmax.f32 %v2321, 0.0
      %v2840 = vmax.f32 %v2324, 0.0
      %v2841 = vmax.f32 %v2329, 0.0
      %v2842 = vmax.f32 %v2332, 0.0
      %v2843 = vmax.f32 %v2337, 0.0
      %v2844 = vmax.f32 %v2340, 0.0
      %v2845 = vmax.f32 %v2345, 0.0
      %v2846 = vmax.f32 %v2348, 0.0
      %v2847 = vmax.f32 %v2353, 0.0
      %v2848 = vmax.f32 %v2356, 0.0
      %v2849 = vmax.f32 %v2361, 0.0
      %v2850 = vmax.f32 %v2364, 0.0
      %v2851 = vmax.f32 %v2369, 0.0
      %v2852 = vmax.f32 %v2372, 0.0
      %v2853 = vmax.f32 %v2377, 0.0
      %v2854 = vmax.f32 %v2380, 0.0
      %v2855 = vmax.f32 %v2385, 0.0
      %v2856 = vmax.f32 %v2388, 0.0
      %v2857 = vmax.f32 %v2393, 0.0
      %v2858 = vmax.f32 %v2396, 0.0
      %v2859 = vmax.f32 %v2401, 0.0
      %v2860 = vmax.f32 %v2404, 0.0
      %v2861 = vmax.f32 %v2409, 0.0
      %v2862 = vmax.f32 %v2412, 0.0
      %v2863 = vmax.f32 %v2417, 0.0
      %v2864 = vmax.f32 %v2420, 0.0
      %v2865 = vmax.f32 %v2425, 0.0
      %v2866 = vmax.f32 %v2428, 0.0
      %v2867 = vmax.f32 %v2433, 0.0
      %v2868 = vmax.f32 %v2436, 0.0
      %v2869 = vmax.f32 %v2441, 0.0
      %v2870 = vmax.f32 %v2444, 0.0
      %v2871 = vmax.f32 %v2449, 0.0
      %v2872 = vmax.f32 %v2452, 0.0
      %v2873 = vmax.f32 %v2457, 0.0
      %v2874 = vmax.f32 %v2460, 0.0
      %v2875 = vmax.f32 %v2465, 0.0
      %v2876 = vmax.f32 %v2468, 0.0
      %v2877 = vmax.f32 %v2473, 0.0
      %v2878 = vmax.f32 %v2476, 0.0
      %v2879 = vmax.f32 %v2481, 0.0
      %v2880 = vmax.f32 %v2484, 0.0
      %v2881 = vmax.f32 %v2489, 0.0
      %v2882 = vmax.f32 %v2492, 0.0
      %v2883 = vmax.f32 %v2497, 0.0
      %v2884 = vmax.f32 %v2500, 0.0
      %v2885 = vmax.f32 %v2505, 0.0
      %v2886 = vmax.f32 %v2508, 0.0
      %v2887 = vmax.f32 %v2513, 0.0
      %v2888 = vmax.f32 %v2516, 0.0
      %v2889 = vmax.f32 %v2521, 0.0
      %v2890 = vmax.f32 %v2524, 0.0
      %v2891 = vmax.f32 %v2529, 0.0
      %v2892 = vmax.f32 %v2532, 0.0
      %v2893 = vmax.f32 %v2537, 0.0
      %v2894 = vmax.f32 %v2540, 0.0
      %v2895 = vmax.f32 %v2545, 0.0
      %v2896 = vmax.f32 %v2548, 0.0
      %v2897 = vmax.f32 %v2553, 0.0
      %v2898 = vmax.f32 %v2556, 0.0
      %v2899 = vmax.f32 %v2561, 0.0
      %v2900 = vmax.f32 %v2564, 0.0
      %v2901 = vmax.f32 %v2569, 0.0
      %v2902 = vmax.f32 %v2572, 0.0
      %v2903 = vmax.f32 %v2577, 0.0
      %v2904 = vmax.f32 %v2580, 0.0
      %v2905 = vmax.f32 %v2585, 0.0
      %v2906 = vmax.f32 %v2588, 0.0
      %v2907 = vmax.f32 %v2593, 0.0
      %v2908 = vmax.f32 %v2596, 0.0
      %v2909 = vmax.f32 %v2601, 0.0
      %v2910 = vmax.f32 %v2604, 0.0
      %v2911 = vmax.f32 %v2609, 0.0
      %v2912 = vmax.f32 %v2612, 0.0
      %v2913 = vmax.f32 %v2617, 0.0
      %v2914 = vmax.f32 %v2620, 0.0
      %v2915 = vmax.f32 %v2625, 0.0
      %v2916 = vmax.f32 %v2628, 0.0
      %v2917 = vmax.f32 %v2633, 0.0
      %v2918 = vmax.f32 %v2636, 0.0
      %v2919 = vmax.f32 %v2641, 0.0
      %v2920 = vmax.f32 %v2644, 0.0
      %v2921 = vmax.f32 %v2649, 0.0
      %v2922 = vmax.f32 %v2652, 0.0
      %v2923 = vmax.f32 %v2657, 0.0
      %v2924 = vmax.f32 %v2660, 0.0
      %v2925 = vmax.f32 %v2665, 0.0
      %v2926 = vmax.f32 %v2668, 0.0
      %v2927 = vpack.c.bf16 %v2672, %v2671
      %v2928 = vpack.c.bf16 %v2674, %v2673
      %v2929 = vpack.c.bf16 %v2676, %v2675
      %v2930 = vpack.c.bf16 %v2678, %v2677
      %v2931 = vpack.c.bf16 %v2680, %v2679
      %v2932 = vpack.c.bf16 %v2682, %v2681
      %v2933 = vpack.c.bf16 %v2684, %v2683
      %v2934 = vpack.c.bf16 %v2686, %v2685
      %v2935 = vpack.c.bf16 %v2688, %v2687
      %v2936 = vpack.c.bf16 %v2690, %v2689
      %v2937 = vpack.c.bf16 %v2692, %v2691
      %v2938 = vpack.c.bf16 %v2694, %v2693
      %v2939 = vpack.c.bf16 %v2696, %v2695
      %v2940 = vpack.c.bf16 %v2698, %v2697
      %v2941 = vpack.c.bf16 %v2700, %v2699
      %v2942 = vpack.c.bf16 %v2702, %v2701
      %v2943 = vpack.c.bf16 %v2704, %v2703
      %v2944 = vpack.c.bf16 %v2706, %v2705
      %v2945 = vpack.c.bf16 %v2708, %v2707
      %v2946 = vpack.c.bf16 %v2710, %v2709
      %v2947 = vpack.c.bf16 %v2712, %v2711
      %v2948 = vpack.c.bf16 %v2714, %v2713
      %v2949 = vpack.c.bf16 %v2716, %v2715
      %v2950 = vpack.c.bf16 %v2718, %v2717
      %v2951 = vpack.c.bf16 %v2720, %v2719
      %v2952 = vpack.c.bf16 %v2722, %v2721
      %v2953 = vpack.c.bf16 %v2724, %v2723
      %v2954 = vpack.c.bf16 %v2726, %v2725
      %v2955 = vpack.c.bf16 %v2728, %v2727
      %v2956 = vpack.c.bf16 %v2730, %v2729
      %v2957 = vpack.c.bf16 %v2732, %v2731
      %v2958 = vpack.c.bf16 %v2734, %v2733
      %v2959 = vpack.c.bf16 %v2736, %v2735
      %v2960 = vpack.c.bf16 %v2738, %v2737
      %v2961 = vpack.c.bf16 %v2740, %v2739
      %v2962 = vpack.c.bf16 %v2742, %v2741
      %v2963 = vpack.c.bf16 %v2744, %v2743
      %v2964 = vpack.c.bf16 %v2746, %v2745
      %v2965 = vpack.c.bf16 %v2748, %v2747
      %v2966 = vpack.c.bf16 %v2750, %v2749
      %v2967 = vpack.c.bf16 %v2752, %v2751
      %v2968 = vpack.c.bf16 %v2754, %v2753
      %v2969 = vpack.c.bf16 %v2756, %v2755
      %v2970 = vpack.c.bf16 %v2758, %v2757
      %v2971 = vpack.c.bf16 %v2760, %v2759
      %v2972 = vpack.c.bf16 %v2762, %v2761
      %v2973 = vpack.c.bf16 %v2764, %v2763
      %v2974 = vpack.c.bf16 %v2766, %v2765
      %v2975 = vpack.c.bf16 %v2768, %v2767
      %v2976 = vpack.c.bf16 %v2770, %v2769
      %v2977 = vpack.c.bf16 %v2772, %v2771
      %v2978 = vpack.c.bf16 %v2774, %v2773
      %v2979 = vpack.c.bf16 %v2776, %v2775
      %v2980 = vpack.c.bf16 %v2778, %v2777
      %v2981 = vpack.c.bf16 %v2780, %v2779
      %v2982 = vpack.c.bf16 %v2782, %v2781
      %v2983 = vpack.c.bf16 %v2784, %v2783
      %v2984 = vpack.c.bf16 %v2786, %v2785
      %v2985 = vpack.c.bf16 %v2788, %v2787
      %v2986 = vpack.c.bf16 %v2790, %v2789
      %v2987 = vpack.c.bf16 %v2792, %v2791
      %v2988 = vpack.c.bf16 %v2794, %v2793
      %v2989 = vpack.c.bf16 %v2796, %v2795
      %v2990 = vpack.c.bf16 %v2798, %v2797
      %v2991 = vpack.c.bf16 %v2800, %v2799
      %v2992 = vpack.c.bf16 %v2802, %v2801
      %v2993 = vpack.c.bf16 %v2804, %v2803
      %v2994 = vpack.c.bf16 %v2806, %v2805
      %v2995 = vpack.c.bf16 %v2808, %v2807
      %v2996 = vpack.c.bf16 %v2810, %v2809
      %v2997 = vpack.c.bf16 %v2812, %v2811
      %v2998 = vpack.c.bf16 %v2814, %v2813
      %v2999 = vpack.c.bf16 %v2816, %v2815
      %v3000 = vpack.c.bf16 %v2818, %v2817
      %v3001 = vpack.c.bf16 %v2820, %v2819
      %v3002 = vpack.c.bf16 %v2822, %v2821
      %v3003 = vpack.c.bf16 %v2824, %v2823
      %v3004 = vpack.c.bf16 %v2826, %v2825
      %v3005 = vpack.c.bf16 %v2828, %v2827
      %v3006 = vpack.c.bf16 %v2830, %v2829
      %v3007 = vpack.c.bf16 %v2832, %v2831
      %v3008 = vpack.c.bf16 %v2834, %v2833
      %v3009 = vpack.c.bf16 %v2836, %v2835
      %v3010 = vpack.c.bf16 %v2838, %v2837
      %v3011 = vpack.c.bf16 %v2840, %v2839
      %v3012 = vpack.c.bf16 %v2842, %v2841
      %v3013 = vpack.c.bf16 %v2844, %v2843
      %v3014 = vpack.c.bf16 %v2846, %v2845
      %v3015 = vpack.c.bf16 %v2848, %v2847
      %v3016 = vpack.c.bf16 %v2850, %v2849
      %v3017 = vpack.c.bf16 %v2852, %v2851
      %v3018 = vpack.c.bf16 %v2854, %v2853
      %v3019 = vpack.c.bf16 %v2856, %v2855
      %v3020 = vpack.c.bf16 %v2858, %v2857
      %v3021 = vpack.c.bf16 %v2860, %v2859
      %v3022 = vpack.c.bf16 %v2862, %v2861
      %v3023 = vpack.c.bf16 %v2864, %v2863
      %v3024 = vpack.c.bf16 %v2866, %v2865
      %v3025 = vpack.c.bf16 %v2868, %v2867
      %v3026 = vpack.c.bf16 %v2870, %v2869
      %v3027 = vpack.c.bf16 %v2872, %v2871
      %v3028 = vpack.c.bf16 %v2874, %v2873
      %v3029 = vpack.c.bf16 %v2876, %v2875
      %v3030 = vpack.c.bf16 %v2878, %v2877
      %v3031 = vpack.c.bf16 %v2880, %v2879
      %v3032 = vpack.c.bf16 %v2882, %v2881
      %v3033 = vpack.c.bf16 %v2884, %v2883
      %v3034 = vpack.c.bf16 %v2886, %v2885
      %v3035 = vpack.c.bf16 %v2888, %v2887
      %v3036 = vpack.c.bf16 %v2890, %v2889
      %v3037 = vpack.c.bf16 %v2892, %v2891
      %v3038 = vpack.c.bf16 %v2894, %v2893
      %v3039 = vpack.c.bf16 %v2896, %v2895
      %v3040 = vpack.c.bf16 %v2898, %v2897
      %v3041 = vpack.c.bf16 %v2900, %v2899
      %v3042 = vpack.c.bf16 %v2902, %v2901
      %v3043 = vpack.c.bf16 %v2904, %v2903
      %v3044 = vpack.c.bf16 %v2906, %v2905
      %v3045 = vpack.c.bf16 %v2908, %v2907
      %v3046 = vpack.c.bf16 %v2910, %v2909
      %v3047 = vpack.c.bf16 %v2912, %v2911
      %v3048 = vpack.c.bf16 %v2914, %v2913
      %v3049 = vpack.c.bf16 %v2916, %v2915
      %v3050 = vpack.c.bf16 %v2918, %v2917
      %v3051 = vpack.c.bf16 %v2920, %v2919
      %v3052 = vpack.c.bf16 %v2922, %v2921
      %v3053 = vpack.c.bf16 %v2924, %v2923
      %v3054 = vpack.c.bf16 %v2926, %v2925
      %v3055 = vlaneseq
      %v3056 = vshrl.u32 %v3055, 7
      %v3057 = vadd.s32 %v3056, 8
      %v3058 = vadd.s32 %v3056, 16
      %v3059 = vadd.s32 %v3056, 24
      %v3060 = vadd.s32 %v3056, 32
      %v3061 = vadd.s32 %v3056, 40
      %v3062 = vadd.s32 %v3056, 48
      %v3063 = vadd.s32 %v3056, 56
      %v3064 = vadd.s32 %v3056, 64
      %v3065 = vadd.s32 %v3056, 72
      %v3066 = vadd.s32 %v3056, 80
      %v3067 = vadd.s32 %v3056, 88
      %v3068 = vadd.s32 %v3056, 96
      %v3069 = vadd.s32 %v3056, 104
      %v3070 = vadd.s32 %v3056, 112
      %v3071 = vadd.s32 %v3056, 120
      %v3072 = vadd.s32 %v3056, 128
      %v3073 = vadd.s32 %v3056, 136
      %v3074 = vadd.s32 %v3056, 144
      %v3075 = vadd.s32 %v3056, 152
      %v3076 = vadd.s32 %v3056, 160
      %v3077 = vadd.s32 %v3056, 168
      %v3078 = vadd.s32 %v3056, 176
      %v3079 = vadd.s32 %v3056, 184
      %v3080 = vadd.s32 %v3056, 192
      %v3081 = vadd.s32 %v3056, 200
      %v3082 = vadd.s32 %v3056, 208
      %v3083 = vadd.s32 %v3056, 216
      %v3084 = vadd.s32 %v3056, 224
      %v3085 = vadd.s32 %v3056, 232
      %v3086 = vadd.s32 %v3056, 240
      %v3087 = vadd.s32 %v3056, 248
      %v3088 = vadd.s32 %v3056, 256
      %v3089 = vadd.s32 %v3056, 264
      %v3090 = vadd.s32 %v3056, 272
      %v3091 = vadd.s32 %v3056, 280
      %v3092 = vadd.s32 %v3056, 288
      %v3093 = vadd.s32 %v3056, 296
      %v3094 = vadd.s32 %v3056, 304
      %v3095 = vadd.s32 %v3056, 312
      %v3096 = vadd.s32 %v3056, 320
      %v3097 = vadd.s32 %v3056, 328
      %v3098 = vadd.s32 %v3056, 336
      %v3099 = vadd.s32 %v3056, 344
      %v3100 = vadd.s32 %v3056, 352
      %v3101 = vadd.s32 %v3056, 360
      %v3102 = vadd.s32 %v3056, 368
      %v3103 = vadd.s32 %v3056, 376
      %v3104 = vadd.s32 %v3056, 384
      %v3105 = vadd.s32 %v3056, 392
      %v3106 = vadd.s32 %v3056, 400
      %v3107 = vadd.s32 %v3056, 408
      %v3108 = vadd.s32 %v3056, 416
      %v3109 = vadd.s32 %v3056, 424
      %v3110 = vadd.s32 %v3056, 432
      %v3111 = vadd.s32 %v3056, 440
      %v3112 = vadd.s32 %v3056, 448
      %v3113 = vadd.s32 %v3056, 456
      %v3114 = vadd.s32 %v3056, 464
      %v3115 = vadd.s32 %v3056, 472
      %v3116 = vadd.s32 %v3056, 480
      %v3117 = vadd.s32 %v3056, 488
      %v3118 = vadd.s32 %v3056, 496
      %v3119 = vadd.s32 %v3056, 504
      %vm3120 = vcmp.lt.s32.totalorder %v3056, 0
      %v3121 = vsub.s32 0, %v3056
      %v3122 = vsel %vm3120, %v3121, %v3056
      %v3123 = vshrl.u32 %v3122, 6
      %v3124 = vand.u32 %v3122, 63
      %v3125 = vsub.s32 0, %v3124
      %v3126 = vsel %vm3120, %v3125, %v3124
      %vm3127 = vcmp.lt.s32.totalorder %v3057, 0
      %v3128 = vsub.s32 0, %v3057
      %v3129 = vsel %vm3127, %v3128, %v3057
      %v3130 = vshrl.u32 %v3129, 6
      %v3131 = vand.u32 %v3129, 63
      %v3132 = vsub.s32 0, %v3131
      %v3133 = vsel %vm3127, %v3132, %v3131
      %vm3134 = vcmp.lt.s32.totalorder %v3058, 0
      %v3135 = vsub.s32 0, %v3058
      %v3136 = vsel %vm3134, %v3135, %v3058
      %v3137 = vshrl.u32 %v3136, 6
      %v3138 = vand.u32 %v3136, 63
      %v3139 = vsub.s32 0, %v3138
      %v3140 = vsel %vm3134, %v3139, %v3138
      %vm3141 = vcmp.lt.s32.totalorder %v3059, 0
      %v3142 = vsub.s32 0, %v3059
      %v3143 = vsel %vm3141, %v3142, %v3059
      %v3144 = vshrl.u32 %v3143, 6
      %v3145 = vand.u32 %v3143, 63
      %v3146 = vsub.s32 0, %v3145
      %v3147 = vsel %vm3141, %v3146, %v3145
      %vm3148 = vcmp.lt.s32.totalorder %v3060, 0
      %v3149 = vsub.s32 0, %v3060
      %v3150 = vsel %vm3148, %v3149, %v3060
      %v3151 = vshrl.u32 %v3150, 6
      %v3152 = vand.u32 %v3150, 63
      %v3153 = vsub.s32 0, %v3152
      %v3154 = vsel %vm3148, %v3153, %v3152
      %vm3155 = vcmp.lt.s32.totalorder %v3061, 0
      %v3156 = vsub.s32 0, %v3061
      %v3157 = vsel %vm3155, %v3156, %v3061
      %v3158 = vshrl.u32 %v3157, 6
      %v3159 = vand.u32 %v3157, 63
      %v3160 = vsub.s32 0, %v3159
      %v3161 = vsel %vm3155, %v3160, %v3159
      %vm3162 = vcmp.lt.s32.totalorder %v3062, 0
      %v3163 = vsub.s32 0, %v3062
      %v3164 = vsel %vm3162, %v3163, %v3062
      %v3165 = vshrl.u32 %v3164, 6
      %v3166 = vand.u32 %v3164, 63
      %v3167 = vsub.s32 0, %v3166
      %v3168 = vsel %vm3162, %v3167, %v3166
      %vm3169 = vcmp.lt.s32.totalorder %v3063, 0
      %v3170 = vsub.s32 0, %v3063
      %v3171 = vsel %vm3169, %v3170, %v3063
      %v3172 = vshrl.u32 %v3171, 6
      %v3173 = vand.u32 %v3171, 63
      %v3174 = vsub.s32 0, %v3173
      %v3175 = vsel %vm3169, %v3174, %v3173
      %vm3176 = vcmp.lt.s32.totalorder %v3064, 0
      %v3177 = vsub.s32 0, %v3064
      %v3178 = vsel %vm3176, %v3177, %v3064
      %v3179 = vshrl.u32 %v3178, 6
      %v3180 = vand.u32 %v3178, 63
      %v3181 = vsub.s32 0, %v3180
      %v3182 = vsel %vm3176, %v3181, %v3180
      %vm3183 = vcmp.lt.s32.totalorder %v3065, 0
      %v3184 = vsub.s32 0, %v3065
      %v3185 = vsel %vm3183, %v3184, %v3065
      %v3186 = vshrl.u32 %v3185, 6
      %v3187 = vand.u32 %v3185, 63
      %v3188 = vsub.s32 0, %v3187
      %v3189 = vsel %vm3183, %v3188, %v3187
      %vm3190 = vcmp.lt.s32.totalorder %v3066, 0
      %v3191 = vsub.s32 0, %v3066
      %v3192 = vsel %vm3190, %v3191, %v3066
      %v3193 = vshrl.u32 %v3192, 6
      %v3194 = vand.u32 %v3192, 63
      %v3195 = vsub.s32 0, %v3194
      %v3196 = vsel %vm3190, %v3195, %v3194
      %vm3197 = vcmp.lt.s32.totalorder %v3067, 0
      %v3198 = vsub.s32 0, %v3067
      %v3199 = vsel %vm3197, %v3198, %v3067
      %v3200 = vshrl.u32 %v3199, 6
      %v3201 = vand.u32 %v3199, 63
      %v3202 = vsub.s32 0, %v3201
      %v3203 = vsel %vm3197, %v3202, %v3201
      %vm3204 = vcmp.lt.s32.totalorder %v3068, 0
      %v3205 = vsub.s32 0, %v3068
      %v3206 = vsel %vm3204, %v3205, %v3068
      %v3207 = vshrl.u32 %v3206, 6
      %v3208 = vand.u32 %v3206, 63
      %v3209 = vsub.s32 0, %v3208
      %v3210 = vsel %vm3204, %v3209, %v3208
      %vm3211 = vcmp.lt.s32.totalorder %v3069, 0
      %v3212 = vsub.s32 0, %v3069
      %v3213 = vsel %vm3211, %v3212, %v3069
      %v3214 = vshrl.u32 %v3213, 6
      %v3215 = vand.u32 %v3213, 63
      %v3216 = vsub.s32 0, %v3215
      %v3217 = vsel %vm3211, %v3216, %v3215
      %vm3218 = vcmp.lt.s32.totalorder %v3070, 0
      %v3219 = vsub.s32 0, %v3070
      %v3220 = vsel %vm3218, %v3219, %v3070
      %v3221 = vshrl.u32 %v3220, 6
      %v3222 = vand.u32 %v3220, 63
      %v3223 = vsub.s32 0, %v3222
      %v3224 = vsel %vm3218, %v3223, %v3222
      %vm3225 = vcmp.lt.s32.totalorder %v3071, 0
      %v3226 = vsub.s32 0, %v3071
      %v3227 = vsel %vm3225, %v3226, %v3071
      %v3228 = vshrl.u32 %v3227, 6
      %v3229 = vand.u32 %v3227, 63
      %v3230 = vsub.s32 0, %v3229
      %v3231 = vsel %vm3225, %v3230, %v3229
      %vm3232 = vcmp.lt.s32.totalorder %v3072, 0
      %v3233 = vsub.s32 0, %v3072
      %v3234 = vsel %vm3232, %v3233, %v3072
      %v3235 = vshrl.u32 %v3234, 6
      %v3236 = vand.u32 %v3234, 63
      %v3237 = vsub.s32 0, %v3236
      %v3238 = vsel %vm3232, %v3237, %v3236
      %vm3239 = vcmp.lt.s32.totalorder %v3073, 0
      %v3240 = vsub.s32 0, %v3073
      %v3241 = vsel %vm3239, %v3240, %v3073
      %v3242 = vshrl.u32 %v3241, 6
      %v3243 = vand.u32 %v3241, 63
      %v3244 = vsub.s32 0, %v3243
      %v3245 = vsel %vm3239, %v3244, %v3243
      %vm3246 = vcmp.lt.s32.totalorder %v3074, 0
      %v3247 = vsub.s32 0, %v3074
      %v3248 = vsel %vm3246, %v3247, %v3074
      %v3249 = vshrl.u32 %v3248, 6
      %v3250 = vand.u32 %v3248, 63
      %v3251 = vsub.s32 0, %v3250
      %v3252 = vsel %vm3246, %v3251, %v3250
      %vm3253 = vcmp.lt.s32.totalorder %v3075, 0
      %v3254 = vsub.s32 0, %v3075
      %v3255 = vsel %vm3253, %v3254, %v3075
      %v3256 = vshrl.u32 %v3255, 6
      %v3257 = vand.u32 %v3255, 63
      %v3258 = vsub.s32 0, %v3257
      %v3259 = vsel %vm3253, %v3258, %v3257
      %vm3260 = vcmp.lt.s32.totalorder %v3076, 0
      %v3261 = vsub.s32 0, %v3076
      %v3262 = vsel %vm3260, %v3261, %v3076
      %v3263 = vshrl.u32 %v3262, 6
      %v3264 = vand.u32 %v3262, 63
      %v3265 = vsub.s32 0, %v3264
      %v3266 = vsel %vm3260, %v3265, %v3264
      %vm3267 = vcmp.lt.s32.totalorder %v3077, 0
      %v3268 = vsub.s32 0, %v3077
      %v3269 = vsel %vm3267, %v3268, %v3077
      %v3270 = vshrl.u32 %v3269, 6
      %v3271 = vand.u32 %v3269, 63
      %v3272 = vsub.s32 0, %v3271
      %v3273 = vsel %vm3267, %v3272, %v3271
      %vm3274 = vcmp.lt.s32.totalorder %v3078, 0
      %v3275 = vsub.s32 0, %v3078
      %v3276 = vsel %vm3274, %v3275, %v3078
      %v3277 = vshrl.u32 %v3276, 6
      %v3278 = vand.u32 %v3276, 63
      %v3279 = vsub.s32 0, %v3278
      %v3280 = vsel %vm3274, %v3279, %v3278
      %vm3281 = vcmp.lt.s32.totalorder %v3079, 0
      %v3282 = vsub.s32 0, %v3079
      %v3283 = vsel %vm3281, %v3282, %v3079
      %v3284 = vshrl.u32 %v3283, 6
      %v3285 = vand.u32 %v3283, 63
      %v3286 = vsub.s32 0, %v3285
      %v3287 = vsel %vm3281, %v3286, %v3285
      %vm3288 = vcmp.lt.s32.totalorder %v3080, 0
      %v3289 = vsub.s32 0, %v3080
      %v3290 = vsel %vm3288, %v3289, %v3080
      %v3291 = vshrl.u32 %v3290, 6
      %v3292 = vand.u32 %v3290, 63
      %v3293 = vsub.s32 0, %v3292
      %v3294 = vsel %vm3288, %v3293, %v3292
      %vm3295 = vcmp.lt.s32.totalorder %v3081, 0
      %v3296 = vsub.s32 0, %v3081
      %v3297 = vsel %vm3295, %v3296, %v3081
      %v3298 = vshrl.u32 %v3297, 6
      %v3299 = vand.u32 %v3297, 63
      %v3300 = vsub.s32 0, %v3299
      %v3301 = vsel %vm3295, %v3300, %v3299
      %vm3302 = vcmp.lt.s32.totalorder %v3082, 0
      %v3303 = vsub.s32 0, %v3082
      %v3304 = vsel %vm3302, %v3303, %v3082
      %v3305 = vshrl.u32 %v3304, 6
      %v3306 = vand.u32 %v3304, 63
      %v3307 = vsub.s32 0, %v3306
      %v3308 = vsel %vm3302, %v3307, %v3306
      %vm3309 = vcmp.lt.s32.totalorder %v3083, 0
      %v3310 = vsub.s32 0, %v3083
      %v3311 = vsel %vm3309, %v3310, %v3083
      %v3312 = vshrl.u32 %v3311, 6
      %v3313 = vand.u32 %v3311, 63
      %v3314 = vsub.s32 0, %v3313
      %v3315 = vsel %vm3309, %v3314, %v3313
      %vm3316 = vcmp.lt.s32.totalorder %v3084, 0
      %v3317 = vsub.s32 0, %v3084
      %v3318 = vsel %vm3316, %v3317, %v3084
      %v3319 = vshrl.u32 %v3318, 6
      %v3320 = vand.u32 %v3318, 63
      %v3321 = vsub.s32 0, %v3320
      %v3322 = vsel %vm3316, %v3321, %v3320
      %vm3323 = vcmp.lt.s32.totalorder %v3085, 0
      %v3324 = vsub.s32 0, %v3085
      %v3325 = vsel %vm3323, %v3324, %v3085
      %v3326 = vshrl.u32 %v3325, 6
      %v3327 = vand.u32 %v3325, 63
      %v3328 = vsub.s32 0, %v3327
      %v3329 = vsel %vm3323, %v3328, %v3327
      %vm3330 = vcmp.lt.s32.totalorder %v3086, 0
      %v3331 = vsub.s32 0, %v3086
      %v3332 = vsel %vm3330, %v3331, %v3086
      %v3333 = vshrl.u32 %v3332, 6
      %v3334 = vand.u32 %v3332, 63
      %v3335 = vsub.s32 0, %v3334
      %v3336 = vsel %vm3330, %v3335, %v3334
      %vm3337 = vcmp.lt.s32.totalorder %v3087, 0
      %v3338 = vsub.s32 0, %v3087
      %v3339 = vsel %vm3337, %v3338, %v3087
      %v3340 = vshrl.u32 %v3339, 6
      %v3341 = vand.u32 %v3339, 63
      %v3342 = vsub.s32 0, %v3341
      %v3343 = vsel %vm3337, %v3342, %v3341
      %vm3344 = vcmp.lt.s32.totalorder %v3088, 0
      %v3345 = vsub.s32 0, %v3088
      %v3346 = vsel %vm3344, %v3345, %v3088
      %v3347 = vshrl.u32 %v3346, 6
      %v3348 = vand.u32 %v3346, 63
      %v3349 = vsub.s32 0, %v3348
      %v3350 = vsel %vm3344, %v3349, %v3348
      %vm3351 = vcmp.lt.s32.totalorder %v3089, 0
      %v3352 = vsub.s32 0, %v3089
      %v3353 = vsel %vm3351, %v3352, %v3089
      %v3354 = vshrl.u32 %v3353, 6
      %v3355 = vand.u32 %v3353, 63
      %v3356 = vsub.s32 0, %v3355
      %v3357 = vsel %vm3351, %v3356, %v3355
      %vm3358 = vcmp.lt.s32.totalorder %v3090, 0
      %v3359 = vsub.s32 0, %v3090
      %v3360 = vsel %vm3358, %v3359, %v3090
      %v3361 = vshrl.u32 %v3360, 6
      %v3362 = vand.u32 %v3360, 63
      %v3363 = vsub.s32 0, %v3362
      %v3364 = vsel %vm3358, %v3363, %v3362
      %vm3365 = vcmp.lt.s32.totalorder %v3091, 0
      %v3366 = vsub.s32 0, %v3091
      %v3367 = vsel %vm3365, %v3366, %v3091
      %v3368 = vshrl.u32 %v3367, 6
      %v3369 = vand.u32 %v3367, 63
      %v3370 = vsub.s32 0, %v3369
      %v3371 = vsel %vm3365, %v3370, %v3369
      %vm3372 = vcmp.lt.s32.totalorder %v3092, 0
      %v3373 = vsub.s32 0, %v3092
      %v3374 = vsel %vm3372, %v3373, %v3092
      %v3375 = vshrl.u32 %v3374, 6
      %v3376 = vand.u32 %v3374, 63
      %v3377 = vsub.s32 0, %v3376
      %v3378 = vsel %vm3372, %v3377, %v3376
      %vm3379 = vcmp.lt.s32.totalorder %v3093, 0
      %v3380 = vsub.s32 0, %v3093
      %v3381 = vsel %vm3379, %v3380, %v3093
      %v3382 = vshrl.u32 %v3381, 6
      %v3383 = vand.u32 %v3381, 63
      %v3384 = vsub.s32 0, %v3383
      %v3385 = vsel %vm3379, %v3384, %v3383
      %vm3386 = vcmp.lt.s32.totalorder %v3094, 0
      %v3387 = vsub.s32 0, %v3094
      %v3388 = vsel %vm3386, %v3387, %v3094
      %v3389 = vshrl.u32 %v3388, 6
      %v3390 = vand.u32 %v3388, 63
      %v3391 = vsub.s32 0, %v3390
      %v3392 = vsel %vm3386, %v3391, %v3390
      %vm3393 = vcmp.lt.s32.totalorder %v3095, 0
      %v3394 = vsub.s32 0, %v3095
      %v3395 = vsel %vm3393, %v3394, %v3095
      %v3396 = vshrl.u32 %v3395, 6
      %v3397 = vand.u32 %v3395, 63
      %v3398 = vsub.s32 0, %v3397
      %v3399 = vsel %vm3393, %v3398, %v3397
      %vm3400 = vcmp.lt.s32.totalorder %v3096, 0
      %v3401 = vsub.s32 0, %v3096
      %v3402 = vsel %vm3400, %v3401, %v3096
      %v3403 = vshrl.u32 %v3402, 6
      %v3404 = vand.u32 %v3402, 63
      %v3405 = vsub.s32 0, %v3404
      %v3406 = vsel %vm3400, %v3405, %v3404
      %vm3407 = vcmp.lt.s32.totalorder %v3097, 0
      %v3408 = vsub.s32 0, %v3097
      %v3409 = vsel %vm3407, %v3408, %v3097
      %v3410 = vshrl.u32 %v3409, 6
      %v3411 = vand.u32 %v3409, 63
      %v3412 = vsub.s32 0, %v3411
      %v3413 = vsel %vm3407, %v3412, %v3411
      %vm3414 = vcmp.lt.s32.totalorder %v3098, 0
      %v3415 = vsub.s32 0, %v3098
      %v3416 = vsel %vm3414, %v3415, %v3098
      %v3417 = vshrl.u32 %v3416, 6
      %v3418 = vand.u32 %v3416, 63
      %v3419 = vsub.s32 0, %v3418
      %v3420 = vsel %vm3414, %v3419, %v3418
      %vm3421 = vcmp.lt.s32.totalorder %v3099, 0
      %v3422 = vsub.s32 0, %v3099
      %v3423 = vsel %vm3421, %v3422, %v3099
      %v3424 = vshrl.u32 %v3423, 6
      %v3425 = vand.u32 %v3423, 63
      %v3426 = vsub.s32 0, %v3425
      %v3427 = vsel %vm3421, %v3426, %v3425
      %vm3428 = vcmp.lt.s32.totalorder %v3100, 0
      %v3429 = vsub.s32 0, %v3100
      %v3430 = vsel %vm3428, %v3429, %v3100
      %v3431 = vshrl.u32 %v3430, 6
      %v3432 = vand.u32 %v3430, 63
      %v3433 = vsub.s32 0, %v3432
      %v3434 = vsel %vm3428, %v3433, %v3432
      %vm3435 = vcmp.lt.s32.totalorder %v3101, 0
      %v3436 = vsub.s32 0, %v3101
      %v3437 = vsel %vm3435, %v3436, %v3101
      %v3438 = vshrl.u32 %v3437, 6
      %v3439 = vand.u32 %v3437, 63
      %v3440 = vsub.s32 0, %v3439
      %v3441 = vsel %vm3435, %v3440, %v3439
      %vm3442 = vcmp.lt.s32.totalorder %v3102, 0
      %v3443 = vsub.s32 0, %v3102
      %v3444 = vsel %vm3442, %v3443, %v3102
      %v3445 = vshrl.u32 %v3444, 6
      %v3446 = vand.u32 %v3444, 63
      %v3447 = vsub.s32 0, %v3446
      %v3448 = vsel %vm3442, %v3447, %v3446
      %vm3449 = vcmp.lt.s32.totalorder %v3103, 0
      %v3450 = vsub.s32 0, %v3103
      %v3451 = vsel %vm3449, %v3450, %v3103
      %v3452 = vshrl.u32 %v3451, 6
      %v3453 = vand.u32 %v3451, 63
      %v3454 = vsub.s32 0, %v3453
      %v3455 = vsel %vm3449, %v3454, %v3453
      %vm3456 = vcmp.lt.s32.totalorder %v3104, 0
      %v3457 = vsub.s32 0, %v3104
      %v3458 = vsel %vm3456, %v3457, %v3104
      %v3459 = vshrl.u32 %v3458, 6
      %v3460 = vand.u32 %v3458, 63
      %v3461 = vsub.s32 0, %v3460
      %v3462 = vsel %vm3456, %v3461, %v3460
      %vm3463 = vcmp.lt.s32.totalorder %v3105, 0
      %v3464 = vsub.s32 0, %v3105
      %v3465 = vsel %vm3463, %v3464, %v3105
      %v3466 = vshrl.u32 %v3465, 6
      %v3467 = vand.u32 %v3465, 63
      %v3468 = vsub.s32 0, %v3467
      %v3469 = vsel %vm3463, %v3468, %v3467
      %vm3470 = vcmp.lt.s32.totalorder %v3106, 0
      %v3471 = vsub.s32 0, %v3106
      %v3472 = vsel %vm3470, %v3471, %v3106
      %v3473 = vshrl.u32 %v3472, 6
      %v3474 = vand.u32 %v3472, 63
      %v3475 = vsub.s32 0, %v3474
      %v3476 = vsel %vm3470, %v3475, %v3474
      %vm3477 = vcmp.lt.s32.totalorder %v3107, 0
      %v3478 = vsub.s32 0, %v3107
      %v3479 = vsel %vm3477, %v3478, %v3107
      %v3480 = vshrl.u32 %v3479, 6
      %v3481 = vand.u32 %v3479, 63
      %v3482 = vsub.s32 0, %v3481
      %v3483 = vsel %vm3477, %v3482, %v3481
      %vm3484 = vcmp.lt.s32.totalorder %v3108, 0
      %v3485 = vsub.s32 0, %v3108
      %v3486 = vsel %vm3484, %v3485, %v3108
      %v3487 = vshrl.u32 %v3486, 6
      %v3488 = vand.u32 %v3486, 63
      %v3489 = vsub.s32 0, %v3488
      %v3490 = vsel %vm3484, %v3489, %v3488
      %vm3491 = vcmp.lt.s32.totalorder %v3109, 0
      %v3492 = vsub.s32 0, %v3109
      %v3493 = vsel %vm3491, %v3492, %v3109
      %v3494 = vshrl.u32 %v3493, 6
      %v3495 = vand.u32 %v3493, 63
      %v3496 = vsub.s32 0, %v3495
      %v3497 = vsel %vm3491, %v3496, %v3495
      %vm3498 = vcmp.lt.s32.totalorder %v3110, 0
      %v3499 = vsub.s32 0, %v3110
      %v3500 = vsel %vm3498, %v3499, %v3110
      %v3501 = vshrl.u32 %v3500, 6
      %v3502 = vand.u32 %v3500, 63
      %v3503 = vsub.s32 0, %v3502
      %v3504 = vsel %vm3498, %v3503, %v3502
      %vm3505 = vcmp.lt.s32.totalorder %v3111, 0
      %v3506 = vsub.s32 0, %v3111
      %v3507 = vsel %vm3505, %v3506, %v3111
      %v3508 = vshrl.u32 %v3507, 6
      %v3509 = vand.u32 %v3507, 63
      %v3510 = vsub.s32 0, %v3509
      %v3511 = vsel %vm3505, %v3510, %v3509
      %vm3512 = vcmp.lt.s32.totalorder %v3112, 0
      %v3513 = vsub.s32 0, %v3112
      %v3514 = vsel %vm3512, %v3513, %v3112
      %v3515 = vshrl.u32 %v3514, 6
      %v3516 = vand.u32 %v3514, 63
      %v3517 = vsub.s32 0, %v3516
      %v3518 = vsel %vm3512, %v3517, %v3516
      %vm3519 = vcmp.lt.s32.totalorder %v3113, 0
      %v3520 = vsub.s32 0, %v3113
      %v3521 = vsel %vm3519, %v3520, %v3113
      %v3522 = vshrl.u32 %v3521, 6
      %v3523 = vand.u32 %v3521, 63
      %v3524 = vsub.s32 0, %v3523
      %v3525 = vsel %vm3519, %v3524, %v3523
      %vm3526 = vcmp.lt.s32.totalorder %v3114, 0
      %v3527 = vsub.s32 0, %v3114
      %v3528 = vsel %vm3526, %v3527, %v3114
      %v3529 = vshrl.u32 %v3528, 6
      %v3530 = vand.u32 %v3528, 63
      %v3531 = vsub.s32 0, %v3530
      %v3532 = vsel %vm3526, %v3531, %v3530
      %vm3533 = vcmp.lt.s32.totalorder %v3115, 0
      %v3534 = vsub.s32 0, %v3115
      %v3535 = vsel %vm3533, %v3534, %v3115
      %v3536 = vshrl.u32 %v3535, 6
      %v3537 = vand.u32 %v3535, 63
      %v3538 = vsub.s32 0, %v3537
      %v3539 = vsel %vm3533, %v3538, %v3537
      %vm3540 = vcmp.lt.s32.totalorder %v3116, 0
      %v3541 = vsub.s32 0, %v3116
      %v3542 = vsel %vm3540, %v3541, %v3116
      %v3543 = vshrl.u32 %v3542, 6
      %v3544 = vand.u32 %v3542, 63
      %v3545 = vsub.s32 0, %v3544
      %v3546 = vsel %vm3540, %v3545, %v3544
      %vm3547 = vcmp.lt.s32.totalorder %v3117, 0
      %v3548 = vsub.s32 0, %v3117
      %v3549 = vsel %vm3547, %v3548, %v3117
      %v3550 = vshrl.u32 %v3549, 6
      %v3551 = vand.u32 %v3549, 63
      %v3552 = vsub.s32 0, %v3551
      %v3553 = vsel %vm3547, %v3552, %v3551
      %vm3554 = vcmp.lt.s32.totalorder %v3118, 0
      %v3555 = vsub.s32 0, %v3118
      %v3556 = vsel %vm3554, %v3555, %v3118
      %v3557 = vshrl.u32 %v3556, 6
      %v3558 = vand.u32 %v3556, 63
      %v3559 = vsub.s32 0, %v3558
      %v3560 = vsel %vm3554, %v3559, %v3558
      %vm3561 = vcmp.lt.s32.totalorder %v3119, 0
      %v3562 = vsub.s32 0, %v3119
      %v3563 = vsel %vm3561, %v3562, %v3119
      %v3564 = vshrl.u32 %v3563, 6
      %v3565 = vand.u32 %v3563, 63
      %v3566 = vsub.s32 0, %v3565
      %v3567 = vsel %vm3561, %v3566, %v3565
      %vm3568 = vcmp.ne.s32.totalorder %v3126, 0
      %vm3569 = vcmp.ne.s32.totalorder %v3133, 0
      %vm3570 = vcmp.ne.s32.totalorder %v3140, 0
      %vm3571 = vcmp.ne.s32.totalorder %v3147, 0
      %vm3572 = vcmp.ne.s32.totalorder %v3154, 0
      %vm3573 = vcmp.ne.s32.totalorder %v3161, 0
      %vm3574 = vcmp.ne.s32.totalorder %v3168, 0
      %vm3575 = vcmp.ne.s32.totalorder %v3175, 0
      %vm3576 = vcmp.ne.s32.totalorder %v3182, 0
      %vm3577 = vcmp.ne.s32.totalorder %v3189, 0
      %vm3578 = vcmp.ne.s32.totalorder %v3196, 0
      %vm3579 = vcmp.ne.s32.totalorder %v3203, 0
      %vm3580 = vcmp.ne.s32.totalorder %v3210, 0
      %vm3581 = vcmp.ne.s32.totalorder %v3217, 0
      %vm3582 = vcmp.ne.s32.totalorder %v3224, 0
      %vm3583 = vcmp.ne.s32.totalorder %v3231, 0
      %vm3584 = vcmp.ne.s32.totalorder %v3238, 0
      %vm3585 = vcmp.ne.s32.totalorder %v3245, 0
      %vm3586 = vcmp.ne.s32.totalorder %v3252, 0
      %vm3587 = vcmp.ne.s32.totalorder %v3259, 0
      %vm3588 = vcmp.ne.s32.totalorder %v3266, 0
      %vm3589 = vcmp.ne.s32.totalorder %v3273, 0
      %vm3590 = vcmp.ne.s32.totalorder %v3280, 0
      %vm3591 = vcmp.ne.s32.totalorder %v3287, 0
      %vm3592 = vcmp.ne.s32.totalorder %v3294, 0
      %vm3593 = vcmp.ne.s32.totalorder %v3301, 0
      %vm3594 = vcmp.ne.s32.totalorder %v3308, 0
      %vm3595 = vcmp.ne.s32.totalorder %v3315, 0
      %vm3596 = vcmp.ne.s32.totalorder %v3322, 0
      %vm3597 = vcmp.ne.s32.totalorder %v3329, 0
      %vm3598 = vcmp.ne.s32.totalorder %v3336, 0
      %vm3599 = vcmp.ne.s32.totalorder %v3343, 0
      %vm3600 = vcmp.ne.s32.totalorder %v3350, 0
      %vm3601 = vcmp.ne.s32.totalorder %v3357, 0
      %vm3602 = vcmp.ne.s32.totalorder %v3364, 0
      %vm3603 = vcmp.ne.s32.totalorder %v3371, 0
      %vm3604 = vcmp.ne.s32.totalorder %v3378, 0
      %vm3605 = vcmp.ne.s32.totalorder %v3385, 0
      %vm3606 = vcmp.ne.s32.totalorder %v3392, 0
      %vm3607 = vcmp.ne.s32.totalorder %v3399, 0
      %vm3608 = vcmp.ne.s32.totalorder %v3406, 0
      %vm3609 = vcmp.ne.s32.totalorder %v3413, 0
      %vm3610 = vcmp.ne.s32.totalorder %v3420, 0
      %vm3611 = vcmp.ne.s32.totalorder %v3427, 0
      %vm3612 = vcmp.ne.s32.totalorder %v3434, 0
      %vm3613 = vcmp.ne.s32.totalorder %v3441, 0
      %vm3614 = vcmp.ne.s32.totalorder %v3448, 0
      %vm3615 = vcmp.ne.s32.totalorder %v3455, 0
      %vm3616 = vcmp.ne.s32.totalorder %v3462, 0
      %vm3617 = vcmp.ne.s32.totalorder %v3469, 0
      %vm3618 = vcmp.ne.s32.totalorder %v3476, 0
      %vm3619 = vcmp.ne.s32.totalorder %v3483, 0
      %vm3620 = vcmp.ne.s32.totalorder %v3490, 0
      %vm3621 = vcmp.ne.s32.totalorder %v3497, 0
      %vm3622 = vcmp.ne.s32.totalorder %v3504, 0
      %vm3623 = vcmp.ne.s32.totalorder %v3511, 0
      %vm3624 = vcmp.ne.s32.totalorder %v3518, 0
      %vm3625 = vcmp.ne.s32.totalorder %v3525, 0
      %vm3626 = vcmp.ne.s32.totalorder %v3532, 0
      %vm3627 = vcmp.ne.s32.totalorder %v3539, 0
      %vm3628 = vcmp.ne.s32.totalorder %v3546, 0
      %vm3629 = vcmp.ne.s32.totalorder %v3553, 0
      %vm3630 = vcmp.ne.s32.totalorder %v3560, 0
      %vm3631 = vcmp.ne.s32.totalorder %v3567, 0
      %vm3632 = vcmp.lt.s32.totalorder %v3126, 0
      %vm3633 = vcmp.lt.s32.totalorder %v3133, 0
      %vm3634 = vcmp.lt.s32.totalorder %v3140, 0
      %vm3635 = vcmp.lt.s32.totalorder %v3147, 0
      %vm3636 = vcmp.lt.s32.totalorder %v3154, 0
      %vm3637 = vcmp.lt.s32.totalorder %v3161, 0
      %vm3638 = vcmp.lt.s32.totalorder %v3168, 0
      %vm3639 = vcmp.lt.s32.totalorder %v3175, 0
      %vm3640 = vcmp.lt.s32.totalorder %v3182, 0
      %vm3641 = vcmp.lt.s32.totalorder %v3189, 0
      %vm3642 = vcmp.lt.s32.totalorder %v3196, 0
      %vm3643 = vcmp.lt.s32.totalorder %v3203, 0
      %vm3644 = vcmp.lt.s32.totalorder %v3210, 0
      %vm3645 = vcmp.lt.s32.totalorder %v3217, 0
      %vm3646 = vcmp.lt.s32.totalorder %v3224, 0
      %vm3647 = vcmp.lt.s32.totalorder %v3231, 0
      %vm3648 = vcmp.lt.s32.totalorder %v3238, 0
      %vm3649 = vcmp.lt.s32.totalorder %v3245, 0
      %vm3650 = vcmp.lt.s32.totalorder %v3252, 0
      %vm3651 = vcmp.lt.s32.totalorder %v3259, 0
      %vm3652 = vcmp.lt.s32.totalorder %v3266, 0
      %vm3653 = vcmp.lt.s32.totalorder %v3273, 0
      %vm3654 = vcmp.lt.s32.totalorder %v3280, 0
      %vm3655 = vcmp.lt.s32.totalorder %v3287, 0
      %vm3656 = vcmp.lt.s32.totalorder %v3294, 0
      %vm3657 = vcmp.lt.s32.totalorder %v3301, 0
      %vm3658 = vcmp.lt.s32.totalorder %v3308, 0
      %vm3659 = vcmp.lt.s32.totalorder %v3315, 0
      %vm3660 = vcmp.lt.s32.totalorder %v3322, 0
      %vm3661 = vcmp.lt.s32.totalorder %v3329, 0
      %vm3662 = vcmp.lt.s32.totalorder %v3336, 0
      %vm3663 = vcmp.lt.s32.totalorder %v3343, 0
      %vm3664 = vcmp.lt.s32.totalorder %v3350, 0
      %vm3665 = vcmp.lt.s32.totalorder %v3357, 0
      %vm3666 = vcmp.lt.s32.totalorder %v3364, 0
      %vm3667 = vcmp.lt.s32.totalorder %v3371, 0
      %vm3668 = vcmp.lt.s32.totalorder %v3378, 0
      %vm3669 = vcmp.lt.s32.totalorder %v3385, 0
      %vm3670 = vcmp.lt.s32.totalorder %v3392, 0
      %vm3671 = vcmp.lt.s32.totalorder %v3399, 0
      %vm3672 = vcmp.lt.s32.totalorder %v3406, 0
      %vm3673 = vcmp.lt.s32.totalorder %v3413, 0
      %vm3674 = vcmp.lt.s32.totalorder %v3420, 0
      %vm3675 = vcmp.lt.s32.totalorder %v3427, 0
      %vm3676 = vcmp.lt.s32.totalorder %v3434, 0
      %vm3677 = vcmp.lt.s32.totalorder %v3441, 0
      %vm3678 = vcmp.lt.s32.totalorder %v3448, 0
      %vm3679 = vcmp.lt.s32.totalorder %v3455, 0
      %vm3680 = vcmp.lt.s32.totalorder %v3462, 0
      %vm3681 = vcmp.lt.s32.totalorder %v3469, 0
      %vm3682 = vcmp.lt.s32.totalorder %v3476, 0
      %vm3683 = vcmp.lt.s32.totalorder %v3483, 0
      %vm3684 = vcmp.lt.s32.totalorder %v3490, 0
      %vm3685 = vcmp.lt.s32.totalorder %v3497, 0
      %vm3686 = vcmp.lt.s32.totalorder %v3504, 0
      %vm3687 = vcmp.lt.s32.totalorder %v3511, 0
      %vm3688 = vcmp.lt.s32.totalorder %v3518, 0
      %vm3689 = vcmp.lt.s32.totalorder %v3525, 0
      %vm3690 = vcmp.lt.s32.totalorder %v3532, 0
      %vm3691 = vcmp.lt.s32.totalorder %v3539, 0
      %vm3692 = vcmp.lt.s32.totalorder %v3546, 0
      %vm3693 = vcmp.lt.s32.totalorder %v3553, 0
      %vm3694 = vcmp.lt.s32.totalorder %v3560, 0
      %vm3695 = vcmp.lt.s32.totalorder %v3567, 0
      %vm3696 = vmand %vm3632, %vm3568
      %vm3697 = vmand %vm3633, %vm3569
      %vm3698 = vmand %vm3634, %vm3570
      %vm3699 = vmand %vm3635, %vm3571
      %vm3700 = vmand %vm3636, %vm3572
      %vm3701 = vmand %vm3637, %vm3573
      %vm3702 = vmand %vm3638, %vm3574
      %vm3703 = vmand %vm3639, %vm3575
      %vm3704 = vmand %vm3640, %vm3576
      %vm3705 = vmand %vm3641, %vm3577
      %vm3706 = vmand %vm3642, %vm3578
      %vm3707 = vmand %vm3643, %vm3579
      %vm3708 = vmand %vm3644, %vm3580
      %vm3709 = vmand %vm3645, %vm3581
      %vm3710 = vmand %vm3646, %vm3582
      %vm3711 = vmand %vm3647, %vm3583
      %vm3712 = vmand %vm3648, %vm3584
      %vm3713 = vmand %vm3649, %vm3585
      %vm3714 = vmand %vm3650, %vm3586
      %vm3715 = vmand %vm3651, %vm3587
      %vm3716 = vmand %vm3652, %vm3588
      %vm3717 = vmand %vm3653, %vm3589
      %vm3718 = vmand %vm3654, %vm3590
      %vm3719 = vmand %vm3655, %vm3591
      %vm3720 = vmand %vm3656, %vm3592
      %vm3721 = vmand %vm3657, %vm3593
      %vm3722 = vmand %vm3658, %vm3594
      %vm3723 = vmand %vm3659, %vm3595
      %vm3724 = vmand %vm3660, %vm3596
      %vm3725 = vmand %vm3661, %vm3597
      %vm3726 = vmand %vm3662, %vm3598
      %vm3727 = vmand %vm3663, %vm3599
      %vm3728 = vmand %vm3664, %vm3600
      %vm3729 = vmand %vm3665, %vm3601
      %vm3730 = vmand %vm3666, %vm3602
      %vm3731 = vmand %vm3667, %vm3603
      %vm3732 = vmand %vm3668, %vm3604
      %vm3733 = vmand %vm3669, %vm3605
      %vm3734 = vmand %vm3670, %vm3606
      %vm3735 = vmand %vm3671, %vm3607
      %vm3736 = vmand %vm3672, %vm3608
      %vm3737 = vmand %vm3673, %vm3609
      %vm3738 = vmand %vm3674, %vm3610
      %vm3739 = vmand %vm3675, %vm3611
      %vm3740 = vmand %vm3676, %vm3612
      %vm3741 = vmand %vm3677, %vm3613
      %vm3742 = vmand %vm3678, %vm3614
      %vm3743 = vmand %vm3679, %vm3615
      %vm3744 = vmand %vm3680, %vm3616
      %vm3745 = vmand %vm3681, %vm3617
      %vm3746 = vmand %vm3682, %vm3618
      %vm3747 = vmand %vm3683, %vm3619
      %vm3748 = vmand %vm3684, %vm3620
      %vm3749 = vmand %vm3685, %vm3621
      %vm3750 = vmand %vm3686, %vm3622
      %vm3751 = vmand %vm3687, %vm3623
      %vm3752 = vmand %vm3688, %vm3624
      %vm3753 = vmand %vm3689, %vm3625
      %vm3754 = vmand %vm3690, %vm3626
      %vm3755 = vmand %vm3691, %vm3627
      %vm3756 = vmand %vm3692, %vm3628
      %vm3757 = vmand %vm3693, %vm3629
      %vm3758 = vmand %vm3694, %vm3630
      %vm3759 = vmand %vm3695, %vm3631
      %v3760 = vadd.s32 %v3126, 64
      %v3761 = vadd.s32 %v3133, 64
      %v3762 = vadd.s32 %v3140, 64
      %v3763 = vadd.s32 %v3147, 64
      %v3764 = vadd.s32 %v3154, 64
      %v3765 = vadd.s32 %v3161, 64
      %v3766 = vadd.s32 %v3168, 64
      %v3767 = vadd.s32 %v3175, 64
      %v3768 = vadd.s32 %v3182, 64
      %v3769 = vadd.s32 %v3189, 64
      %v3770 = vadd.s32 %v3196, 64
      %v3771 = vadd.s32 %v3203, 64
      %v3772 = vadd.s32 %v3210, 64
      %v3773 = vadd.s32 %v3217, 64
      %v3774 = vadd.s32 %v3224, 64
      %v3775 = vadd.s32 %v3231, 64
      %v3776 = vadd.s32 %v3238, 64
      %v3777 = vadd.s32 %v3245, 64
      %v3778 = vadd.s32 %v3252, 64
      %v3779 = vadd.s32 %v3259, 64
      %v3780 = vadd.s32 %v3266, 64
      %v3781 = vadd.s32 %v3273, 64
      %v3782 = vadd.s32 %v3280, 64
      %v3783 = vadd.s32 %v3287, 64
      %v3784 = vadd.s32 %v3294, 64
      %v3785 = vadd.s32 %v3301, 64
      %v3786 = vadd.s32 %v3308, 64
      %v3787 = vadd.s32 %v3315, 64
      %v3788 = vadd.s32 %v3322, 64
      %v3789 = vadd.s32 %v3329, 64
      %v3790 = vadd.s32 %v3336, 64
      %v3791 = vadd.s32 %v3343, 64
      %v3792 = vadd.s32 %v3350, 64
      %v3793 = vadd.s32 %v3357, 64
      %v3794 = vadd.s32 %v3364, 64
      %v3795 = vadd.s32 %v3371, 64
      %v3796 = vadd.s32 %v3378, 64
      %v3797 = vadd.s32 %v3385, 64
      %v3798 = vadd.s32 %v3392, 64
      %v3799 = vadd.s32 %v3399, 64
      %v3800 = vadd.s32 %v3406, 64
      %v3801 = vadd.s32 %v3413, 64
      %v3802 = vadd.s32 %v3420, 64
      %v3803 = vadd.s32 %v3427, 64
      %v3804 = vadd.s32 %v3434, 64
      %v3805 = vadd.s32 %v3441, 64
      %v3806 = vadd.s32 %v3448, 64
      %v3807 = vadd.s32 %v3455, 64
      %v3808 = vadd.s32 %v3462, 64
      %v3809 = vadd.s32 %v3469, 64
      %v3810 = vadd.s32 %v3476, 64
      %v3811 = vadd.s32 %v3483, 64
      %v3812 = vadd.s32 %v3490, 64
      %v3813 = vadd.s32 %v3497, 64
      %v3814 = vadd.s32 %v3504, 64
      %v3815 = vadd.s32 %v3511, 64
      %v3816 = vadd.s32 %v3518, 64
      %v3817 = vadd.s32 %v3525, 64
      %v3818 = vadd.s32 %v3532, 64
      %v3819 = vadd.s32 %v3539, 64
      %v3820 = vadd.s32 %v3546, 64
      %v3821 = vadd.s32 %v3553, 64
      %v3822 = vadd.s32 %v3560, 64
      %v3823 = vadd.s32 %v3567, 64
      %v3824 = vsel %vm3696, %v3760, %v3126
      %v3825 = vsel %vm3697, %v3761, %v3133
      %v3826 = vsel %vm3698, %v3762, %v3140
      %v3827 = vsel %vm3699, %v3763, %v3147
      %v3828 = vsel %vm3700, %v3764, %v3154
      %v3829 = vsel %vm3701, %v3765, %v3161
      %v3830 = vsel %vm3702, %v3766, %v3168
      %v3831 = vsel %vm3703, %v3767, %v3175
      %v3832 = vsel %vm3704, %v3768, %v3182
      %v3833 = vsel %vm3705, %v3769, %v3189
      %v3834 = vsel %vm3706, %v3770, %v3196
      %v3835 = vsel %vm3707, %v3771, %v3203
      %v3836 = vsel %vm3708, %v3772, %v3210
      %v3837 = vsel %vm3709, %v3773, %v3217
      %v3838 = vsel %vm3710, %v3774, %v3224
      %v3839 = vsel %vm3711, %v3775, %v3231
      %v3840 = vsel %vm3712, %v3776, %v3238
      %v3841 = vsel %vm3713, %v3777, %v3245
      %v3842 = vsel %vm3714, %v3778, %v3252
      %v3843 = vsel %vm3715, %v3779, %v3259
      %v3844 = vsel %vm3716, %v3780, %v3266
      %v3845 = vsel %vm3717, %v3781, %v3273
      %v3846 = vsel %vm3718, %v3782, %v3280
      %v3847 = vsel %vm3719, %v3783, %v3287
      %v3848 = vsel %vm3720, %v3784, %v3294
      %v3849 = vsel %vm3721, %v3785, %v3301
      %v3850 = vsel %vm3722, %v3786, %v3308
      %v3851 = vsel %vm3723, %v3787, %v3315
      %v3852 = vsel %vm3724, %v3788, %v3322
      %v3853 = vsel %vm3725, %v3789, %v3329
      %v3854 = vsel %vm3726, %v3790, %v3336
      %v3855 = vsel %vm3727, %v3791, %v3343
      %v3856 = vsel %vm3728, %v3792, %v3350
      %v3857 = vsel %vm3729, %v3793, %v3357
      %v3858 = vsel %vm3730, %v3794, %v3364
      %v3859 = vsel %vm3731, %v3795, %v3371
      %v3860 = vsel %vm3732, %v3796, %v3378
      %v3861 = vsel %vm3733, %v3797, %v3385
      %v3862 = vsel %vm3734, %v3798, %v3392
      %v3863 = vsel %vm3735, %v3799, %v3399
      %v3864 = vsel %vm3736, %v3800, %v3406
      %v3865 = vsel %vm3737, %v3801, %v3413
      %v3866 = vsel %vm3738, %v3802, %v3420
      %v3867 = vsel %vm3739, %v3803, %v3427
      %v3868 = vsel %vm3740, %v3804, %v3434
      %v3869 = vsel %vm3741, %v3805, %v3441
      %v3870 = vsel %vm3742, %v3806, %v3448
      %v3871 = vsel %vm3743, %v3807, %v3455
      %v3872 = vsel %vm3744, %v3808, %v3462
      %v3873 = vsel %vm3745, %v3809, %v3469
      %v3874 = vsel %vm3746, %v3810, %v3476
      %v3875 = vsel %vm3747, %v3811, %v3483
      %v3876 = vsel %vm3748, %v3812, %v3490
      %v3877 = vsel %vm3749, %v3813, %v3497
      %v3878 = vsel %vm3750, %v3814, %v3504
      %v3879 = vsel %vm3751, %v3815, %v3511
      %v3880 = vsel %vm3752, %v3816, %v3518
      %v3881 = vsel %vm3753, %v3817, %v3525
      %v3882 = vsel %vm3754, %v3818, %v3532
      %v3883 = vsel %vm3755, %v3819, %v3539
      %v3884 = vsel %vm3756, %v3820, %v3546
      %v3885 = vsel %vm3757, %v3821, %v3553
      %v3886 = vsel %vm3758, %v3822, %v3560
      %v3887 = vsel %vm3759, %v3823, %v3567
      %vm3888 = vcmp.ge.s32.totalorder %v3824, 8
      %vm3889 = vcmp.ge.s32.totalorder %v3825, 8
      %vm3890 = vcmp.ge.s32.totalorder %v3826, 8
      %vm3891 = vcmp.ge.s32.totalorder %v3827, 8
      %vm3892 = vcmp.ge.s32.totalorder %v3828, 8
      %vm3893 = vcmp.ge.s32.totalorder %v3829, 8
      %vm3894 = vcmp.ge.s32.totalorder %v3830, 8
      %vm3895 = vcmp.ge.s32.totalorder %v3831, 8
      %vm3896 = vcmp.ge.s32.totalorder %v3832, 8
      %vm3897 = vcmp.ge.s32.totalorder %v3833, 8
      %vm3898 = vcmp.ge.s32.totalorder %v3834, 8
      %vm3899 = vcmp.ge.s32.totalorder %v3835, 8
      %vm3900 = vcmp.ge.s32.totalorder %v3836, 8
      %vm3901 = vcmp.ge.s32.totalorder %v3837, 8
      %vm3902 = vcmp.ge.s32.totalorder %v3838, 8
      %vm3903 = vcmp.ge.s32.totalorder %v3839, 8
      %vm3904 = vcmp.ge.s32.totalorder %v3840, 8
      %vm3905 = vcmp.ge.s32.totalorder %v3841, 8
      %vm3906 = vcmp.ge.s32.totalorder %v3842, 8
      %vm3907 = vcmp.ge.s32.totalorder %v3843, 8
      %vm3908 = vcmp.ge.s32.totalorder %v3844, 8
      %vm3909 = vcmp.ge.s32.totalorder %v3845, 8
      %vm3910 = vcmp.ge.s32.totalorder %v3846, 8
      %vm3911 = vcmp.ge.s32.totalorder %v3847, 8
      %vm3912 = vcmp.ge.s32.totalorder %v3848, 8
      %vm3913 = vcmp.ge.s32.totalorder %v3849, 8
      %vm3914 = vcmp.ge.s32.totalorder %v3850, 8
      %vm3915 = vcmp.ge.s32.totalorder %v3851, 8
      %vm3916 = vcmp.ge.s32.totalorder %v3852, 8
      %vm3917 = vcmp.ge.s32.totalorder %v3853, 8
      %vm3918 = vcmp.ge.s32.totalorder %v3854, 8
      %vm3919 = vcmp.ge.s32.totalorder %v3855, 8
      %vm3920 = vcmp.ge.s32.totalorder %v3856, 8
      %vm3921 = vcmp.ge.s32.totalorder %v3857, 8
      %vm3922 = vcmp.ge.s32.totalorder %v3858, 8
      %vm3923 = vcmp.ge.s32.totalorder %v3859, 8
      %vm3924 = vcmp.ge.s32.totalorder %v3860, 8
      %vm3925 = vcmp.ge.s32.totalorder %v3861, 8
      %vm3926 = vcmp.ge.s32.totalorder %v3862, 8
      %vm3927 = vcmp.ge.s32.totalorder %v3863, 8
      %vm3928 = vcmp.ge.s32.totalorder %v3864, 8
      %vm3929 = vcmp.ge.s32.totalorder %v3865, 8
      %vm3930 = vcmp.ge.s32.totalorder %v3866, 8
      %vm3931 = vcmp.ge.s32.totalorder %v3867, 8
      %vm3932 = vcmp.ge.s32.totalorder %v3868, 8
      %vm3933 = vcmp.ge.s32.totalorder %v3869, 8
      %vm3934 = vcmp.ge.s32.totalorder %v3870, 8
      %vm3935 = vcmp.ge.s32.totalorder %v3871, 8
      %vm3936 = vcmp.ge.s32.totalorder %v3872, 8
      %vm3937 = vcmp.ge.s32.totalorder %v3873, 8
      %vm3938 = vcmp.ge.s32.totalorder %v3874, 8
      %vm3939 = vcmp.ge.s32.totalorder %v3875, 8
      %vm3940 = vcmp.ge.s32.totalorder %v3876, 8
      %vm3941 = vcmp.ge.s32.totalorder %v3877, 8
      %vm3942 = vcmp.ge.s32.totalorder %v3878, 8
      %vm3943 = vcmp.ge.s32.totalorder %v3879, 8
      %vm3944 = vcmp.ge.s32.totalorder %v3880, 8
      %vm3945 = vcmp.ge.s32.totalorder %v3881, 8
      %vm3946 = vcmp.ge.s32.totalorder %v3882, 8
      %vm3947 = vcmp.ge.s32.totalorder %v3883, 8
      %vm3948 = vcmp.ge.s32.totalorder %v3884, 8
      %vm3949 = vcmp.ge.s32.totalorder %v3885, 8
      %vm3950 = vcmp.ge.s32.totalorder %v3886, 8
      %vm3951 = vcmp.ge.s32.totalorder %v3887, 8
      %v3952 = vsel %vm3888, 1, 0
      %v3953 = vsel %vm3889, 1, 0
      %v3954 = vsel %vm3890, 1, 0
      %v3955 = vsel %vm3891, 1, 0
      %v3956 = vsel %vm3892, 1, 0
      %v3957 = vsel %vm3893, 1, 0
      %v3958 = vsel %vm3894, 1, 0
      %v3959 = vsel %vm3895, 1, 0
      %v3960 = vsel %vm3896, 1, 0
      %v3961 = vsel %vm3897, 1, 0
      %v3962 = vsel %vm3898, 1, 0
      %v3963 = vsel %vm3899, 1, 0
      %v3964 = vsel %vm3900, 1, 0
      %v3965 = vsel %vm3901, 1, 0
      %v3966 = vsel %vm3902, 1, 0
      %v3967 = vsel %vm3903, 1, 0
      %v3968 = vsel %vm3904, 1, 0
      %v3969 = vsel %vm3905, 1, 0
      %v3970 = vsel %vm3906, 1, 0
      %v3971 = vsel %vm3907, 1, 0
      %v3972 = vsel %vm3908, 1, 0
      %v3973 = vsel %vm3909, 1, 0
      %v3974 = vsel %vm3910, 1, 0
      %v3975 = vsel %vm3911, 1, 0
      %v3976 = vsel %vm3912, 1, 0
      %v3977 = vsel %vm3913, 1, 0
      %v3978 = vsel %vm3914, 1, 0
      %v3979 = vsel %vm3915, 1, 0
      %v3980 = vsel %vm3916, 1, 0
      %v3981 = vsel %vm3917, 1, 0
      %v3982 = vsel %vm3918, 1, 0
      %v3983 = vsel %vm3919, 1, 0
      %v3984 = vsel %vm3920, 1, 0
      %v3985 = vsel %vm3921, 1, 0
      %v3986 = vsel %vm3922, 1, 0
      %v3987 = vsel %vm3923, 1, 0
      %v3988 = vsel %vm3924, 1, 0
      %v3989 = vsel %vm3925, 1, 0
      %v3990 = vsel %vm3926, 1, 0
      %v3991 = vsel %vm3927, 1, 0
      %v3992 = vsel %vm3928, 1, 0
      %v3993 = vsel %vm3929, 1, 0
      %v3994 = vsel %vm3930, 1, 0
      %v3995 = vsel %vm3931, 1, 0
      %v3996 = vsel %vm3932, 1, 0
      %v3997 = vsel %vm3933, 1, 0
      %v3998 = vsel %vm3934, 1, 0
      %v3999 = vsel %vm3935, 1, 0
      %v4000 = vsel %vm3936, 1, 0
      %v4001 = vsel %vm3937, 1, 0
      %v4002 = vsel %vm3938, 1, 0
      %v4003 = vsel %vm3939, 1, 0
      %v4004 = vsel %vm3940, 1, 0
      %v4005 = vsel %vm3941, 1, 0
      %v4006 = vsel %vm3942, 1, 0
      %v4007 = vsel %vm3943, 1, 0
      %v4008 = vsel %vm3944, 1, 0
      %v4009 = vsel %vm3945, 1, 0
      %v4010 = vsel %vm3946, 1, 0
      %v4011 = vsel %vm3947, 1, 0
      %v4012 = vsel %vm3948, 1, 0
      %v4013 = vsel %vm3949, 1, 0
      %v4014 = vsel %vm3950, 1, 0
      %v4015 = vsel %vm3951, 1, 0
      %v4016 = vcvt.s32.f32 %v3952
      %v4017 = vcvt.s32.f32 %v3953
      %v4018 = vcvt.s32.f32 %v3954
      %v4019 = vcvt.s32.f32 %v3955
      %v4020 = vcvt.s32.f32 %v3956
      %v4021 = vcvt.s32.f32 %v3957
      %v4022 = vcvt.s32.f32 %v3958
      %v4023 = vcvt.s32.f32 %v3959
      %v4024 = vcvt.s32.f32 %v3960
      %v4025 = vcvt.s32.f32 %v3961
      %v4026 = vcvt.s32.f32 %v3962
      %v4027 = vcvt.s32.f32 %v3963
      %v4028 = vcvt.s32.f32 %v3964
      %v4029 = vcvt.s32.f32 %v3965
      %v4030 = vcvt.s32.f32 %v3966
      %v4031 = vcvt.s32.f32 %v3967
      %v4032 = vcvt.s32.f32 %v3968
      %v4033 = vcvt.s32.f32 %v3969
      %v4034 = vcvt.s32.f32 %v3970
      %v4035 = vcvt.s32.f32 %v3971
      %v4036 = vcvt.s32.f32 %v3972
      %v4037 = vcvt.s32.f32 %v3973
      %v4038 = vcvt.s32.f32 %v3974
      %v4039 = vcvt.s32.f32 %v3975
      %v4040 = vcvt.s32.f32 %v3976
      %v4041 = vcvt.s32.f32 %v3977
      %v4042 = vcvt.s32.f32 %v3978
      %v4043 = vcvt.s32.f32 %v3979
      %v4044 = vcvt.s32.f32 %v3980
      %v4045 = vcvt.s32.f32 %v3981
      %v4046 = vcvt.s32.f32 %v3982
      %v4047 = vcvt.s32.f32 %v3983
      %v4048 = vcvt.s32.f32 %v3984
      %v4049 = vcvt.s32.f32 %v3985
      %v4050 = vcvt.s32.f32 %v3986
      %v4051 = vcvt.s32.f32 %v3987
      %v4052 = vcvt.s32.f32 %v3988
      %v4053 = vcvt.s32.f32 %v3989
      %v4054 = vcvt.s32.f32 %v3990
      %v4055 = vcvt.s32.f32 %v3991
      %v4056 = vcvt.s32.f32 %v3992
      %v4057 = vcvt.s32.f32 %v3993
      %v4058 = vcvt.s32.f32 %v3994
      %v4059 = vcvt.s32.f32 %v3995
      %v4060 = vcvt.s32.f32 %v3996
      %v4061 = vcvt.s32.f32 %v3997
      %v4062 = vcvt.s32.f32 %v3998
      %v4063 = vcvt.s32.f32 %v3999
      %v4064 = vcvt.s32.f32 %v4000
      %v4065 = vcvt.s32.f32 %v4001
      %v4066 = vcvt.s32.f32 %v4002
      %v4067 = vcvt.s32.f32 %v4003
      %v4068 = vcvt.s32.f32 %v4004
      %v4069 = vcvt.s32.f32 %v4005
      %v4070 = vcvt.s32.f32 %v4006
      %v4071 = vcvt.s32.f32 %v4007
      %v4072 = vcvt.s32.f32 %v4008
      %v4073 = vcvt.s32.f32 %v4009
      %v4074 = vcvt.s32.f32 %v4010
      %v4075 = vcvt.s32.f32 %v4011
      %v4076 = vcvt.s32.f32 %v4012
      %v4077 = vcvt.s32.f32 %v4013
      %v4078 = vcvt.s32.f32 %v4014
      %v4079 = vcvt.s32.f32 %v4015
      %v4080 = vpack.c.bf16 %v4017, %v4016
      %v4081 = vpack.c.bf16 %v4019, %v4018
      %v4082 = vpack.c.bf16 %v4021, %v4020
      %v4083 = vpack.c.bf16 %v4023, %v4022
      %v4084 = vpack.c.bf16 %v4025, %v4024
      %v4085 = vpack.c.bf16 %v4027, %v4026
      %v4086 = vpack.c.bf16 %v4029, %v4028
      %v4087 = vpack.c.bf16 %v4031, %v4030
      %v4088 = vpack.c.bf16 %v4033, %v4032
      %v4089 = vpack.c.bf16 %v4035, %v4034
      %v4090 = vpack.c.bf16 %v4037, %v4036
      %v4091 = vpack.c.bf16 %v4039, %v4038
      %v4092 = vpack.c.bf16 %v4041, %v4040
      %v4093 = vpack.c.bf16 %v4043, %v4042
      %v4094 = vpack.c.bf16 %v4045, %v4044
      %v4095 = vpack.c.bf16 %v4047, %v4046
      %v4096 = vpack.c.bf16 %v4049, %v4048
      %v4097 = vpack.c.bf16 %v4051, %v4050
      %v4098 = vpack.c.bf16 %v4053, %v4052
      %v4099 = vpack.c.bf16 %v4055, %v4054
      %v4100 = vpack.c.bf16 %v4057, %v4056
      %v4101 = vpack.c.bf16 %v4059, %v4058
      %v4102 = vpack.c.bf16 %v4061, %v4060
      %v4103 = vpack.c.bf16 %v4063, %v4062
      %v4104 = vpack.c.bf16 %v4065, %v4064
      %v4105 = vpack.c.bf16 %v4067, %v4066
      %v4106 = vpack.c.bf16 %v4069, %v4068
      %v4107 = vpack.c.bf16 %v4071, %v4070
      %v4108 = vpack.c.bf16 %v4073, %v4072
      %v4109 = vpack.c.bf16 %v4075, %v4074
      %v4110 = vpack.c.bf16 %v4077, %v4076
      %v4111 = vpack.c.bf16 %v4079, %v4078
      %vm4112 = vcmp.lt.s32.totalorder %v3056, 0
      %v4113 = vsub.s32 0, %v3056
      %v4114 = vsel %vm4112, %v4113, %v3056
      %v4115 = vshrl.u32 %v4114, 3
      %v4116 = vand.u32 %v4114, 7
      %v4117 = vsub.s32 0, %v4116
      %v4118 = vsel %vm4112, %v4117, %v4116
      %vm4119 = vcmp.lt.s32.totalorder %v3057, 0
      %v4120 = vsub.s32 0, %v3057
      %v4121 = vsel %vm4119, %v4120, %v3057
      %v4122 = vshrl.u32 %v4121, 3
      %v4123 = vand.u32 %v4121, 7
      %v4124 = vsub.s32 0, %v4123
      %v4125 = vsel %vm4119, %v4124, %v4123
      %vm4126 = vcmp.lt.s32.totalorder %v3058, 0
      %v4127 = vsub.s32 0, %v3058
      %v4128 = vsel %vm4126, %v4127, %v3058
      %v4129 = vshrl.u32 %v4128, 3
      %v4130 = vand.u32 %v4128, 7
      %v4131 = vsub.s32 0, %v4130
      %v4132 = vsel %vm4126, %v4131, %v4130
      %vm4133 = vcmp.lt.s32.totalorder %v3059, 0
      %v4134 = vsub.s32 0, %v3059
      %v4135 = vsel %vm4133, %v4134, %v3059
      %v4136 = vshrl.u32 %v4135, 3
      %v4137 = vand.u32 %v4135, 7
      %v4138 = vsub.s32 0, %v4137
      %v4139 = vsel %vm4133, %v4138, %v4137
      %vm4140 = vcmp.lt.s32.totalorder %v3060, 0
      %v4141 = vsub.s32 0, %v3060
      %v4142 = vsel %vm4140, %v4141, %v3060
      %v4143 = vshrl.u32 %v4142, 3
      %v4144 = vand.u32 %v4142, 7
      %v4145 = vsub.s32 0, %v4144
      %v4146 = vsel %vm4140, %v4145, %v4144
      %vm4147 = vcmp.lt.s32.totalorder %v3061, 0
      %v4148 = vsub.s32 0, %v3061
      %v4149 = vsel %vm4147, %v4148, %v3061
      %v4150 = vshrl.u32 %v4149, 3
      %v4151 = vand.u32 %v4149, 7
      %v4152 = vsub.s32 0, %v4151
      %v4153 = vsel %vm4147, %v4152, %v4151
      %vm4154 = vcmp.lt.s32.totalorder %v3062, 0
      %v4155 = vsub.s32 0, %v3062
      %v4156 = vsel %vm4154, %v4155, %v3062
      %v4157 = vshrl.u32 %v4156, 3
      %v4158 = vand.u32 %v4156, 7
      %v4159 = vsub.s32 0, %v4158
      %v4160 = vsel %vm4154, %v4159, %v4158
      %vm4161 = vcmp.lt.s32.totalorder %v3063, 0
      %v4162 = vsub.s32 0, %v3063
      %v4163 = vsel %vm4161, %v4162, %v3063
      %v4164 = vshrl.u32 %v4163, 3
      %v4165 = vand.u32 %v4163, 7
      %v4166 = vsub.s32 0, %v4165
      %v4167 = vsel %vm4161, %v4166, %v4165
      %vm4168 = vcmp.lt.s32.totalorder %v3064, 0
      %v4169 = vsub.s32 0, %v3064
      %v4170 = vsel %vm4168, %v4169, %v3064
      %v4171 = vshrl.u32 %v4170, 3
      %v4172 = vand.u32 %v4170, 7
      %v4173 = vsub.s32 0, %v4172
      %v4174 = vsel %vm4168, %v4173, %v4172
      %vm4175 = vcmp.lt.s32.totalorder %v3065, 0
      %v4176 = vsub.s32 0, %v3065
      %v4177 = vsel %vm4175, %v4176, %v3065
      %v4178 = vshrl.u32 %v4177, 3
      %v4179 = vand.u32 %v4177, 7
      %v4180 = vsub.s32 0, %v4179
      %v4181 = vsel %vm4175, %v4180, %v4179
      %vm4182 = vcmp.lt.s32.totalorder %v3066, 0
      %v4183 = vsub.s32 0, %v3066
      %v4184 = vsel %vm4182, %v4183, %v3066
      %v4185 = vshrl.u32 %v4184, 3
      %v4186 = vand.u32 %v4184, 7
      %v4187 = vsub.s32 0, %v4186
      %v4188 = vsel %vm4182, %v4187, %v4186
      %vm4189 = vcmp.lt.s32.totalorder %v3067, 0
      %v4190 = vsub.s32 0, %v3067
      %v4191 = vsel %vm4189, %v4190, %v3067
      %v4192 = vshrl.u32 %v4191, 3
      %v4193 = vand.u32 %v4191, 7
      %v4194 = vsub.s32 0, %v4193
      %v4195 = vsel %vm4189, %v4194, %v4193
      %vm4196 = vcmp.lt.s32.totalorder %v3068, 0
      %v4197 = vsub.s32 0, %v3068
      %v4198 = vsel %vm4196, %v4197, %v3068
      %v4199 = vshrl.u32 %v4198, 3
      %v4200 = vand.u32 %v4198, 7
      %v4201 = vsub.s32 0, %v4200
      %v4202 = vsel %vm4196, %v4201, %v4200
      %vm4203 = vcmp.lt.s32.totalorder %v3069, 0
      %v4204 = vsub.s32 0, %v3069
      %v4205 = vsel %vm4203, %v4204, %v3069
      %v4206 = vshrl.u32 %v4205, 3
      %v4207 = vand.u32 %v4205, 7
      %v4208 = vsub.s32 0, %v4207
      %v4209 = vsel %vm4203, %v4208, %v4207
      %vm4210 = vcmp.lt.s32.totalorder %v3070, 0
      %v4211 = vsub.s32 0, %v3070
      %v4212 = vsel %vm4210, %v4211, %v3070
      %v4213 = vshrl.u32 %v4212, 3
      %v4214 = vand.u32 %v4212, 7
      %v4215 = vsub.s32 0, %v4214
      %v4216 = vsel %vm4210, %v4215, %v4214
      %vm4217 = vcmp.lt.s32.totalorder %v3071, 0
      %v4218 = vsub.s32 0, %v3071
      %v4219 = vsel %vm4217, %v4218, %v3071
      %v4220 = vshrl.u32 %v4219, 3
      %v4221 = vand.u32 %v4219, 7
      %v4222 = vsub.s32 0, %v4221
      %v4223 = vsel %vm4217, %v4222, %v4221
      %vm4224 = vcmp.lt.s32.totalorder %v3072, 0
      %v4225 = vsub.s32 0, %v3072
      %v4226 = vsel %vm4224, %v4225, %v3072
      %v4227 = vshrl.u32 %v4226, 3
      %v4228 = vand.u32 %v4226, 7
      %v4229 = vsub.s32 0, %v4228
      %v4230 = vsel %vm4224, %v4229, %v4228
      %vm4231 = vcmp.lt.s32.totalorder %v3073, 0
      %v4232 = vsub.s32 0, %v3073
      %v4233 = vsel %vm4231, %v4232, %v3073
      %v4234 = vshrl.u32 %v4233, 3
      %v4235 = vand.u32 %v4233, 7
      %v4236 = vsub.s32 0, %v4235
      %v4237 = vsel %vm4231, %v4236, %v4235
      %vm4238 = vcmp.lt.s32.totalorder %v3074, 0
      %v4239 = vsub.s32 0, %v3074
      %v4240 = vsel %vm4238, %v4239, %v3074
      %v4241 = vshrl.u32 %v4240, 3
      %v4242 = vand.u32 %v4240, 7
      %v4243 = vsub.s32 0, %v4242
      %v4244 = vsel %vm4238, %v4243, %v4242
      %vm4245 = vcmp.lt.s32.totalorder %v3075, 0
      %v4246 = vsub.s32 0, %v3075
      %v4247 = vsel %vm4245, %v4246, %v3075
      %v4248 = vshrl.u32 %v4247, 3
      %v4249 = vand.u32 %v4247, 7
      %v4250 = vsub.s32 0, %v4249
      %v4251 = vsel %vm4245, %v4250, %v4249
      %vm4252 = vcmp.lt.s32.totalorder %v3076, 0
      %v4253 = vsub.s32 0, %v3076
      %v4254 = vsel %vm4252, %v4253, %v3076
      %v4255 = vshrl.u32 %v4254, 3
      %v4256 = vand.u32 %v4254, 7
      %v4257 = vsub.s32 0, %v4256
      %v4258 = vsel %vm4252, %v4257, %v4256
      %vm4259 = vcmp.lt.s32.totalorder %v3077, 0
      %v4260 = vsub.s32 0, %v3077
      %v4261 = vsel %vm4259, %v4260, %v3077
      %v4262 = vshrl.u32 %v4261, 3
      %v4263 = vand.u32 %v4261, 7
      %v4264 = vsub.s32 0, %v4263
      %v4265 = vsel %vm4259, %v4264, %v4263
      %vm4266 = vcmp.lt.s32.totalorder %v3078, 0
      %v4267 = vsub.s32 0, %v3078
      %v4268 = vsel %vm4266, %v4267, %v3078
      %v4269 = vshrl.u32 %v4268, 3
      %v4270 = vand.u32 %v4268, 7
      %v4271 = vsub.s32 0, %v4270
      %v4272 = vsel %vm4266, %v4271, %v4270
      %vm4273 = vcmp.lt.s32.totalorder %v3079, 0
      %v4274 = vsub.s32 0, %v3079
      %v4275 = vsel %vm4273, %v4274, %v3079
      %v4276 = vshrl.u32 %v4275, 3
      %v4277 = vand.u32 %v4275, 7
      %v4278 = vsub.s32 0, %v4277
      %v4279 = vsel %vm4273, %v4278, %v4277
      %vm4280 = vcmp.lt.s32.totalorder %v3080, 0
      %v4281 = vsub.s32 0, %v3080
      %v4282 = vsel %vm4280, %v4281, %v3080
      %v4283 = vshrl.u32 %v4282, 3
      %v4284 = vand.u32 %v4282, 7
      %v4285 = vsub.s32 0, %v4284
      %v4286 = vsel %vm4280, %v4285, %v4284
      %vm4287 = vcmp.lt.s32.totalorder %v3081, 0
      %v4288 = vsub.s32 0, %v3081
      %v4289 = vsel %vm4287, %v4288, %v3081
      %v4290 = vshrl.u32 %v4289, 3
      %v4291 = vand.u32 %v4289, 7
      %v4292 = vsub.s32 0, %v4291
      %v4293 = vsel %vm4287, %v4292, %v4291
      %vm4294 = vcmp.lt.s32.totalorder %v3082, 0
      %v4295 = vsub.s32 0, %v3082
      %v4296 = vsel %vm4294, %v4295, %v3082
      %v4297 = vshrl.u32 %v4296, 3
      %v4298 = vand.u32 %v4296, 7
      %v4299 = vsub.s32 0, %v4298
      %v4300 = vsel %vm4294, %v4299, %v4298
      %vm4301 = vcmp.lt.s32.totalorder %v3083, 0
      %v4302 = vsub.s32 0, %v3083
      %v4303 = vsel %vm4301, %v4302, %v3083
      %v4304 = vshrl.u32 %v4303, 3
      %v4305 = vand.u32 %v4303, 7
      %v4306 = vsub.s32 0, %v4305
      %v4307 = vsel %vm4301, %v4306, %v4305
      %vm4308 = vcmp.lt.s32.totalorder %v3084, 0
      %v4309 = vsub.s32 0, %v3084
      %v4310 = vsel %vm4308, %v4309, %v3084
      %v4311 = vshrl.u32 %v4310, 3
      %v4312 = vand.u32 %v4310, 7
      %v4313 = vsub.s32 0, %v4312
      %v4314 = vsel %vm4308, %v4313, %v4312
      %vm4315 = vcmp.lt.s32.totalorder %v3085, 0
      %v4316 = vsub.s32 0, %v3085
      %v4317 = vsel %vm4315, %v4316, %v3085
      %v4318 = vshrl.u32 %v4317, 3
      %v4319 = vand.u32 %v4317, 7
      %v4320 = vsub.s32 0, %v4319
      %v4321 = vsel %vm4315, %v4320, %v4319
      %vm4322 = vcmp.lt.s32.totalorder %v3086, 0
      %v4323 = vsub.s32 0, %v3086
      %v4324 = vsel %vm4322, %v4323, %v3086
      %v4325 = vshrl.u32 %v4324, 3
      %v4326 = vand.u32 %v4324, 7
      %v4327 = vsub.s32 0, %v4326
      %v4328 = vsel %vm4322, %v4327, %v4326
      %vm4329 = vcmp.lt.s32.totalorder %v3087, 0
      %v4330 = vsub.s32 0, %v3087
      %v4331 = vsel %vm4329, %v4330, %v3087
      %v4332 = vshrl.u32 %v4331, 3
      %v4333 = vand.u32 %v4331, 7
      %v4334 = vsub.s32 0, %v4333
      %v4335 = vsel %vm4329, %v4334, %v4333
      %vm4336 = vcmp.lt.s32.totalorder %v3088, 0
      %v4337 = vsub.s32 0, %v3088
      %v4338 = vsel %vm4336, %v4337, %v3088
      %v4339 = vshrl.u32 %v4338, 3
      %v4340 = vand.u32 %v4338, 7
      %v4341 = vsub.s32 0, %v4340
      %v4342 = vsel %vm4336, %v4341, %v4340
      %vm4343 = vcmp.lt.s32.totalorder %v3089, 0
      %v4344 = vsub.s32 0, %v3089
      %v4345 = vsel %vm4343, %v4344, %v3089
      %v4346 = vshrl.u32 %v4345, 3
      %v4347 = vand.u32 %v4345, 7
      %v4348 = vsub.s32 0, %v4347
      %v4349 = vsel %vm4343, %v4348, %v4347
      %vm4350 = vcmp.lt.s32.totalorder %v3090, 0
      %v4351 = vsub.s32 0, %v3090
      %v4352 = vsel %vm4350, %v4351, %v3090
      %v4353 = vshrl.u32 %v4352, 3
      %v4354 = vand.u32 %v4352, 7
      %v4355 = vsub.s32 0, %v4354
      %v4356 = vsel %vm4350, %v4355, %v4354
      %vm4357 = vcmp.lt.s32.totalorder %v3091, 0
      %v4358 = vsub.s32 0, %v3091
      %v4359 = vsel %vm4357, %v4358, %v3091
      %v4360 = vshrl.u32 %v4359, 3
      %v4361 = vand.u32 %v4359, 7
      %v4362 = vsub.s32 0, %v4361
      %v4363 = vsel %vm4357, %v4362, %v4361
      %vm4364 = vcmp.lt.s32.totalorder %v3092, 0
      %v4365 = vsub.s32 0, %v3092
      %v4366 = vsel %vm4364, %v4365, %v3092
      %v4367 = vshrl.u32 %v4366, 3
      %v4368 = vand.u32 %v4366, 7
      %v4369 = vsub.s32 0, %v4368
      %v4370 = vsel %vm4364, %v4369, %v4368
      %vm4371 = vcmp.lt.s32.totalorder %v3093, 0
      %v4372 = vsub.s32 0, %v3093
      %v4373 = vsel %vm4371, %v4372, %v3093
      %v4374 = vshrl.u32 %v4373, 3
      %v4375 = vand.u32 %v4373, 7
      %v4376 = vsub.s32 0, %v4375
      %v4377 = vsel %vm4371, %v4376, %v4375
      %vm4378 = vcmp.lt.s32.totalorder %v3094, 0
      %v4379 = vsub.s32 0, %v3094
      %v4380 = vsel %vm4378, %v4379, %v3094
      %v4381 = vshrl.u32 %v4380, 3
      %v4382 = vand.u32 %v4380, 7
      %v4383 = vsub.s32 0, %v4382
      %v4384 = vsel %vm4378, %v4383, %v4382
      %vm4385 = vcmp.lt.s32.totalorder %v3095, 0
      %v4386 = vsub.s32 0, %v3095
      %v4387 = vsel %vm4385, %v4386, %v3095
      %v4388 = vshrl.u32 %v4387, 3
      %v4389 = vand.u32 %v4387, 7
      %v4390 = vsub.s32 0, %v4389
      %v4391 = vsel %vm4385, %v4390, %v4389
      %vm4392 = vcmp.lt.s32.totalorder %v3096, 0
      %v4393 = vsub.s32 0, %v3096
      %v4394 = vsel %vm4392, %v4393, %v3096
      %v4395 = vshrl.u32 %v4394, 3
      %v4396 = vand.u32 %v4394, 7
      %v4397 = vsub.s32 0, %v4396
      %v4398 = vsel %vm4392, %v4397, %v4396
      %vm4399 = vcmp.lt.s32.totalorder %v3097, 0
      %v4400 = vsub.s32 0, %v3097
      %v4401 = vsel %vm4399, %v4400, %v3097
      %v4402 = vshrl.u32 %v4401, 3
      %v4403 = vand.u32 %v4401, 7
      %v4404 = vsub.s32 0, %v4403
      %v4405 = vsel %vm4399, %v4404, %v4403
      %vm4406 = vcmp.lt.s32.totalorder %v3098, 0
      %v4407 = vsub.s32 0, %v3098
      %v4408 = vsel %vm4406, %v4407, %v3098
      %v4409 = vshrl.u32 %v4408, 3
      %v4410 = vand.u32 %v4408, 7
      %v4411 = vsub.s32 0, %v4410
      %v4412 = vsel %vm4406, %v4411, %v4410
      %vm4413 = vcmp.lt.s32.totalorder %v3099, 0
      %v4414 = vsub.s32 0, %v3099
      %v4415 = vsel %vm4413, %v4414, %v3099
      %v4416 = vshrl.u32 %v4415, 3
      %v4417 = vand.u32 %v4415, 7
      %v4418 = vsub.s32 0, %v4417
      %v4419 = vsel %vm4413, %v4418, %v4417
      %vm4420 = vcmp.lt.s32.totalorder %v3100, 0
      %v4421 = vsub.s32 0, %v3100
      %v4422 = vsel %vm4420, %v4421, %v3100
      %v4423 = vshrl.u32 %v4422, 3
      %v4424 = vand.u32 %v4422, 7
      %v4425 = vsub.s32 0, %v4424
      %v4426 = vsel %vm4420, %v4425, %v4424
      %vm4427 = vcmp.lt.s32.totalorder %v3101, 0
      %v4428 = vsub.s32 0, %v3101
      %v4429 = vsel %vm4427, %v4428, %v3101
      %v4430 = vshrl.u32 %v4429, 3
      %v4431 = vand.u32 %v4429, 7
      %v4432 = vsub.s32 0, %v4431
      %v4433 = vsel %vm4427, %v4432, %v4431
      %vm4434 = vcmp.lt.s32.totalorder %v3102, 0
      %v4435 = vsub.s32 0, %v3102
      %v4436 = vsel %vm4434, %v4435, %v3102
      %v4437 = vshrl.u32 %v4436, 3
      %v4438 = vand.u32 %v4436, 7
      %v4439 = vsub.s32 0, %v4438
      %v4440 = vsel %vm4434, %v4439, %v4438
      %vm4441 = vcmp.lt.s32.totalorder %v3103, 0
      %v4442 = vsub.s32 0, %v3103
      %v4443 = vsel %vm4441, %v4442, %v3103
      %v4444 = vshrl.u32 %v4443, 3
      %v4445 = vand.u32 %v4443, 7
      %v4446 = vsub.s32 0, %v4445
      %v4447 = vsel %vm4441, %v4446, %v4445
      %vm4448 = vcmp.lt.s32.totalorder %v3104, 0
      %v4449 = vsub.s32 0, %v3104
      %v4450 = vsel %vm4448, %v4449, %v3104
      %v4451 = vshrl.u32 %v4450, 3
      %v4452 = vand.u32 %v4450, 7
      %v4453 = vsub.s32 0, %v4452
      %v4454 = vsel %vm4448, %v4453, %v4452
      %vm4455 = vcmp.lt.s32.totalorder %v3105, 0
      %v4456 = vsub.s32 0, %v3105
      %v4457 = vsel %vm4455, %v4456, %v3105
      %v4458 = vshrl.u32 %v4457, 3
      %v4459 = vand.u32 %v4457, 7
      %v4460 = vsub.s32 0, %v4459
      %v4461 = vsel %vm4455, %v4460, %v4459
      %vm4462 = vcmp.lt.s32.totalorder %v3106, 0
      %v4463 = vsub.s32 0, %v3106
      %v4464 = vsel %vm4462, %v4463, %v3106
      %v4465 = vshrl.u32 %v4464, 3
      %v4466 = vand.u32 %v4464, 7
      %v4467 = vsub.s32 0, %v4466
      %v4468 = vsel %vm4462, %v4467, %v4466
      %vm4469 = vcmp.lt.s32.totalorder %v3107, 0
      %v4470 = vsub.s32 0, %v3107
      %v4471 = vsel %vm4469, %v4470, %v3107
      %v4472 = vshrl.u32 %v4471, 3
      %v4473 = vand.u32 %v4471, 7
      %v4474 = vsub.s32 0, %v4473
      %v4475 = vsel %vm4469, %v4474, %v4473
      %vm4476 = vcmp.lt.s32.totalorder %v3108, 0
      %v4477 = vsub.s32 0, %v3108
      %v4478 = vsel %vm4476, %v4477, %v3108
      %v4479 = vshrl.u32 %v4478, 3
      %v4480 = vand.u32 %v4478, 7
      %v4481 = vsub.s32 0, %v4480
      %v4482 = vsel %vm4476, %v4481, %v4480
      %vm4483 = vcmp.lt.s32.totalorder %v3109, 0
      %v4484 = vsub.s32 0, %v3109
      %v4485 = vsel %vm4483, %v4484, %v3109
      %v4486 = vshrl.u32 %v4485, 3
      %v4487 = vand.u32 %v4485, 7
      %v4488 = vsub.s32 0, %v4487
      %v4489 = vsel %vm4483, %v4488, %v4487
      %vm4490 = vcmp.lt.s32.totalorder %v3110, 0
      %v4491 = vsub.s32 0, %v3110
      %v4492 = vsel %vm4490, %v4491, %v3110
      %v4493 = vshrl.u32 %v4492, 3
      %v4494 = vand.u32 %v4492, 7
      %v4495 = vsub.s32 0, %v4494
      %v4496 = vsel %vm4490, %v4495, %v4494
      %vm4497 = vcmp.lt.s32.totalorder %v3111, 0
      %v4498 = vsub.s32 0, %v3111
      %v4499 = vsel %vm4497, %v4498, %v3111
      %v4500 = vshrl.u32 %v4499, 3
      %v4501 = vand.u32 %v4499, 7
      %v4502 = vsub.s32 0, %v4501
      %v4503 = vsel %vm4497, %v4502, %v4501
      %vm4504 = vcmp.lt.s32.totalorder %v3112, 0
      %v4505 = vsub.s32 0, %v3112
      %v4506 = vsel %vm4504, %v4505, %v3112
      %v4507 = vshrl.u32 %v4506, 3
      %v4508 = vand.u32 %v4506, 7
      %v4509 = vsub.s32 0, %v4508
      %v4510 = vsel %vm4504, %v4509, %v4508
      %vm4511 = vcmp.lt.s32.totalorder %v3113, 0
      %v4512 = vsub.s32 0, %v3113
      %v4513 = vsel %vm4511, %v4512, %v3113
      %v4514 = vshrl.u32 %v4513, 3
      %v4515 = vand.u32 %v4513, 7
      %v4516 = vsub.s32 0, %v4515
      %v4517 = vsel %vm4511, %v4516, %v4515
      %vm4518 = vcmp.lt.s32.totalorder %v3114, 0
      %v4519 = vsub.s32 0, %v3114
      %v4520 = vsel %vm4518, %v4519, %v3114
      %v4521 = vshrl.u32 %v4520, 3
      %v4522 = vand.u32 %v4520, 7
      %v4523 = vsub.s32 0, %v4522
      %v4524 = vsel %vm4518, %v4523, %v4522
      %vm4525 = vcmp.lt.s32.totalorder %v3115, 0
      %v4526 = vsub.s32 0, %v3115
      %v4527 = vsel %vm4525, %v4526, %v3115
      %v4528 = vshrl.u32 %v4527, 3
      %v4529 = vand.u32 %v4527, 7
      %v4530 = vsub.s32 0, %v4529
      %v4531 = vsel %vm4525, %v4530, %v4529
      %vm4532 = vcmp.lt.s32.totalorder %v3116, 0
      %v4533 = vsub.s32 0, %v3116
      %v4534 = vsel %vm4532, %v4533, %v3116
      %v4535 = vshrl.u32 %v4534, 3
      %v4536 = vand.u32 %v4534, 7
      %v4537 = vsub.s32 0, %v4536
      %v4538 = vsel %vm4532, %v4537, %v4536
      %vm4539 = vcmp.lt.s32.totalorder %v3117, 0
      %v4540 = vsub.s32 0, %v3117
      %v4541 = vsel %vm4539, %v4540, %v3117
      %v4542 = vshrl.u32 %v4541, 3
      %v4543 = vand.u32 %v4541, 7
      %v4544 = vsub.s32 0, %v4543
      %v4545 = vsel %vm4539, %v4544, %v4543
      %vm4546 = vcmp.lt.s32.totalorder %v3118, 0
      %v4547 = vsub.s32 0, %v3118
      %v4548 = vsel %vm4546, %v4547, %v3118
      %v4549 = vshrl.u32 %v4548, 3
      %v4550 = vand.u32 %v4548, 7
      %v4551 = vsub.s32 0, %v4550
      %v4552 = vsel %vm4546, %v4551, %v4550
      %vm4553 = vcmp.lt.s32.totalorder %v3119, 0
      %v4554 = vsub.s32 0, %v3119
      %v4555 = vsel %vm4553, %v4554, %v3119
      %v4556 = vshrl.u32 %v4555, 3
      %v4557 = vand.u32 %v4555, 7
      %v4558 = vsub.s32 0, %v4557
      %v4559 = vsel %vm4553, %v4558, %v4557
      %vm4560 = vcmp.ne.s32.totalorder %v4118, 0
      %vm4561 = vcmp.ne.s32.totalorder %v4125, 0
      %vm4562 = vcmp.ne.s32.totalorder %v4132, 0
      %vm4563 = vcmp.ne.s32.totalorder %v4139, 0
      %vm4564 = vcmp.ne.s32.totalorder %v4146, 0
      %vm4565 = vcmp.ne.s32.totalorder %v4153, 0
      %vm4566 = vcmp.ne.s32.totalorder %v4160, 0
      %vm4567 = vcmp.ne.s32.totalorder %v4167, 0
      %vm4568 = vcmp.ne.s32.totalorder %v4174, 0
      %vm4569 = vcmp.ne.s32.totalorder %v4181, 0
      %vm4570 = vcmp.ne.s32.totalorder %v4188, 0
      %vm4571 = vcmp.ne.s32.totalorder %v4195, 0
      %vm4572 = vcmp.ne.s32.totalorder %v4202, 0
      %vm4573 = vcmp.ne.s32.totalorder %v4209, 0
      %vm4574 = vcmp.ne.s32.totalorder %v4216, 0
      %vm4575 = vcmp.ne.s32.totalorder %v4223, 0
      %vm4576 = vcmp.ne.s32.totalorder %v4230, 0
      %vm4577 = vcmp.ne.s32.totalorder %v4237, 0
      %vm4578 = vcmp.ne.s32.totalorder %v4244, 0
      %vm4579 = vcmp.ne.s32.totalorder %v4251, 0
      %vm4580 = vcmp.ne.s32.totalorder %v4258, 0
      %vm4581 = vcmp.ne.s32.totalorder %v4265, 0
      %vm4582 = vcmp.ne.s32.totalorder %v4272, 0
      %vm4583 = vcmp.ne.s32.totalorder %v4279, 0
      %vm4584 = vcmp.ne.s32.totalorder %v4286, 0
      %vm4585 = vcmp.ne.s32.totalorder %v4293, 0
      %vm4586 = vcmp.ne.s32.totalorder %v4300, 0
      %vm4587 = vcmp.ne.s32.totalorder %v4307, 0
      %vm4588 = vcmp.ne.s32.totalorder %v4314, 0
      %vm4589 = vcmp.ne.s32.totalorder %v4321, 0
      %vm4590 = vcmp.ne.s32.totalorder %v4328, 0
      %vm4591 = vcmp.ne.s32.totalorder %v4335, 0
      %vm4592 = vcmp.ne.s32.totalorder %v4342, 0
      %vm4593 = vcmp.ne.s32.totalorder %v4349, 0
      %vm4594 = vcmp.ne.s32.totalorder %v4356, 0
      %vm4595 = vcmp.ne.s32.totalorder %v4363, 0
      %vm4596 = vcmp.ne.s32.totalorder %v4370, 0
      %vm4597 = vcmp.ne.s32.totalorder %v4377, 0
      %vm4598 = vcmp.ne.s32.totalorder %v4384, 0
      %vm4599 = vcmp.ne.s32.totalorder %v4391, 0
      %vm4600 = vcmp.ne.s32.totalorder %v4398, 0
      %vm4601 = vcmp.ne.s32.totalorder %v4405, 0
      %vm4602 = vcmp.ne.s32.totalorder %v4412, 0
      %vm4603 = vcmp.ne.s32.totalorder %v4419, 0
      %vm4604 = vcmp.ne.s32.totalorder %v4426, 0
      %vm4605 = vcmp.ne.s32.totalorder %v4433, 0
      %vm4606 = vcmp.ne.s32.totalorder %v4440, 0
      %vm4607 = vcmp.ne.s32.totalorder %v4447, 0
      %vm4608 = vcmp.ne.s32.totalorder %v4454, 0
      %vm4609 = vcmp.ne.s32.totalorder %v4461, 0
      %vm4610 = vcmp.ne.s32.totalorder %v4468, 0
      %vm4611 = vcmp.ne.s32.totalorder %v4475, 0
      %vm4612 = vcmp.ne.s32.totalorder %v4482, 0
      %vm4613 = vcmp.ne.s32.totalorder %v4489, 0
      %vm4614 = vcmp.ne.s32.totalorder %v4496, 0
      %vm4615 = vcmp.ne.s32.totalorder %v4503, 0
      %vm4616 = vcmp.ne.s32.totalorder %v4510, 0
      %vm4617 = vcmp.ne.s32.totalorder %v4517, 0
      %vm4618 = vcmp.ne.s32.totalorder %v4524, 0
      %vm4619 = vcmp.ne.s32.totalorder %v4531, 0
      %vm4620 = vcmp.ne.s32.totalorder %v4538, 0
      %vm4621 = vcmp.ne.s32.totalorder %v4545, 0
      %vm4622 = vcmp.ne.s32.totalorder %v4552, 0
      %vm4623 = vcmp.ne.s32.totalorder %v4559, 0
      %vm4624 = vcmp.lt.s32.totalorder %v4118, 0
      %vm4625 = vcmp.lt.s32.totalorder %v4125, 0
      %vm4626 = vcmp.lt.s32.totalorder %v4132, 0
      %vm4627 = vcmp.lt.s32.totalorder %v4139, 0
      %vm4628 = vcmp.lt.s32.totalorder %v4146, 0
      %vm4629 = vcmp.lt.s32.totalorder %v4153, 0
      %vm4630 = vcmp.lt.s32.totalorder %v4160, 0
      %vm4631 = vcmp.lt.s32.totalorder %v4167, 0
      %vm4632 = vcmp.lt.s32.totalorder %v4174, 0
      %vm4633 = vcmp.lt.s32.totalorder %v4181, 0
      %vm4634 = vcmp.lt.s32.totalorder %v4188, 0
      %vm4635 = vcmp.lt.s32.totalorder %v4195, 0
      %vm4636 = vcmp.lt.s32.totalorder %v4202, 0
      %vm4637 = vcmp.lt.s32.totalorder %v4209, 0
      %vm4638 = vcmp.lt.s32.totalorder %v4216, 0
      %vm4639 = vcmp.lt.s32.totalorder %v4223, 0
      %vm4640 = vcmp.lt.s32.totalorder %v4230, 0
      %vm4641 = vcmp.lt.s32.totalorder %v4237, 0
      %vm4642 = vcmp.lt.s32.totalorder %v4244, 0
      %vm4643 = vcmp.lt.s32.totalorder %v4251, 0
      %vm4644 = vcmp.lt.s32.totalorder %v4258, 0
      %vm4645 = vcmp.lt.s32.totalorder %v4265, 0
      %vm4646 = vcmp.lt.s32.totalorder %v4272, 0
      %vm4647 = vcmp.lt.s32.totalorder %v4279, 0
      %vm4648 = vcmp.lt.s32.totalorder %v4286, 0
      %vm4649 = vcmp.lt.s32.totalorder %v4293, 0
      %vm4650 = vcmp.lt.s32.totalorder %v4300, 0
      %vm4651 = vcmp.lt.s32.totalorder %v4307, 0
      %vm4652 = vcmp.lt.s32.totalorder %v4314, 0
      %vm4653 = vcmp.lt.s32.totalorder %v4321, 0
      %vm4654 = vcmp.lt.s32.totalorder %v4328, 0
      %vm4655 = vcmp.lt.s32.totalorder %v4335, 0
      %vm4656 = vcmp.lt.s32.totalorder %v4342, 0
      %vm4657 = vcmp.lt.s32.totalorder %v4349, 0
      %vm4658 = vcmp.lt.s32.totalorder %v4356, 0
      %vm4659 = vcmp.lt.s32.totalorder %v4363, 0
      %vm4660 = vcmp.lt.s32.totalorder %v4370, 0
      %vm4661 = vcmp.lt.s32.totalorder %v4377, 0
      %vm4662 = vcmp.lt.s32.totalorder %v4384, 0
      %vm4663 = vcmp.lt.s32.totalorder %v4391, 0
      %vm4664 = vcmp.lt.s32.totalorder %v4398, 0
      %vm4665 = vcmp.lt.s32.totalorder %v4405, 0
      %vm4666 = vcmp.lt.s32.totalorder %v4412, 0
      %vm4667 = vcmp.lt.s32.totalorder %v4419, 0
      %vm4668 = vcmp.lt.s32.totalorder %v4426, 0
      %vm4669 = vcmp.lt.s32.totalorder %v4433, 0
      %vm4670 = vcmp.lt.s32.totalorder %v4440, 0
      %vm4671 = vcmp.lt.s32.totalorder %v4447, 0
      %vm4672 = vcmp.lt.s32.totalorder %v4454, 0
      %vm4673 = vcmp.lt.s32.totalorder %v4461, 0
      %vm4674 = vcmp.lt.s32.totalorder %v4468, 0
      %vm4675 = vcmp.lt.s32.totalorder %v4475, 0
      %vm4676 = vcmp.lt.s32.totalorder %v4482, 0
      %vm4677 = vcmp.lt.s32.totalorder %v4489, 0
      %vm4678 = vcmp.lt.s32.totalorder %v4496, 0
      %vm4679 = vcmp.lt.s32.totalorder %v4503, 0
      %vm4680 = vcmp.lt.s32.totalorder %v4510, 0
      %vm4681 = vcmp.lt.s32.totalorder %v4517, 0
      %vm4682 = vcmp.lt.s32.totalorder %v4524, 0
      %vm4683 = vcmp.lt.s32.totalorder %v4531, 0
      %vm4684 = vcmp.lt.s32.totalorder %v4538, 0
      %vm4685 = vcmp.lt.s32.totalorder %v4545, 0
      %vm4686 = vcmp.lt.s32.totalorder %v4552, 0
      %vm4687 = vcmp.lt.s32.totalorder %v4559, 0
      %vm4688 = vmand %vm4624, %vm4560
      %vm4689 = vmand %vm4625, %vm4561
      %vm4690 = vmand %vm4626, %vm4562
      %vm4691 = vmand %vm4627, %vm4563
      %vm4692 = vmand %vm4628, %vm4564
      %vm4693 = vmand %vm4629, %vm4565
      %vm4694 = vmand %vm4630, %vm4566
      %vm4695 = vmand %vm4631, %vm4567
      %vm4696 = vmand %vm4632, %vm4568
      %vm4697 = vmand %vm4633, %vm4569
      %vm4698 = vmand %vm4634, %vm4570
      %vm4699 = vmand %vm4635, %vm4571
      %vm4700 = vmand %vm4636, %vm4572
      %vm4701 = vmand %vm4637, %vm4573
      %vm4702 = vmand %vm4638, %vm4574
      %vm4703 = vmand %vm4639, %vm4575
      %vm4704 = vmand %vm4640, %vm4576
      %vm4705 = vmand %vm4641, %vm4577
      %vm4706 = vmand %vm4642, %vm4578
      %vm4707 = vmand %vm4643, %vm4579
      %vm4708 = vmand %vm4644, %vm4580
      %vm4709 = vmand %vm4645, %vm4581
      %vm4710 = vmand %vm4646, %vm4582
      %vm4711 = vmand %vm4647, %vm4583
      %vm4712 = vmand %vm4648, %vm4584
      %vm4713 = vmand %vm4649, %vm4585
      %vm4714 = vmand %vm4650, %vm4586
      %vm4715 = vmand %vm4651, %vm4587
      %vm4716 = vmand %vm4652, %vm4588
      %vm4717 = vmand %vm4653, %vm4589
      %vm4718 = vmand %vm4654, %vm4590
      %vm4719 = vmand %vm4655, %vm4591
      %vm4720 = vmand %vm4656, %vm4592
      %vm4721 = vmand %vm4657, %vm4593
      %vm4722 = vmand %vm4658, %vm4594
      %vm4723 = vmand %vm4659, %vm4595
      %vm4724 = vmand %vm4660, %vm4596
      %vm4725 = vmand %vm4661, %vm4597
      %vm4726 = vmand %vm4662, %vm4598
      %vm4727 = vmand %vm4663, %vm4599
      %vm4728 = vmand %vm4664, %vm4600
      %vm4729 = vmand %vm4665, %vm4601
      %vm4730 = vmand %vm4666, %vm4602
      %vm4731 = vmand %vm4667, %vm4603
      %vm4732 = vmand %vm4668, %vm4604
      %vm4733 = vmand %vm4669, %vm4605
      %vm4734 = vmand %vm4670, %vm4606
      %vm4735 = vmand %vm4671, %vm4607
      %vm4736 = vmand %vm4672, %vm4608
      %vm4737 = vmand %vm4673, %vm4609
      %vm4738 = vmand %vm4674, %vm4610
      %vm4739 = vmand %vm4675, %vm4611
      %vm4740 = vmand %vm4676, %vm4612
      %vm4741 = vmand %vm4677, %vm4613
      %vm4742 = vmand %vm4678, %vm4614
      %vm4743 = vmand %vm4679, %vm4615
      %vm4744 = vmand %vm4680, %vm4616
      %vm4745 = vmand %vm4681, %vm4617
      %vm4746 = vmand %vm4682, %vm4618
      %vm4747 = vmand %vm4683, %vm4619
      %vm4748 = vmand %vm4684, %vm4620
      %vm4749 = vmand %vm4685, %vm4621
      %vm4750 = vmand %vm4686, %vm4622
      %vm4751 = vmand %vm4687, %vm4623
      %v4752 = vadd.s32 %v4118, 8
      %v4753 = vadd.s32 %v4125, 8
      %v4754 = vadd.s32 %v4132, 8
      %v4755 = vadd.s32 %v4139, 8
      %v4756 = vadd.s32 %v4146, 8
      %v4757 = vadd.s32 %v4153, 8
      %v4758 = vadd.s32 %v4160, 8
      %v4759 = vadd.s32 %v4167, 8
      %v4760 = vadd.s32 %v4174, 8
      %v4761 = vadd.s32 %v4181, 8
      %v4762 = vadd.s32 %v4188, 8
      %v4763 = vadd.s32 %v4195, 8
      %v4764 = vadd.s32 %v4202, 8
      %v4765 = vadd.s32 %v4209, 8
      %v4766 = vadd.s32 %v4216, 8
      %v4767 = vadd.s32 %v4223, 8
      %v4768 = vadd.s32 %v4230, 8
      %v4769 = vadd.s32 %v4237, 8
      %v4770 = vadd.s32 %v4244, 8
      %v4771 = vadd.s32 %v4251, 8
      %v4772 = vadd.s32 %v4258, 8
      %v4773 = vadd.s32 %v4265, 8
      %v4774 = vadd.s32 %v4272, 8
      %v4775 = vadd.s32 %v4279, 8
      %v4776 = vadd.s32 %v4286, 8
      %v4777 = vadd.s32 %v4293, 8
      %v4778 = vadd.s32 %v4300, 8
      %v4779 = vadd.s32 %v4307, 8
      %v4780 = vadd.s32 %v4314, 8
      %v4781 = vadd.s32 %v4321, 8
      %v4782 = vadd.s32 %v4328, 8
      %v4783 = vadd.s32 %v4335, 8
      %v4784 = vadd.s32 %v4342, 8
      %v4785 = vadd.s32 %v4349, 8
      %v4786 = vadd.s32 %v4356, 8
      %v4787 = vadd.s32 %v4363, 8
      %v4788 = vadd.s32 %v4370, 8
      %v4789 = vadd.s32 %v4377, 8
      %v4790 = vadd.s32 %v4384, 8
      %v4791 = vadd.s32 %v4391, 8
      %v4792 = vadd.s32 %v4398, 8
      %v4793 = vadd.s32 %v4405, 8
      %v4794 = vadd.s32 %v4412, 8
      %v4795 = vadd.s32 %v4419, 8
      %v4796 = vadd.s32 %v4426, 8
      %v4797 = vadd.s32 %v4433, 8
      %v4798 = vadd.s32 %v4440, 8
      %v4799 = vadd.s32 %v4447, 8
      %v4800 = vadd.s32 %v4454, 8
      %v4801 = vadd.s32 %v4461, 8
      %v4802 = vadd.s32 %v4468, 8
      %v4803 = vadd.s32 %v4475, 8
      %v4804 = vadd.s32 %v4482, 8
      %v4805 = vadd.s32 %v4489, 8
      %v4806 = vadd.s32 %v4496, 8
      %v4807 = vadd.s32 %v4503, 8
      %v4808 = vadd.s32 %v4510, 8
      %v4809 = vadd.s32 %v4517, 8
      %v4810 = vadd.s32 %v4524, 8
      %v4811 = vadd.s32 %v4531, 8
      %v4812 = vadd.s32 %v4538, 8
      %v4813 = vadd.s32 %v4545, 8
      %v4814 = vadd.s32 %v4552, 8
      %v4815 = vadd.s32 %v4559, 8
      %v4816 = vsel %vm4688, %v4752, %v4118
      %v4817 = vsel %vm4689, %v4753, %v4125
      %v4818 = vsel %vm4690, %v4754, %v4132
      %v4819 = vsel %vm4691, %v4755, %v4139
      %v4820 = vsel %vm4692, %v4756, %v4146
      %v4821 = vsel %vm4693, %v4757, %v4153
      %v4822 = vsel %vm4694, %v4758, %v4160
      %v4823 = vsel %vm4695, %v4759, %v4167
      %v4824 = vsel %vm4696, %v4760, %v4174
      %v4825 = vsel %vm4697, %v4761, %v4181
      %v4826 = vsel %vm4698, %v4762, %v4188
      %v4827 = vsel %vm4699, %v4763, %v4195
      %v4828 = vsel %vm4700, %v4764, %v4202
      %v4829 = vsel %vm4701, %v4765, %v4209
      %v4830 = vsel %vm4702, %v4766, %v4216
      %v4831 = vsel %vm4703, %v4767, %v4223
      %v4832 = vsel %vm4704, %v4768, %v4230
      %v4833 = vsel %vm4705, %v4769, %v4237
      %v4834 = vsel %vm4706, %v4770, %v4244
      %v4835 = vsel %vm4707, %v4771, %v4251
      %v4836 = vsel %vm4708, %v4772, %v4258
      %v4837 = vsel %vm4709, %v4773, %v4265
      %v4838 = vsel %vm4710, %v4774, %v4272
      %v4839 = vsel %vm4711, %v4775, %v4279
      %v4840 = vsel %vm4712, %v4776, %v4286
      %v4841 = vsel %vm4713, %v4777, %v4293
      %v4842 = vsel %vm4714, %v4778, %v4300
      %v4843 = vsel %vm4715, %v4779, %v4307
      %v4844 = vsel %vm4716, %v4780, %v4314
      %v4845 = vsel %vm4717, %v4781, %v4321
      %v4846 = vsel %vm4718, %v4782, %v4328
      %v4847 = vsel %vm4719, %v4783, %v4335
      %v4848 = vsel %vm4720, %v4784, %v4342
      %v4849 = vsel %vm4721, %v4785, %v4349
      %v4850 = vsel %vm4722, %v4786, %v4356
      %v4851 = vsel %vm4723, %v4787, %v4363
      %v4852 = vsel %vm4724, %v4788, %v4370
      %v4853 = vsel %vm4725, %v4789, %v4377
      %v4854 = vsel %vm4726, %v4790, %v4384
      %v4855 = vsel %vm4727, %v4791, %v4391
      %v4856 = vsel %vm4728, %v4792, %v4398
      %v4857 = vsel %vm4729, %v4793, %v4405
      %v4858 = vsel %vm4730, %v4794, %v4412
      %v4859 = vsel %vm4731, %v4795, %v4419
      %v4860 = vsel %vm4732, %v4796, %v4426
      %v4861 = vsel %vm4733, %v4797, %v4433
      %v4862 = vsel %vm4734, %v4798, %v4440
      %v4863 = vsel %vm4735, %v4799, %v4447
      %v4864 = vsel %vm4736, %v4800, %v4454
      %v4865 = vsel %vm4737, %v4801, %v4461
      %v4866 = vsel %vm4738, %v4802, %v4468
      %v4867 = vsel %vm4739, %v4803, %v4475
      %v4868 = vsel %vm4740, %v4804, %v4482
      %v4869 = vsel %vm4741, %v4805, %v4489
      %v4870 = vsel %vm4742, %v4806, %v4496
      %v4871 = vsel %vm4743, %v4807, %v4503
      %v4872 = vsel %vm4744, %v4808, %v4510
      %v4873 = vsel %vm4745, %v4809, %v4517
      %v4874 = vsel %vm4746, %v4810, %v4524
      %v4875 = vsel %vm4747, %v4811, %v4531
      %v4876 = vsel %vm4748, %v4812, %v4538
      %v4877 = vsel %vm4749, %v4813, %v4545
      %v4878 = vsel %vm4750, %v4814, %v4552
      %v4879 = vsel %vm4751, %v4815, %v4559
      %vm4880 = vcmp.ne.s32.totalorder %v4816, 0
      %vm4881 = vcmp.ne.s32.totalorder %v4817, 0
      %vm4882 = vcmp.ne.s32.totalorder %v4818, 0
      %vm4883 = vcmp.ne.s32.totalorder %v4819, 0
      %vm4884 = vcmp.ne.s32.totalorder %v4820, 0
      %vm4885 = vcmp.ne.s32.totalorder %v4821, 0
      %vm4886 = vcmp.ne.s32.totalorder %v4822, 0
      %vm4887 = vcmp.ne.s32.totalorder %v4823, 0
      %vm4888 = vcmp.ne.s32.totalorder %v4824, 0
      %vm4889 = vcmp.ne.s32.totalorder %v4825, 0
      %vm4890 = vcmp.ne.s32.totalorder %v4826, 0
      %vm4891 = vcmp.ne.s32.totalorder %v4827, 0
      %vm4892 = vcmp.ne.s32.totalorder %v4828, 0
      %vm4893 = vcmp.ne.s32.totalorder %v4829, 0
      %vm4894 = vcmp.ne.s32.totalorder %v4830, 0
      %vm4895 = vcmp.ne.s32.totalorder %v4831, 0
      %vm4896 = vcmp.ne.s32.totalorder %v4832, 0
      %vm4897 = vcmp.ne.s32.totalorder %v4833, 0
      %vm4898 = vcmp.ne.s32.totalorder %v4834, 0
      %vm4899 = vcmp.ne.s32.totalorder %v4835, 0
      %vm4900 = vcmp.ne.s32.totalorder %v4836, 0
      %vm4901 = vcmp.ne.s32.totalorder %v4837, 0
      %vm4902 = vcmp.ne.s32.totalorder %v4838, 0
      %vm4903 = vcmp.ne.s32.totalorder %v4839, 0
      %vm4904 = vcmp.ne.s32.totalorder %v4840, 0
      %vm4905 = vcmp.ne.s32.totalorder %v4841, 0
      %vm4906 = vcmp.ne.s32.totalorder %v4842, 0
      %vm4907 = vcmp.ne.s32.totalorder %v4843, 0
      %vm4908 = vcmp.ne.s32.totalorder %v4844, 0
      %vm4909 = vcmp.ne.s32.totalorder %v4845, 0
      %vm4910 = vcmp.ne.s32.totalorder %v4846, 0
      %vm4911 = vcmp.ne.s32.totalorder %v4847, 0
      %vm4912 = vcmp.ne.s32.totalorder %v4848, 0
      %vm4913 = vcmp.ne.s32.totalorder %v4849, 0
      %vm4914 = vcmp.ne.s32.totalorder %v4850, 0
      %vm4915 = vcmp.ne.s32.totalorder %v4851, 0
      %vm4916 = vcmp.ne.s32.totalorder %v4852, 0
      %vm4917 = vcmp.ne.s32.totalorder %v4853, 0
      %vm4918 = vcmp.ne.s32.totalorder %v4854, 0
      %vm4919 = vcmp.ne.s32.totalorder %v4855, 0
      %vm4920 = vcmp.ne.s32.totalorder %v4856, 0
      %vm4921 = vcmp.ne.s32.totalorder %v4857, 0
      %vm4922 = vcmp.ne.s32.totalorder %v4858, 0
      %vm4923 = vcmp.ne.s32.totalorder %v4859, 0
      %vm4924 = vcmp.ne.s32.totalorder %v4860, 0
      %vm4925 = vcmp.ne.s32.totalorder %v4861, 0
      %vm4926 = vcmp.ne.s32.totalorder %v4862, 0
      %vm4927 = vcmp.ne.s32.totalorder %v4863, 0
      %vm4928 = vcmp.ne.s32.totalorder %v4864, 0
      %vm4929 = vcmp.ne.s32.totalorder %v4865, 0
      %vm4930 = vcmp.ne.s32.totalorder %v4866, 0
      %vm4931 = vcmp.ne.s32.totalorder %v4867, 0
      %vm4932 = vcmp.ne.s32.totalorder %v4868, 0
      %vm4933 = vcmp.ne.s32.totalorder %v4869, 0
      %vm4934 = vcmp.ne.s32.totalorder %v4870, 0
      %vm4935 = vcmp.ne.s32.totalorder %v4871, 0
      %vm4936 = vcmp.ne.s32.totalorder %v4872, 0
      %vm4937 = vcmp.ne.s32.totalorder %v4873, 0
      %vm4938 = vcmp.ne.s32.totalorder %v4874, 0
      %vm4939 = vcmp.ne.s32.totalorder %v4875, 0
      %vm4940 = vcmp.ne.s32.totalorder %v4876, 0
      %vm4941 = vcmp.ne.s32.totalorder %v4877, 0
      %vm4942 = vcmp.ne.s32.totalorder %v4878, 0
      %vm4943 = vcmp.ne.s32.totalorder %v4879, 0
      %v4944 = vsel %vm4880, 1, 0
      %v4945 = vsel %vm4881, 1, 0
      %v4946 = vsel %vm4882, 1, 0
      %v4947 = vsel %vm4883, 1, 0
      %v4948 = vsel %vm4884, 1, 0
      %v4949 = vsel %vm4885, 1, 0
      %v4950 = vsel %vm4886, 1, 0
      %v4951 = vsel %vm4887, 1, 0
      %v4952 = vsel %vm4888, 1, 0
      %v4953 = vsel %vm4889, 1, 0
      %v4954 = vsel %vm4890, 1, 0
      %v4955 = vsel %vm4891, 1, 0
      %v4956 = vsel %vm4892, 1, 0
      %v4957 = vsel %vm4893, 1, 0
      %v4958 = vsel %vm4894, 1, 0
      %v4959 = vsel %vm4895, 1, 0
      %v4960 = vsel %vm4896, 1, 0
      %v4961 = vsel %vm4897, 1, 0
      %v4962 = vsel %vm4898, 1, 0
      %v4963 = vsel %vm4899, 1, 0
      %v4964 = vsel %vm4900, 1, 0
      %v4965 = vsel %vm4901, 1, 0
      %v4966 = vsel %vm4902, 1, 0
      %v4967 = vsel %vm4903, 1, 0
      %v4968 = vsel %vm4904, 1, 0
      %v4969 = vsel %vm4905, 1, 0
      %v4970 = vsel %vm4906, 1, 0
      %v4971 = vsel %vm4907, 1, 0
      %v4972 = vsel %vm4908, 1, 0
      %v4973 = vsel %vm4909, 1, 0
      %v4974 = vsel %vm4910, 1, 0
      %v4975 = vsel %vm4911, 1, 0
      %v4976 = vsel %vm4912, 1, 0
      %v4977 = vsel %vm4913, 1, 0
      %v4978 = vsel %vm4914, 1, 0
      %v4979 = vsel %vm4915, 1, 0
      %v4980 = vsel %vm4916, 1, 0
      %v4981 = vsel %vm4917, 1, 0
      %v4982 = vsel %vm4918, 1, 0
      %v4983 = vsel %vm4919, 1, 0
      %v4984 = vsel %vm4920, 1, 0
      %v4985 = vsel %vm4921, 1, 0
      %v4986 = vsel %vm4922, 1, 0
      %v4987 = vsel %vm4923, 1, 0
      %v4988 = vsel %vm4924, 1, 0
      %v4989 = vsel %vm4925, 1, 0
      %v4990 = vsel %vm4926, 1, 0
      %v4991 = vsel %vm4927, 1, 0
      %v4992 = vsel %vm4928, 1, 0
      %v4993 = vsel %vm4929, 1, 0
      %v4994 = vsel %vm4930, 1, 0
      %v4995 = vsel %vm4931, 1, 0
      %v4996 = vsel %vm4932, 1, 0
      %v4997 = vsel %vm4933, 1, 0
      %v4998 = vsel %vm4934, 1, 0
      %v4999 = vsel %vm4935, 1, 0
      %v5000 = vsel %vm4936, 1, 0
      %v5001 = vsel %vm4937, 1, 0
      %v5002 = vsel %vm4938, 1, 0
      %v5003 = vsel %vm4939, 1, 0
      %v5004 = vsel %vm4940, 1, 0
      %v5005 = vsel %vm4941, 1, 0
      %v5006 = vsel %vm4942, 1, 0
      %v5007 = vsel %vm4943, 1, 0
      %v5008 = vcvt.s32.f32 %v4944
      %v5009 = vcvt.s32.f32 %v4945
      %v5010 = vcvt.s32.f32 %v4946
      %v5011 = vcvt.s32.f32 %v4947
      %v5012 = vcvt.s32.f32 %v4948
      %v5013 = vcvt.s32.f32 %v4949
      %v5014 = vcvt.s32.f32 %v4950
      %v5015 = vcvt.s32.f32 %v4951
      %v5016 = vcvt.s32.f32 %v4952
      %v5017 = vcvt.s32.f32 %v4953
      %v5018 = vcvt.s32.f32 %v4954
      %v5019 = vcvt.s32.f32 %v4955
      %v5020 = vcvt.s32.f32 %v4956
      %v5021 = vcvt.s32.f32 %v4957
      %v5022 = vcvt.s32.f32 %v4958
      %v5023 = vcvt.s32.f32 %v4959
      %v5024 = vcvt.s32.f32 %v4960
      %v5025 = vcvt.s32.f32 %v4961
      %v5026 = vcvt.s32.f32 %v4962
      %v5027 = vcvt.s32.f32 %v4963
      %v5028 = vcvt.s32.f32 %v4964
      %v5029 = vcvt.s32.f32 %v4965
      %v5030 = vcvt.s32.f32 %v4966
      %v5031 = vcvt.s32.f32 %v4967
      %v5032 = vcvt.s32.f32 %v4968
      %v5033 = vcvt.s32.f32 %v4969
      %v5034 = vcvt.s32.f32 %v4970
      %v5035 = vcvt.s32.f32 %v4971
      %v5036 = vcvt.s32.f32 %v4972
      %v5037 = vcvt.s32.f32 %v4973
      %v5038 = vcvt.s32.f32 %v4974
      %v5039 = vcvt.s32.f32 %v4975
      %v5040 = vcvt.s32.f32 %v4976
      %v5041 = vcvt.s32.f32 %v4977
      %v5042 = vcvt.s32.f32 %v4978
      %v5043 = vcvt.s32.f32 %v4979
      %v5044 = vcvt.s32.f32 %v4980
      %v5045 = vcvt.s32.f32 %v4981
      %v5046 = vcvt.s32.f32 %v4982
      %v5047 = vcvt.s32.f32 %v4983
      %v5048 = vcvt.s32.f32 %v4984
      %v5049 = vcvt.s32.f32 %v4985
      %v5050 = vcvt.s32.f32 %v4986
      %v5051 = vcvt.s32.f32 %v4987
      %v5052 = vcvt.s32.f32 %v4988
      %v5053 = vcvt.s32.f32 %v4989
      %v5054 = vcvt.s32.f32 %v4990
      %v5055 = vcvt.s32.f32 %v4991
      %v5056 = vcvt.s32.f32 %v4992
      %v5057 = vcvt.s32.f32 %v4993
      %v5058 = vcvt.s32.f32 %v4994
      %v5059 = vcvt.s32.f32 %v4995
      %v5060 = vcvt.s32.f32 %v4996
      %v5061 = vcvt.s32.f32 %v4997
      %v5062 = vcvt.s32.f32 %v4998
      %v5063 = vcvt.s32.f32 %v4999
      %v5064 = vcvt.s32.f32 %v5000
      %v5065 = vcvt.s32.f32 %v5001
      %v5066 = vcvt.s32.f32 %v5002
      %v5067 = vcvt.s32.f32 %v5003
      %v5068 = vcvt.s32.f32 %v5004
      %v5069 = vcvt.s32.f32 %v5005
      %v5070 = vcvt.s32.f32 %v5006
      %v5071 = vcvt.s32.f32 %v5007
      %v5072 = vpack.c.bf16 %v5009, %v5008
      %v5073 = vpack.c.bf16 %v5011, %v5010
      %v5074 = vpack.c.bf16 %v5013, %v5012
      %v5075 = vpack.c.bf16 %v5015, %v5014
      %v5076 = vpack.c.bf16 %v5017, %v5016
      %v5077 = vpack.c.bf16 %v5019, %v5018
      %v5078 = vpack.c.bf16 %v5021, %v5020
      %v5079 = vpack.c.bf16 %v5023, %v5022
      %v5080 = vpack.c.bf16 %v5025, %v5024
      %v5081 = vpack.c.bf16 %v5027, %v5026
      %v5082 = vpack.c.bf16 %v5029, %v5028
      %v5083 = vpack.c.bf16 %v5031, %v5030
      %v5084 = vpack.c.bf16 %v5033, %v5032
      %v5085 = vpack.c.bf16 %v5035, %v5034
      %v5086 = vpack.c.bf16 %v5037, %v5036
      %v5087 = vpack.c.bf16 %v5039, %v5038
      %v5088 = vpack.c.bf16 %v5041, %v5040
      %v5089 = vpack.c.bf16 %v5043, %v5042
      %v5090 = vpack.c.bf16 %v5045, %v5044
      %v5091 = vpack.c.bf16 %v5047, %v5046
      %v5092 = vpack.c.bf16 %v5049, %v5048
      %v5093 = vpack.c.bf16 %v5051, %v5050
      %v5094 = vpack.c.bf16 %v5053, %v5052
      %v5095 = vpack.c.bf16 %v5055, %v5054
      %v5096 = vpack.c.bf16 %v5057, %v5056
      %v5097 = vpack.c.bf16 %v5059, %v5058
      %v5098 = vpack.c.bf16 %v5061, %v5060
      %v5099 = vpack.c.bf16 %v5063, %v5062
      %v5100 = vpack.c.bf16 %v5065, %v5064
      %v5101 = vpack.c.bf16 %v5067, %v5066
      %v5102 = vpack.c.bf16 %v5069, %v5068
      %v5103 = vpack.c.bf16 %v5071, %v5070
      %v5104 = vmul.bf16 %v4080, %v5072
      %v5105 = vmul.bf16 %v4081, %v5073
      %v5106 = vmul.bf16 %v4082, %v5074
      %v5107 = vmul.bf16 %v4083, %v5075
      %v5108 = vmul.bf16 %v4084, %v5076
      %v5109 = vmul.bf16 %v4085, %v5077
      %v5110 = vmul.bf16 %v4086, %v5078
      %v5111 = vmul.bf16 %v4087, %v5079
      %v5112 = vmul.bf16 %v4088, %v5080
      %v5113 = vmul.bf16 %v4089, %v5081
      %v5114 = vmul.bf16 %v4090, %v5082
      %v5115 = vmul.bf16 %v4091, %v5083
      %v5116 = vmul.bf16 %v4092, %v5084
      %v5117 = vmul.bf16 %v4093, %v5085
      %v5118 = vmul.bf16 %v4094, %v5086
      %v5119 = vmul.bf16 %v4095, %v5087
      %v5120 = vmul.bf16 %v4096, %v5088
      %v5121 = vmul.bf16 %v4097, %v5089
      %v5122 = vmul.bf16 %v4098, %v5090
      %v5123 = vmul.bf16 %v4099, %v5091
      %v5124 = vmul.bf16 %v4100, %v5092
      %v5125 = vmul.bf16 %v4101, %v5093
      %v5126 = vmul.bf16 %v4102, %v5094
      %v5127 = vmul.bf16 %v4103, %v5095
      %v5128 = vmul.bf16 %v4104, %v5096
      %v5129 = vmul.bf16 %v4105, %v5097
      %v5130 = vmul.bf16 %v4106, %v5098
      %v5131 = vmul.bf16 %v4107, %v5099
      %v5132 = vmul.bf16 %v4108, %v5100
      %v5133 = vmul.bf16 %v4109, %v5101
      %v5134 = vmul.bf16 %v4110, %v5102
      %v5135 = vmul.bf16 %v4111, %v5103
      %vm5136 = vsmask.f32 4352
      %v5138 = vshrl.u32 %v3023, 16
      %v5140 = vrot.slane %v5138, 3
      %v5141 = vshll.u32 %v3023, 16
      %v5143 = vrot.slane %v5141, 4
      %v5144 = vor.u32 %v5140, %v5143
      %v5146 = vshrl.u32 %v3024, 16
      %v5148 = vrot.slane %v5146, 3
      %v5149 = vshll.u32 %v3024, 16
      %v5151 = vrot.slane %v5149, 4
      %v5152 = vor.u32 %v5148, %v5151
      %v5153 = vsel %vm5136, %v5144, %v5152
      %v5155 = vshrl.u32 %v3025, 16
      %v5157 = vrot.slane %v5155, 3
      %v5158 = vshll.u32 %v3025, 16
      %v5160 = vrot.slane %v5158, 4
      %v5161 = vor.u32 %v5157, %v5160
      %v5162 = vsel %vm5136, %v5152, %v5161
      %v5164 = vshrl.u32 %v3026, 16
      %v5166 = vrot.slane %v5164, 3
      %v5167 = vshll.u32 %v3026, 16
      %v5169 = vrot.slane %v5167, 4
      %v5170 = vor.u32 %v5166, %v5169
      %v5171 = vsel %vm5136, %v5161, %v5170
      %v5173 = vshrl.u32 %v3027, 16
      %v5175 = vrot.slane %v5173, 3
      %v5176 = vshll.u32 %v3027, 16
      %v5178 = vrot.slane %v5176, 4
      %v5179 = vor.u32 %v5175, %v5178
      %v5180 = vsel %vm5136, %v5170, %v5179
      %v5182 = vshrl.u32 %v3028, 16
      %v5184 = vrot.slane %v5182, 3
      %v5185 = vshll.u32 %v3028, 16
      %v5187 = vrot.slane %v5185, 4
      %v5188 = vor.u32 %v5184, %v5187
      %v5189 = vsel %vm5136, %v5179, %v5188
      %v5191 = vshrl.u32 %v3029, 16
      %v5193 = vrot.slane %v5191, 3
      %v5194 = vshll.u32 %v3029, 16
      %v5196 = vrot.slane %v5194, 4
      %v5197 = vor.u32 %v5193, %v5196
      %v5198 = vsel %vm5136, %v5188, %v5197
      %v5200 = vshrl.u32 %v3030, 16
      %v5202 = vrot.slane %v5200, 3
      %v5203 = vshll.u32 %v3030, 16
      %v5205 = vrot.slane %v5203, 4
      %v5206 = vor.u32 %v5202, %v5205
      %v5207 = vsel %vm5136, %v5197, %v5206
      %v5209 = vshrl.u32 %v3031, 16
      %v5211 = vrot.slane %v5209, 3
      %v5212 = vshll.u32 %v3031, 16
      %v5214 = vrot.slane %v5212, 4
      %v5215 = vor.u32 %v5211, %v5214
      %v5216 = vsel %vm5136, %v5206, %v5215
      %v5218 = vshrl.u32 %v3032, 16
      %v5220 = vrot.slane %v5218, 3
      %v5221 = vshll.u32 %v3032, 16
      %v5223 = vrot.slane %v5221, 4
      %v5224 = vor.u32 %v5220, %v5223
      %v5225 = vsel %vm5136, %v5215, %v5224
      %v5227 = vshrl.u32 %v3033, 16
      %v5229 = vrot.slane %v5227, 3
      %v5230 = vshll.u32 %v3033, 16
      %v5232 = vrot.slane %v5230, 4
      %v5233 = vor.u32 %v5229, %v5232
      %v5234 = vsel %vm5136, %v5224, %v5233
      %v5236 = vshrl.u32 %v3034, 16
      %v5238 = vrot.slane %v5236, 3
      %v5239 = vshll.u32 %v3034, 16
      %v5241 = vrot.slane %v5239, 4
      %v5242 = vor.u32 %v5238, %v5241
      %v5243 = vsel %vm5136, %v5233, %v5242
      %v5245 = vshrl.u32 %v3035, 16
      %v5247 = vrot.slane %v5245, 3
      %v5248 = vshll.u32 %v3035, 16
      %v5250 = vrot.slane %v5248, 4
      %v5251 = vor.u32 %v5247, %v5250
      %v5252 = vsel %vm5136, %v5242, %v5251
      %v5254 = vshrl.u32 %v3036, 16
      %v5256 = vrot.slane %v5254, 3
      %v5257 = vshll.u32 %v3036, 16
      %v5259 = vrot.slane %v5257, 4
      %v5260 = vor.u32 %v5256, %v5259
      %v5261 = vsel %vm5136, %v5251, %v5260
      %v5263 = vshrl.u32 %v3037, 16
      %v5265 = vrot.slane %v5263, 3
      %v5266 = vshll.u32 %v3037, 16
      %v5268 = vrot.slane %v5266, 4
      %v5269 = vor.u32 %v5265, %v5268
      %v5270 = vsel %vm5136, %v5260, %v5269
      %v5272 = vshrl.u32 %v3038, 16
      %v5274 = vrot.slane %v5272, 3
      %v5275 = vshll.u32 %v3038, 16
      %v5277 = vrot.slane %v5275, 4
      %v5278 = vor.u32 %v5274, %v5277
      %v5279 = vsel %vm5136, %v5269, %v5278
      %v5281 = vshrl.u32 %v3039, 16
      %v5283 = vrot.slane %v5281, 3
      %v5284 = vshll.u32 %v3039, 16
      %v5286 = vrot.slane %v5284, 4
      %v5287 = vor.u32 %v5283, %v5286
      %v5288 = vsel %vm5136, %v5278, %v5287
      %v5290 = vshrl.u32 %v3040, 16
      %v5292 = vrot.slane %v5290, 3
      %v5293 = vshll.u32 %v3040, 16
      %v5295 = vrot.slane %v5293, 4
      %v5296 = vor.u32 %v5292, %v5295
      %v5297 = vsel %vm5136, %v5287, %v5296
      %v5299 = vshrl.u32 %v3041, 16
      %v5301 = vrot.slane %v5299, 3
      %v5302 = vshll.u32 %v3041, 16
      %v5304 = vrot.slane %v5302, 4
      %v5305 = vor.u32 %v5301, %v5304
      %v5306 = vsel %vm5136, %v5296, %v5305
      %v5308 = vshrl.u32 %v3042, 16
      %v5310 = vrot.slane %v5308, 3
      %v5311 = vshll.u32 %v3042, 16
      %v5313 = vrot.slane %v5311, 4
      %v5314 = vor.u32 %v5310, %v5313
      %v5315 = vsel %vm5136, %v5305, %v5314
      %v5317 = vshrl.u32 %v3043, 16
      %v5319 = vrot.slane %v5317, 3
      %v5320 = vshll.u32 %v3043, 16
      %v5322 = vrot.slane %v5320, 4
      %v5323 = vor.u32 %v5319, %v5322
      %v5324 = vsel %vm5136, %v5314, %v5323
      %v5326 = vshrl.u32 %v3044, 16
      %v5328 = vrot.slane %v5326, 3
      %v5329 = vshll.u32 %v3044, 16
      %v5331 = vrot.slane %v5329, 4
      %v5332 = vor.u32 %v5328, %v5331
      %v5333 = vsel %vm5136, %v5323, %v5332
      %v5335 = vshrl.u32 %v3045, 16
      %v5337 = vrot.slane %v5335, 3
      %v5338 = vshll.u32 %v3045, 16
      %v5340 = vrot.slane %v5338, 4
      %v5341 = vor.u32 %v5337, %v5340
      %v5342 = vsel %vm5136, %v5332, %v5341
      %v5344 = vshrl.u32 %v3046, 16
      %v5346 = vrot.slane %v5344, 3
      %v5347 = vshll.u32 %v3046, 16
      %v5349 = vrot.slane %v5347, 4
      %v5350 = vor.u32 %v5346, %v5349
      %v5351 = vsel %vm5136, %v5341, %v5350
      %v5353 = vshrl.u32 %v3047, 16
      %v5355 = vrot.slane %v5353, 3
      %v5356 = vshll.u32 %v3047, 16
      %v5358 = vrot.slane %v5356, 4
      %v5359 = vor.u32 %v5355, %v5358
      %v5360 = vsel %vm5136, %v5350, %v5359
      %v5362 = vshrl.u32 %v3048, 16
      %v5364 = vrot.slane %v5362, 3
      %v5365 = vshll.u32 %v3048, 16
      %v5367 = vrot.slane %v5365, 4
      %v5368 = vor.u32 %v5364, %v5367
      %v5369 = vsel %vm5136, %v5359, %v5368
      %v5371 = vshrl.u32 %v3049, 16
      %v5373 = vrot.slane %v5371, 3
      %v5374 = vshll.u32 %v3049, 16
      %v5376 = vrot.slane %v5374, 4
      %v5377 = vor.u32 %v5373, %v5376
      %v5378 = vsel %vm5136, %v5368, %v5377
      %v5380 = vshrl.u32 %v3050, 16
      %v5382 = vrot.slane %v5380, 3
      %v5383 = vshll.u32 %v3050, 16
      %v5385 = vrot.slane %v5383, 4
      %v5386 = vor.u32 %v5382, %v5385
      %v5387 = vsel %vm5136, %v5377, %v5386
      %v5389 = vshrl.u32 %v3051, 16
      %v5391 = vrot.slane %v5389, 3
      %v5392 = vshll.u32 %v3051, 16
      %v5394 = vrot.slane %v5392, 4
      %v5395 = vor.u32 %v5391, %v5394
      %v5396 = vsel %vm5136, %v5386, %v5395
      %v5398 = vshrl.u32 %v3052, 16
      %v5400 = vrot.slane %v5398, 3
      %v5401 = vshll.u32 %v3052, 16
      %v5403 = vrot.slane %v5401, 4
      %v5404 = vor.u32 %v5400, %v5403
      %v5405 = vsel %vm5136, %v5395, %v5404
      %v5407 = vshrl.u32 %v3053, 16
      %v5409 = vrot.slane %v5407, 3
      %v5410 = vshll.u32 %v3053, 16
      %v5412 = vrot.slane %v5410, 4
      %v5413 = vor.u32 %v5409, %v5412
      %v5414 = vsel %vm5136, %v5404, %v5413
      %v5416 = vshrl.u32 %v3054, 16
      %v5418 = vrot.slane %v5416, 3
      %v5419 = vshll.u32 %v3054, 16
      %v5421 = vrot.slane %v5419, 4
      %v5422 = vor.u32 %v5418, %v5421
      %v5423 = vsel %vm5136, %v5413, %v5422
      %vm5456 = vcmask 1044480
      %vm5457 = vmand %vm5456, %vm5136
      %v5458 = vsel %vm5457, 0, %v5144
      %v5459 = vmul.bf16 %v5458, %v5104
      %v5460 = vmul.bf16 %v5153, %v5105
      %v5461 = vmul.bf16 %v5162, %v5106
      %v5462 = vmul.bf16 %v5171, %v5107
      %v5463 = vmul.bf16 %v5180, %v5108
      %v5464 = vmul.bf16 %v5189, %v5109
      %v5465 = vmul.bf16 %v5198, %v5110
      %v5466 = vmul.bf16 %v5207, %v5111
      %v5467 = vmul.bf16 %v5216, %v5112
      %v5468 = vmul.bf16 %v5225, %v5113
      %v5469 = vmul.bf16 %v5234, %v5114
      %v5470 = vmul.bf16 %v5243, %v5115
      %v5471 = vmul.bf16 %v5252, %v5116
      %v5472 = vmul.bf16 %v5261, %v5117
      %v5473 = vmul.bf16 %v5270, %v5118
      %v5474 = vmul.bf16 %v5279, %v5119
      %v5475 = vmul.bf16 %v5288, %v5120
      %v5476 = vmul.bf16 %v5297, %v5121
      %v5477 = vmul.bf16 %v5306, %v5122
      %v5478 = vmul.bf16 %v5315, %v5123
      %v5479 = vmul.bf16 %v5324, %v5124
      %v5480 = vmul.bf16 %v5333, %v5125
      %v5481 = vmul.bf16 %v5342, %v5126
      %v5482 = vmul.bf16 %v5351, %v5127
      %v5483 = vmul.bf16 %v5360, %v5128
      %v5484 = vmul.bf16 %v5369, %v5129
      %v5485 = vmul.bf16 %v5378, %v5130
      %v5486 = vmul.bf16 %v5387, %v5131
      %v5487 = vmul.bf16 %v5396, %v5132
      %v5488 = vmul.bf16 %v5405, %v5133
      %v5489 = vmul.bf16 %v5414, %v5134
      %v5490 = vmul.bf16 %v5423, %v5135
      %vm5523 = vcmask 1043456
      %v5524 = vrot.slane %v2991, 4
      %v5525 = vrot.slane %v2992, 4
      %v5526 = vsel %vm5523, %v5524, %v5525
      %v5527 = vrot.slane %v2993, 4
      %v5528 = vsel %vm5523, %v5525, %v5527
      %v5529 = vrot.slane %v2994, 4
      %v5530 = vsel %vm5523, %v5527, %v5529
      %v5531 = vrot.slane %v2995, 4
      %v5532 = vsel %vm5523, %v5529, %v5531
      %v5533 = vrot.slane %v2996, 4
      %v5534 = vsel %vm5523, %v5531, %v5533
      %v5535 = vrot.slane %v2997, 4
      %v5536 = vsel %vm5523, %v5533, %v5535
      %v5537 = vrot.slane %v2998, 4
      %v5538 = vsel %vm5523, %v5535, %v5537
      %v5539 = vrot.slane %v2999, 4
      %v5540 = vsel %vm5523, %v5537, %v5539
      %v5541 = vrot.slane %v3000, 4
      %v5542 = vsel %vm5523, %v5539, %v5541
      %v5543 = vrot.slane %v3001, 4
      %v5544 = vsel %vm5523, %v5541, %v5543
      %v5545 = vrot.slane %v3002, 4
      %v5546 = vsel %vm5523, %v5543, %v5545
      %v5547 = vrot.slane %v3003, 4
      %v5548 = vsel %vm5523, %v5545, %v5547
      %v5549 = vrot.slane %v3004, 4
      %v5550 = vsel %vm5523, %v5547, %v5549
      %v5551 = vrot.slane %v3005, 4
      %v5552 = vsel %vm5523, %v5549, %v5551
      %v5553 = vrot.slane %v3006, 4
      %v5554 = vsel %vm5523, %v5551, %v5553
      %v5555 = vrot.slane %v3007, 4
      %v5556 = vsel %vm5523, %v5553, %v5555
      %v5557 = vrot.slane %v3008, 4
      %v5558 = vsel %vm5523, %v5555, %v5557
      %v5559 = vrot.slane %v3009, 4
      %v5560 = vsel %vm5523, %v5557, %v5559
      %v5561 = vrot.slane %v3010, 4
      %v5562 = vsel %vm5523, %v5559, %v5561
      %v5563 = vrot.slane %v3011, 4
      %v5564 = vsel %vm5523, %v5561, %v5563
      %v5565 = vrot.slane %v3012, 4
      %v5566 = vsel %vm5523, %v5563, %v5565
      %v5567 = vrot.slane %v3013, 4
      %v5568 = vsel %vm5523, %v5565, %v5567
      %v5569 = vrot.slane %v3014, 4
      %v5570 = vsel %vm5523, %v5567, %v5569
      %v5571 = vrot.slane %v3015, 4
      %v5572 = vsel %vm5523, %v5569, %v5571
      %v5573 = vrot.slane %v3016, 4
      %v5574 = vsel %vm5523, %v5571, %v5573
      %v5575 = vrot.slane %v3017, 4
      %v5576 = vsel %vm5523, %v5573, %v5575
      %v5577 = vrot.slane %v3018, 4
      %v5578 = vsel %vm5523, %v5575, %v5577
      %v5579 = vrot.slane %v3019, 4
      %v5580 = vsel %vm5523, %v5577, %v5579
      %v5581 = vrot.slane %v3020, 4
      %v5582 = vsel %vm5523, %v5579, %v5581
      %v5583 = vrot.slane %v3021, 4
      %v5584 = vsel %vm5523, %v5581, %v5583
      %v5585 = vrot.slane %v3022, 4
      %v5586 = vsel %vm5523, %v5583, %v5585
      %vm5618 = vcmask 1043456
      %v5621 = vsel %vm5618, 0, %v5524
      %v5623 = vmul.bf16 %v5621, %v4080
      %v5624 = vmul.bf16 %v5526, %v4081
      %v5625 = vmul.bf16 %v5528, %v4082
      %v5626 = vmul.bf16 %v5530, %v4083
      %v5627 = vmul.bf16 %v5532, %v4084
      %v5628 = vmul.bf16 %v5534, %v4085
      %v5629 = vmul.bf16 %v5536, %v4086
      %v5630 = vmul.bf16 %v5538, %v4087
      %v5631 = vmul.bf16 %v5540, %v4088
      %v5632 = vmul.bf16 %v5542, %v4089
      %v5633 = vmul.bf16 %v5544, %v4090
      %v5634 = vmul.bf16 %v5546, %v4091
      %v5635 = vmul.bf16 %v5548, %v4092
      %v5636 = vmul.bf16 %v5550, %v4093
      %v5637 = vmul.bf16 %v5552, %v4094
      %v5638 = vmul.bf16 %v5554, %v4095
      %v5639 = vmul.bf16 %v5556, %v4096
      %v5640 = vmul.bf16 %v5558, %v4097
      %v5641 = vmul.bf16 %v5560, %v4098
      %v5642 = vmul.bf16 %v5562, %v4099
      %v5643 = vmul.bf16 %v5564, %v4100
      %v5644 = vmul.bf16 %v5566, %v4101
      %v5645 = vmul.bf16 %v5568, %v4102
      %v5646 = vmul.bf16 %v5570, %v4103
      %v5647 = vmul.bf16 %v5572, %v4104
      %v5648 = vmul.bf16 %v5574, %v4105
      %v5649 = vmul.bf16 %v5576, %v4106
      %v5650 = vmul.bf16 %v5578, %v4107
      %v5651 = vmul.bf16 %v5580, %v4108
      %v5652 = vmul.bf16 %v5582, %v4109
      %v5653 = vmul.bf16 %v5584, %v4110
      %v5654 = vmul.bf16 %v5586, %v4111
      %v5687 = vrot.slane %v3023, 4
      %v5688 = vrot.slane %v3024, 4
      %v5689 = vsel %vm5523, %v5687, %v5688
      %v5690 = vrot.slane %v3025, 4
      %v5691 = vsel %vm5523, %v5688, %v5690
      %v5692 = vrot.slane %v3026, 4
      %v5693 = vsel %vm5523, %v5690, %v5692
      %v5694 = vrot.slane %v3027, 4
      %v5695 = vsel %vm5523, %v5692, %v5694
      %v5696 = vrot.slane %v3028, 4
      %v5697 = vsel %vm5523, %v5694, %v5696
      %v5698 = vrot.slane %v3029, 4
      %v5699 = vsel %vm5523, %v5696, %v5698
      %v5700 = vrot.slane %v3030, 4
      %v5701 = vsel %vm5523, %v5698, %v5700
      %v5702 = vrot.slane %v3031, 4
      %v5703 = vsel %vm5523, %v5700, %v5702
      %v5704 = vrot.slane %v3032, 4
      %v5705 = vsel %vm5523, %v5702, %v5704
      %v5706 = vrot.slane %v3033, 4
      %v5707 = vsel %vm5523, %v5704, %v5706
      %v5708 = vrot.slane %v3034, 4
      %v5709 = vsel %vm5523, %v5706, %v5708
      %v5710 = vrot.slane %v3035, 4
      %v5711 = vsel %vm5523, %v5708, %v5710
      %v5712 = vrot.slane %v3036, 4
      %v5713 = vsel %vm5523, %v5710, %v5712
      %v5714 = vrot.slane %v3037, 4
      %v5715 = vsel %vm5523, %v5712, %v5714
      %v5716 = vrot.slane %v3038, 4
      %v5717 = vsel %vm5523, %v5714, %v5716
      %v5718 = vrot.slane %v3039, 4
      %v5719 = vsel %vm5523, %v5716, %v5718
      %v5720 = vrot.slane %v3040, 4
      %v5721 = vsel %vm5523, %v5718, %v5720
      %v5722 = vrot.slane %v3041, 4
      %v5723 = vsel %vm5523, %v5720, %v5722
      %v5724 = vrot.slane %v3042, 4
      %v5725 = vsel %vm5523, %v5722, %v5724
      %v5726 = vrot.slane %v3043, 4
      %v5727 = vsel %vm5523, %v5724, %v5726
      %v5728 = vrot.slane %v3044, 4
      %v5729 = vsel %vm5523, %v5726, %v5728
      %v5730 = vrot.slane %v3045, 4
      %v5731 = vsel %vm5523, %v5728, %v5730
      %v5732 = vrot.slane %v3046, 4
      %v5733 = vsel %vm5523, %v5730, %v5732
      %v5734 = vrot.slane %v3047, 4
      %v5735 = vsel %vm5523, %v5732, %v5734
      %v5736 = vrot.slane %v3048, 4
      %v5737 = vsel %vm5523, %v5734, %v5736
      %v5738 = vrot.slane %v3049, 4
      %v5739 = vsel %vm5523, %v5736, %v5738
      %v5740 = vrot.slane %v3050, 4
      %v5741 = vsel %vm5523, %v5738, %v5740
      %v5742 = vrot.slane %v3051, 4
      %v5743 = vsel %vm5523, %v5740, %v5742
      %v5744 = vrot.slane %v3052, 4
      %v5745 = vsel %vm5523, %v5742, %v5744
      %v5746 = vrot.slane %v3053, 4
      %v5747 = vsel %vm5523, %v5744, %v5746
      %v5748 = vrot.slane %v3054, 4
      %v5749 = vsel %vm5523, %v5746, %v5748
      %v5782 = vsel %vm5618, 0, %v5687
      %v5784 = vmul.bf16 %v5782, %v4080
      %v5785 = vmul.bf16 %v5689, %v4081
      %v5786 = vmul.bf16 %v5691, %v4082
      %v5787 = vmul.bf16 %v5693, %v4083
      %v5788 = vmul.bf16 %v5695, %v4084
      %v5789 = vmul.bf16 %v5697, %v4085
      %v5790 = vmul.bf16 %v5699, %v4086
      %v5791 = vmul.bf16 %v5701, %v4087
      %v5792 = vmul.bf16 %v5703, %v4088
      %v5793 = vmul.bf16 %v5705, %v4089
      %v5794 = vmul.bf16 %v5707, %v4090
      %v5795 = vmul.bf16 %v5709, %v4091
      %v5796 = vmul.bf16 %v5711, %v4092
      %v5797 = vmul.bf16 %v5713, %v4093
      %v5798 = vmul.bf16 %v5715, %v4094
      %v5799 = vmul.bf16 %v5717, %v4095
      %v5800 = vmul.bf16 %v5719, %v4096
      %v5801 = vmul.bf16 %v5721, %v4097
      %v5802 = vmul.bf16 %v5723, %v4098
      %v5803 = vmul.bf16 %v5725, %v4099
      %v5804 = vmul.bf16 %v5727, %v4100
      %v5805 = vmul.bf16 %v5729, %v4101
      %v5806 = vmul.bf16 %v5731, %v4102
      %v5807 = vmul.bf16 %v5733, %v4103
      %v5808 = vmul.bf16 %v5735, %v4104
      %v5809 = vmul.bf16 %v5737, %v4105
      %v5810 = vmul.bf16 %v5739, %v4106
      %v5811 = vmul.bf16 %v5741, %v4107
      %v5812 = vmul.bf16 %v5743, %v4108
      %v5813 = vmul.bf16 %v5745, %v4109
      %v5814 = vmul.bf16 %v5747, %v4110
      %v5815 = vmul.bf16 %v5749, %v4111
      %vm5816 = vsmask.f32 256
      %v5818 = vshrl.u32 %v2959, 16
      %v5820 = vrot.slane %v5818, 7
      %v5821 = vshll.u32 %v2959, 16
      %v5823 = vor.u32 %v5820, %v5821
      %v5825 = vshrl.u32 %v2960, 16
      %v5827 = vrot.slane %v5825, 7
      %v5828 = vshll.u32 %v2960, 16
      %v5830 = vor.u32 %v5827, %v5828
      %v5831 = vsel %vm5816, %v5820, %v5830
      %v5833 = vshrl.u32 %v2961, 16
      %v5835 = vrot.slane %v5833, 7
      %v5836 = vshll.u32 %v2961, 16
      %v5838 = vor.u32 %v5835, %v5836
      %v5839 = vsel %vm5816, %v5827, %v5838
      %v5841 = vshrl.u32 %v2962, 16
      %v5843 = vrot.slane %v5841, 7
      %v5844 = vshll.u32 %v2962, 16
      %v5846 = vor.u32 %v5843, %v5844
      %v5847 = vsel %vm5816, %v5835, %v5846
      %v5849 = vshrl.u32 %v2963, 16
      %v5851 = vrot.slane %v5849, 7
      %v5852 = vshll.u32 %v2963, 16
      %v5854 = vor.u32 %v5851, %v5852
      %v5855 = vsel %vm5816, %v5843, %v5854
      %v5857 = vshrl.u32 %v2964, 16
      %v5859 = vrot.slane %v5857, 7
      %v5860 = vshll.u32 %v2964, 16
      %v5862 = vor.u32 %v5859, %v5860
      %v5863 = vsel %vm5816, %v5851, %v5862
      %v5865 = vshrl.u32 %v2965, 16
      %v5867 = vrot.slane %v5865, 7
      %v5868 = vshll.u32 %v2965, 16
      %v5870 = vor.u32 %v5867, %v5868
      %v5871 = vsel %vm5816, %v5859, %v5870
      %v5873 = vshrl.u32 %v2966, 16
      %v5875 = vrot.slane %v5873, 7
      %v5876 = vshll.u32 %v2966, 16
      %v5878 = vor.u32 %v5875, %v5876
      %v5879 = vsel %vm5816, %v5867, %v5878
      %v5881 = vshrl.u32 %v2967, 16
      %v5883 = vrot.slane %v5881, 7
      %v5884 = vshll.u32 %v2967, 16
      %v5886 = vor.u32 %v5883, %v5884
      %v5887 = vsel %vm5816, %v5875, %v5886
      %v5889 = vshrl.u32 %v2968, 16
      %v5891 = vrot.slane %v5889, 7
      %v5892 = vshll.u32 %v2968, 16
      %v5894 = vor.u32 %v5891, %v5892
      %v5895 = vsel %vm5816, %v5883, %v5894
      %v5897 = vshrl.u32 %v2969, 16
      %v5899 = vrot.slane %v5897, 7
      %v5900 = vshll.u32 %v2969, 16
      %v5902 = vor.u32 %v5899, %v5900
      %v5903 = vsel %vm5816, %v5891, %v5902
      %v5905 = vshrl.u32 %v2970, 16
      %v5907 = vrot.slane %v5905, 7
      %v5908 = vshll.u32 %v2970, 16
      %v5910 = vor.u32 %v5907, %v5908
      %v5911 = vsel %vm5816, %v5899, %v5910
      %v5913 = vshrl.u32 %v2971, 16
      %v5915 = vrot.slane %v5913, 7
      %v5916 = vshll.u32 %v2971, 16
      %v5918 = vor.u32 %v5915, %v5916
      %v5919 = vsel %vm5816, %v5907, %v5918
      %v5921 = vshrl.u32 %v2972, 16
      %v5923 = vrot.slane %v5921, 7
      %v5924 = vshll.u32 %v2972, 16
      %v5926 = vor.u32 %v5923, %v5924
      %v5927 = vsel %vm5816, %v5915, %v5926
      %v5929 = vshrl.u32 %v2973, 16
      %v5931 = vrot.slane %v5929, 7
      %v5932 = vshll.u32 %v2973, 16
      %v5934 = vor.u32 %v5931, %v5932
      %v5935 = vsel %vm5816, %v5923, %v5934
      %v5937 = vshrl.u32 %v2974, 16
      %v5939 = vrot.slane %v5937, 7
      %v5940 = vshll.u32 %v2974, 16
      %v5942 = vor.u32 %v5939, %v5940
      %v5943 = vsel %vm5816, %v5931, %v5942
      %v5945 = vshrl.u32 %v2975, 16
      %v5947 = vrot.slane %v5945, 7
      %v5948 = vshll.u32 %v2975, 16
      %v5950 = vor.u32 %v5947, %v5948
      %v5951 = vsel %vm5816, %v5939, %v5950
      %v5953 = vshrl.u32 %v2976, 16
      %v5955 = vrot.slane %v5953, 7
      %v5956 = vshll.u32 %v2976, 16
      %v5958 = vor.u32 %v5955, %v5956
      %v5959 = vsel %vm5816, %v5947, %v5958
      %v5961 = vshrl.u32 %v2977, 16
      %v5963 = vrot.slane %v5961, 7
      %v5964 = vshll.u32 %v2977, 16
      %v5966 = vor.u32 %v5963, %v5964
      %v5967 = vsel %vm5816, %v5955, %v5966
      %v5969 = vshrl.u32 %v2978, 16
      %v5971 = vrot.slane %v5969, 7
      %v5972 = vshll.u32 %v2978, 16
      %v5974 = vor.u32 %v5971, %v5972
      %v5975 = vsel %vm5816, %v5963, %v5974
      %v5977 = vshrl.u32 %v2979, 16
      %v5979 = vrot.slane %v5977, 7
      %v5980 = vshll.u32 %v2979, 16
      %v5982 = vor.u32 %v5979, %v5980
      %v5983 = vsel %vm5816, %v5971, %v5982
      %v5985 = vshrl.u32 %v2980, 16
      %v5987 = vrot.slane %v5985, 7
      %v5988 = vshll.u32 %v2980, 16
      %v5990 = vor.u32 %v5987, %v5988
      %v5991 = vsel %vm5816, %v5979, %v5990
      %v5993 = vshrl.u32 %v2981, 16
      %v5995 = vrot.slane %v5993, 7
      %v5996 = vshll.u32 %v2981, 16
      %v5998 = vor.u32 %v5995, %v5996
      %v5999 = vsel %vm5816, %v5987, %v5998
      %v6001 = vshrl.u32 %v2982, 16
      %v6003 = vrot.slane %v6001, 7
      %v6004 = vshll.u32 %v2982, 16
      %v6006 = vor.u32 %v6003, %v6004
      %v6007 = vsel %vm5816, %v5995, %v6006
      %v6009 = vshrl.u32 %v2983, 16
      %v6011 = vrot.slane %v6009, 7
      %v6012 = vshll.u32 %v2983, 16
      %v6014 = vor.u32 %v6011, %v6012
      %v6015 = vsel %vm5816, %v6003, %v6014
      %v6017 = vshrl.u32 %v2984, 16
      %v6019 = vrot.slane %v6017, 7
      %v6020 = vshll.u32 %v2984, 16
      %v6022 = vor.u32 %v6019, %v6020
      %v6023 = vsel %vm5816, %v6011, %v6022
      %v6025 = vshrl.u32 %v2985, 16
      %v6027 = vrot.slane %v6025, 7
      %v6028 = vshll.u32 %v2985, 16
      %v6030 = vor.u32 %v6027, %v6028
      %v6031 = vsel %vm5816, %v6019, %v6030
      %v6033 = vshrl.u32 %v2986, 16
      %v6035 = vrot.slane %v6033, 7
      %v6036 = vshll.u32 %v2986, 16
      %v6038 = vor.u32 %v6035, %v6036
      %v6039 = vsel %vm5816, %v6027, %v6038
      %v6041 = vshrl.u32 %v2987, 16
      %v6043 = vrot.slane %v6041, 7
      %v6044 = vshll.u32 %v2987, 16
      %v6046 = vor.u32 %v6043, %v6044
      %v6047 = vsel %vm5816, %v6035, %v6046
      %v6049 = vshrl.u32 %v2988, 16
      %v6051 = vrot.slane %v6049, 7
      %v6052 = vshll.u32 %v2988, 16
      %v6054 = vor.u32 %v6051, %v6052
      %v6055 = vsel %vm5816, %v6043, %v6054
      %v6057 = vshrl.u32 %v2989, 16
      %v6059 = vrot.slane %v6057, 7
      %v6060 = vshll.u32 %v2989, 16
      %v6062 = vor.u32 %v6059, %v6060
      %v6063 = vsel %vm5816, %v6051, %v6062
      %v6065 = vshrl.u32 %v2990, 16
      %v6067 = vrot.slane %v6065, 7
      %v6068 = vshll.u32 %v2990, 16
      %v6070 = vor.u32 %v6067, %v6068
      %v6071 = vsel %vm5816, %v6059, %v6070
      %vm6104 = vcmask 1040384
      %vm6105 = vmand %vm6104, %vm5816
      %v6106 = vsel %vm6105, 0, %v5823
      %v6107 = vmul.bf16 %v6106, %v5072
      %v6108 = vmul.bf16 %v5831, %v5073
      %v6109 = vmul.bf16 %v5839, %v5074
      %v6110 = vmul.bf16 %v5847, %v5075
      %v6111 = vmul.bf16 %v5855, %v5076
      %v6112 = vmul.bf16 %v5863, %v5077
      %v6113 = vmul.bf16 %v5871, %v5078
      %v6114 = vmul.bf16 %v5879, %v5079
      %v6115 = vmul.bf16 %v5887, %v5080
      %v6116 = vmul.bf16 %v5895, %v5081
      %v6117 = vmul.bf16 %v5903, %v5082
      %v6118 = vmul.bf16 %v5911, %v5083
      %v6119 = vmul.bf16 %v5919, %v5084
      %v6120 = vmul.bf16 %v5927, %v5085
      %v6121 = vmul.bf16 %v5935, %v5086
      %v6122 = vmul.bf16 %v5943, %v5087
      %v6123 = vmul.bf16 %v5951, %v5088
      %v6124 = vmul.bf16 %v5959, %v5089
      %v6125 = vmul.bf16 %v5967, %v5090
      %v6126 = vmul.bf16 %v5975, %v5091
      %v6127 = vmul.bf16 %v5983, %v5092
      %v6128 = vmul.bf16 %v5991, %v5093
      %v6129 = vmul.bf16 %v5999, %v5094
      %v6130 = vmul.bf16 %v6007, %v5095
      %v6131 = vmul.bf16 %v6015, %v5096
      %v6132 = vmul.bf16 %v6023, %v5097
      %v6133 = vmul.bf16 %v6031, %v5098
      %v6134 = vmul.bf16 %v6039, %v5099
      %v6135 = vmul.bf16 %v6047, %v5100
      %v6136 = vmul.bf16 %v6055, %v5101
      %v6137 = vmul.bf16 %v6063, %v5102
      %v6138 = vmul.bf16 %v6071, %v5103
      %v6139 = vrot.slane %v5138, 7
      %v6140 = vor.u32 %v6139, %v5141
      %v6141 = vrot.slane %v5146, 7
      %v6142 = vor.u32 %v6141, %v5149
      %v6143 = vsel %vm5816, %v6139, %v6142
      %v6144 = vrot.slane %v5155, 7
      %v6145 = vor.u32 %v6144, %v5158
      %v6146 = vsel %vm5816, %v6141, %v6145
      %v6147 = vrot.slane %v5164, 7
      %v6148 = vor.u32 %v6147, %v5167
      %v6149 = vsel %vm5816, %v6144, %v6148
      %v6150 = vrot.slane %v5173, 7
      %v6151 = vor.u32 %v6150, %v5176
      %v6152 = vsel %vm5816, %v6147, %v6151
      %v6153 = vrot.slane %v5182, 7
      %v6154 = vor.u32 %v6153, %v5185
      %v6155 = vsel %vm5816, %v6150, %v6154
      %v6156 = vrot.slane %v5191, 7
      %v6157 = vor.u32 %v6156, %v5194
      %v6158 = vsel %vm5816, %v6153, %v6157
      %v6159 = vrot.slane %v5200, 7
      %v6160 = vor.u32 %v6159, %v5203
      %v6161 = vsel %vm5816, %v6156, %v6160
      %v6162 = vrot.slane %v5209, 7
      %v6163 = vor.u32 %v6162, %v5212
      %v6164 = vsel %vm5816, %v6159, %v6163
      %v6165 = vrot.slane %v5218, 7
      %v6166 = vor.u32 %v6165, %v5221
      %v6167 = vsel %vm5816, %v6162, %v6166
      %v6168 = vrot.slane %v5227, 7
      %v6169 = vor.u32 %v6168, %v5230
      %v6170 = vsel %vm5816, %v6165, %v6169
      %v6171 = vrot.slane %v5236, 7
      %v6172 = vor.u32 %v6171, %v5239
      %v6173 = vsel %vm5816, %v6168, %v6172
      %v6174 = vrot.slane %v5245, 7
      %v6175 = vor.u32 %v6174, %v5248
      %v6176 = vsel %vm5816, %v6171, %v6175
      %v6177 = vrot.slane %v5254, 7
      %v6178 = vor.u32 %v6177, %v5257
      %v6179 = vsel %vm5816, %v6174, %v6178
      %v6180 = vrot.slane %v5263, 7
      %v6181 = vor.u32 %v6180, %v5266
      %v6182 = vsel %vm5816, %v6177, %v6181
      %v6183 = vrot.slane %v5272, 7
      %v6184 = vor.u32 %v6183, %v5275
      %v6185 = vsel %vm5816, %v6180, %v6184
      %v6186 = vrot.slane %v5281, 7
      %v6187 = vor.u32 %v6186, %v5284
      %v6188 = vsel %vm5816, %v6183, %v6187
      %v6189 = vrot.slane %v5290, 7
      %v6190 = vor.u32 %v6189, %v5293
      %v6191 = vsel %vm5816, %v6186, %v6190
      %v6192 = vrot.slane %v5299, 7
      %v6193 = vor.u32 %v6192, %v5302
      %v6194 = vsel %vm5816, %v6189, %v6193
      %v6195 = vrot.slane %v5308, 7
      %v6196 = vor.u32 %v6195, %v5311
      %v6197 = vsel %vm5816, %v6192, %v6196
      %v6198 = vrot.slane %v5317, 7
      %v6199 = vor.u32 %v6198, %v5320
      %v6200 = vsel %vm5816, %v6195, %v6199
      %v6201 = vrot.slane %v5326, 7
      %v6202 = vor.u32 %v6201, %v5329
      %v6203 = vsel %vm5816, %v6198, %v6202
      %v6204 = vrot.slane %v5335, 7
      %v6205 = vor.u32 %v6204, %v5338
      %v6206 = vsel %vm5816, %v6201, %v6205
      %v6207 = vrot.slane %v5344, 7
      %v6208 = vor.u32 %v6207, %v5347
      %v6209 = vsel %vm5816, %v6204, %v6208
      %v6210 = vrot.slane %v5353, 7
      %v6211 = vor.u32 %v6210, %v5356
      %v6212 = vsel %vm5816, %v6207, %v6211
      %v6213 = vrot.slane %v5362, 7
      %v6214 = vor.u32 %v6213, %v5365
      %v6215 = vsel %vm5816, %v6210, %v6214
      %v6216 = vrot.slane %v5371, 7
      %v6217 = vor.u32 %v6216, %v5374
      %v6218 = vsel %vm5816, %v6213, %v6217
      %v6219 = vrot.slane %v5380, 7
      %v6220 = vor.u32 %v6219, %v5383
      %v6221 = vsel %vm5816, %v6216, %v6220
      %v6222 = vrot.slane %v5389, 7
      %v6223 = vor.u32 %v6222, %v5392
      %v6224 = vsel %vm5816, %v6219, %v6223
      %v6225 = vrot.slane %v5398, 7
      %v6226 = vor.u32 %v6225, %v5401
      %v6227 = vsel %vm5816, %v6222, %v6226
      %v6228 = vrot.slane %v5407, 7
      %v6229 = vor.u32 %v6228, %v5410
      %v6230 = vsel %vm5816, %v6225, %v6229
      %v6231 = vrot.slane %v5416, 7
      %v6232 = vor.u32 %v6231, %v5419
      %v6233 = vsel %vm5816, %v6228, %v6232
      %v6266 = vsel %vm6105, 0, %v6140
      %v6267 = vmul.bf16 %v6266, %v5072
      %v6268 = vmul.bf16 %v6143, %v5073
      %v6269 = vmul.bf16 %v6146, %v5074
      %v6270 = vmul.bf16 %v6149, %v5075
      %v6271 = vmul.bf16 %v6152, %v5076
      %v6272 = vmul.bf16 %v6155, %v5077
      %v6273 = vmul.bf16 %v6158, %v5078
      %v6274 = vmul.bf16 %v6161, %v5079
      %v6275 = vmul.bf16 %v6164, %v5080
      %v6276 = vmul.bf16 %v6167, %v5081
      %v6277 = vmul.bf16 %v6170, %v5082
      %v6278 = vmul.bf16 %v6173, %v5083
      %v6279 = vmul.bf16 %v6176, %v5084
      %v6280 = vmul.bf16 %v6179, %v5085
      %v6281 = vmul.bf16 %v6182, %v5086
      %v6282 = vmul.bf16 %v6185, %v5087
      %v6283 = vmul.bf16 %v6188, %v5088
      %v6284 = vmul.bf16 %v6191, %v5089
      %v6285 = vmul.bf16 %v6194, %v5090
      %v6286 = vmul.bf16 %v6197, %v5091
      %v6287 = vmul.bf16 %v6200, %v5092
      %v6288 = vmul.bf16 %v6203, %v5093
      %v6289 = vmul.bf16 %v6206, %v5094
      %v6290 = vmul.bf16 %v6209, %v5095
      %v6291 = vmul.bf16 %v6212, %v5096
      %v6292 = vmul.bf16 %v6215, %v5097
      %v6293 = vmul.bf16 %v6218, %v5098
      %v6294 = vmul.bf16 %v6221, %v5099
      %v6295 = vmul.bf16 %v6224, %v5100
      %v6296 = vmul.bf16 %v6227, %v5101
      %v6297 = vmul.bf16 %v6230, %v5102
      %v6298 = vmul.bf16 %v6233, %v5103
      %v6299 = vld [vmem:[%s2] sm:$0xf]
      %v6300 = vld [vmem:[%s2 + $0x4] sm:$0xf]
      %v6301 = vld [vmem:[%s2 + $0x8] sm:$0xf]
      %v6302 = vld [vmem:[%s2 + $0xc] sm:$0xf]
      %v6303 = vld [vmem:[%s2 + $0x10] sm:$0xf]
      %v6304 = vld [vmem:[%s2 + $0x14] sm:$0xf]
      %v6305 = vld [vmem:[%s2 + $0x18] sm:$0xf]
      %v6306 = vld [vmem:[%s2 + $0x1c] sm:$0xf]
      %v6307 = vld [vmem:[%s2 + $0x20] sm:$0xf]
      %v6308 = vld [vmem:[%s2 + $0x24] sm:$0xf]
      %v6309 = vld [vmem:[%s2 + $0x28] sm:$0xf]
      %v6310 = vld [vmem:[%s2 + $0x2c] sm:$0xf]
      %v6311 = vld [vmem:[%s2 + $0x30] sm:$0xf]
      %v6312 = vld [vmem:[%s2 + $0x34] sm:$0xf]
      %v6313 = vld [vmem:[%s2 + $0x38] sm:$0xf]
      %v6314 = vld [vmem:[%s2 + $0x3c] sm:$0xf]
      %v6315 = vld [vmem:[%s2 + $0x40] sm:$0xf]
      %v6316 = vld [vmem:[%s2 + $0x44] sm:$0xf]
      %v6317 = vld [vmem:[%s2 + $0x48] sm:$0xf]
      %v6318 = vld [vmem:[%s2 + $0x4c] sm:$0xf]
      %v6319 = vld [vmem:[%s2 + $0x50] sm:$0xf]
      %v6320 = vld [vmem:[%s2 + $0x54] sm:$0xf]
      %v6321 = vld [vmem:[%s2 + $0x58] sm:$0xf]
      %v6322 = vld [vmem:[%s2 + $0x5c] sm:$0xf]
      %v6323 = vld [vmem:[%s2 + $0x60] sm:$0xf]
      %v6324 = vld [vmem:[%s2 + $0x64] sm:$0xf]
      %v6325 = vld [vmem:[%s2 + $0x68] sm:$0xf]
      %v6326 = vld [vmem:[%s2 + $0x6c] sm:$0xf]
      %v6327 = vld [vmem:[%s2 + $0x70] sm:$0xf]
      %v6328 = vld [vmem:[%s2 + $0x74] sm:$0xf]
      %v6329 = vld [vmem:[%s2 + $0x78] sm:$0xf]
      %v6330 = vld [vmem:[%s2 + $0x7c] sm:$0xf]
      %v6331 = vld [vmem:[%s2 + $0x80] sm:$0xf]
      %v6332 = vld [vmem:[%s2 + $0x84] sm:$0xf]
      %v6333 = vld [vmem:[%s2 + $0x88] sm:$0xf]
      %v6334 = vld [vmem:[%s2 + $0x8c] sm:$0xf]
      %v6335 = vld [vmem:[%s2 + $0x90] sm:$0xf]
      %v6336 = vld [vmem:[%s2 + $0x94] sm:$0xf]
      %v6337 = vld [vmem:[%s2 + $0x98] sm:$0xf]
      %v6338 = vld [vmem:[%s2 + $0x9c] sm:$0xf]
      %v6339 = vld [vmem:[%s2 + $0xa0] sm:$0xf]
      %v6340 = vld [vmem:[%s2 + $0xa4] sm:$0xf]
      %v6341 = vld [vmem:[%s2 + $0xa8] sm:$0xf]
      %v6342 = vld [vmem:[%s2 + $0xac] sm:$0xf]
      %v6343 = vld [vmem:[%s2 + $0xb0] sm:$0xf]
      %v6344 = vld [vmem:[%s2 + $0xb4] sm:$0xf]
      %v6345 = vld [vmem:[%s2 + $0xb8] sm:$0xf]
      %v6346 = vld [vmem:[%s2 + $0xbc] sm:$0xf]
      %v6347 = vld [vmem:[%s2 + $0xc0] sm:$0xf]
      %v6348 = vld [vmem:[%s2 + $0xc4] sm:$0xf]
      %v6349 = vld [vmem:[%s2 + $0xc8] sm:$0xf]
      %v6350 = vld [vmem:[%s2 + $0xcc] sm:$0xf]
      %v6351 = vld [vmem:[%s2 + $0xd0] sm:$0xf]
      %v6352 = vld [vmem:[%s2 + $0xd4] sm:$0xf]
      %v6353 = vld [vmem:[%s2 + $0xd8] sm:$0xf]
      %v6354 = vld [vmem:[%s2 + $0xdc] sm:$0xf]
      %v6355 = vld [vmem:[%s2 + $0xe0] sm:$0xf]
      %v6356 = vld [vmem:[%s2 + $0xe4] sm:$0xf]
      %v6357 = vld [vmem:[%s2 + $0xe8] sm:$0xf]
      %v6358 = vld [vmem:[%s2 + $0xec] sm:$0xf]
      %v6359 = vld [vmem:[%s2 + $0xf0] sm:$0xf]
      %v6360 = vld [vmem:[%s2 + $0xf4] sm:$0xf]
      %v6361 = vld [vmem:[%s2 + $0xf8] sm:$0xf]
      %v6362 = vld [vmem:[%s2 + $0xfc] sm:$0xf]
      %v6363 = vld [vmem:[%s2 + $0x100] sm:$0xf]
      %v6364 = vld [vmem:[%s2 + $0x104] sm:$0xf]
      %v6365 = vld [vmem:[%s2 + $0x108] sm:$0xf]
      %v6366 = vld [vmem:[%s2 + $0x10c] sm:$0xf]
      %v6367 = vld [vmem:[%s2 + $0x110] sm:$0xf]
      %v6368 = vld [vmem:[%s2 + $0x114] sm:$0xf]
      %v6369 = vld [vmem:[%s2 + $0x118] sm:$0xf]
      %v6370 = vld [vmem:[%s2 + $0x11c] sm:$0xf]
      %v6371 = vld [vmem:[%s2 + $0x120] sm:$0xf]
      %v6372 = vld [vmem:[%s2 + $0x124] sm:$0xf]
      %v6373 = vld [vmem:[%s2 + $0x128] sm:$0xf]
      %v6374 = vld [vmem:[%s2 + $0x12c] sm:$0xf]
      %v6375 = vld [vmem:[%s2 + $0x130] sm:$0xf]
      %v6376 = vld [vmem:[%s2 + $0x134] sm:$0xf]
      %v6377 = vld [vmem:[%s2 + $0x138] sm:$0xf]
      %v6378 = vld [vmem:[%s2 + $0x13c] sm:$0xf]
      %v6379 = vld [vmem:[%s2 + $0x140] sm:$0xf]
      %v6380 = vld [vmem:[%s2 + $0x144] sm:$0xf]
      %v6381 = vld [vmem:[%s2 + $0x148] sm:$0xf]
      %v6382 = vld [vmem:[%s2 + $0x14c] sm:$0xf]
      %v6383 = vld [vmem:[%s2 + $0x150] sm:$0xf]
      %v6384 = vld [vmem:[%s2 + $0x154] sm:$0xf]
      %v6385 = vld [vmem:[%s2 + $0x158] sm:$0xf]
      %v6386 = vld [vmem:[%s2 + $0x15c] sm:$0xf]
      %v6387 = vld [vmem:[%s2 + $0x160] sm:$0xf]
      %v6388 = vld [vmem:[%s2 + $0x164] sm:$0xf]
      %v6389 = vld [vmem:[%s2 + $0x168] sm:$0xf]
      %v6390 = vld [vmem:[%s2 + $0x16c] sm:$0xf]
      %v6391 = vld [vmem:[%s2 + $0x170] sm:$0xf]
      %v6392 = vld [vmem:[%s2 + $0x174] sm:$0xf]
      %v6393 = vld [vmem:[%s2 + $0x178] sm:$0xf]
      %v6394 = vld [vmem:[%s2 + $0x17c] sm:$0xf]
      %v6395 = vld [vmem:[%s2 + $0x180] sm:$0xf]
      %v6396 = vld [vmem:[%s2 + $0x184] sm:$0xf]
      %v6397 = vld [vmem:[%s2 + $0x188] sm:$0xf]
      %v6398 = vld [vmem:[%s2 + $0x18c] sm:$0xf]
      %v6399 = vld [vmem:[%s2 + $0x190] sm:$0xf]
      %v6400 = vld [vmem:[%s2 + $0x194] sm:$0xf]
      %v6401 = vld [vmem:[%s2 + $0x198] sm:$0xf]
      %v6402 = vld [vmem:[%s2 + $0x19c] sm:$0xf]
      %v6403 = vld [vmem:[%s2 + $0x1a0] sm:$0xf]
      %v6404 = vld [vmem:[%s2 + $0x1a4] sm:$0xf]
      %v6405 = vld [vmem:[%s2 + $0x1a8] sm:$0xf]
      %v6406 = vld [vmem:[%s2 + $0x1ac] sm:$0xf]
      %v6407 = vld [vmem:[%s2 + $0x1b0] sm:$0xf]
      %v6408 = vld [vmem:[%s2 + $0x1b4] sm:$0xf]
      %v6409 = vld [vmem:[%s2 + $0x1b8] sm:$0xf]
      %v6410 = vld [vmem:[%s2 + $0x1bc] sm:$0xf]
      %v6411 = vld [vmem:[%s2 + $0x1c0] sm:$0xf]
      %v6412 = vld [vmem:[%s2 + $0x1c4] sm:$0xf]
      %v6413 = vld [vmem:[%s2 + $0x1c8] sm:$0xf]
      %v6414 = vld [vmem:[%s2 + $0x1cc] sm:$0xf]
      %v6415 = vld [vmem:[%s2 + $0x1d0] sm:$0xf]
      %v6416 = vld [vmem:[%s2 + $0x1d4] sm:$0xf]
      %v6417 = vld [vmem:[%s2 + $0x1d8] sm:$0xf]
      %v6418 = vld [vmem:[%s2 + $0x1dc] sm:$0xf]
      %v6419 = vld [vmem:[%s2 + $0x1e0] sm:$0xf]
      %v6420 = vld [vmem:[%s2 + $0x1e4] sm:$0xf]
      %v6421 = vld [vmem:[%s2 + $0x1e8] sm:$0xf]
      %v6422 = vld [vmem:[%s2 + $0x1ec] sm:$0xf]
      %v6423 = vld [vmem:[%s2 + $0x1f0] sm:$0xf]
      %v6424 = vld [vmem:[%s2 + $0x1f4] sm:$0xf]
      %v6425 = vld [vmem:[%s2 + $0x1f8] sm:$0xf]
      %v6426 = vld [vmem:[%s2 + $0x1fc] sm:$0xf]
      %v6427 = vld [vmem:[%s2 + $0x200] sm:$0xf]
      %v6428 = vld [vmem:[%s2 + $0x204] sm:$0xf]
      %v6429 = vld [vmem:[%s2 + $0x208] sm:$0xf]
      %v6430 = vld [vmem:[%s2 + $0x20c] sm:$0xf]
      %v6431 = vld [vmem:[%s2 + $0x210] sm:$0xf]
      %v6432 = vld [vmem:[%s2 + $0x214] sm:$0xf]
      %v6433 = vld [vmem:[%s2 + $0x218] sm:$0xf]
      %v6434 = vld [vmem:[%s2 + $0x21c] sm:$0xf]
      %v6435 = vld [vmem:[%s2 + $0x220] sm:$0xf]
      %v6436 = vld [vmem:[%s2 + $0x224] sm:$0xf]
      %v6437 = vld [vmem:[%s2 + $0x228] sm:$0xf]
      %v6438 = vld [vmem:[%s2 + $0x22c] sm:$0xf]
      %v6439 = vld [vmem:[%s2 + $0x230] sm:$0xf]
      %v6440 = vld [vmem:[%s2 + $0x234] sm:$0xf]
      %v6441 = vld [vmem:[%s2 + $0x238] sm:$0xf]
      %v6442 = vld [vmem:[%s2 + $0x23c] sm:$0xf]
      %v6443 = vlaneseq
      %v6444 = vshrl.u32 %v6443, 7
      %v6445 = vsub.s32 0, %v6444
      %v6446 = vrot.slane %v308, %v6445
      %v6591 = vunpack.c.l.b16 %v6299
      %v6592 = vunpack.c.l.b16 %v6300
      %v6593 = vunpack.c.l.b16 %v6301
      %v6594 = vunpack.c.l.b16 %v6302
      %v6595 = vunpack.c.l.b16 %v6303
      %v6596 = vunpack.c.l.b16 %v6304
      %v6597 = vunpack.c.l.b16 %v6305
      %v6598 = vunpack.c.l.b16 %v6306
      %v6599 = vunpack.c.l.b16 %v6307
      %v6600 = vunpack.c.l.b16 %v6308
      %v6601 = vunpack.c.l.b16 %v6309
      %v6602 = vunpack.c.l.b16 %v6310
      %v6603 = vunpack.c.l.b16 %v6311
      %v6604 = vunpack.c.l.b16 %v6312
      %v6605 = vunpack.c.l.b16 %v6313
      %v6606 = vunpack.c.l.b16 %v6314
      %v6607 = vunpack.c.l.b16 %v6315
      %v6608 = vunpack.c.l.b16 %v6316
      %v6609 = vunpack.c.l.b16 %v6317
      %v6610 = vunpack.c.l.b16 %v6318
      %v6611 = vunpack.c.l.b16 %v6319
      %v6612 = vunpack.c.l.b16 %v6320
      %v6613 = vunpack.c.l.b16 %v6321
      %v6614 = vunpack.c.l.b16 %v6322
      %v6615 = vunpack.c.l.b16 %v6323
      %v6616 = vunpack.c.l.b16 %v6324
      %v6617 = vunpack.c.l.b16 %v6325
      %v6618 = vunpack.c.l.b16 %v6326
      %v6619 = vunpack.c.l.b16 %v6327
      %v6620 = vunpack.c.l.b16 %v6328
      %v6621 = vunpack.c.l.b16 %v6329
      %v6622 = vunpack.c.l.b16 %v6330
      %v6623 = vunpack.c.l.b16 %v6331
      %v6624 = vunpack.c.l.b16 %v6332
      %v6625 = vunpack.c.l.b16 %v6333
      %v6626 = vunpack.c.l.b16 %v6334
      %v6627 = vunpack.c.l.b16 %v6335
      %v6628 = vunpack.c.l.b16 %v6336
      %v6629 = vunpack.c.l.b16 %v6337
      %v6630 = vunpack.c.l.b16 %v6338
      %v6631 = vunpack.c.l.b16 %v6339
      %v6632 = vunpack.c.l.b16 %v6340
      %v6633 = vunpack.c.l.b16 %v6341
      %v6634 = vunpack.c.l.b16 %v6342
      %v6635 = vunpack.c.l.b16 %v6343
      %v6636 = vunpack.c.l.b16 %v6344
      %v6637 = vunpack.c.l.b16 %v6345
      %v6638 = vunpack.c.l.b16 %v6346
      %v6639 = vunpack.c.l.b16 %v6347
      %v6640 = vunpack.c.l.b16 %v6348
      %v6641 = vunpack.c.l.b16 %v6349
      %v6642 = vunpack.c.l.b16 %v6350
      %v6643 = vunpack.c.l.b16 %v6351
      %v6644 = vunpack.c.l.b16 %v6352
      %v6645 = vunpack.c.l.b16 %v6353
      %v6646 = vunpack.c.l.b16 %v6354
      %v6647 = vunpack.c.l.b16 %v6355
      %v6648 = vunpack.c.l.b16 %v6356
      %v6649 = vunpack.c.l.b16 %v6357
      %v6650 = vunpack.c.l.b16 %v6358
      %v6651 = vunpack.c.l.b16 %v6359
      %v6652 = vunpack.c.l.b16 %v6360
      %v6653 = vunpack.c.l.b16 %v6361
      %v6654 = vunpack.c.l.b16 %v6362
      %v6655 = vunpack.c.l.b16 %v6363
      %v6656 = vunpack.c.l.b16 %v6364
      %v6657 = vunpack.c.l.b16 %v6365
      %v6658 = vunpack.c.l.b16 %v6366
      %v6659 = vunpack.c.l.b16 %v6367
      %v6660 = vunpack.c.l.b16 %v6368
      %v6661 = vunpack.c.l.b16 %v6369
      %v6662 = vunpack.c.l.b16 %v6370
      %v6663 = vunpack.c.l.b16 %v6371
      %v6664 = vunpack.c.l.b16 %v6372
      %v6665 = vunpack.c.l.b16 %v6373
      %v6666 = vunpack.c.l.b16 %v6374
      %v6667 = vunpack.c.l.b16 %v6375
      %v6668 = vunpack.c.l.b16 %v6376
      %v6669 = vunpack.c.l.b16 %v6377
      %v6670 = vunpack.c.l.b16 %v6378
      %v6671 = vunpack.c.l.b16 %v6379
      %v6672 = vunpack.c.l.b16 %v6380
      %v6673 = vunpack.c.l.b16 %v6381
      %v6674 = vunpack.c.l.b16 %v6382
      %v6675 = vunpack.c.l.b16 %v6383
      %v6676 = vunpack.c.l.b16 %v6384
      %v6677 = vunpack.c.l.b16 %v6385
      %v6678 = vunpack.c.l.b16 %v6386
      %v6679 = vunpack.c.l.b16 %v6387
      %v6680 = vunpack.c.l.b16 %v6388
      %v6681 = vunpack.c.l.b16 %v6389
      %v6682 = vunpack.c.l.b16 %v6390
      %v6683 = vunpack.c.l.b16 %v6391
      %v6684 = vunpack.c.l.b16 %v6392
      %v6685 = vunpack.c.l.b16 %v6393
      %v6686 = vunpack.c.l.b16 %v6394
      %v6687 = vunpack.c.l.b16 %v6395
      %v6688 = vunpack.c.l.b16 %v6396
      %v6689 = vunpack.c.l.b16 %v6397
      %v6690 = vunpack.c.l.b16 %v6398
      %v6691 = vunpack.c.l.b16 %v6399
      %v6692 = vunpack.c.l.b16 %v6400
      %v6693 = vunpack.c.l.b16 %v6401
      %v6694 = vunpack.c.l.b16 %v6402
      %v6695 = vunpack.c.l.b16 %v6403
      %v6696 = vunpack.c.l.b16 %v6404
      %v6697 = vunpack.c.l.b16 %v6405
      %v6698 = vunpack.c.l.b16 %v6406
      %v6699 = vunpack.c.l.b16 %v6407
      %v6700 = vunpack.c.l.b16 %v6408
      %v6701 = vunpack.c.l.b16 %v6409
      %v6702 = vunpack.c.l.b16 %v6410
      %v6703 = vunpack.c.l.b16 %v6411
      %v6704 = vunpack.c.l.b16 %v6412
      %v6705 = vunpack.c.l.b16 %v6413
      %v6706 = vunpack.c.l.b16 %v6414
      %v6707 = vunpack.c.l.b16 %v6415
      %v6708 = vunpack.c.l.b16 %v6416
      %v6709 = vunpack.c.l.b16 %v6417
      %v6710 = vunpack.c.l.b16 %v6418
      %v6711 = vunpack.c.l.b16 %v6419
      %v6712 = vunpack.c.l.b16 %v6420
      %v6713 = vunpack.c.l.b16 %v6421
      %v6714 = vunpack.c.l.b16 %v6422
      %v6715 = vunpack.c.l.b16 %v6423
      %v6716 = vunpack.c.l.b16 %v6424
      %v6717 = vunpack.c.l.b16 %v6425
      %v6718 = vunpack.c.l.b16 %v6426
      %v6719 = vunpack.c.l.b16 %v6427
      %v6720 = vunpack.c.l.b16 %v6428
      %v6721 = vunpack.c.l.b16 %v6429
      %v6722 = vunpack.c.l.b16 %v6430
      %v6723 = vunpack.c.l.b16 %v6431
      %v6724 = vunpack.c.l.b16 %v6432
      %v6725 = vunpack.c.l.b16 %v6433
      %v6726 = vunpack.c.l.b16 %v6434
      %v6727 = vunpack.c.l.b16 %v6435
      %v6728 = vunpack.c.l.b16 %v6436
      %v6729 = vunpack.c.l.b16 %v6437
      %v6730 = vunpack.c.l.b16 %v6438
      %v6731 = vunpack.c.l.b16 %v6439
      %v6732 = vunpack.c.l.b16 %v6440
      %v6733 = vunpack.c.l.b16 %v6441
      %v6734 = vunpack.c.l.b16 %v6442
      %v6735 = vpack.c.b16 %v6592, %v6591
      %v6736 = vpack.c.b16 %v6594, %v6593
      %v6737 = vpack.c.b16 %v6596, %v6595
      %v6738 = vpack.c.b16 %v6598, %v6597
      %v6739 = vpack.c.b16 %v6600, %v6599
      %v6740 = vpack.c.b16 %v6602, %v6601
      %v6741 = vpack.c.b16 %v6604, %v6603
      %v6742 = vpack.c.b16 %v6606, %v6605
      %v6743 = vpack.c.b16 %v6608, %v6607
      %v6744 = vpack.c.b16 %v6610, %v6609
      %v6745 = vpack.c.b16 %v6612, %v6611
      %v6746 = vpack.c.b16 %v6614, %v6613
      %v6747 = vpack.c.b16 %v6616, %v6615
      %v6748 = vpack.c.b16 %v6618, %v6617
      %v6749 = vpack.c.b16 %v6620, %v6619
      %v6750 = vpack.c.b16 %v6622, %v6621
      %v6751 = vpack.c.b16 %v6624, %v6623
      %v6752 = vpack.c.b16 %v6626, %v6625
      %v6753 = vpack.c.b16 %v6628, %v6627
      %v6754 = vpack.c.b16 %v6630, %v6629
      %v6755 = vpack.c.b16 %v6632, %v6631
      %v6756 = vpack.c.b16 %v6634, %v6633
      %v6757 = vpack.c.b16 %v6636, %v6635
      %v6758 = vpack.c.b16 %v6638, %v6637
      %v6759 = vpack.c.b16 %v6640, %v6639
      %v6760 = vpack.c.b16 %v6642, %v6641
      %v6761 = vpack.c.b16 %v6644, %v6643
      %v6762 = vpack.c.b16 %v6646, %v6645
      %v6763 = vpack.c.b16 %v6648, %v6647
      %v6764 = vpack.c.b16 %v6650, %v6649
      %v6765 = vpack.c.b16 %v6652, %v6651
      %v6766 = vpack.c.b16 %v6654, %v6653
      %v6767 = vpack.c.b16 %v6656, %v6655
      %v6768 = vpack.c.b16 %v6658, %v6657
      %v6769 = vpack.c.b16 %v6660, %v6659
      %v6770 = vpack.c.b16 %v6662, %v6661
      %v6771 = vpack.c.b16 %v6664, %v6663
      %v6772 = vpack.c.b16 %v6666, %v6665
      %v6773 = vpack.c.b16 %v6668, %v6667
      %v6774 = vpack.c.b16 %v6670, %v6669
      %v6775 = vpack.c.b16 %v6672, %v6671
      %v6776 = vpack.c.b16 %v6674, %v6673
      %v6777 = vpack.c.b16 %v6676, %v6675
      %v6778 = vpack.c.b16 %v6678, %v6677
      %v6779 = vpack.c.b16 %v6680, %v6679
      %v6780 = vpack.c.b16 %v6682, %v6681
      %v6781 = vpack.c.b16 %v6684, %v6683
      %v6782 = vpack.c.b16 %v6686, %v6685
      %v6783 = vpack.c.b16 %v6688, %v6687
      %v6784 = vpack.c.b16 %v6690, %v6689
      %v6785 = vpack.c.b16 %v6692, %v6691
      %v6786 = vpack.c.b16 %v6694, %v6693
      %v6787 = vpack.c.b16 %v6696, %v6695
      %v6788 = vpack.c.b16 %v6698, %v6697
      %v6789 = vpack.c.b16 %v6700, %v6699
      %v6790 = vpack.c.b16 %v6702, %v6701
      %v6791 = vpack.c.b16 %v6704, %v6703
      %v6792 = vpack.c.b16 %v6706, %v6705
      %v6793 = vpack.c.b16 %v6708, %v6707
      %v6794 = vpack.c.b16 %v6710, %v6709
      %v6795 = vpack.c.b16 %v6712, %v6711
      %v6796 = vpack.c.b16 %v6714, %v6713
      %v6797 = vpack.c.b16 %v6716, %v6715
      %v6798 = vpack.c.b16 %v6718, %v6717
      %v6799 = vpack.c.b16 %v6720, %v6719
      %v6800 = vpack.c.b16 %v6722, %v6721
      %v6801 = vpack.c.b16 %v6724, %v6723
      %v6802 = vpack.c.b16 %v6726, %v6725
      %v6803 = vpack.c.b16 %v6728, %v6727
      %v6804 = vpack.c.b16 %v6730, %v6729
      %v6805 = vpack.c.b16 %v6732, %v6731
      %v6806 = vpack.c.b16 %v6734, %v6733
      %6879 = vmatprep.subr.bf16.mxu0 0
      %6880 = vmatpush1.bf16.msra.mxu0 %v6735
      %6881 = vmatprep.subr.bf16.mxu0 0
      %6882 = vmatpush1.bf16.msra.mxu0 %v6736
      %6883 = vmatprep.subr.bf16.mxu0 0
      %6884 = vmatpush1.bf16.msra.mxu0 %v6737
      %6885 = vmatprep.subr.bf16.mxu0 0
      %6886 = vmatpush1.bf16.msra.mxu0 %v6738
      %6887 = vmatprep.subr.bf16.mxu0 0
      %6888 = vmatpush1.bf16.msra.mxu0 %v6739
      %6889 = vmatprep.subr.bf16.mxu0 0
      %6890 = vmatpush1.bf16.msra.mxu0 %v6740
      %6891 = vmatprep.subr.bf16.mxu0 0
      %6892 = vmatpush1.bf16.msra.mxu0 %v6741
      %6893 = vmatprep.subr.bf16.mxu0 0
      %6894 = vmatpush1.bf16.msra.mxu0 %v6742
      %6895 = vmatprep.subr.bf16.mxu0 0
      %6896 = vmatpush1.bf16.msra.mxu0 %v6743
      %6897 = vmatprep.subr.bf16.mxu0 0
      %6898 = vmatpush1.bf16.msra.mxu0 %v6744
      %6899 = vmatprep.subr.bf16.mxu0 0
      %6900 = vmatpush1.bf16.msra.mxu0 %v6745
      %6901 = vmatprep.subr.bf16.mxu0 0
      %6902 = vmatpush1.bf16.msra.mxu0 %v6746
      %6903 = vmatprep.subr.bf16.mxu0 0
      %6904 = vmatpush1.bf16.msra.mxu0 %v6747
      %6905 = vmatprep.subr.bf16.mxu0 0
      %6906 = vmatpush1.bf16.msra.mxu0 %v6748
      %6907 = vmatprep.subr.bf16.mxu0 0
      %6908 = vmatpush1.bf16.msra.mxu0 %v6749
      %6909 = vmatprep.subr.bf16.mxu0 0
      %6910 = vmatpush1.bf16.msra.mxu0 %v6750
      %6911 = vmatprep.mubr.bf16.mxu0 %v5623
      %6912 = vmatmul.mubr.bf16.gmra.mrb[0].mxu0 %v5459
      %v6913 = vpop.f32.mrb[0].mxu0
      %v6914 = vadd.f32 %v6446, %v6913
      %v6915 = vpop.f32.mrb[0].mxu0
      %v6916 = vpop.f32.mrb[0].mxu0
      %v6917 = vadd.f32 %v6446, %v6916
      %v6918 = vpop.f32.mrb[0].mxu0
      %6919 = vmatprep.mubr.bf16.mxu0 %v5624
      %6920 = vmatmul.mubr.bf16.gmra.mrb[0].mxu0 %v5460
      %v6921 = vpop.f32.mrb[0].mxu0
      %v6922 = vadd.f32 %v6446, %v6921
      %v6923 = vpop.f32.mrb[0].mxu0
      %v6924 = vpop.f32.mrb[0].mxu0
      %v6925 = vadd.f32 %v6446, %v6924
      %v6926 = vpop.f32.mrb[0].mxu0
      %6927 = vmatprep.mubr.bf16.mxu0 %v5625
      %6928 = vmatmul.mubr.bf16.gmra.mrb[0].mxu0 %v5461
      %v6929 = vpop.f32.mrb[0].mxu0
      %v6930 = vadd.f32 %v6446, %v6929
      %v6931 = vpop.f32.mrb[0].mxu0
      %v6932 = vpop.f32.mrb[0].mxu0
      %v6933 = vadd.f32 %v6446, %v6932
      %v6934 = vpop.f32.mrb[0].mxu0
      %6935 = vmatprep.mubr.bf16.mxu0 %v5626
      %6936 = vmatmul.mubr.bf16.gmra.mrb[0].mxu0 %v5462
      %v6937 = vpop.f32.mrb[0].mxu0
      %v6938 = vadd.f32 %v6446, %v6937
      %v6939 = vpop.f32.mrb[0].mxu0
      %v6940 = vpop.f32.mrb[0].mxu0
      %v6941 = vadd.f32 %v6446, %v6940
      %v6942 = vpop.f32.mrb[0].mxu0
      %6943 = vmatprep.mubr.bf16.mxu0 %v5627
      %6944 = vmatmul.mubr.bf16.gmra.mrb[0].mxu0 %v5463
      %v6945 = vpop.f32.mrb[0].mxu0
      %v6946 = vadd.f32 %v6446, %v6945
      %v6947 = vpop.f32.mrb[0].mxu0
      %v6948 = vpop.f32.mrb[0].mxu0
      %v6949 = vadd.f32 %v6446, %v6948
      %v6950 = vpop.f32.mrb[0].mxu0
      %6951 = vmatprep.mubr.bf16.mxu0 %v5628
      %6952 = vmatmul.mubr.bf16.gmra.mrb[0].mxu0 %v5464
      %v6953 = vpop.f32.mrb[0].mxu0
      %v6954 = vadd.f32 %v6446, %v6953
      %v6955 = vpop.f32.mrb[0].mxu0
      %v6956 = vpop.f32.mrb[0].mxu0
      %v6957 = vadd.f32 %v6446, %v6956
      %v6958 = vpop.f32.mrb[0].mxu0
      %6959 = vmatprep.mubr.bf16.mxu0 %v5629
      %6960 = vmatmul.mubr.bf16.gmra.mrb[0].mxu0 %v5465
      %v6961 = vpop.f32.mrb[0].mxu0
      %v6962 = vadd.f32 %v6446, %v6961
      %v6963 = vpop.f32.mrb[0].mxu0
      %v6964 = vpop.f32.mrb[0].mxu0
      %v6965 = vadd.f32 %v6446, %v6964
      %v6966 = vpop.f32.mrb[0].mxu0
      %6967 = vmatprep.mubr.bf16.mxu0 %v5630
      %6968 = vmatmul.mubr.bf16.gmra.mrb[0].mxu0 %v5466
      %v6969 = vpop.f32.mrb[0].mxu0
      %v6970 = vadd.f32 %v6446, %v6969
      %v6971 = vpop.f32.mrb[0].mxu0
      %v6972 = vpop.f32.mrb[0].mxu0
      %v6973 = vadd.f32 %v6446, %v6972
      %v6974 = vpop.f32.mrb[0].mxu0
      %6975 = vmatprep.mubr.bf16.mxu0 %v5631
      %6976 = vmatmul.mubr.bf16.gmra.mrb[0].mxu0 %v5467
      %v6977 = vpop.f32.mrb[0].mxu0
      %v6978 = vadd.f32 %v6446, %v6977
      %v6979 = vpop.f32.mrb[0].mxu0
      %v6980 = vpop.f32.mrb[0].mxu0
      %v6981 = vadd.f32 %v6446, %v6980
      %v6982 = vpop.f32.mrb[0].mxu0
      %6983 = vmatprep.mubr.bf16.mxu0 %v5632
      %6984 = vmatmul.mubr.bf16.gmra.mrb[0].mxu0 %v5468
      %v6985 = vpop.f32.mrb[0].mxu0
      %v6986 = vadd.f32 %v6446, %v6985
      %v6987 = vpop.f32.mrb[0].mxu0
      %v6988 = vpop.f32.mrb[0].mxu0
      %v6989 = vadd.f32 %v6446, %v6988
      %v6990 = vpop.f32.mrb[0].mxu0
      %6991 = vmatprep.mubr.bf16.mxu0 %v5633
      %6992 = vmatmul.mubr.bf16.gmra.mrb[0].mxu0 %v5469
      %v6993 = vpop.f32.mrb[0].mxu0
      %v6994 = vadd.f32 %v6446, %v6993
      %v6995 = vpop.f32.mrb[0].mxu0
      %v6996 = vpop.f32.mrb[0].mxu0
      %v6997 = vadd.f32 %v6446, %v6996
      %v6998 = vpop.f32.mrb[0].mxu0
      %6999 = vmatprep.mubr.bf16.mxu0 %v5634
      %7000 = vmatmul.mubr.bf16.gmra.mrb[0].mxu0 %v5470
      %v7001 = vpop.f32.mrb[0].mxu0
      %v7002 = vadd.f32 %v6446, %v7001
      %v7003 = vpop.f32.mrb[0].mxu0
      %v7004 = vpop.f32.mrb[0].mxu0
      %v7005 = vadd.f32 %v6446, %v7004
      %v7006 = vpop.f32.mrb[0].mxu0
      %7007 = vmatprep.mubr.bf16.mxu0 %v5635
      %7008 = vmatmul.mubr.bf16.gmra.mrb[0].mxu0 %v5471
      %v7009 = vpop.f32.mrb[0].mxu0
      %v7010 = vadd.f32 %v6446, %v7009
      %v7011 = vpop.f32.mrb[0].mxu0
      %v7012 = vpop.f32.mrb[0].mxu0
      %v7013 = vadd.f32 %v6446, %v7012
      %v7014 = vpop.f32.mrb[0].mxu0
      %7015 = vmatprep.mubr.bf16.mxu0 %v5636
      %7016 = vmatmul.mubr.bf16.gmra.mrb[0].mxu0 %v5472
      %v7017 = vpop.f32.mrb[0].mxu0
      %v7018 = vadd.f32 %v6446, %v7017
      %v7019 = vpop.f32.mrb[0].mxu0
      %v7020 = vpop.f32.mrb[0].mxu0
      %v7021 = vadd.f32 %v6446, %v7020
      %v7022 = vpop.f32.mrb[0].mxu0
      %7023 = vmatprep.mubr.bf16.mxu0 %v5637
      %7024 = vmatmul.mubr.bf16.gmra.mrb[0].mxu0 %v5473
      %v7025 = vpop.f32.mrb[0].mxu0
      %v7026 = vadd.f32 %v6446, %v7025
      %v7027 = vpop.f32.mrb[0].mxu0
      %v7028 = vpop.f32.mrb[0].mxu0
      %v7029 = vadd.f32 %v6446, %v7028
      %v7030 = vpop.f32.mrb[0].mxu0
      %7031 = vmatprep.mubr.bf16.mxu0 %v5638
      %7032 = vmatmul.mubr.bf16.gmra.mrb[0].mxu0 %v5474
      %v7033 = vpop.f32.mrb[0].mxu0
      %v7034 = vadd.f32 %v6446, %v7033
      %v7035 = vpop.f32.mrb[0].mxu0
      %v7036 = vpop.f32.mrb[0].mxu0
      %v7037 = vadd.f32 %v6446, %v7036
      %v7038 = vpop.f32.mrb[0].mxu0
      %7039 = vmatprep.mubr.bf16.mxu0 %v5639
      %7040 = vmatmul.mubr.bf16.gmra.mrb[0].mxu0 %v5475
      %v7041 = vpop.f32.mrb[0].mxu0
      %v7042 = vadd.f32 %v6446, %v7041
      %v7043 = vpop.f32.mrb[0].mxu0
      %v7044 = vpop.f32.mrb[0].mxu0
      %v7045 = vadd.f32 %v6446, %v7044
      %v7046 = vpop.f32.mrb[0].mxu0
      %7047 = vmatprep.mubr.bf16.mxu0 %v5640
      %7048 = vmatmul.mubr.bf16.gmra.mrb[0].mxu0 %v5476
      %v7049 = vpop.f32.mrb[0].mxu0
      %v7050 = vadd.f32 %v6446, %v7049
      %v7051 = vpop.f32.mrb[0].mxu0
      %v7052 = vpop.f32.mrb[0].mxu0
      %v7053 = vadd.f32 %v6446, %v7052
      %v7054 = vpop.f32.mrb[0].mxu0
      %7055 = vmatprep.mubr.bf16.mxu0 %v5641
      %7056 = vmatmul.mubr.bf16.gmra.mrb[0].mxu0 %v5477
      %v7057 = vpop.f32.mrb[0].mxu0
      %v7058 = vadd.f32 %v6446, %v7057
      %v7059 = vpop.f32.mrb[0].mxu0
      %v7060 = vpop.f32.mrb[0].mxu0
      %v7061 = vadd.f32 %v6446, %v7060
      %v7062 = vpop.f32.mrb[0].mxu0
      %7063 = vmatprep.mubr.bf16.mxu0 %v5642
      %7064 = vmatmul.mubr.bf16.gmra.mrb[0].mxu0 %v5478
      %v7065 = vpop.f32.mrb[0].mxu0
      %v7066 = vadd.f32 %v6446, %v7065
      %v7067 = vpop.f32.mrb[0].mxu0
      %v7068 = vpop.f32.mrb[0].mxu0
      %v7069 = vadd.f32 %v6446, %v7068
      %v7070 = vpop.f32.mrb[0].mxu0
      %7071 = vmatprep.mubr.bf16.mxu0 %v5643
      %7072 = vmatmul.mubr.bf16.gmra.mrb[0].mxu0 %v5479
      %v7073 = vpop.f32.mrb[0].mxu0
      %v7074 = vadd.f32 %v6446, %v7073
      %v7075 = vpop.f32.mrb[0].mxu0
      %v7076 = vpop.f32.mrb[0].mxu0
      %v7077 = vadd.f32 %v6446, %v7076
      %v7078 = vpop.f32.mrb[0].mxu0
      %7079 = vmatprep.mubr.bf16.mxu0 %v5644
      %7080 = vmatmul.mubr.bf16.gmra.mrb[0].mxu0 %v5480
      %v7081 = vpop.f32.mrb[0].mxu0
      %v7082 = vadd.f32 %v6446, %v7081
      %v7083 = vpop.f32.mrb[0].mxu0
      %v7084 = vpop.f32.mrb[0].mxu0
      %v7085 = vadd.f32 %v6446, %v7084
      %v7086 = vpop.f32.mrb[0].mxu0
      %7087 = vmatprep.mubr.bf16.mxu0 %v5645
      %7088 = vmatmul.mubr.bf16.gmra.mrb[0].mxu0 %v5481
      %v7089 = vpop.f32.mrb[0].mxu0
      %v7090 = vadd.f32 %v6446, %v7089
      %v7091 = vpop.f32.mrb[0].mxu0
      %v7092 = vpop.f32.mrb[0].mxu0
      %v7093 = vadd.f32 %v6446, %v7092
      %v7094 = vpop.f32.mrb[0].mxu0
      %7095 = vmatprep.mubr.bf16.mxu0 %v5646
      %7096 = vmatmul.mubr.bf16.gmra.mrb[0].mxu0 %v5482
      %v7097 = vpop.f32.mrb[0].mxu0
      %v7098 = vadd.f32 %v6446, %v7097
      %v7099 = vpop.f32.mrb[0].mxu0
      %v7100 = vpop.f32.mrb[0].mxu0
      %v7101 = vadd.f32 %v6446, %v7100
      %v7102 = vpop.f32.mrb[0].mxu0
      %7103 = vmatprep.mubr.bf16.mxu0 %v5647
      %7104 = vmatmul.mubr.bf16.gmra.mrb[0].mxu0 %v5483
      %v7105 = vpop.f32.mrb[0].mxu0
      %v7106 = vadd.f32 %v6446, %v7105
      %v7107 = vpop.f32.mrb[0].mxu0
      %v7108 = vpop.f32.mrb[0].mxu0
      %v7109 = vadd.f32 %v6446, %v7108
      %v7110 = vpop.f32.mrb[0].mxu0
      %7111 = vmatprep.mubr.bf16.mxu0 %v5648
      %7112 = vmatmul.mubr.bf16.gmra.mrb[0].mxu0 %v5484
      %v7113 = vpop.f32.mrb[0].mxu0
      %v7114 = vadd.f32 %v6446, %v7113
      %v7115 = vpop.f32.mrb[0].mxu0
      %v7116 = vpop.f32.mrb[0].mxu0
      %v7117 = vadd.f32 %v6446, %v7116
      %v7118 = vpop.f32.mrb[0].mxu0
      %7119 = vmatprep.mubr.bf16.mxu0 %v5649
      %7120 = vmatmul.mubr.bf16.gmra.mrb[0].mxu0 %v5485
      %v7121 = vpop.f32.mrb[0].mxu0
      %v7122 = vadd.f32 %v6446, %v7121
      %v7123 = vpop.f32.mrb[0].mxu0
      %v7124 = vpop.f32.mrb[0].mxu0
      %v7125 = vadd.f32 %v6446, %v7124
      %v7126 = vpop.f32.mrb[0].mxu0
      %7127 = vmatprep.mubr.bf16.mxu0 %v5650
      %7128 = vmatmul.mubr.bf16.gmra.mrb[0].mxu0 %v5486
      %v7129 = vpop.f32.mrb[0].mxu0
      %v7130 = vadd.f32 %v6446, %v7129
      %v7131 = vpop.f32.mrb[0].mxu0
      %v7132 = vpop.f32.mrb[0].mxu0
      %v7133 = vadd.f32 %v6446, %v7132
      %v7134 = vpop.f32.mrb[0].mxu0
      %7135 = vmatprep.mubr.bf16.mxu0 %v5651
      %7136 = vmatmul.mubr.bf16.gmra.mrb[0].mxu0 %v5487
      %v7137 = vpop.f32.mrb[0].mxu0
      %v7138 = vadd.f32 %v6446, %v7137
      %v7139 = vpop.f32.mrb[0].mxu0
      %v7140 = vpop.f32.mrb[0].mxu0
      %v7141 = vadd.f32 %v6446, %v7140
      %v7142 = vpop.f32.mrb[0].mxu0
      %7143 = vmatprep.mubr.bf16.mxu0 %v5652
      %7144 = vmatmul.mubr.bf16.gmra.mrb[0].mxu0 %v5488
      %v7145 = vpop.f32.mrb[0].mxu0
      %v7146 = vadd.f32 %v6446, %v7145
      %v7147 = vpop.f32.mrb[0].mxu0
      %v7148 = vpop.f32.mrb[0].mxu0
      %v7149 = vadd.f32 %v6446, %v7148
      %v7150 = vpop.f32.mrb[0].mxu0
      %7151 = vmatprep.mubr.bf16.mxu0 %v5653
      %7152 = vmatmul.mubr.bf16.gmra.mrb[0].mxu0 %v5489
      %v7153 = vpop.f32.mrb[0].mxu0
      %v7154 = vadd.f32 %v6446, %v7153
      %v7155 = vpop.f32.mrb[0].mxu0
      %v7156 = vpop.f32.mrb[0].mxu0
      %v7157 = vadd.f32 %v6446, %v7156
      %v7158 = vpop.f32.mrb[0].mxu0
      %7159 = vmatprep.mubr.bf16.mxu0 %v5654
      %7160 = vmatmul.mubr.bf16.gmra.mrb[0].mxu0 %v5490
      %v7161 = vpop.f32.mrb[0].mxu0
      %v7162 = vadd.f32 %v6446, %v7161
      %v7163 = vpop.f32.mrb[0].mxu0
      %v7164 = vpop.f32.mrb[0].mxu0
      %v7165 = vadd.f32 %v6446, %v7164
      %v7166 = vpop.f32.mrb[0].mxu0
      %7167 = vdwg.mxu0
      %7168 = vmatprep.subr.bf16.mxu0 0
      %7169 = vmatpush1.bf16.msra.mxu0 %v6751
      %7170 = vmatprep.subr.bf16.mxu0 0
      %7171 = vmatpush1.bf16.msra.mxu0 %v6752
      %7172 = vmatprep.subr.bf16.mxu0 0
      %7173 = vmatpush1.bf16.msra.mxu0 %v6753
      %7174 = vmatprep.subr.bf16.mxu0 0
      %7175 = vmatpush1.bf16.msra.mxu0 %v6754
      %7176 = vmatprep.subr.bf16.mxu0 0
      %7177 = vmatpush1.bf16.msra.mxu0 %v6755
      %7178 = vmatprep.subr.bf16.mxu0 0
      %7179 = vmatpush1.bf16.msra.mxu0 %v6756
      %7180 = vmatprep.subr.bf16.mxu0 0
      %7181 = vmatpush1.bf16.msra.mxu0 %v6757
      %7182 = vmatprep.subr.bf16.mxu0 0
      %7183 = vmatpush1.bf16.msra.mxu0 %v6758
      %7184 = vmatprep.subr.bf16.mxu0 0
      %7185 = vmatpush1.bf16.msra.mxu0 %v6759
      %7186 = vmatprep.subr.bf16.mxu0 0
      %7187 = vmatpush1.bf16.msra.mxu0 %v6760
      %7188 = vmatprep.subr.bf16.mxu0 0
      %7189 = vmatpush1.bf16.msra.mxu0 %v6761
      %7190 = vmatprep.subr.bf16.mxu0 0
      %7191 = vmatpush1.bf16.msra.mxu0 %v6762
      %7192 = vmatprep.subr.bf16.mxu0 0
      %7193 = vmatpush1.bf16.msra.mxu0 %v6763
      %7194 = vmatprep.subr.bf16.mxu0 0
      %7195 = vmatpush1.bf16.msra.mxu0 %v6764
      %7196 = vmatprep.subr.bf16.mxu0 0
      %7197 = vmatpush1.bf16.msra.mxu0 %v6765
      %7198 = vmatprep.subr.bf16.mxu0 0
      %7199 = vmatpush1.bf16.msra.mxu0 %v6766
      %7200 = vmatprep.mubr.bf16.mxu0 %v6107
      %7201 = vmatmul.mubr.bf16.gmra.mrb[0].mxu0 %v5784
      %v7202 = vpop.f32.mrb[0].mxu0
      %v7203 = vadd.f32 %v6914, %v7202
      %v7204 = vpop.f32.mrb[0].mxu0
      %v7205 = vpop.f32.mrb[0].mxu0
      %v7206 = vadd.f32 %v6917, %v7205
      %v7207 = vpop.f32.mrb[0].mxu0
      %7208 = vmatprep.mubr.bf16.mxu0 %v6108
      %7209 = vmatmul.mubr.bf16.gmra.mrb[0].mxu0 %v5785
      %v7210 = vpop.f32.mrb[0].mxu0
      %v7211 = vadd.f32 %v6922, %v7210
      %v7212 = vpop.f32.mrb[0].mxu0
      %v7213 = vpop.f32.mrb[0].mxu0
      %v7214 = vadd.f32 %v6925, %v7213
      %v7215 = vpop.f32.mrb[0].mxu0
      %7216 = vmatprep.mubr.bf16.mxu0 %v6109
      %7217 = vmatmul.mubr.bf16.gmra.mrb[0].mxu0 %v5786
      %v7218 = vpop.f32.mrb[0].mxu0
      %v7219 = vadd.f32 %v6930, %v7218
      %v7220 = vpop.f32.mrb[0].mxu0
      %v7221 = vpop.f32.mrb[0].mxu0
      %v7222 = vadd.f32 %v6933, %v7221
      %v7223 = vpop.f32.mrb[0].mxu0
      %7224 = vmatprep.mubr.bf16.mxu0 %v6110
      %7225 = vmatmul.mubr.bf16.gmra.mrb[0].mxu0 %v5787
      %v7226 = vpop.f32.mrb[0].mxu0
      %v7227 = vadd.f32 %v6938, %v7226
      %v7228 = vpop.f32.mrb[0].mxu0
      %v7229 = vpop.f32.mrb[0].mxu0
      %v7230 = vadd.f32 %v6941, %v7229
      %v7231 = vpop.f32.mrb[0].mxu0
      %7232 = vmatprep.mubr.bf16.mxu0 %v6111
      %7233 = vmatmul.mubr.bf16.gmra.mrb[0].mxu0 %v5788
      %v7234 = vpop.f32.mrb[0].mxu0
      %v7235 = vadd.f32 %v6946, %v7234
      %v7236 = vpop.f32.mrb[0].mxu0
      %v7237 = vpop.f32.mrb[0].mxu0
      %v7238 = vadd.f32 %v6949, %v7237
      %v7239 = vpop.f32.mrb[0].mxu0
      %7240 = vmatprep.mubr.bf16.mxu0 %v6112
      %7241 = vmatmul.mubr.bf16.gmra.mrb[0].mxu0 %v5789
      %v7242 = vpop.f32.mrb[0].mxu0
      %v7243 = vadd.f32 %v6954, %v7242
      %v7244 = vpop.f32.mrb[0].mxu0
      %v7245 = vpop.f32.mrb[0].mxu0
      %v7246 = vadd.f32 %v6957, %v7245
      %v7247 = vpop.f32.mrb[0].mxu0
      %7248 = vmatprep.mubr.bf16.mxu0 %v6113
      %7249 = vmatmul.mubr.bf16.gmra.mrb[0].mxu0 %v5790
      %v7250 = vpop.f32.mrb[0].mxu0
      %v7251 = vadd.f32 %v6962, %v7250
      %v7252 = vpop.f32.mrb[0].mxu0
      %v7253 = vpop.f32.mrb[0].mxu0
      %v7254 = vadd.f32 %v6965, %v7253
      %v7255 = vpop.f32.mrb[0].mxu0
      %7256 = vmatprep.mubr.bf16.mxu0 %v6114
      %7257 = vmatmul.mubr.bf16.gmra.mrb[0].mxu0 %v5791
      %v7258 = vpop.f32.mrb[0].mxu0
      %v7259 = vadd.f32 %v6970, %v7258
      %v7260 = vpop.f32.mrb[0].mxu0
      %v7261 = vpop.f32.mrb[0].mxu0
      %v7262 = vadd.f32 %v6973, %v7261
      %v7263 = vpop.f32.mrb[0].mxu0
      %7264 = vmatprep.mubr.bf16.mxu0 %v6115
      %7265 = vmatmul.mubr.bf16.gmra.mrb[0].mxu0 %v5792
      %v7266 = vpop.f32.mrb[0].mxu0
      %v7267 = vadd.f32 %v6978, %v7266
      %v7268 = vpop.f32.mrb[0].mxu0
      %v7269 = vpop.f32.mrb[0].mxu0
      %v7270 = vadd.f32 %v6981, %v7269
      %v7271 = vpop.f32.mrb[0].mxu0
      %7272 = vmatprep.mubr.bf16.mxu0 %v6116
      %7273 = vmatmul.mubr.bf16.gmra.mrb[0].mxu0 %v5793
      %v7274 = vpop.f32.mrb[0].mxu0
      %v7275 = vadd.f32 %v6986, %v7274
      %v7276 = vpop.f32.mrb[0].mxu0
      %v7277 = vpop.f32.mrb[0].mxu0
      %v7278 = vadd.f32 %v6989, %v7277
      %v7279 = vpop.f32.mrb[0].mxu0
      %7280 = vmatprep.mubr.bf16.mxu0 %v6117
      %7281 = vmatmul.mubr.bf16.gmra.mrb[0].mxu0 %v5794
      %v7282 = vpop.f32.mrb[0].mxu0
      %v7283 = vadd.f32 %v6994, %v7282
      %v7284 = vpop.f32.mrb[0].mxu0
      %v7285 = vpop.f32.mrb[0].mxu0
      %v7286 = vadd.f32 %v6997, %v7285
      %v7287 = vpop.f32.mrb[0].mxu0
      %7288 = vmatprep.mubr.bf16.mxu0 %v6118
      %7289 = vmatmul.mubr.bf16.gmra.mrb[0].mxu0 %v5795
      %v7290 = vpop.f32.mrb[0].mxu0
      %v7291 = vadd.f32 %v7002, %v7290
      %v7292 = vpop.f32.mrb[0].mxu0
      %v7293 = vpop.f32.mrb[0].mxu0
      %v7294 = vadd.f32 %v7005, %v7293
      %v7295 = vpop.f32.mrb[0].mxu0
      %7296 = vmatprep.mubr.bf16.mxu0 %v6119
      %7297 = vmatmul.mubr.bf16.gmra.mrb[0].mxu0 %v5796
      %v7298 = vpop.f32.mrb[0].mxu0
      %v7299 = vadd.f32 %v7010, %v7298
      %v7300 = vpop.f32.mrb[0].mxu0
      %v7301 = vpop.f32.mrb[0].mxu0
      %v7302 = vadd.f32 %v7013, %v7301
      %v7303 = vpop.f32.mrb[0].mxu0
      %7304 = vmatprep.mubr.bf16.mxu0 %v6120
      %7305 = vmatmul.mubr.bf16.gmra.mrb[0].mxu0 %v5797
      %v7306 = vpop.f32.mrb[0].mxu0
      %v7307 = vadd.f32 %v7018, %v7306
      %v7308 = vpop.f32.mrb[0].mxu0
      %v7309 = vpop.f32.mrb[0].mxu0
      %v7310 = vadd.f32 %v7021, %v7309
      %v7311 = vpop.f32.mrb[0].mxu0
      %7312 = vmatprep.mubr.bf16.mxu0 %v6121
      %7313 = vmatmul.mubr.bf16.gmra.mrb[0].mxu0 %v5798
      %v7314 = vpop.f32.mrb[0].mxu0
      %v7315 = vadd.f32 %v7026, %v7314
      %v7316 = vpop.f32.mrb[0].mxu0
      %v7317 = vpop.f32.mrb[0].mxu0
      %v7318 = vadd.f32 %v7029, %v7317
      %v7319 = vpop.f32.mrb[0].mxu0
      %7320 = vmatprep.mubr.bf16.mxu0 %v6122
      %7321 = vmatmul.mubr.bf16.gmra.mrb[0].mxu0 %v5799
      %v7322 = vpop.f32.mrb[0].mxu0
      %v7323 = vadd.f32 %v7034, %v7322
      %v7324 = vpop.f32.mrb[0].mxu0
      %v7325 = vpop.f32.mrb[0].mxu0
      %v7326 = vadd.f32 %v7037, %v7325
      %v7327 = vpop.f32.mrb[0].mxu0
      %7328 = vmatprep.mubr.bf16.mxu0 %v6123
      %7329 = vmatmul.mubr.bf16.gmra.mrb[0].mxu0 %v5800
      %v7330 = vpop.f32.mrb[0].mxu0
      %v7331 = vadd.f32 %v7042, %v7330
      %v7332 = vpop.f32.mrb[0].mxu0
      %v7333 = vpop.f32.mrb[0].mxu0
      %v7334 = vadd.f32 %v7045, %v7333
      %v7335 = vpop.f32.mrb[0].mxu0
      %7336 = vmatprep.mubr.bf16.mxu0 %v6124
      %7337 = vmatmul.mubr.bf16.gmra.mrb[0].mxu0 %v5801
      %v7338 = vpop.f32.mrb[0].mxu0
      %v7339 = vadd.f32 %v7050, %v7338
      %v7340 = vpop.f32.mrb[0].mxu0
      %v7341 = vpop.f32.mrb[0].mxu0
      %v7342 = vadd.f32 %v7053, %v7341
      %v7343 = vpop.f32.mrb[0].mxu0
      %7344 = vmatprep.mubr.bf16.mxu0 %v6125
      %7345 = vmatmul.mubr.bf16.gmra.mrb[0].mxu0 %v5802
      %v7346 = vpop.f32.mrb[0].mxu0
      %v7347 = vadd.f32 %v7058, %v7346
      %v7348 = vpop.f32.mrb[0].mxu0
      %v7349 = vpop.f32.mrb[0].mxu0
      %v7350 = vadd.f32 %v7061, %v7349
      %v7351 = vpop.f32.mrb[0].mxu0
      %7352 = vmatprep.mubr.bf16.mxu0 %v6126
      %7353 = vmatmul.mubr.bf16.gmra.mrb[0].mxu0 %v5803
      %v7354 = vpop.f32.mrb[0].mxu0
      %v7355 = vadd.f32 %v7066, %v7354
      %v7356 = vpop.f32.mrb[0].mxu0
      %v7357 = vpop.f32.mrb[0].mxu0
      %v7358 = vadd.f32 %v7069, %v7357
      %v7359 = vpop.f32.mrb[0].mxu0
      %7360 = vmatprep.mubr.bf16.mxu0 %v6127
      %7361 = vmatmul.mubr.bf16.gmra.mrb[0].mxu0 %v5804
      %v7362 = vpop.f32.mrb[0].mxu0
      %v7363 = vadd.f32 %v7074, %v7362
      %v7364 = vpop.f32.mrb[0].mxu0
      %v7365 = vpop.f32.mrb[0].mxu0
      %v7366 = vadd.f32 %v7077, %v7365
      %v7367 = vpop.f32.mrb[0].mxu0
      %7368 = vmatprep.mubr.bf16.mxu0 %v6128
      %7369 = vmatmul.mubr.bf16.gmra.mrb[0].mxu0 %v5805
      %v7370 = vpop.f32.mrb[0].mxu0
      %v7371 = vadd.f32 %v7082, %v7370
      %v7372 = vpop.f32.mrb[0].mxu0
      %v7373 = vpop.f32.mrb[0].mxu0
      %v7374 = vadd.f32 %v7085, %v7373
      %v7375 = vpop.f32.mrb[0].mxu0
      %7376 = vmatprep.mubr.bf16.mxu0 %v6129
      %7377 = vmatmul.mubr.bf16.gmra.mrb[0].mxu0 %v5806
      %v7378 = vpop.f32.mrb[0].mxu0
      %v7379 = vadd.f32 %v7090, %v7378
      %v7380 = vpop.f32.mrb[0].mxu0
      %v7381 = vpop.f32.mrb[0].mxu0
      %v7382 = vadd.f32 %v7093, %v7381
      %v7383 = vpop.f32.mrb[0].mxu0
      %7384 = vmatprep.mubr.bf16.mxu0 %v6130
      %7385 = vmatmul.mubr.bf16.gmra.mrb[0].mxu0 %v5807
      %v7386 = vpop.f32.mrb[0].mxu0
      %v7387 = vadd.f32 %v7098, %v7386
      %v7388 = vpop.f32.mrb[0].mxu0
      %v7389 = vpop.f32.mrb[0].mxu0
      %v7390 = vadd.f32 %v7101, %v7389
      %v7391 = vpop.f32.mrb[0].mxu0
      %7392 = vmatprep.mubr.bf16.mxu0 %v6131
      %7393 = vmatmul.mubr.bf16.gmra.mrb[0].mxu0 %v5808
      %v7394 = vpop.f32.mrb[0].mxu0
      %v7395 = vadd.f32 %v7106, %v7394
      %v7396 = vpop.f32.mrb[0].mxu0
      %v7397 = vpop.f32.mrb[0].mxu0
      %v7398 = vadd.f32 %v7109, %v7397
      %v7399 = vpop.f32.mrb[0].mxu0
      %7400 = vmatprep.mubr.bf16.mxu0 %v6132
      %7401 = vmatmul.mubr.bf16.gmra.mrb[0].mxu0 %v5809
      %v7402 = vpop.f32.mrb[0].mxu0
      %v7403 = vadd.f32 %v7114, %v7402
      %v7404 = vpop.f32.mrb[0].mxu0
      %v7405 = vpop.f32.mrb[0].mxu0
      %v7406 = vadd.f32 %v7117, %v7405
      %v7407 = vpop.f32.mrb[0].mxu0
      %7408 = vmatprep.mubr.bf16.mxu0 %v6133
      %7409 = vmatmul.mubr.bf16.gmra.mrb[0].mxu0 %v5810
      %v7410 = vpop.f32.mrb[0].mxu0
      %v7411 = vadd.f32 %v7122, %v7410
      %v7412 = vpop.f32.mrb[0].mxu0
      %v7413 = vpop.f32.mrb[0].mxu0
      %v7414 = vadd.f32 %v7125, %v7413
      %v7415 = vpop.f32.mrb[0].mxu0
      %7416 = vmatprep.mubr.bf16.mxu0 %v6134
      %7417 = vmatmul.mubr.bf16.gmra.mrb[0].mxu0 %v5811
      %v7418 = vpop.f32.mrb[0].mxu0
      %v7419 = vadd.f32 %v7130, %v7418
      %v7420 = vpop.f32.mrb[0].mxu0
      %v7421 = vpop.f32.mrb[0].mxu0
      %v7422 = vadd.f32 %v7133, %v7421
      %v7423 = vpop.f32.mrb[0].mxu0
      %7424 = vmatprep.mubr.bf16.mxu0 %v6135
      %7425 = vmatmul.mubr.bf16.gmra.mrb[0].mxu0 %v5812
      %v7426 = vpop.f32.mrb[0].mxu0
      %v7427 = vadd.f32 %v7138, %v7426
      %v7428 = vpop.f32.mrb[0].mxu0
      %v7429 = vpop.f32.mrb[0].mxu0
      %v7430 = vadd.f32 %v7141, %v7429
      %v7431 = vpop.f32.mrb[0].mxu0
      %7432 = vmatprep.mubr.bf16.mxu0 %v6136
      %7433 = vmatmul.mubr.bf16.gmra.mrb[0].mxu0 %v5813
      %v7434 = vpop.f32.mrb[0].mxu0
      %v7435 = vadd.f32 %v7146, %v7434
      %v7436 = vpop.f32.mrb[0].mxu0
      %v7437 = vpop.f32.mrb[0].mxu0
      %v7438 = vadd.f32 %v7149, %v7437
      %v7439 = vpop.f32.mrb[0].mxu0
      %7440 = vmatprep.mubr.bf16.mxu0 %v6137
      %7441 = vmatmul.mubr.bf16.gmra.mrb[0].mxu0 %v5814
      %v7442 = vpop.f32.mrb[0].mxu0
      %v7443 = vadd.f32 %v7154, %v7442
      %v7444 = vpop.f32.mrb[0].mxu0
      %v7445 = vpop.f32.mrb[0].mxu0
      %v7446 = vadd.f32 %v7157, %v7445
      %v7447 = vpop.f32.mrb[0].mxu0
      %7448 = vmatprep.mubr.bf16.mxu0 %v6138
      %7449 = vmatmul.mubr.bf16.gmra.mrb[0].mxu0 %v5815
      %v7450 = vpop.f32.mrb[0].mxu0
      %v7451 = vadd.f32 %v7162, %v7450
      %v7452 = vpop.f32.mrb[0].mxu0
      %v7453 = vpop.f32.mrb[0].mxu0
      %v7454 = vadd.f32 %v7165, %v7453
      %v7455 = vpop.f32.mrb[0].mxu0
      %7456 = vdwg.mxu0
      %7457 = vmatprep.subr.bf16.mxu0 0
      %7458 = vmatpush1.bf16.msra.mxu0 %v6767
      %7459 = vmatprep.subr.bf16.mxu0 0
      %7460 = vmatpush1.bf16.msra.mxu0 %v6768
      %7461 = vmatprep.subr.bf16.mxu0 0
      %7462 = vmatpush1.bf16.msra.mxu0 %v6769
      %7463 = vmatprep.subr.bf16.mxu0 0
      %7464 = vmatpush1.bf16.msra.mxu0 %v6770
      %7465 = vmatprep.subr.bf16.mxu0 0
      %7466 = vmatpush1.bf16.msra.mxu0 %v6771
      %7467 = vmatprep.subr.bf16.mxu0 0
      %7468 = vmatpush1.bf16.msra.mxu0 %v6772
      %7469 = vmatprep.subr.bf16.mxu0 0
      %7470 = vmatpush1.bf16.msra.mxu0 %v6773
      %7471 = vmatprep.subr.bf16.mxu0 0
      %7472 = vmatpush1.bf16.msra.mxu0 %v6774
      %7473 = vmatprep.subr.bf16.mxu0 0
      %7474 = vmatpush1.bf16.msra.mxu0 %v6775
      %7475 = vmatprep.subr.bf16.mxu0 0
      %7476 = vmatpush1.bf16.msra.mxu0 %v6776
      %7477 = vmatprep.subr.bf16.mxu0 0
      %7478 = vmatpush1.bf16.msra.mxu0 %v6777
      %7479 = vmatprep.subr.bf16.mxu0 0
      %7480 = vmatpush1.bf16.msra.mxu0 %v6778
      %7481 = vmatprep.subr.bf16.mxu0 0
      %7482 = vmatpush1.bf16.msra.mxu0 %v6779
      %7483 = vmatprep.subr.bf16.mxu0 0
      %7484 = vmatpush1.bf16.msra.mxu0 %v6780
      %7485 = vmatprep.subr.bf16.mxu0 0
      %7486 = vmatpush1.bf16.msra.mxu0 %v6781
      %7487 = vmatprep.subr.bf16.mxu0 0
      %7488 = vmatpush1.bf16.msra.mxu0 %v6782
      %7489 = vmatprep.mubr.bf16.mxu0 %v2959
      %7490 = vmatmul.mubr.bf16.gmra.mrb[0].mxu0 %v2927
      %v7491 = vpop.f32.mrb[0].mxu0
      %v7492 = vadd.f32 %v7203, %v7491
      %v7493 = vpop.f32.mrb[0].mxu0
      %v7494 = vpop.f32.mrb[0].mxu0
      %v7495 = vadd.f32 %v7206, %v7494
      %v7496 = vpop.f32.mrb[0].mxu0
      %7497 = vmatprep.mubr.bf16.mxu0 %v2960
      %7498 = vmatmul.mubr.bf16.gmra.mrb[0].mxu0 %v2928
      %v7499 = vpop.f32.mrb[0].mxu0
      %v7500 = vadd.f32 %v7211, %v7499
      %v7501 = vpop.f32.mrb[0].mxu0
      %v7502 = vpop.f32.mrb[0].mxu0
      %v7503 = vadd.f32 %v7214, %v7502
      %v7504 = vpop.f32.mrb[0].mxu0
      %7505 = vmatprep.mubr.bf16.mxu0 %v2961
      %7506 = vmatmul.mubr.bf16.gmra.mrb[0].mxu0 %v2929
      %v7507 = vpop.f32.mrb[0].mxu0
      %v7508 = vadd.f32 %v7219, %v7507
      %v7509 = vpop.f32.mrb[0].mxu0
      %v7510 = vpop.f32.mrb[0].mxu0
      %v7511 = vadd.f32 %v7222, %v7510
      %v7512 = vpop.f32.mrb[0].mxu0
      %7513 = vmatprep.mubr.bf16.mxu0 %v2962
      %7514 = vmatmul.mubr.bf16.gmra.mrb[0].mxu0 %v2930
      %v7515 = vpop.f32.mrb[0].mxu0
      %v7516 = vadd.f32 %v7227, %v7515
      %v7517 = vpop.f32.mrb[0].mxu0
      %v7518 = vpop.f32.mrb[0].mxu0
      %v7519 = vadd.f32 %v7230, %v7518
      %v7520 = vpop.f32.mrb[0].mxu0
      %7521 = vmatprep.mubr.bf16.mxu0 %v2963
      %7522 = vmatmul.mubr.bf16.gmra.mrb[0].mxu0 %v2931
      %v7523 = vpop.f32.mrb[0].mxu0
      %v7524 = vadd.f32 %v7235, %v7523
      %v7525 = vpop.f32.mrb[0].mxu0
      %v7526 = vpop.f32.mrb[0].mxu0
      %v7527 = vadd.f32 %v7238, %v7526
      %v7528 = vpop.f32.mrb[0].mxu0
      %7529 = vmatprep.mubr.bf16.mxu0 %v2964
      %7530 = vmatmul.mubr.bf16.gmra.mrb[0].mxu0 %v2932
      %v7531 = vpop.f32.mrb[0].mxu0
      %v7532 = vadd.f32 %v7243, %v7531
      %v7533 = vpop.f32.mrb[0].mxu0
      %v7534 = vpop.f32.mrb[0].mxu0
      %v7535 = vadd.f32 %v7246, %v7534
      %v7536 = vpop.f32.mrb[0].mxu0
      %7537 = vmatprep.mubr.bf16.mxu0 %v2965
      %7538 = vmatmul.mubr.bf16.gmra.mrb[0].mxu0 %v2933
      %v7539 = vpop.f32.mrb[0].mxu0
      %v7540 = vadd.f32 %v7251, %v7539
      %v7541 = vpop.f32.mrb[0].mxu0
      %v7542 = vpop.f32.mrb[0].mxu0
      %v7543 = vadd.f32 %v7254, %v7542
      %v7544 = vpop.f32.mrb[0].mxu0
      %7545 = vmatprep.mubr.bf16.mxu0 %v2966
      %7546 = vmatmul.mubr.bf16.gmra.mrb[0].mxu0 %v2934
      %v7547 = vpop.f32.mrb[0].mxu0
      %v7548 = vadd.f32 %v7259, %v7547
      %v7549 = vpop.f32.mrb[0].mxu0
      %v7550 = vpop.f32.mrb[0].mxu0
      %v7551 = vadd.f32 %v7262, %v7550
      %v7552 = vpop.f32.mrb[0].mxu0
      %7553 = vmatprep.mubr.bf16.mxu0 %v2967
      %7554 = vmatmul.mubr.bf16.gmra.mrb[0].mxu0 %v2935
      %v7555 = vpop.f32.mrb[0].mxu0
      %v7556 = vadd.f32 %v7267, %v7555
      %v7557 = vpop.f32.mrb[0].mxu0
      %v7558 = vpop.f32.mrb[0].mxu0
      %v7559 = vadd.f32 %v7270, %v7558
      %v7560 = vpop.f32.mrb[0].mxu0
      %7561 = vmatprep.mubr.bf16.mxu0 %v2968
      %7562 = vmatmul.mubr.bf16.gmra.mrb[0].mxu0 %v2936
      %v7563 = vpop.f32.mrb[0].mxu0
      %v7564 = vadd.f32 %v7275, %v7563
      %v7565 = vpop.f32.mrb[0].mxu0
      %v7566 = vpop.f32.mrb[0].mxu0
      %v7567 = vadd.f32 %v7278, %v7566
      %v7568 = vpop.f32.mrb[0].mxu0
      %7569 = vmatprep.mubr.bf16.mxu0 %v2969
      %7570 = vmatmul.mubr.bf16.gmra.mrb[0].mxu0 %v2937
      %v7571 = vpop.f32.mrb[0].mxu0
      %v7572 = vadd.f32 %v7283, %v7571
      %v7573 = vpop.f32.mrb[0].mxu0
      %v7574 = vpop.f32.mrb[0].mxu0
      %v7575 = vadd.f32 %v7286, %v7574
      %v7576 = vpop.f32.mrb[0].mxu0
      %7577 = vmatprep.mubr.bf16.mxu0 %v2970
      %7578 = vmatmul.mubr.bf16.gmra.mrb[0].mxu0 %v2938
      %v7579 = vpop.f32.mrb[0].mxu0
      %v7580 = vadd.f32 %v7291, %v7579
      %v7581 = vpop.f32.mrb[0].mxu0
      %v7582 = vpop.f32.mrb[0].mxu0
      %v7583 = vadd.f32 %v7294, %v7582
      %v7584 = vpop.f32.mrb[0].mxu0
      %7585 = vmatprep.mubr.bf16.mxu0 %v2971
      %7586 = vmatmul.mubr.bf16.gmra.mrb[0].mxu0 %v2939
      %v7587 = vpop.f32.mrb[0].mxu0
      %v7588 = vadd.f32 %v7299, %v7587
      %v7589 = vpop.f32.mrb[0].mxu0
      %v7590 = vpop.f32.mrb[0].mxu0
      %v7591 = vadd.f32 %v7302, %v7590
      %v7592 = vpop.f32.mrb[0].mxu0
      %7593 = vmatprep.mubr.bf16.mxu0 %v2972
      %7594 = vmatmul.mubr.bf16.gmra.mrb[0].mxu0 %v2940
      %v7595 = vpop.f32.mrb[0].mxu0
      %v7596 = vadd.f32 %v7307, %v7595
      %v7597 = vpop.f32.mrb[0].mxu0
      %v7598 = vpop.f32.mrb[0].mxu0
      %v7599 = vadd.f32 %v7310, %v7598
      %v7600 = vpop.f32.mrb[0].mxu0
      %7601 = vmatprep.mubr.bf16.mxu0 %v2973
      %7602 = vmatmul.mubr.bf16.gmra.mrb[0].mxu0 %v2941
      %v7603 = vpop.f32.mrb[0].mxu0
      %v7604 = vadd.f32 %v7315, %v7603
      %v7605 = vpop.f32.mrb[0].mxu0
      %v7606 = vpop.f32.mrb[0].mxu0
      %v7607 = vadd.f32 %v7318, %v7606
      %v7608 = vpop.f32.mrb[0].mxu0
      %7609 = vmatprep.mubr.bf16.mxu0 %v2974
      %7610 = vmatmul.mubr.bf16.gmra.mrb[0].mxu0 %v2942
      %v7611 = vpop.f32.mrb[0].mxu0
      %v7612 = vadd.f32 %v7323, %v7611
      %v7613 = vpop.f32.mrb[0].mxu0
      %v7614 = vpop.f32.mrb[0].mxu0
      %v7615 = vadd.f32 %v7326, %v7614
      %v7616 = vpop.f32.mrb[0].mxu0
      %7617 = vmatprep.mubr.bf16.mxu0 %v2975
      %7618 = vmatmul.mubr.bf16.gmra.mrb[0].mxu0 %v2943
      %v7619 = vpop.f32.mrb[0].mxu0
      %v7620 = vadd.f32 %v7331, %v7619
      %v7621 = vpop.f32.mrb[0].mxu0
      %v7622 = vpop.f32.mrb[0].mxu0
      %v7623 = vadd.f32 %v7334, %v7622
      %v7624 = vpop.f32.mrb[0].mxu0
      %7625 = vmatprep.mubr.bf16.mxu0 %v2976
      %7626 = vmatmul.mubr.bf16.gmra.mrb[0].mxu0 %v2944
      %v7627 = vpop.f32.mrb[0].mxu0
      %v7628 = vadd.f32 %v7339, %v7627
      %v7629 = vpop.f32.mrb[0].mxu0
      %v7630 = vpop.f32.mrb[0].mxu0
      %v7631 = vadd.f32 %v7342, %v7630
      %v7632 = vpop.f32.mrb[0].mxu0
      %7633 = vmatprep.mubr.bf16.mxu0 %v2977
      %7634 = vmatmul.mubr.bf16.gmra.mrb[0].mxu0 %v2945
      %v7635 = vpop.f32.mrb[0].mxu0
      %v7636 = vadd.f32 %v7347, %v7635
      %v7637 = vpop.f32.mrb[0].mxu0
      %v7638 = vpop.f32.mrb[0].mxu0
      %v7639 = vadd.f32 %v7350, %v7638
      %v7640 = vpop.f32.mrb[0].mxu0
      %7641 = vmatprep.mubr.bf16.mxu0 %v2978
      %7642 = vmatmul.mubr.bf16.gmra.mrb[0].mxu0 %v2946
      %v7643 = vpop.f32.mrb[0].mxu0
      %v7644 = vadd.f32 %v7355, %v7643
      %v7645 = vpop.f32.mrb[0].mxu0
      %v7646 = vpop.f32.mrb[0].mxu0
      %v7647 = vadd.f32 %v7358, %v7646
      %v7648 = vpop.f32.mrb[0].mxu0
      %7649 = vmatprep.mubr.bf16.mxu0 %v2979
      %7650 = vmatmul.mubr.bf16.gmra.mrb[0].mxu0 %v2947
      %v7651 = vpop.f32.mrb[0].mxu0
      %v7652 = vadd.f32 %v7363, %v7651
      %v7653 = vpop.f32.mrb[0].mxu0
      %v7654 = vpop.f32.mrb[0].mxu0
      %v7655 = vadd.f32 %v7366, %v7654
      %v7656 = vpop.f32.mrb[0].mxu0
      %7657 = vmatprep.mubr.bf16.mxu0 %v2980
      %7658 = vmatmul.mubr.bf16.gmra.mrb[0].mxu0 %v2948
      %v7659 = vpop.f32.mrb[0].mxu0
      %v7660 = vadd.f32 %v7371, %v7659
      %v7661 = vpop.f32.mrb[0].mxu0
      %v7662 = vpop.f32.mrb[0].mxu0
      %v7663 = vadd.f32 %v7374, %v7662
      %v7664 = vpop.f32.mrb[0].mxu0
      %7665 = vmatprep.mubr.bf16.mxu0 %v2981
      %7666 = vmatmul.mubr.bf16.gmra.mrb[0].mxu0 %v2949
      %v7667 = vpop.f32.mrb[0].mxu0
      %v7668 = vadd.f32 %v7379, %v7667
      %v7669 = vpop.f32.mrb[0].mxu0
      %v7670 = vpop.f32.mrb[0].mxu0
      %v7671 = vadd.f32 %v7382, %v7670
      %v7672 = vpop.f32.mrb[0].mxu0
      %7673 = vmatprep.mubr.bf16.mxu0 %v2982
      %7674 = vmatmul.mubr.bf16.gmra.mrb[0].mxu0 %v2950
      %v7675 = vpop.f32.mrb[0].mxu0
      %v7676 = vadd.f32 %v7387, %v7675
      %v7677 = vpop.f32.mrb[0].mxu0
      %v7678 = vpop.f32.mrb[0].mxu0
      %v7679 = vadd.f32 %v7390, %v7678
      %v7680 = vpop.f32.mrb[0].mxu0
      %7681 = vmatprep.mubr.bf16.mxu0 %v2983
      %7682 = vmatmul.mubr.bf16.gmra.mrb[0].mxu0 %v2951
      %v7683 = vpop.f32.mrb[0].mxu0
      %v7684 = vadd.f32 %v7395, %v7683
      %v7685 = vpop.f32.mrb[0].mxu0
      %v7686 = vpop.f32.mrb[0].mxu0
      %v7687 = vadd.f32 %v7398, %v7686
      %v7688 = vpop.f32.mrb[0].mxu0
      %7689 = vmatprep.mubr.bf16.mxu0 %v2984
      %7690 = vmatmul.mubr.bf16.gmra.mrb[0].mxu0 %v2952
      %v7691 = vpop.f32.mrb[0].mxu0
      %v7692 = vadd.f32 %v7403, %v7691
      %v7693 = vpop.f32.mrb[0].mxu0
      %v7694 = vpop.f32.mrb[0].mxu0
      %v7695 = vadd.f32 %v7406, %v7694
      %v7696 = vpop.f32.mrb[0].mxu0
      %7697 = vmatprep.mubr.bf16.mxu0 %v2985
      %7698 = vmatmul.mubr.bf16.gmra.mrb[0].mxu0 %v2953
      %v7699 = vpop.f32.mrb[0].mxu0
      %v7700 = vadd.f32 %v7411, %v7699
      %v7701 = vpop.f32.mrb[0].mxu0
      %v7702 = vpop.f32.mrb[0].mxu0
      %v7703 = vadd.f32 %v7414, %v7702
      %v7704 = vpop.f32.mrb[0].mxu0
      %7705 = vmatprep.mubr.bf16.mxu0 %v2986
      %7706 = vmatmul.mubr.bf16.gmra.mrb[0].mxu0 %v2954
      %v7707 = vpop.f32.mrb[0].mxu0
      %v7708 = vadd.f32 %v7419, %v7707
      %v7709 = vpop.f32.mrb[0].mxu0
      %v7710 = vpop.f32.mrb[0].mxu0
      %v7711 = vadd.f32 %v7422, %v7710
      %v7712 = vpop.f32.mrb[0].mxu0
      %7713 = vmatprep.mubr.bf16.mxu0 %v2987
      %7714 = vmatmul.mubr.bf16.gmra.mrb[0].mxu0 %v2955
      %v7715 = vpop.f32.mrb[0].mxu0
      %v7716 = vadd.f32 %v7427, %v7715
      %v7717 = vpop.f32.mrb[0].mxu0
      %v7718 = vpop.f32.mrb[0].mxu0
      %v7719 = vadd.f32 %v7430, %v7718
      %v7720 = vpop.f32.mrb[0].mxu0
      %7721 = vmatprep.mubr.bf16.mxu0 %v2988
      %7722 = vmatmul.mubr.bf16.gmra.mrb[0].mxu0 %v2956
      %v7723 = vpop.f32.mrb[0].mxu0
      %v7724 = vadd.f32 %v7435, %v7723
      %v7725 = vpop.f32.mrb[0].mxu0
      %v7726 = vpop.f32.mrb[0].mxu0
      %v7727 = vadd.f32 %v7438, %v7726
      %v7728 = vpop.f32.mrb[0].mxu0
      %7729 = vmatprep.mubr.bf16.mxu0 %v2989
      %7730 = vmatmul.mubr.bf16.gmra.mrb[0].mxu0 %v2957
      %v7731 = vpop.f32.mrb[0].mxu0
      %v7732 = vadd.f32 %v7443, %v7731
      %v7733 = vpop.f32.mrb[0].mxu0
      %v7734 = vpop.f32.mrb[0].mxu0
      %v7735 = vadd.f32 %v7446, %v7734
      %v7736 = vpop.f32.mrb[0].mxu0
      %7737 = vmatprep.mubr.bf16.mxu0 %v2990
      %7738 = vmatmul.mubr.bf16.gmra.mrb[0].mxu0 %v2958
      %v7739 = vpop.f32.mrb[0].mxu0
      %v7740 = vadd.f32 %v7451, %v7739
      %v7741 = vpop.f32.mrb[0].mxu0
      %v7742 = vpop.f32.mrb[0].mxu0
      %v7743 = vadd.f32 %v7454, %v7742
      %v7744 = vpop.f32.mrb[0].mxu0
      %7745 = vdwg.mxu0
      %7746 = vmatprep.subr.bf16.mxu0 0
      %7747 = vmatpush1.bf16.msra.mxu0 %v6783
      %7748 = vmatprep.subr.bf16.mxu0 0
      %7749 = vmatpush1.bf16.msra.mxu0 %v6784
      %7750 = vmatprep.subr.bf16.mxu0 0
      %7751 = vmatpush1.bf16.msra.mxu0 %v6785
      %7752 = vmatprep.subr.bf16.mxu0 0
      %7753 = vmatpush1.bf16.msra.mxu0 %v6786
      %7754 = vmatprep.subr.bf16.mxu0 0
      %7755 = vmatpush1.bf16.msra.mxu0 %v6787
      %7756 = vmatprep.subr.bf16.mxu0 0
      %7757 = vmatpush1.bf16.msra.mxu0 %v6788
      %7758 = vmatprep.subr.bf16.mxu0 0
      %7759 = vmatpush1.bf16.msra.mxu0 %v6789
      %7760 = vmatprep.subr.bf16.mxu0 0
      %7761 = vmatpush1.bf16.msra.mxu0 %v6790
      %7762 = vmatprep.subr.bf16.mxu0 0
      %7763 = vmatpush1.bf16.msra.mxu0 %v6791
      %7764 = vmatprep.subr.bf16.mxu0 0
      %7765 = vmatpush1.bf16.msra.mxu0 %v6792
      %7766 = vmatprep.subr.bf16.mxu0 0
      %7767 = vmatpush1.bf16.msra.mxu0 %v6793
      %7768 = vmatprep.subr.bf16.mxu0 0
      %7769 = vmatpush1.bf16.msra.mxu0 %v6794
      %7770 = vmatprep.subr.bf16.mxu0 0
      %7771 = vmatpush1.bf16.msra.mxu0 %v6795
      %7772 = vmatprep.subr.bf16.mxu0 0
      %7773 = vmatpush1.bf16.msra.mxu0 %v6796
      %7774 = vmatprep.subr.bf16.mxu0 0
      %7775 = vmatpush1.bf16.msra.mxu0 %v6797
      %7776 = vmatprep.subr.bf16.mxu0 0
      %7777 = vmatpush1.bf16.msra.mxu0 %v6798
      %7778 = vmatprep.mubr.bf16.mxu0 %v2991
      %7779 = vmatmul.mubr.bf16.gmra.mrb[0].mxu0 %v6267
      %v7780 = vpop.f32.mrb[0].mxu0
      %v7781 = vadd.f32 %v7492, %v7780
      %v7782 = vpop.f32.mrb[0].mxu0
      %v7783 = vpop.f32.mrb[0].mxu0
      %v7784 = vadd.f32 %v7495, %v7783
      %v7785 = vpop.f32.mrb[0].mxu0
      %7786 = vmatprep.mubr.bf16.mxu0 %v2992
      %7787 = vmatmul.mubr.bf16.gmra.mrb[0].mxu0 %v6268
      %v7788 = vpop.f32.mrb[0].mxu0
      %v7789 = vadd.f32 %v7500, %v7788
      %v7790 = vpop.f32.mrb[0].mxu0
      %v7791 = vpop.f32.mrb[0].mxu0
      %v7792 = vadd.f32 %v7503, %v7791
      %v7793 = vpop.f32.mrb[0].mxu0
      %7794 = vmatprep.mubr.bf16.mxu0 %v2993
      %7795 = vmatmul.mubr.bf16.gmra.mrb[0].mxu0 %v6269
      %v7796 = vpop.f32.mrb[0].mxu0
      %v7797 = vadd.f32 %v7508, %v7796
      %v7798 = vpop.f32.mrb[0].mxu0
      %v7799 = vpop.f32.mrb[0].mxu0
      %v7800 = vadd.f32 %v7511, %v7799
      %v7801 = vpop.f32.mrb[0].mxu0
      %7802 = vmatprep.mubr.bf16.mxu0 %v2994
      %7803 = vmatmul.mubr.bf16.gmra.mrb[0].mxu0 %v6270
      %v7804 = vpop.f32.mrb[0].mxu0
      %v7805 = vadd.f32 %v7516, %v7804
      %v7806 = vpop.f32.mrb[0].mxu0
      %v7807 = vpop.f32.mrb[0].mxu0
      %v7808 = vadd.f32 %v7519, %v7807
      %v7809 = vpop.f32.mrb[0].mxu0
      %7810 = vmatprep.mubr.bf16.mxu0 %v2995
      %7811 = vmatmul.mubr.bf16.gmra.mrb[0].mxu0 %v6271
      %v7812 = vpop.f32.mrb[0].mxu0
      %v7813 = vadd.f32 %v7524, %v7812
      %v7814 = vpop.f32.mrb[0].mxu0
      %v7815 = vpop.f32.mrb[0].mxu0
      %v7816 = vadd.f32 %v7527, %v7815
      %v7817 = vpop.f32.mrb[0].mxu0
      %7818 = vmatprep.mubr.bf16.mxu0 %v2996
      %7819 = vmatmul.mubr.bf16.gmra.mrb[0].mxu0 %v6272
      %v7820 = vpop.f32.mrb[0].mxu0
      %v7821 = vadd.f32 %v7532, %v7820
      %v7822 = vpop.f32.mrb[0].mxu0
      %v7823 = vpop.f32.mrb[0].mxu0
      %v7824 = vadd.f32 %v7535, %v7823
      %v7825 = vpop.f32.mrb[0].mxu0
      %7826 = vmatprep.mubr.bf16.mxu0 %v2997
      %7827 = vmatmul.mubr.bf16.gmra.mrb[0].mxu0 %v6273
      %v7828 = vpop.f32.mrb[0].mxu0
      %v7829 = vadd.f32 %v7540, %v7828
      %v7830 = vpop.f32.mrb[0].mxu0
      %v7831 = vpop.f32.mrb[0].mxu0
      %v7832 = vadd.f32 %v7543, %v7831
      %v7833 = vpop.f32.mrb[0].mxu0
      %7834 = vmatprep.mubr.bf16.mxu0 %v2998
      %7835 = vmatmul.mubr.bf16.gmra.mrb[0].mxu0 %v6274
      %v7836 = vpop.f32.mrb[0].mxu0
      %v7837 = vadd.f32 %v7548, %v7836
      %v7838 = vpop.f32.mrb[0].mxu0
      %v7839 = vpop.f32.mrb[0].mxu0
      %v7840 = vadd.f32 %v7551, %v7839
      %v7841 = vpop.f32.mrb[0].mxu0
      %7842 = vmatprep.mubr.bf16.mxu0 %v2999
      %7843 = vmatmul.mubr.bf16.gmra.mrb[0].mxu0 %v6275
      %v7844 = vpop.f32.mrb[0].mxu0
      %v7845 = vadd.f32 %v7556, %v7844
      %v7846 = vpop.f32.mrb[0].mxu0
      %v7847 = vpop.f32.mrb[0].mxu0
      %v7848 = vadd.f32 %v7559, %v7847
      %v7849 = vpop.f32.mrb[0].mxu0
      %7850 = vmatprep.mubr.bf16.mxu0 %v3000
      %7851 = vmatmul.mubr.bf16.gmra.mrb[0].mxu0 %v6276
      %v7852 = vpop.f32.mrb[0].mxu0
      %v7853 = vadd.f32 %v7564, %v7852
      %v7854 = vpop.f32.mrb[0].mxu0
      %v7855 = vpop.f32.mrb[0].mxu0
      %v7856 = vadd.f32 %v7567, %v7855
      %v7857 = vpop.f32.mrb[0].mxu0
      %7858 = vmatprep.mubr.bf16.mxu0 %v3001
      %7859 = vmatmul.mubr.bf16.gmra.mrb[0].mxu0 %v6277
      %v7860 = vpop.f32.mrb[0].mxu0
      %v7861 = vadd.f32 %v7572, %v7860
      %v7862 = vpop.f32.mrb[0].mxu0
      %v7863 = vpop.f32.mrb[0].mxu0
      %v7864 = vadd.f32 %v7575, %v7863
      %v7865 = vpop.f32.mrb[0].mxu0
      %7866 = vmatprep.mubr.bf16.mxu0 %v3002
      %7867 = vmatmul.mubr.bf16.gmra.mrb[0].mxu0 %v6278
      %v7868 = vpop.f32.mrb[0].mxu0
      %v7869 = vadd.f32 %v7580, %v7868
      %v7870 = vpop.f32.mrb[0].mxu0
      %v7871 = vpop.f32.mrb[0].mxu0
      %v7872 = vadd.f32 %v7583, %v7871
      %v7873 = vpop.f32.mrb[0].mxu0
      %7874 = vmatprep.mubr.bf16.mxu0 %v3003
      %7875 = vmatmul.mubr.bf16.gmra.mrb[0].mxu0 %v6279
      %v7876 = vpop.f32.mrb[0].mxu0
      %v7877 = vadd.f32 %v7588, %v7876
      %v7878 = vpop.f32.mrb[0].mxu0
      %v7879 = vpop.f32.mrb[0].mxu0
      %v7880 = vadd.f32 %v7591, %v7879
      %v7881 = vpop.f32.mrb[0].mxu0
      %7882 = vmatprep.mubr.bf16.mxu0 %v3004
      %7883 = vmatmul.mubr.bf16.gmra.mrb[0].mxu0 %v6280
      %v7884 = vpop.f32.mrb[0].mxu0
      %v7885 = vadd.f32 %v7596, %v7884
      %v7886 = vpop.f32.mrb[0].mxu0
      %v7887 = vpop.f32.mrb[0].mxu0
      %v7888 = vadd.f32 %v7599, %v7887
      %v7889 = vpop.f32.mrb[0].mxu0
      %7890 = vmatprep.mubr.bf16.mxu0 %v3005
      %7891 = vmatmul.mubr.bf16.gmra.mrb[0].mxu0 %v6281
      %v7892 = vpop.f32.mrb[0].mxu0
      %v7893 = vadd.f32 %v7604, %v7892
      %v7894 = vpop.f32.mrb[0].mxu0
      %v7895 = vpop.f32.mrb[0].mxu0
      %v7896 = vadd.f32 %v7607, %v7895
      %v7897 = vpop.f32.mrb[0].mxu0
      %7898 = vmatprep.mubr.bf16.mxu0 %v3006
      %7899 = vmatmul.mubr.bf16.gmra.mrb[0].mxu0 %v6282
      %v7900 = vpop.f32.mrb[0].mxu0
      %v7901 = vadd.f32 %v7612, %v7900
      %v7902 = vpop.f32.mrb[0].mxu0
      %v7903 = vpop.f32.mrb[0].mxu0
      %v7904 = vadd.f32 %v7615, %v7903
      %v7905 = vpop.f32.mrb[0].mxu0
      %7906 = vmatprep.mubr.bf16.mxu0 %v3007
      %7907 = vmatmul.mubr.bf16.gmra.mrb[0].mxu0 %v6283
      %v7908 = vpop.f32.mrb[0].mxu0
      %v7909 = vadd.f32 %v7620, %v7908
      %v7910 = vpop.f32.mrb[0].mxu0
      %v7911 = vpop.f32.mrb[0].mxu0
      %v7912 = vadd.f32 %v7623, %v7911
      %v7913 = vpop.f32.mrb[0].mxu0
      %7914 = vmatprep.mubr.bf16.mxu0 %v3008
      %7915 = vmatmul.mubr.bf16.gmra.mrb[0].mxu0 %v6284
      %v7916 = vpop.f32.mrb[0].mxu0
      %v7917 = vadd.f32 %v7628, %v7916
      %v7918 = vpop.f32.mrb[0].mxu0
      %v7919 = vpop.f32.mrb[0].mxu0
      %v7920 = vadd.f32 %v7631, %v7919
      %v7921 = vpop.f32.mrb[0].mxu0
      %7922 = vmatprep.mubr.bf16.mxu0 %v3009
      %7923 = vmatmul.mubr.bf16.gmra.mrb[0].mxu0 %v6285
      %v7924 = vpop.f32.mrb[0].mxu0
      %v7925 = vadd.f32 %v7636, %v7924
      %v7926 = vpop.f32.mrb[0].mxu0
      %v7927 = vpop.f32.mrb[0].mxu0
      %v7928 = vadd.f32 %v7639, %v7927
      %v7929 = vpop.f32.mrb[0].mxu0
      %7930 = vmatprep.mubr.bf16.mxu0 %v3010
      %7931 = vmatmul.mubr.bf16.gmra.mrb[0].mxu0 %v6286
      %v7932 = vpop.f32.mrb[0].mxu0
      %v7933 = vadd.f32 %v7644, %v7932
      %v7934 = vpop.f32.mrb[0].mxu0
      %v7935 = vpop.f32.mrb[0].mxu0
      %v7936 = vadd.f32 %v7647, %v7935
      %v7937 = vpop.f32.mrb[0].mxu0
      %7938 = vmatprep.mubr.bf16.mxu0 %v3011
      %7939 = vmatmul.mubr.bf16.gmra.mrb[0].mxu0 %v6287
      %v7940 = vpop.f32.mrb[0].mxu0
      %v7941 = vadd.f32 %v7652, %v7940
      %v7942 = vpop.f32.mrb[0].mxu0
      %v7943 = vpop.f32.mrb[0].mxu0
      %v7944 = vadd.f32 %v7655, %v7943
      %v7945 = vpop.f32.mrb[0].mxu0
      %7946 = vmatprep.mubr.bf16.mxu0 %v3012
      %7947 = vmatmul.mubr.bf16.gmra.mrb[0].mxu0 %v6288
      %v7948 = vpop.f32.mrb[0].mxu0
      %v7949 = vadd.f32 %v7660, %v7948
      %v7950 = vpop.f32.mrb[0].mxu0
      %v7951 = vpop.f32.mrb[0].mxu0
      %v7952 = vadd.f32 %v7663, %v7951
      %v7953 = vpop.f32.mrb[0].mxu0
      %7954 = vmatprep.mubr.bf16.mxu0 %v3013
      %7955 = vmatmul.mubr.bf16.gmra.mrb[0].mxu0 %v6289
      %v7956 = vpop.f32.mrb[0].mxu0
      %v7957 = vadd.f32 %v7668, %v7956
      %v7958 = vpop.f32.mrb[0].mxu0
      %v7959 = vpop.f32.mrb[0].mxu0
      %v7960 = vadd.f32 %v7671, %v7959
      %v7961 = vpop.f32.mrb[0].mxu0
      %7962 = vmatprep.mubr.bf16.mxu0 %v3014
      %7963 = vmatmul.mubr.bf16.gmra.mrb[0].mxu0 %v6290
      %v7964 = vpop.f32.mrb[0].mxu0
      %v7965 = vadd.f32 %v7676, %v7964
      %v7966 = vpop.f32.mrb[0].mxu0
      %v7967 = vpop.f32.mrb[0].mxu0
      %v7968 = vadd.f32 %v7679, %v7967
      %v7969 = vpop.f32.mrb[0].mxu0
      %7970 = vmatprep.mubr.bf16.mxu0 %v3015
      %7971 = vmatmul.mubr.bf16.gmra.mrb[0].mxu0 %v6291
      %v7972 = vpop.f32.mrb[0].mxu0
      %v7973 = vadd.f32 %v7684, %v7972
      %v7974 = vpop.f32.mrb[0].mxu0
      %v7975 = vpop.f32.mrb[0].mxu0
      %v7976 = vadd.f32 %v7687, %v7975
      %v7977 = vpop.f32.mrb[0].mxu0
      %7978 = vmatprep.mubr.bf16.mxu0 %v3016
      %7979 = vmatmul.mubr.bf16.gmra.mrb[0].mxu0 %v6292
      %v7980 = vpop.f32.mrb[0].mxu0
      %v7981 = vadd.f32 %v7692, %v7980
      %v7982 = vpop.f32.mrb[0].mxu0
      %v7983 = vpop.f32.mrb[0].mxu0
      %v7984 = vadd.f32 %v7695, %v7983
      %v7985 = vpop.f32.mrb[0].mxu0
      %7986 = vmatprep.mubr.bf16.mxu0 %v3017
      %7987 = vmatmul.mubr.bf16.gmra.mrb[0].mxu0 %v6293
      %v7988 = vpop.f32.mrb[0].mxu0
      %v7989 = vadd.f32 %v7700, %v7988
      %v7990 = vpop.f32.mrb[0].mxu0
      %v7991 = vpop.f32.mrb[0].mxu0
      %v7992 = vadd.f32 %v7703, %v7991
      %v7993 = vpop.f32.mrb[0].mxu0
      %7994 = vmatprep.mubr.bf16.mxu0 %v3018
      %7995 = vmatmul.mubr.bf16.gmra.mrb[0].mxu0 %v6294
      %v7996 = vpop.f32.mrb[0].mxu0
      %v7997 = vadd.f32 %v7708, %v7996
      %v7998 = vpop.f32.mrb[0].mxu0
      %v7999 = vpop.f32.mrb[0].mxu0
      %v8000 = vadd.f32 %v7711, %v7999
      %v8001 = vpop.f32.mrb[0].mxu0
      %8002 = vmatprep.mubr.bf16.mxu0 %v3019
      %8003 = vmatmul.mubr.bf16.gmra.mrb[0].mxu0 %v6295
      %v8004 = vpop.f32.mrb[0].mxu0
      %v8005 = vadd.f32 %v7716, %v8004
      %v8006 = vpop.f32.mrb[0].mxu0
      %v8007 = vpop.f32.mrb[0].mxu0
      %v8008 = vadd.f32 %v7719, %v8007
      %v8009 = vpop.f32.mrb[0].mxu0
      %8010 = vmatprep.mubr.bf16.mxu0 %v3020
      %8011 = vmatmul.mubr.bf16.gmra.mrb[0].mxu0 %v6296
      %v8012 = vpop.f32.mrb[0].mxu0
      %v8013 = vadd.f32 %v7724, %v8012
      %v8014 = vpop.f32.mrb[0].mxu0
      %v8015 = vpop.f32.mrb[0].mxu0
      %v8016 = vadd.f32 %v7727, %v8015
      %v8017 = vpop.f32.mrb[0].mxu0
      %8018 = vmatprep.mubr.bf16.mxu0 %v3021
      %8019 = vmatmul.mubr.bf16.gmra.mrb[0].mxu0 %v6297
      %v8020 = vpop.f32.mrb[0].mxu0
      %v8021 = vadd.f32 %v7732, %v8020
      %v8022 = vpop.f32.mrb[0].mxu0
      %v8023 = vpop.f32.mrb[0].mxu0
      %v8024 = vadd.f32 %v7735, %v8023
      %v8025 = vpop.f32.mrb[0].mxu0
      %8026 = vmatprep.mubr.bf16.mxu0 %v3022
      %8027 = vmatmul.mubr.bf16.gmra.mrb[0].mxu0 %v6298
      %v8028 = vpop.f32.mrb[0].mxu0
      %v8029 = vadd.f32 %v7740, %v8028
      %v8030 = vpop.f32.mrb[0].mxu0
      %v8031 = vpop.f32.mrb[0].mxu0
      %v8032 = vadd.f32 %v7743, %v8031
      %v8033 = vpop.f32.mrb[0].mxu0
      %8034 = vdwg.mxu0
      %8035 = vmatprep.subr.bf16.mxu0 0
      %8036 = vmatpush1.bf16.msra.mxu0 %v6799
      %8037 = vmatprep.subr.bf16.mxu0 0
      %8038 = vmatpush1.bf16.msra.mxu0 %v6800
      %8039 = vmatprep.subr.bf16.mxu0 0
      %8040 = vmatpush1.bf16.msra.mxu0 %v6801
      %8041 = vmatprep.subr.bf16.mxu0 0
      %8042 = vmatpush1.bf16.msra.mxu0 %v6802
      %8043 = vmatprep.subr.bf16.mxu0 0
      %8044 = vmatpush1.bf16.msra.mxu0 %v6803
      %8045 = vmatprep.subr.bf16.mxu0 0
      %8046 = vmatpush1.bf16.msra.mxu0 %v6804
      %8047 = vmatprep.subr.bf16.mxu0 0
      %8048 = vmatpush1.bf16.msra.mxu0 %v6805
      %8049 = vmatprep.subr.bf16.mxu0 0
      %8050 = vmatpush1.bf16.msra.mxu0 %v6806
      %8051 = vmatprep.subr.bf16.mxu0 0
      %8052 = vmatpush1.bf16.msra.mxu0 0
      %8053 = vmatprep.subr.bf16.mxu0 0
      %8054 = vmatpush1.bf16.msra.mxu0 0
      %8055 = vmatprep.subr.bf16.mxu0 0
      %8056 = vmatpush1.bf16.msra.mxu0 0
      %8057 = vmatprep.subr.bf16.mxu0 0
      %8058 = vmatpush1.bf16.msra.mxu0 0
      %8059 = vmatprep.subr.bf16.mxu0 0
      %8060 = vmatpush1.bf16.msra.mxu0 0
      %8061 = vmatprep.subr.bf16.mxu0 0
      %8062 = vmatpush1.bf16.msra.mxu0 0
      %8063 = vmatprep.subr.bf16.mxu0 0
      %8064 = vmatpush1.bf16.msra.mxu0 0
      %8065 = vmatprep.subr.bf16.mxu0 0
      %8066 = vmatpush1.bf16.msra.mxu0 0
      %8067 = vmatprep.mubr.bf16.mxu0 0
      %8068 = vmatmul.mubr.bf16.gmra.mrb[0].mxu0 %v3023
      %v8069 = vpop.f32.mrb[0].mxu0
      %v8070 = vadd.f32 %v7781, %v8069
      %v8071 = vpop.f32.mrb[0].mxu0
      %v8072 = vpop.f32.mrb[0].mxu0
      %v8073 = vadd.f32 %v7784, %v8072
      %v8074 = vpop.f32.mrb[0].mxu0
      %8075 = vmatprep.mubr.bf16.mxu0 0
      %8076 = vmatmul.mubr.bf16.gmra.mrb[0].mxu0 %v3024
      %v8077 = vpop.f32.mrb[0].mxu0
      %v8078 = vadd.f32 %v7789, %v8077
      %v8079 = vpop.f32.mrb[0].mxu0
      %v8080 = vpop.f32.mrb[0].mxu0
      %v8081 = vadd.f32 %v7792, %v8080
      %v8082 = vpop.f32.mrb[0].mxu0
      %8083 = vmatprep.mubr.bf16.mxu0 0
      %8084 = vmatmul.mubr.bf16.gmra.mrb[0].mxu0 %v3025
      %v8085 = vpop.f32.mrb[0].mxu0
      %v8086 = vadd.f32 %v7797, %v8085
      %v8087 = vpop.f32.mrb[0].mxu0
      %v8088 = vpop.f32.mrb[0].mxu0
      %v8089 = vadd.f32 %v7800, %v8088
      %v8090 = vpop.f32.mrb[0].mxu0
      %8091 = vmatprep.mubr.bf16.mxu0 0
      %8092 = vmatmul.mubr.bf16.gmra.mrb[0].mxu0 %v3026
      %v8093 = vpop.f32.mrb[0].mxu0
      %v8094 = vadd.f32 %v7805, %v8093
      %v8095 = vpop.f32.mrb[0].mxu0
      %v8096 = vpop.f32.mrb[0].mxu0
      %v8097 = vadd.f32 %v7808, %v8096
      %v8098 = vpop.f32.mrb[0].mxu0
      %8099 = vmatprep.mubr.bf16.mxu0 0
      %8100 = vmatmul.mubr.bf16.gmra.mrb[0].mxu0 %v3027
      %v8101 = vpop.f32.mrb[0].mxu0
      %v8102 = vadd.f32 %v7813, %v8101
      %v8103 = vpop.f32.mrb[0].mxu0
      %v8104 = vpop.f32.mrb[0].mxu0
      %v8105 = vadd.f32 %v7816, %v8104
      %v8106 = vpop.f32.mrb[0].mxu0
      %8107 = vmatprep.mubr.bf16.mxu0 0
      %8108 = vmatmul.mubr.bf16.gmra.mrb[0].mxu0 %v3028
      %v8109 = vpop.f32.mrb[0].mxu0
      %v8110 = vadd.f32 %v7821, %v8109
      %v8111 = vpop.f32.mrb[0].mxu0
      %v8112 = vpop.f32.mrb[0].mxu0
      %v8113 = vadd.f32 %v7824, %v8112
      %v8114 = vpop.f32.mrb[0].mxu0
      %8115 = vmatprep.mubr.bf16.mxu0 0
      %8116 = vmatmul.mubr.bf16.gmra.mrb[0].mxu0 %v3029
      %v8117 = vpop.f32.mrb[0].mxu0
      %v8118 = vadd.f32 %v7829, %v8117
      %v8119 = vpop.f32.mrb[0].mxu0
      %v8120 = vpop.f32.mrb[0].mxu0
      %v8121 = vadd.f32 %v7832, %v8120
      %v8122 = vpop.f32.mrb[0].mxu0
      %8123 = vmatprep.mubr.bf16.mxu0 0
      %8124 = vmatmul.mubr.bf16.gmra.mrb[0].mxu0 %v3030
      %v8125 = vpop.f32.mrb[0].mxu0
      %v8126 = vadd.f32 %v7837, %v8125
      %v8127 = vpop.f32.mrb[0].mxu0
      %v8128 = vpop.f32.mrb[0].mxu0
      %v8129 = vadd.f32 %v7840, %v8128
      %v8130 = vpop.f32.mrb[0].mxu0
      %8131 = vmatprep.mubr.bf16.mxu0 0
      %8132 = vmatmul.mubr.bf16.gmra.mrb[0].mxu0 %v3031
      %v8133 = vpop.f32.mrb[0].mxu0
      %v8134 = vadd.f32 %v7845, %v8133
      %v8135 = vpop.f32.mrb[0].mxu0
      %v8136 = vpop.f32.mrb[0].mxu0
      %v8137 = vadd.f32 %v7848, %v8136
      %v8138 = vpop.f32.mrb[0].mxu0
      %8139 = vmatprep.mubr.bf16.mxu0 0
      %8140 = vmatmul.mubr.bf16.gmra.mrb[0].mxu0 %v3032
      %v8141 = vpop.f32.mrb[0].mxu0
      %v8142 = vadd.f32 %v7853, %v8141
      %v8143 = vpop.f32.mrb[0].mxu0
      %v8144 = vpop.f32.mrb[0].mxu0
      %v8145 = vadd.f32 %v7856, %v8144
      %v8146 = vpop.f32.mrb[0].mxu0
      %8147 = vmatprep.mubr.bf16.mxu0 0
      %8148 = vmatmul.mubr.bf16.gmra.mrb[0].mxu0 %v3033
      %v8149 = vpop.f32.mrb[0].mxu0
      %v8150 = vadd.f32 %v7861, %v8149
      %v8151 = vpop.f32.mrb[0].mxu0
      %v8152 = vpop.f32.mrb[0].mxu0
      %v8153 = vadd.f32 %v7864, %v8152
      %v8154 = vpop.f32.mrb[0].mxu0
      %8155 = vmatprep.mubr.bf16.mxu0 0
      %8156 = vmatmul.mubr.bf16.gmra.mrb[0].mxu0 %v3034
      %v8157 = vpop.f32.mrb[0].mxu0
      %v8158 = vadd.f32 %v7869, %v8157
      %v8159 = vpop.f32.mrb[0].mxu0
      %v8160 = vpop.f32.mrb[0].mxu0
      %v8161 = vadd.f32 %v7872, %v8160
      %v8162 = vpop.f32.mrb[0].mxu0
      %8163 = vmatprep.mubr.bf16.mxu0 0
      %8164 = vmatmul.mubr.bf16.gmra.mrb[0].mxu0 %v3035
      %v8165 = vpop.f32.mrb[0].mxu0
      %v8166 = vadd.f32 %v7877, %v8165
      %v8167 = vpop.f32.mrb[0].mxu0
      %v8168 = vpop.f32.mrb[0].mxu0
      %v8169 = vadd.f32 %v7880, %v8168
      %v8170 = vpop.f32.mrb[0].mxu0
      %8171 = vmatprep.mubr.bf16.mxu0 0
      %8172 = vmatmul.mubr.bf16.gmra.mrb[0].mxu0 %v3036
      %v8173 = vpop.f32.mrb[0].mxu0
      %v8174 = vadd.f32 %v7885, %v8173
      %v8175 = vpop.f32.mrb[0].mxu0
      %v8176 = vpop.f32.mrb[0].mxu0
      %v8177 = vadd.f32 %v7888, %v8176
      %v8178 = vpop.f32.mrb[0].mxu0
      %8179 = vmatprep.mubr.bf16.mxu0 0
      %8180 = vmatmul.mubr.bf16.gmra.mrb[0].mxu0 %v3037
      %v8181 = vpop.f32.mrb[0].mxu0
      %v8182 = vadd.f32 %v7893, %v8181
      %v8183 = vpop.f32.mrb[0].mxu0
      %v8184 = vpop.f32.mrb[0].mxu0
      %v8185 = vadd.f32 %v7896, %v8184
      %v8186 = vpop.f32.mrb[0].mxu0
      %8187 = vmatprep.mubr.bf16.mxu0 0
      %8188 = vmatmul.mubr.bf16.gmra.mrb[0].mxu0 %v3038
      %v8189 = vpop.f32.mrb[0].mxu0
      %v8190 = vadd.f32 %v7901, %v8189
      %v8191 = vpop.f32.mrb[0].mxu0
      %v8192 = vpop.f32.mrb[0].mxu0
      %v8193 = vadd.f32 %v7904, %v8192
      %v8194 = vpop.f32.mrb[0].mxu0
      %8195 = vmatprep.mubr.bf16.mxu0 0
      %8196 = vmatmul.mubr.bf16.gmra.mrb[0].mxu0 %v3039
      %v8197 = vpop.f32.mrb[0].mxu0
      %v8198 = vadd.f32 %v7909, %v8197
      %v8199 = vpop.f32.mrb[0].mxu0
      %v8200 = vpop.f32.mrb[0].mxu0
      %v8201 = vadd.f32 %v7912, %v8200
      %v8202 = vpop.f32.mrb[0].mxu0
      %8203 = vmatprep.mubr.bf16.mxu0 0
      %8204 = vmatmul.mubr.bf16.gmra.mrb[0].mxu0 %v3040
      %v8205 = vpop.f32.mrb[0].mxu0
      %v8206 = vadd.f32 %v7917, %v8205
      %v8207 = vpop.f32.mrb[0].mxu0
      %v8208 = vpop.f32.mrb[0].mxu0
      %v8209 = vadd.f32 %v7920, %v8208
      %v8210 = vpop.f32.mrb[0].mxu0
      %8211 = vmatprep.mubr.bf16.mxu0 0
      %8212 = vmatmul.mubr.bf16.gmra.mrb[0].mxu0 %v3041
      %v8213 = vpop.f32.mrb[0].mxu0
      %v8214 = vadd.f32 %v7925, %v8213
      %v8215 = vpop.f32.mrb[0].mxu0
      %v8216 = vpop.f32.mrb[0].mxu0
      %v8217 = vadd.f32 %v7928, %v8216
      %v8218 = vpop.f32.mrb[0].mxu0
      %8219 = vmatprep.mubr.bf16.mxu0 0
      %8220 = vmatmul.mubr.bf16.gmra.mrb[0].mxu0 %v3042
      %v8221 = vpop.f32.mrb[0].mxu0
      %v8222 = vadd.f32 %v7933, %v8221
      %v8223 = vpop.f32.mrb[0].mxu0
      %v8224 = vpop.f32.mrb[0].mxu0
      %v8225 = vadd.f32 %v7936, %v8224
      %v8226 = vpop.f32.mrb[0].mxu0
      %8227 = vmatprep.mubr.bf16.mxu0 0
      %8228 = vmatmul.mubr.bf16.gmra.mrb[0].mxu0 %v3043
      %v8229 = vpop.f32.mrb[0].mxu0
      %v8230 = vadd.f32 %v7941, %v8229
      %v8231 = vpop.f32.mrb[0].mxu0
      %v8232 = vpop.f32.mrb[0].mxu0
      %v8233 = vadd.f32 %v7944, %v8232
      %v8234 = vpop.f32.mrb[0].mxu0
      %8235 = vmatprep.mubr.bf16.mxu0 0
      %8236 = vmatmul.mubr.bf16.gmra.mrb[0].mxu0 %v3044
      %v8237 = vpop.f32.mrb[0].mxu0
      %v8238 = vadd.f32 %v7949, %v8237
      %v8239 = vpop.f32.mrb[0].mxu0
      %v8240 = vpop.f32.mrb[0].mxu0
      %v8241 = vadd.f32 %v7952, %v8240
      %v8242 = vpop.f32.mrb[0].mxu0
      %8243 = vmatprep.mubr.bf16.mxu0 0
      %8244 = vmatmul.mubr.bf16.gmra.mrb[0].mxu0 %v3045
      %v8245 = vpop.f32.mrb[0].mxu0
      %v8246 = vadd.f32 %v7957, %v8245
      %v8247 = vpop.f32.mrb[0].mxu0
      %v8248 = vpop.f32.mrb[0].mxu0
      %v8249 = vadd.f32 %v7960, %v8248
      %v8250 = vpop.f32.mrb[0].mxu0
      %8251 = vmatprep.mubr.bf16.mxu0 0
      %8252 = vmatmul.mubr.bf16.gmra.mrb[0].mxu0 %v3046
      %v8253 = vpop.f32.mrb[0].mxu0
      %v8254 = vadd.f32 %v7965, %v8253
      %v8255 = vpop.f32.mrb[0].mxu0
      %v8256 = vpop.f32.mrb[0].mxu0
      %v8257 = vadd.f32 %v7968, %v8256
      %v8258 = vpop.f32.mrb[0].mxu0
      %8259 = vmatprep.mubr.bf16.mxu0 0
      %8260 = vmatmul.mubr.bf16.gmra.mrb[0].mxu0 %v3047
      %v8261 = vpop.f32.mrb[0].mxu0
      %v8262 = vadd.f32 %v7973, %v8261
      %v8263 = vpop.f32.mrb[0].mxu0
      %v8264 = vpop.f32.mrb[0].mxu0
      %v8265 = vadd.f32 %v7976, %v8264
      %v8266 = vpop.f32.mrb[0].mxu0
      %8267 = vmatprep.mubr.bf16.mxu0 0
      %8268 = vmatmul.mubr.bf16.gmra.mrb[0].mxu0 %v3048
      %v8269 = vpop.f32.mrb[0].mxu0
      %v8270 = vadd.f32 %v7981, %v8269
      %v8271 = vpop.f32.mrb[0].mxu0
      %v8272 = vpop.f32.mrb[0].mxu0
      %v8273 = vadd.f32 %v7984, %v8272
      %v8274 = vpop.f32.mrb[0].mxu0
      %8275 = vmatprep.mubr.bf16.mxu0 0
      %8276 = vmatmul.mubr.bf16.gmra.mrb[0].mxu0 %v3049
      %v8277 = vpop.f32.mrb[0].mxu0
      %v8278 = vadd.f32 %v7989, %v8277
      %v8279 = vpop.f32.mrb[0].mxu0
      %v8280 = vpop.f32.mrb[0].mxu0
      %v8281 = vadd.f32 %v7992, %v8280
      %v8282 = vpop.f32.mrb[0].mxu0
      %8283 = vmatprep.mubr.bf16.mxu0 0
      %8284 = vmatmul.mubr.bf16.gmra.mrb[0].mxu0 %v3050
      %v8285 = vpop.f32.mrb[0].mxu0
      %v8286 = vadd.f32 %v7997, %v8285
      %v8287 = vpop.f32.mrb[0].mxu0
      %v8288 = vpop.f32.mrb[0].mxu0
      %v8289 = vadd.f32 %v8000, %v8288
      %v8290 = vpop.f32.mrb[0].mxu0
      %8291 = vmatprep.mubr.bf16.mxu0 0
      %8292 = vmatmul.mubr.bf16.gmra.mrb[0].mxu0 %v3051
      %v8293 = vpop.f32.mrb[0].mxu0
      %v8294 = vadd.f32 %v8005, %v8293
      %v8295 = vpop.f32.mrb[0].mxu0
      %v8296 = vpop.f32.mrb[0].mxu0
      %v8297 = vadd.f32 %v8008, %v8296
      %v8298 = vpop.f32.mrb[0].mxu0
      %8299 = vmatprep.mubr.bf16.mxu0 0
      %8300 = vmatmul.mubr.bf16.gmra.mrb[0].mxu0 %v3052
      %v8301 = vpop.f32.mrb[0].mxu0
      %v8302 = vadd.f32 %v8013, %v8301
      %v8303 = vpop.f32.mrb[0].mxu0
      %v8304 = vpop.f32.mrb[0].mxu0
      %v8305 = vadd.f32 %v8016, %v8304
      %v8306 = vpop.f32.mrb[0].mxu0
      %8307 = vmatprep.mubr.bf16.mxu0 0
      %8308 = vmatmul.mubr.bf16.gmra.mrb[0].mxu0 %v3053
      %v8309 = vpop.f32.mrb[0].mxu0
      %v8310 = vadd.f32 %v8021, %v8309
      %v8311 = vpop.f32.mrb[0].mxu0
      %v8312 = vpop.f32.mrb[0].mxu0
      %v8313 = vadd.f32 %v8024, %v8312
      %v8314 = vpop.f32.mrb[0].mxu0
      %8315 = vmatprep.mubr.bf16.mxu0 0
      %8316 = vmatmul.mubr.bf16.gmra.mrb[0].mxu0 %v3054
      %v8317 = vpop.f32.mrb[0].mxu0
      %v8318 = vadd.f32 %v8029, %v8317
      %v8319 = vpop.f32.mrb[0].mxu0
      %v8320 = vpop.f32.mrb[0].mxu0
      %v8321 = vadd.f32 %v8032, %v8320
      %v8322 = vpop.f32.mrb[0].mxu0
      %8323 = vdwg.mxu0
      %v8324 = vmax.f32 %v8070, 0.0
      %v8325 = vmax.f32 %v8073, 0.0
      %v8326 = vmax.f32 %v8078, 0.0
      %v8327 = vmax.f32 %v8081, 0.0
      %v8328 = vmax.f32 %v8086, 0.0
      %v8329 = vmax.f32 %v8089, 0.0
      %v8330 = vmax.f32 %v8094, 0.0
      %v8331 = vmax.f32 %v8097, 0.0
      %v8332 = vmax.f32 %v8102, 0.0
      %v8333 = vmax.f32 %v8105, 0.0
      %v8334 = vmax.f32 %v8110, 0.0
      %v8335 = vmax.f32 %v8113, 0.0
      %v8336 = vmax.f32 %v8118, 0.0
      %v8337 = vmax.f32 %v8121, 0.0
      %v8338 = vmax.f32 %v8126, 0.0
      %v8339 = vmax.f32 %v8129, 0.0
      %v8340 = vmax.f32 %v8134, 0.0
      %v8341 = vmax.f32 %v8137, 0.0
      %v8342 = vmax.f32 %v8142, 0.0
      %v8343 = vmax.f32 %v8145, 0.0
      %v8344 = vmax.f32 %v8150, 0.0
      %v8345 = vmax.f32 %v8153, 0.0
      %v8346 = vmax.f32 %v8158, 0.0
      %v8347 = vmax.f32 %v8161, 0.0
      %v8348 = vmax.f32 %v8166, 0.0
      %v8349 = vmax.f32 %v8169, 0.0
      %v8350 = vmax.f32 %v8174, 0.0
      %v8351 = vmax.f32 %v8177, 0.0
      %v8352 = vmax.f32 %v8182, 0.0
      %v8353 = vmax.f32 %v8185, 0.0
      %v8354 = vmax.f32 %v8190, 0.0
      %v8355 = vmax.f32 %v8193, 0.0
      %v8356 = vmax.f32 %v8198, 0.0
      %v8357 = vmax.f32 %v8201, 0.0
      %v8358 = vmax.f32 %v8206, 0.0
      %v8359 = vmax.f32 %v8209, 0.0
      %v8360 = vmax.f32 %v8214, 0.0
      %v8361 = vmax.f32 %v8217, 0.0
      %v8362 = vmax.f32 %v8222, 0.0
      %v8363 = vmax.f32 %v8225, 0.0
      %v8364 = vmax.f32 %v8230, 0.0
      %v8365 = vmax.f32 %v8233, 0.0
      %v8366 = vmax.f32 %v8238, 0.0
      %v8367 = vmax.f32 %v8241, 0.0
      %v8368 = vmax.f32 %v8246, 0.0
      %v8369 = vmax.f32 %v8249, 0.0
      %v8370 = vmax.f32 %v8254, 0.0
      %v8371 = vmax.f32 %v8257, 0.0
      %v8372 = vmax.f32 %v8262, 0.0
      %v8373 = vmax.f32 %v8265, 0.0
      %v8374 = vmax.f32 %v8270, 0.0
      %v8375 = vmax.f32 %v8273, 0.0
      %v8376 = vmax.f32 %v8278, 0.0
      %v8377 = vmax.f32 %v8281, 0.0
      %v8378 = vmax.f32 %v8286, 0.0
      %v8379 = vmax.f32 %v8289, 0.0
      %v8380 = vmax.f32 %v8294, 0.0
      %v8381 = vmax.f32 %v8297, 0.0
      %v8382 = vmax.f32 %v8302, 0.0
      %v8383 = vmax.f32 %v8305, 0.0
      %v8384 = vmax.f32 %v8310, 0.0
      %v8385 = vmax.f32 %v8313, 0.0
      %v8386 = vmax.f32 %v8318, 0.0
      %v8387 = vmax.f32 %v8321, 0.0
      %v8388 = vpack.c.bf16 %v8325, %v8324
      %v8389 = vpack.c.bf16 %v8327, %v8326
      %v8390 = vpack.c.bf16 %v8329, %v8328
      %v8391 = vpack.c.bf16 %v8331, %v8330
      %v8392 = vpack.c.bf16 %v8333, %v8332
      %v8393 = vpack.c.bf16 %v8335, %v8334
      %v8394 = vpack.c.bf16 %v8337, %v8336
      %v8395 = vpack.c.bf16 %v8339, %v8338
      %v8396 = vpack.c.bf16 %v8341, %v8340
      %v8397 = vpack.c.bf16 %v8343, %v8342
      %v8398 = vpack.c.bf16 %v8345, %v8344
      %v8399 = vpack.c.bf16 %v8347, %v8346
      %v8400 = vpack.c.bf16 %v8349, %v8348
      %v8401 = vpack.c.bf16 %v8351, %v8350
      %v8402 = vpack.c.bf16 %v8353, %v8352
      %v8403 = vpack.c.bf16 %v8355, %v8354
      %v8404 = vpack.c.bf16 %v8357, %v8356
      %v8405 = vpack.c.bf16 %v8359, %v8358
      %v8406 = vpack.c.bf16 %v8361, %v8360
      %v8407 = vpack.c.bf16 %v8363, %v8362
      %v8408 = vpack.c.bf16 %v8365, %v8364
      %v8409 = vpack.c.bf16 %v8367, %v8366
      %v8410 = vpack.c.bf16 %v8369, %v8368
      %v8411 = vpack.c.bf16 %v8371, %v8370
      %v8412 = vpack.c.bf16 %v8373, %v8372
      %v8413 = vpack.c.bf16 %v8375, %v8374
      %v8414 = vpack.c.bf16 %v8377, %v8376
      %v8415 = vpack.c.bf16 %v8379, %v8378
      %v8416 = vpack.c.bf16 %v8381, %v8380
      %v8417 = vpack.c.bf16 %v8383, %v8382
      %v8418 = vpack.c.bf16 %v8385, %v8384
      %v8419 = vpack.c.bf16 %v8387, %v8386
      %v8420 = vld [vmem:[%s3] sm:$0xff]
      %v8421 = vld [vmem:[%s3 + $0x8] sm:$0xff]
      %v8422 = vld [vmem:[%s3 + $0x10] sm:$0xff]
      %v8423 = vld [vmem:[%s3 + $0x18] sm:$0xff]
      %v8424 = vld [vmem:[%s3 + $0x20] sm:$0xff]
      %v8425 = vld [vmem:[%s3 + $0x28] sm:$0xff]
      %v8426 = vld [vmem:[%s3 + $0x30] sm:$0xff]
      %v8427 = vld [vmem:[%s3 + $0x38] sm:$0xff]
      %v8428 = vld [vmem:[%s3 + $0x40] sm:$0xff]
      %v8429 = vld [vmem:[%s3 + $0x48] sm:$0xff]
      %v8430 = vld [vmem:[%s3 + $0x50] sm:$0xff]
      %v8431 = vld [vmem:[%s3 + $0x58] sm:$0xff]
      %v8432 = vld [vmem:[%s3 + $0x60] sm:$0xff]
      %v8433 = vld [vmem:[%s3 + $0x68] sm:$0xff]
      %v8434 = vld [vmem:[%s3 + $0x70] sm:$0xff]
      %v8435 = vld [vmem:[%s3 + $0x78] sm:$0xff]
      %v8436 = vld [vmem:[%s3 + $0x80] sm:$0xff]
      %v8437 = vld [vmem:[%s3 + $0x88] sm:$0xff]
      %v8438 = vld [vmem:[%s3 + $0x90] sm:$0xff]
      %v8439 = vld [vmem:[%s3 + $0x98] sm:$0xff]
      %v8440 = vld [vmem:[%s3 + $0xa0] sm:$0xff]
      %v8441 = vld [vmem:[%s3 + $0xa8] sm:$0xff]
      %v8442 = vld [vmem:[%s3 + $0xb0] sm:$0xff]
      %v8443 = vld [vmem:[%s3 + $0xb8] sm:$0xff]
      %v8444 = vld [vmem:[%s3 + $0xc0] sm:$0xff]
      %v8445 = vld [vmem:[%s3 + $0xc8] sm:$0xff]
      %v8446 = vld [vmem:[%s3 + $0xd0] sm:$0xff]
      %v8447 = vld [vmem:[%s3 + $0xd8] sm:$0xff]
      %v8448 = vld [vmem:[%s3 + $0xe0] sm:$0xff]
      %v8449 = vld [vmem:[%s3 + $0xe8] sm:$0xff]
      %v8450 = vld [vmem:[%s3 + $0xf0] sm:$0xff]
      %v8451 = vld [vmem:[%s3 + $0xf8] sm:$0xff]
      %v8452 = vld [vmem:[%s3 + $0x100] sm:$0xff]
      %v8453 = vld [vmem:[%s3 + $0x108] sm:$0xff]
      %v8488 = vunpack.c.l.b16 %v8420
      %v8489 = vunpack.c.h.b16 %v8420
      %v8490 = vunpack.c.l.b16 %v8421
      %v8491 = vunpack.c.h.b16 %v8421
      %v8492 = vunpack.c.l.b16 %v8422
      %v8493 = vunpack.c.h.b16 %v8422
      %v8494 = vunpack.c.l.b16 %v8423
      %v8495 = vunpack.c.h.b16 %v8423
      %v8496 = vunpack.c.l.b16 %v8424
      %v8497 = vunpack.c.h.b16 %v8424
      %v8498 = vunpack.c.l.b16 %v8425
      %v8499 = vunpack.c.h.b16 %v8425
      %v8500 = vunpack.c.l.b16 %v8426
      %v8501 = vunpack.c.h.b16 %v8426
      %v8502 = vunpack.c.l.b16 %v8427
      %v8503 = vunpack.c.h.b16 %v8427
      %v8504 = vunpack.c.l.b16 %v8428
      %v8505 = vunpack.c.h.b16 %v8428
      %v8506 = vunpack.c.l.b16 %v8429
      %v8507 = vunpack.c.h.b16 %v8429
      %v8508 = vunpack.c.l.b16 %v8430
      %v8509 = vunpack.c.h.b16 %v8430
      %v8510 = vunpack.c.l.b16 %v8431
      %v8511 = vunpack.c.h.b16 %v8431
      %v8512 = vunpack.c.l.b16 %v8432
      %v8513 = vunpack.c.h.b16 %v8432
      %v8514 = vunpack.c.l.b16 %v8433
      %v8515 = vunpack.c.h.b16 %v8433
      %v8516 = vunpack.c.l.b16 %v8434
      %v8517 = vunpack.c.h.b16 %v8434
      %v8518 = vunpack.c.l.b16 %v8435
      %v8519 = vunpack.c.h.b16 %v8435
      %v8520 = vunpack.c.l.b16 %v8436
      %v8521 = vunpack.c.h.b16 %v8436
      %v8522 = vunpack.c.l.b16 %v8437
      %v8523 = vunpack.c.h.b16 %v8437
      %v8524 = vunpack.c.l.b16 %v8438
      %v8525 = vunpack.c.h.b16 %v8438
      %v8526 = vunpack.c.l.b16 %v8439
      %v8527 = vunpack.c.h.b16 %v8439
      %v8528 = vunpack.c.l.b16 %v8440
      %v8529 = vunpack.c.h.b16 %v8440
      %v8530 = vunpack.c.l.b16 %v8441
      %v8531 = vunpack.c.h.b16 %v8441
      %v8532 = vunpack.c.l.b16 %v8442
      %v8533 = vunpack.c.h.b16 %v8442
      %v8534 = vunpack.c.l.b16 %v8443
      %v8535 = vunpack.c.h.b16 %v8443
      %v8536 = vunpack.c.l.b16 %v8444
      %v8537 = vunpack.c.h.b16 %v8444
      %v8538 = vunpack.c.l.b16 %v8445
      %v8539 = vunpack.c.h.b16 %v8445
      %v8540 = vunpack.c.l.b16 %v8446
      %v8541 = vunpack.c.h.b16 %v8446
      %v8542 = vunpack.c.l.b16 %v8447
      %v8543 = vunpack.c.h.b16 %v8447
      %v8544 = vunpack.c.l.b16 %v8448
      %v8545 = vunpack.c.h.b16 %v8448
      %v8546 = vunpack.c.l.b16 %v8449
      %v8547 = vunpack.c.h.b16 %v8449
      %v8548 = vunpack.c.l.b16 %v8450
      %v8549 = vunpack.c.h.b16 %v8450
      %v8550 = vunpack.c.l.b16 %v8451
      %v8551 = vunpack.c.h.b16 %v8451
      %v8552 = vunpack.c.l.b16 %v8452
      %v8553 = vunpack.c.h.b16 %v8452
      %v8554 = vunpack.c.l.b16 %v8453
      %v8555 = vunpack.c.h.b16 %v8453
      %v8556 = vpack.c.b16 %v8492, %v8488
      %v8557 = vpack.c.b16 %v8493, %v8489
      %v8558 = vpack.c.b16 %v8494, %v8490
      %v8559 = vpack.c.b16 %v8495, %v8491
      %v8560 = vpack.c.b16 %v8500, %v8496
      %v8561 = vpack.c.b16 %v8501, %v8497
      %v8562 = vpack.c.b16 %v8502, %v8498
      %v8563 = vpack.c.b16 %v8503, %v8499
      %v8564 = vpack.c.b16 %v8508, %v8504
      %v8565 = vpack.c.b16 %v8509, %v8505
      %v8566 = vpack.c.b16 %v8510, %v8506
      %v8567 = vpack.c.b16 %v8511, %v8507
      %v8568 = vpack.c.b16 %v8516, %v8512
      %v8569 = vpack.c.b16 %v8517, %v8513
      %v8570 = vpack.c.b16 %v8518, %v8514
      %v8571 = vpack.c.b16 %v8519, %v8515
      %v8572 = vpack.c.b16 %v8524, %v8520
      %v8573 = vpack.c.b16 %v8525, %v8521
      %v8574 = vpack.c.b16 %v8526, %v8522
      %v8575 = vpack.c.b16 %v8527, %v8523
      %v8576 = vpack.c.b16 %v8532, %v8528
      %v8577 = vpack.c.b16 %v8533, %v8529
      %v8578 = vpack.c.b16 %v8534, %v8530
      %v8579 = vpack.c.b16 %v8535, %v8531
      %v8580 = vpack.c.b16 %v8540, %v8536
      %v8581 = vpack.c.b16 %v8541, %v8537
      %v8582 = vpack.c.b16 %v8542, %v8538
      %v8583 = vpack.c.b16 %v8543, %v8539
      %v8584 = vpack.c.b16 %v8548, %v8544
      %v8585 = vpack.c.b16 %v8549, %v8545
      %v8586 = vpack.c.b16 %v8550, %v8546
      %v8587 = vpack.c.b16 %v8551, %v8547
      %v8588 = vpack.c.b16 %v8552, %v8552
      %v8589 = vpack.c.b16 %v8553, %v8553
      %v8590 = vpack.c.b16 %v8554, %v8554
      %v8591 = vpack.c.b16 %v8555, %v8555
      %8628 = vmatprep.subr.bf16.mxu0 0
      %8629 = vmatpush1.bf16.msra.mxu0 %v8388
      %8630 = vmatprep.subr.bf16.mxu0 0
      %8631 = vmatpush1.bf16.msra.mxu0 %v8389
      %8632 = vmatprep.subr.bf16.mxu0 0
      %8633 = vmatpush1.bf16.msra.mxu0 %v8390
      %8634 = vmatprep.subr.bf16.mxu0 0
      %8635 = vmatpush1.bf16.msra.mxu0 %v8391
      %8636 = vmatprep.subr.bf16.mxu0 0
      %8637 = vmatpush1.bf16.msra.mxu0 %v8392
      %8638 = vmatprep.subr.bf16.mxu0 0
      %8639 = vmatpush1.bf16.msra.mxu0 %v8393
      %8640 = vmatprep.subr.bf16.mxu0 0
      %8641 = vmatpush1.bf16.msra.mxu0 %v8394
      %8642 = vmatprep.subr.bf16.mxu0 0
      %8643 = vmatpush1.bf16.msra.mxu0 %v8395
      %8644 = vmatprep.subr.bf16.mxu0 0
      %8645 = vmatpush1.bf16.msra.mxu0 %v8396
      %8646 = vmatprep.subr.bf16.mxu0 0
      %8647 = vmatpush1.bf16.msra.mxu0 %v8397
      %8648 = vmatprep.subr.bf16.mxu0 0
      %8649 = vmatpush1.bf16.msra.mxu0 %v8398
      %8650 = vmatprep.subr.bf16.mxu0 0
      %8651 = vmatpush1.bf16.msra.mxu0 %v8399
      %8652 = vmatprep.subr.bf16.mxu0 0
      %8653 = vmatpush1.bf16.msra.mxu0 %v8400
      %8654 = vmatprep.subr.bf16.mxu0 0
      %8655 = vmatpush1.bf16.msra.mxu0 %v8401
      %8656 = vmatprep.subr.bf16.mxu0 0
      %8657 = vmatpush1.bf16.msra.mxu0 %v8402
      %8658 = vmatprep.subr.bf16.mxu0 0
      %8659 = vmatpush1.bf16.msra.mxu0 %v8403
      %8660 = vmatprep.mubr.bf16.mxu0 %v8557
      %8661 = vmatmul.mubr.bf16.gmra.mrb[0].mxu0 %v8556
      %v8662 = vpop.f32.mrb[0].mxu0
      %v8663 = vadd.f32 0.0, %v8662
      %v8664 = vpop.f32.mrb[0].mxu0
      %v8665 = vpop.f32.mrb[0].mxu0
      %v8666 = vadd.f32 0.0, %v8665
      %v8667 = vpop.f32.mrb[0].mxu0
      %8668 = vmatprep.mubr.bf16.mxu0 %v8561
      %8669 = vmatmul.mubr.bf16.gmra.mrb[0].mxu0 %v8560
      %v8670 = vpop.f32.mrb[0].mxu0
      %v8671 = vadd.f32 0.0, %v8670
      %v8672 = vpop.f32.mrb[0].mxu0
      %v8673 = vpop.f32.mrb[0].mxu0
      %v8674 = vadd.f32 0.0, %v8673
      %v8675 = vpop.f32.mrb[0].mxu0
      %8676 = vmatprep.mubr.bf16.mxu0 %v8565
      %8677 = vmatmul.mubr.bf16.gmra.mrb[0].mxu0 %v8564
      %v8678 = vpop.f32.mrb[0].mxu0
      %v8679 = vadd.f32 0.0, %v8678
      %v8680 = vpop.f32.mrb[0].mxu0
      %v8681 = vpop.f32.mrb[0].mxu0
      %v8682 = vadd.f32 0.0, %v8681
      %v8683 = vpop.f32.mrb[0].mxu0
      %8684 = vmatprep.mubr.bf16.mxu0 %v8569
      %8685 = vmatmul.mubr.bf16.gmra.mrb[0].mxu0 %v8568
      %v8686 = vpop.f32.mrb[0].mxu0
      %v8687 = vadd.f32 0.0, %v8686
      %v8688 = vpop.f32.mrb[0].mxu0
      %v8689 = vpop.f32.mrb[0].mxu0
      %v8690 = vadd.f32 0.0, %v8689
      %v8691 = vpop.f32.mrb[0].mxu0
      %8692 = vmatprep.mubr.bf16.mxu0 %v8573
      %8693 = vmatmul.mubr.bf16.gmra.mrb[0].mxu0 %v8572
      %v8694 = vpop.f32.mrb[0].mxu0
      %v8695 = vadd.f32 0.0, %v8694
      %v8696 = vpop.f32.mrb[0].mxu0
      %v8697 = vpop.f32.mrb[0].mxu0
      %v8698 = vadd.f32 0.0, %v8697
      %v8699 = vpop.f32.mrb[0].mxu0
      %8700 = vmatprep.mubr.bf16.mxu0 %v8577
      %8701 = vmatmul.mubr.bf16.gmra.mrb[0].mxu0 %v8576
      %v8702 = vpop.f32.mrb[0].mxu0
      %v8703 = vadd.f32 0.0, %v8702
      %v8704 = vpop.f32.mrb[0].mxu0
      %v8705 = vpop.f32.mrb[0].mxu0
      %v8706 = vadd.f32 0.0, %v8705
      %v8707 = vpop.f32.mrb[0].mxu0
      %8708 = vmatprep.mubr.bf16.mxu0 %v8581
      %8709 = vmatmul.mubr.bf16.gmra.mrb[0].mxu0 %v8580
      %v8710 = vpop.f32.mrb[0].mxu0
      %v8711 = vadd.f32 0.0, %v8710
      %v8712 = vpop.f32.mrb[0].mxu0
      %v8713 = vpop.f32.mrb[0].mxu0
      %v8714 = vadd.f32 0.0, %v8713
      %v8715 = vpop.f32.mrb[0].mxu0
      %8716 = vmatprep.mubr.bf16.mxu0 %v8585
      %8717 = vmatmul.mubr.bf16.gmra.mrb[0].mxu0 %v8584
      %v8718 = vpop.f32.mrb[0].mxu0
      %v8719 = vadd.f32 0.0, %v8718
      %v8720 = vpop.f32.mrb[0].mxu0
      %v8721 = vpop.f32.mrb[0].mxu0
      %v8722 = vadd.f32 0.0, %v8721
      %v8723 = vpop.f32.mrb[0].mxu0
      %8724 = vmatprep.mubr.bf16.mxu0 %v8589
      %8725 = vmatmul.mubr.bf16.gmra.mrb[0].mxu0 %v8588
      %v8726 = vpop.f32.mrb[0].mxu0
      %v8727 = vadd.f32 0.0, %v8726
      %v8728 = vpop.f32.mrb[0].mxu0
      %v8729 = vpop.f32.mrb[0].mxu0
      %v8730 = vpop.f32.mrb[0].mxu0
      %8731 = vdwg.mxu0
      %8732 = vmatprep.subr.bf16.mxu0 0
      %8733 = vmatpush1.bf16.msra.mxu0 %v8404
      %8734 = vmatprep.subr.bf16.mxu0 0
      %8735 = vmatpush1.bf16.msra.mxu0 %v8405
      %8736 = vmatprep.subr.bf16.mxu0 0
      %8737 = vmatpush1.bf16.msra.mxu0 %v8406
      %8738 = vmatprep.subr.bf16.mxu0 0
      %8739 = vmatpush1.bf16.msra.mxu0 %v8407
      %8740 = vmatprep.subr.bf16.mxu0 0
      %8741 = vmatpush1.bf16.msra.mxu0 %v8408
      %8742 = vmatprep.subr.bf16.mxu0 0
      %8743 = vmatpush1.bf16.msra.mxu0 %v8409
      %8744 = vmatprep.subr.bf16.mxu0 0
      %8745 = vmatpush1.bf16.msra.mxu0 %v8410
      %8746 = vmatprep.subr.bf16.mxu0 0
      %8747 = vmatpush1.bf16.msra.mxu0 %v8411
      %8748 = vmatprep.subr.bf16.mxu0 0
      %8749 = vmatpush1.bf16.msra.mxu0 %v8412
      %8750 = vmatprep.subr.bf16.mxu0 0
      %8751 = vmatpush1.bf16.msra.mxu0 %v8413
      %8752 = vmatprep.subr.bf16.mxu0 0
      %8753 = vmatpush1.bf16.msra.mxu0 %v8414
      %8754 = vmatprep.subr.bf16.mxu0 0
      %8755 = vmatpush1.bf16.msra.mxu0 %v8415
      %8756 = vmatprep.subr.bf16.mxu0 0
      %8757 = vmatpush1.bf16.msra.mxu0 %v8416
      %8758 = vmatprep.subr.bf16.mxu0 0
      %8759 = vmatpush1.bf16.msra.mxu0 %v8417
      %8760 = vmatprep.subr.bf16.mxu0 0
      %8761 = vmatpush1.bf16.msra.mxu0 %v8418
      %8762 = vmatprep.subr.bf16.mxu0 0
      %8763 = vmatpush1.bf16.msra.mxu0 %v8419
      %8764 = vmatprep.mubr.bf16.mxu0 %v8559
      %8765 = vmatmul.mubr.bf16.gmra.mrb[0].mxu0 %v8558
      %v8766 = vpop.f32.mrb[0].mxu0
      %v8767 = vadd.f32 %v8663, %v8766
      %v8768 = vpop.f32.mrb[0].mxu0
      %v8769 = vpop.f32.mrb[0].mxu0
      %v8770 = vadd.f32 %v8666, %v8769
      %v8771 = vpop.f32.mrb[0].mxu0
      %8772 = vmatprep.mubr.bf16.mxu0 %v8563
      %8773 = vmatmul.mubr.bf16.gmra.mrb[0].mxu0 %v8562
      %v8774 = vpop.f32.mrb[0].mxu0
      %v8775 = vadd.f32 %v8671, %v8774
      %v8776 = vpop.f32.mrb[0].mxu0
      %v8777 = vpop.f32.mrb[0].mxu0
      %v8778 = vadd.f32 %v8674, %v8777
      %v8779 = vpop.f32.mrb[0].mxu0
      %8780 = vmatprep.mubr.bf16.mxu0 %v8567
      %8781 = vmatmul.mubr.bf16.gmra.mrb[0].mxu0 %v8566
      %v8782 = vpop.f32.mrb[0].mxu0
      %v8783 = vadd.f32 %v8679, %v8782
      %v8784 = vpop.f32.mrb[0].mxu0
      %v8785 = vpop.f32.mrb[0].mxu0
      %v8786 = vadd.f32 %v8682, %v8785
      %v8787 = vpop.f32.mrb[0].mxu0
      %8788 = vmatprep.mubr.bf16.mxu0 %v8571
      %8789 = vmatmul.mubr.bf16.gmra.mrb[0].mxu0 %v8570
      %v8790 = vpop.f32.mrb[0].mxu0
      %v8791 = vadd.f32 %v8687, %v8790
      %v8792 = vpop.f32.mrb[0].mxu0
      %v8793 = vpop.f32.mrb[0].mxu0
      %v8794 = vadd.f32 %v8690, %v8793
      %v8795 = vpop.f32.mrb[0].mxu0
      %8796 = vmatprep.mubr.bf16.mxu0 %v8575
      %8797 = vmatmul.mubr.bf16.gmra.mrb[0].mxu0 %v8574
      %v8798 = vpop.f32.mrb[0].mxu0
      %v8799 = vadd.f32 %v8695, %v8798
      %v8800 = vpop.f32.mrb[0].mxu0
      %v8801 = vpop.f32.mrb[0].mxu0
      %v8802 = vadd.f32 %v8698, %v8801
      %v8803 = vpop.f32.mrb[0].mxu0
      %8804 = vmatprep.mubr.bf16.mxu0 %v8579
      %8805 = vmatmul.mubr.bf16.gmra.mrb[0].mxu0 %v8578
      %v8806 = vpop.f32.mrb[0].mxu0
      %v8807 = vadd.f32 %v8703, %v8806
      %v8808 = vpop.f32.mrb[0].mxu0
      %v8809 = vpop.f32.mrb[0].mxu0
      %v8810 = vadd.f32 %v8706, %v8809
      %v8811 = vpop.f32.mrb[0].mxu0
      %8812 = vmatprep.mubr.bf16.mxu0 %v8583
      %8813 = vmatmul.mubr.bf16.gmra.mrb[0].mxu0 %v8582
      %v8814 = vpop.f32.mrb[0].mxu0
      %v8815 = vadd.f32 %v8711, %v8814
      %v8816 = vpop.f32.mrb[0].mxu0
      %v8817 = vpop.f32.mrb[0].mxu0
      %v8818 = vadd.f32 %v8714, %v8817
      %v8819 = vpop.f32.mrb[0].mxu0
      %8820 = vmatprep.mubr.bf16.mxu0 %v8587
      %8821 = vmatmul.mubr.bf16.gmra.mrb[0].mxu0 %v8586
      %v8822 = vpop.f32.mrb[0].mxu0
      %v8823 = vadd.f32 %v8719, %v8822
      %v8824 = vpop.f32.mrb[0].mxu0
      %v8825 = vpop.f32.mrb[0].mxu0
      %v8826 = vadd.f32 %v8722, %v8825
      %v8827 = vpop.f32.mrb[0].mxu0
      %8828 = vmatprep.mubr.bf16.mxu0 %v8591
      %8829 = vmatmul.mubr.bf16.gmra.mrb[0].mxu0 %v8590
      %v8830 = vpop.f32.mrb[0].mxu0
      %v8831 = vadd.f32 %v8727, %v8830
      %v8832 = vpop.f32.mrb[0].mxu0
      %v8833 = vpop.f32.mrb[0].mxu0
      %v8834 = vpop.f32.mrb[0].mxu0
      %8835 = vdwg.mxu0
      %v8836 = vpack.c.bf16 %v8770, %v8767
      %v8837 = vpack.c.bf16 %v8778, %v8775
      %v8838 = vpack.c.bf16 %v8786, %v8783
      %v8839 = vpack.c.bf16 %v8794, %v8791
      %v8840 = vpack.c.bf16 %v8802, %v8799
      %v8841 = vpack.c.bf16 %v8810, %v8807
      %v8842 = vpack.c.bf16 %v8818, %v8815
      %v8843 = vpack.c.bf16 %v8826, %v8823
      %v8844 = vld [vmem:[%s4] sm:$0xf]
      %v8845 = vld [vmem:[%s4 + $0x4] sm:$0xf]
      %v8846 = vld [vmem:[%s4 + $0x8] sm:$0xf]
      %v8847 = vld [vmem:[%s4 + $0xc] sm:$0xf]
      %v8848 = vld [vmem:[%s4 + $0x10] sm:$0xf]
      %v8849 = vld [vmem:[%s4 + $0x14] sm:$0xf]
      %v8850 = vld [vmem:[%s4 + $0x18] sm:$0xf]
      %v8851 = vld [vmem:[%s4 + $0x1c] sm:$0xf]
      %v8852 = vld [vmem:[%s4 + $0x20] sm:$0xf]
      %v8853 = vld [vmem:[%s4 + $0x24] sm:$0xf]
      %v8854 = vld [vmem:[%s4 + $0x28] sm:$0xf]
      %v8855 = vld [vmem:[%s4 + $0x2c] sm:$0xf]
      %v8856 = vld [vmem:[%s4 + $0x30] sm:$0xf]
      %v8857 = vld [vmem:[%s4 + $0x34] sm:$0xf]
      %v8858 = vld [vmem:[%s4 + $0x38] sm:$0xf]
      %v8859 = vld [vmem:[%s4 + $0x3c] sm:$0xf]
      %v8860 = vld [vmem:[%s4 + $0x40] sm:$0xf]
      %v8861 = vld [vmem:[%s4 + $0x44] sm:$0xf]
      %v8862 = vld [vmem:[%s4 + $0x48] sm:$0xf]
      %v8863 = vld [vmem:[%s4 + $0x4c] sm:$0xf]
      %v8864 = vld [vmem:[%s4 + $0x50] sm:$0xf]
      %v8865 = vld [vmem:[%s4 + $0x54] sm:$0xf]
      %v8866 = vld [vmem:[%s4 + $0x58] sm:$0xf]
      %v8867 = vld [vmem:[%s4 + $0x5c] sm:$0xf]
      %v8868 = vld [vmem:[%s4 + $0x60] sm:$0xf]
      %v8869 = vld [vmem:[%s4 + $0x64] sm:$0xf]
      %v8870 = vld [vmem:[%s4 + $0x68] sm:$0xf]
      %v8871 = vld [vmem:[%s4 + $0x6c] sm:$0xf]
      %v8872 = vld [vmem:[%s4 + $0x70] sm:$0xf]
      %v8873 = vld [vmem:[%s4 + $0x74] sm:$0xf]
      %v8874 = vld [vmem:[%s4 + $0x78] sm:$0xf]
      %v8875 = vld [vmem:[%s4 + $0x7c] sm:$0xf]
      %v8876 = vld [vmem:[%s4 + $0x80] sm:$0xf]
      %v8877 = vld [vmem:[%s4 + $0x84] sm:$0xf]
      %v8878 = vld [vmem:[%s4 + $0x88] sm:$0xf]
      %v8879 = vld [vmem:[%s4 + $0x8c] sm:$0xf]
      %v8880 = vld [vmem:[%s4 + $0x90] sm:$0xf]
      %v8881 = vld [vmem:[%s4 + $0x94] sm:$0xf]
      %v8882 = vld [vmem:[%s4 + $0x98] sm:$0xf]
      %v8883 = vld [vmem:[%s4 + $0x9c] sm:$0xf]
      %v8884 = vld [vmem:[%s4 + $0xa0] sm:$0xf]
      %v8885 = vld [vmem:[%s4 + $0xa4] sm:$0xf]
      %v8886 = vld [vmem:[%s4 + $0xa8] sm:$0xf]
      %v8887 = vld [vmem:[%s4 + $0xac] sm:$0xf]
      %v8888 = vld [vmem:[%s4 + $0xb0] sm:$0xf]
      %v8889 = vld [vmem:[%s4 + $0xb4] sm:$0xf]
      %v8890 = vld [vmem:[%s4 + $0xb8] sm:$0xf]
      %v8891 = vld [vmem:[%s4 + $0xbc] sm:$0xf]
      %v8892 = vld [vmem:[%s4 + $0xc0] sm:$0xf]
      %v8893 = vld [vmem:[%s4 + $0xc4] sm:$0xf]
      %v8894 = vld [vmem:[%s4 + $0xc8] sm:$0xf]
      %v8895 = vld [vmem:[%s4 + $0xcc] sm:$0xf]
      %v8896 = vld [vmem:[%s4 + $0xd0] sm:$0xf]
      %v8897 = vld [vmem:[%s4 + $0xd4] sm:$0xf]
      %v8898 = vld [vmem:[%s4 + $0xd8] sm:$0xf]
      %v8899 = vld [vmem:[%s4 + $0xdc] sm:$0xf]
      %v8900 = vld [vmem:[%s4 + $0xe0] sm:$0xf]
      %v8901 = vld [vmem:[%s4 + $0xe4] sm:$0xf]
      %v8902 = vld [vmem:[%s4 + $0xe8] sm:$0xf]
      %v8903 = vld [vmem:[%s4 + $0xec] sm:$0xf]
      %v8904 = vld [vmem:[%s4 + $0xf0] sm:$0xf]
      %v8905 = vld [vmem:[%s4 + $0xf4] sm:$0xf]
      %v8906 = vld [vmem:[%s4 + $0xf8] sm:$0xf]
      %v8907 = vld [vmem:[%s4 + $0xfc] sm:$0xf]
      %v8908 = vlaneseq
      %v8909 = vshrl.u32 %v8908, 7
      %v8910 = vsub.s32 0, %v8909
      %v8911 = vrot.slane %v309, %v8910
      %v8976 = vunpack.c.l.b16 %v8844
      %v8977 = vunpack.c.l.b16 %v8845
      %v8978 = vunpack.c.l.b16 %v8846
      %v8979 = vunpack.c.l.b16 %v8847
      %v8980 = vunpack.c.l.b16 %v8848
      %v8981 = vunpack.c.l.b16 %v8849
      %v8982 = vunpack.c.l.b16 %v8850
      %v8983 = vunpack.c.l.b16 %v8851
      %v8984 = vunpack.c.l.b16 %v8852
      %v8985 = vunpack.c.l.b16 %v8853
      %v8986 = vunpack.c.l.b16 %v8854
      %v8987 = vunpack.c.l.b16 %v8855
      %v8988 = vunpack.c.l.b16 %v8856
      %v8989 = vunpack.c.l.b16 %v8857
      %v8990 = vunpack.c.l.b16 %v8858
      %v8991 = vunpack.c.l.b16 %v8859
      %v8992 = vunpack.c.l.b16 %v8860
      %v8993 = vunpack.c.l.b16 %v8861
      %v8994 = vunpack.c.l.b16 %v8862
      %v8995 = vunpack.c.l.b16 %v8863
      %v8996 = vunpack.c.l.b16 %v8864
      %v8997 = vunpack.c.l.b16 %v8865
      %v8998 = vunpack.c.l.b16 %v8866
      %v8999 = vunpack.c.l.b16 %v8867
      %v9000 = vunpack.c.l.b16 %v8868
      %v9001 = vunpack.c.l.b16 %v8869
      %v9002 = vunpack.c.l.b16 %v8870
      %v9003 = vunpack.c.l.b16 %v8871
      %v9004 = vunpack.c.l.b16 %v8872
      %v9005 = vunpack.c.l.b16 %v8873
      %v9006 = vunpack.c.l.b16 %v8874
      %v9007 = vunpack.c.l.b16 %v8875
      %v9008 = vunpack.c.l.b16 %v8876
      %v9009 = vunpack.c.l.b16 %v8877
      %v9010 = vunpack.c.l.b16 %v8878
      %v9011 = vunpack.c.l.b16 %v8879
      %v9012 = vunpack.c.l.b16 %v8880
      %v9013 = vunpack.c.l.b16 %v8881
      %v9014 = vunpack.c.l.b16 %v8882
      %v9015 = vunpack.c.l.b16 %v8883
      %v9016 = vunpack.c.l.b16 %v8884
      %v9017 = vunpack.c.l.b16 %v8885
      %v9018 = vunpack.c.l.b16 %v8886
      %v9019 = vunpack.c.l.b16 %v8887
      %v9020 = vunpack.c.l.b16 %v8888
      %v9021 = vunpack.c.l.b16 %v8889
      %v9022 = vunpack.c.l.b16 %v8890
      %v9023 = vunpack.c.l.b16 %v8891
      %v9024 = vunpack.c.l.b16 %v8892
      %v9025 = vunpack.c.l.b16 %v8893
      %v9026 = vunpack.c.l.b16 %v8894
      %v9027 = vunpack.c.l.b16 %v8895
      %v9028 = vunpack.c.l.b16 %v8896
      %v9029 = vunpack.c.l.b16 %v8897
      %v9030 = vunpack.c.l.b16 %v8898
      %v9031 = vunpack.c.l.b16 %v8899
      %v9032 = vunpack.c.l.b16 %v8900
      %v9033 = vunpack.c.l.b16 %v8901
      %v9034 = vunpack.c.l.b16 %v8902
      %v9035 = vunpack.c.l.b16 %v8903
      %v9036 = vunpack.c.l.b16 %v8904
      %v9037 = vunpack.c.l.b16 %v8905
      %v9038 = vunpack.c.l.b16 %v8906
      %v9039 = vunpack.c.l.b16 %v8907
      %v9040 = vpack.c.b16 %v8977, %v8976
      %v9041 = vpack.c.b16 %v8979, %v8978
      %v9042 = vpack.c.b16 %v8981, %v8980
      %v9043 = vpack.c.b16 %v8983, %v8982
      %v9044 = vpack.c.b16 %v8985, %v8984
      %v9045 = vpack.c.b16 %v8987, %v8986
      %v9046 = vpack.c.b16 %v8989, %v8988
      %v9047 = vpack.c.b16 %v8991, %v8990
      %v9048 = vpack.c.b16 %v8993, %v8992
      %v9049 = vpack.c.b16 %v8995, %v8994
      %v9050 = vpack.c.b16 %v8997, %v8996
      %v9051 = vpack.c.b16 %v8999, %v8998
      %v9052 = vpack.c.b16 %v9001, %v9000
      %v9053 = vpack.c.b16 %v9003, %v9002
      %v9054 = vpack.c.b16 %v9005, %v9004
      %v9055 = vpack.c.b16 %v9007, %v9006
      %v9056 = vpack.c.b16 %v9009, %v9008
      %v9057 = vpack.c.b16 %v9011, %v9010
      %v9058 = vpack.c.b16 %v9013, %v9012
      %v9059 = vpack.c.b16 %v9015, %v9014
      %v9060 = vpack.c.b16 %v9017, %v9016
      %v9061 = vpack.c.b16 %v9019, %v9018
      %v9062 = vpack.c.b16 %v9021, %v9020
      %v9063 = vpack.c.b16 %v9023, %v9022
      %v9064 = vpack.c.b16 %v9025, %v9024
      %v9065 = vpack.c.b16 %v9027, %v9026
      %v9066 = vpack.c.b16 %v9029, %v9028
      %v9067 = vpack.c.b16 %v9031, %v9030
      %v9068 = vpack.c.b16 %v9033, %v9032
      %v9069 = vpack.c.b16 %v9035, %v9034
      %v9070 = vpack.c.b16 %v9037, %v9036
      %v9071 = vpack.c.b16 %v9039, %v9038
      %9104 = vmatprep.subr.bf16.mxu0 0
      %9105 = vmatpush1.bf16.msra.mxu0 %v9040
      %9106 = vmatprep.subr.bf16.mxu0 0
      %9107 = vmatpush1.bf16.msra.mxu0 %v9041
      %9108 = vmatprep.subr.bf16.mxu0 0
      %9109 = vmatpush1.bf16.msra.mxu0 %v9042
      %9110 = vmatprep.subr.bf16.mxu0 0
      %9111 = vmatpush1.bf16.msra.mxu0 %v9043
      %9112 = vmatprep.subr.bf16.mxu0 0
      %9113 = vmatpush1.bf16.msra.mxu0 %v9044
      %9114 = vmatprep.subr.bf16.mxu0 0
      %9115 = vmatpush1.bf16.msra.mxu0 %v9045
      %9116 = vmatprep.subr.bf16.mxu0 0
      %9117 = vmatpush1.bf16.msra.mxu0 %v9046
      %9118 = vmatprep.subr.bf16.mxu0 0
      %9119 = vmatpush1.bf16.msra.mxu0 %v9047
      %9120 = vmatprep.subr.bf16.mxu0 0
      %9121 = vmatpush1.bf16.msra.mxu0 %v9048
      %9122 = vmatprep.subr.bf16.mxu0 0
      %9123 = vmatpush1.bf16.msra.mxu0 %v9049
      %9124 = vmatprep.subr.bf16.mxu0 0
      %9125 = vmatpush1.bf16.msra.mxu0 %v9050
      %9126 = vmatprep.subr.bf16.mxu0 0
      %9127 = vmatpush1.bf16.msra.mxu0 %v9051
      %9128 = vmatprep.subr.bf16.mxu0 0
      %9129 = vmatpush1.bf16.msra.mxu0 %v9052
      %9130 = vmatprep.subr.bf16.mxu0 0
      %9131 = vmatpush1.bf16.msra.mxu0 %v9053
      %9132 = vmatprep.subr.bf16.mxu0 0
      %9133 = vmatpush1.bf16.msra.mxu0 %v9054
      %9134 = vmatprep.subr.bf16.mxu0 0
      %9135 = vmatpush1.bf16.msra.mxu0 %v9055
      %9136 = vmatprep.mubr.bf16.mxu0 %v8838
      %9137 = vmatmul.mubr.bf16.gmra.mrb[0].mxu0 %v8836
      %v9138 = vpop.f32.mrb[0].mxu0
      %v9139 = vadd.f32 %v8911, %v9138
      %v9140 = vpop.f32.mrb[0].mxu0
      %v9141 = vpop.f32.mrb[0].mxu0
      %v9142 = vadd.f32 %v8911, %v9141
      %v9143 = vpop.f32.mrb[0].mxu0
      %9144 = vmatprep.mubr.bf16.mxu0 %v8839
      %9145 = vmatmul.mubr.bf16.gmra.mrb[0].mxu0 %v8837
      %v9146 = vpop.f32.mrb[0].mxu0
      %v9147 = vadd.f32 %v8911, %v9146
      %v9148 = vpop.f32.mrb[0].mxu0
      %v9149 = vpop.f32.mrb[0].mxu0
      %v9150 = vadd.f32 %v8911, %v9149
      %v9151 = vpop.f32.mrb[0].mxu0
      %9152 = vdwg.mxu0
      %9153 = vmatprep.subr.bf16.mxu0 0
      %9154 = vmatpush1.bf16.msra.mxu0 %v9056
      %9155 = vmatprep.subr.bf16.mxu0 0
      %9156 = vmatpush1.bf16.msra.mxu0 %v9057
      %9157 = vmatprep.subr.bf16.mxu0 0
      %9158 = vmatpush1.bf16.msra.mxu0 %v9058
      %9159 = vmatprep.subr.bf16.mxu0 0
      %9160 = vmatpush1.bf16.msra.mxu0 %v9059
      %9161 = vmatprep.subr.bf16.mxu0 0
      %9162 = vmatpush1.bf16.msra.mxu0 %v9060
      %9163 = vmatprep.subr.bf16.mxu0 0
      %9164 = vmatpush1.bf16.msra.mxu0 %v9061
      %9165 = vmatprep.subr.bf16.mxu0 0
      %9166 = vmatpush1.bf16.msra.mxu0 %v9062
      %9167 = vmatprep.subr.bf16.mxu0 0
      %9168 = vmatpush1.bf16.msra.mxu0 %v9063
      %9169 = vmatprep.subr.bf16.mxu0 0
      %9170 = vmatpush1.bf16.msra.mxu0 %v9064
      %9171 = vmatprep.subr.bf16.mxu0 0
      %9172 = vmatpush1.bf16.msra.mxu0 %v9065
      %9173 = vmatprep.subr.bf16.mxu0 0
      %9174 = vmatpush1.bf16.msra.mxu0 %v9066
      %9175 = vmatprep.subr.bf16.mxu0 0
      %9176 = vmatpush1.bf16.msra.mxu0 %v9067
      %9177 = vmatprep.subr.bf16.mxu0 0
      %9178 = vmatpush1.bf16.msra.mxu0 %v9068
      %9179 = vmatprep.subr.bf16.mxu0 0
      %9180 = vmatpush1.bf16.msra.mxu0 %v9069
      %9181 = vmatprep.subr.bf16.mxu0 0
      %9182 = vmatpush1.bf16.msra.mxu0 %v9070
      %9183 = vmatprep.subr.bf16.mxu0 0
      %9184 = vmatpush1.bf16.msra.mxu0 %v9071
      %9185 = vmatprep.mubr.bf16.mxu0 %v8842
      %9186 = vmatmul.mubr.bf16.gmra.mrb[0].mxu0 %v8840
      %v9187 = vpop.f32.mrb[0].mxu0
      %v9188 = vadd.f32 %v9139, %v9187
      %v9189 = vpop.f32.mrb[0].mxu0
      %v9190 = vpop.f32.mrb[0].mxu0
      %v9191 = vadd.f32 %v9142, %v9190
      %v9192 = vpop.f32.mrb[0].mxu0
      %9193 = vmatprep.mubr.bf16.mxu0 %v8843
      %9194 = vmatmul.mubr.bf16.gmra.mrb[0].mxu0 %v8841
      %v9195 = vpop.f32.mrb[0].mxu0
      %v9196 = vadd.f32 %v9147, %v9195
      %v9197 = vpop.f32.mrb[0].mxu0
      %v9198 = vpop.f32.mrb[0].mxu0
      %v9199 = vadd.f32 %v9150, %v9198
      %v9200 = vpop.f32.mrb[0].mxu0
      %9201 = vdwg.mxu0
      %v9202 = vmax.f32 %v9188, 0.0
      %v9203 = vmax.f32 %v9191, 0.0
      %v9204 = vmax.f32 %v9196, 0.0
      %v9205 = vmax.f32 %v9199, 0.0
      %v9206 = vlaneseq
      %v9207 = vshrl.u32 %v9206, 7
      %v9208 = vsub.s32 0, %v9207
      %v9209 = vrot.slane %v310, %v9208
      %v9210 = vmul.f32 %v9202, %v9209
      %v9211 = vmul.f32 %v9203, %v9209
      %v9212 = vmul.f32 %v9204, %v9209
      %v9213 = vmul.f32 %v9205, %v9209
      %9214 = vadd.xlane.f32.xlu0 %v9210
      %v9215 = vpop.xlane.xlu0 %9214
      %9216 = vadd.xlane.f32.xlu0 %v9211
      %v9217 = vpop.xlane.xlu0 %9216
      %9218 = vadd.xlane.f32.xlu0 %v9212
      %v9219 = vpop.xlane.xlu0 %9218
      %9220 = vadd.xlane.f32.xlu0 %v9213
      %v9221 = vpop.xlane.xlu0 %9220
      %v9222 = vmax.f32 %v9215, %v9217
      %v9223 = vmax.f32 %v9219, %v9221
      %v9224 = vmax.f32 %v9222, %v9223
      %v9225 = vrot.slane %v9224, 4
      %v9226 = vmax.f32 %v9224, %v9225
      %v9227 = vrot.slane %v9226, 2
      %v9228 = vmax.f32 %v9226, %v9227
      %v9229 = vrot.slane %v9228, 1
      %v9230 = vmax.f32 %v9228, %v9229
      %v9231 = vsub.f32 %v9215, %v9230
      %v9232 = vsub.f32 %v9217, %v9230
      %v9233 = vsub.f32 %v9219, %v9230
      %v9234 = vsub.f32 %v9221, %v9230
      %v9235 = vmul.f32 %v9231, 1.442695
      %v9236 = vpow.pop %v9235
      %v9237 = vmul.f32 %v9232, 1.442695
      %v9238 = vpow.pop %v9237
      %v9239 = vmul.f32 %v9233, 1.442695
      %v9240 = vpow.pop %v9239
      %v9241 = vmul.f32 %v9234, 1.442695
      %v9242 = vpow.pop %v9241
      %v9243 = vlaneseq
      %v9244 = vshrl.u32 %v9243, 7
      %v9245 = vsub.s32 0, %v9244
      %v9246 = vrot.slane %v312, %v9245
      %v9247 = vadd.f32 %v9202, %v9246
      %v9248 = vadd.f32 %v9203, %v9246
      %v9249 = vadd.f32 %v9204, %v9246
      %v9250 = vadd.f32 %v9205, %v9246
      %v9251 = vmul.f32 %v9247, %v9236
      %v9252 = vmul.f32 %v9248, %v9238
      %v9253 = vmul.f32 %v9249, %v9240
      %v9254 = vmul.f32 %v9250, %v9242
      %v9255 = vld [vmem:[%s5] sm:$0xff]
      %v9257 = vsel %vm1229, %v9255, 0
      %9259 = vmatprep.subr.mxu0 0.0
      %9260 = vmatpush1.msra.mxu0 %v9251
      %9261 = vmatprep.subr.mxu0 0.0
      %9262 = vmatpush1.msra.mxu0 %v9252
      %9263 = vmatprep.subr.mxu0 0.0
      %9264 = vmatpush1.msra.mxu0 %v9253
      %9265 = vmatprep.subr.mxu0 0.0
      %9266 = vmatpush1.msra.mxu0 %v9254
      %9267 = vmatprep.subr.mxu0 0.0
      %9268 = vmatpush1.msra.mxu0 0.0
      %9269 = vmatprep.subr.mxu0 0.0
      %9270 = vmatpush1.msra.mxu0 0.0
      %9271 = vmatprep.subr.mxu0 0.0
      %9272 = vmatpush1.msra.mxu0 0.0
      %9273 = vmatprep.subr.mxu0 0.0
      %9274 = vmatpush1.msra.mxu0 0.0
      %9275 = vmatprep.subr.mxu0 0.0
      %9276 = vmatpush1.msra.mxu0 0.0
      %9277 = vmatprep.subr.mxu0 0.0
      %9278 = vmatpush1.msra.mxu0 0.0
      %9279 = vmatprep.subr.mxu0 0.0
      %9280 = vmatpush1.msra.mxu0 0.0
      %9281 = vmatprep.subr.mxu0 0.0
      %9282 = vmatpush1.msra.mxu0 0.0
      %9283 = vmatprep.subr.mxu0 0.0
      %9284 = vmatpush1.msra.mxu0 0.0
      %9285 = vmatprep.subr.mxu0 0.0
      %9286 = vmatpush1.msra.mxu0 0.0
      %9287 = vmatprep.subr.mxu0 0.0
      %9288 = vmatpush1.msra.mxu0 0.0
      %9289 = vmatprep.subr.mxu0 0.0
      %9290 = vmatpush1.msra.mxu0 0.0
      %9291 = vmatprep.subr.mxu0 0.0
      %9292 = vmatpush1.msra.mxu0 0.0
      %9293 = vmatprep.subr.mxu0 0.0
      %9294 = vmatpush1.msra.mxu0 0.0
      %9295 = vmatprep.subr.mxu0 0.0
      %9296 = vmatpush1.msra.mxu0 0.0
      %9297 = vmatprep.subr.mxu0 0.0
      %9298 = vmatpush1.msra.mxu0 0.0
      %9299 = vmatprep.subr.mxu0 0.0
      %9300 = vmatpush1.msra.mxu0 0.0
      %9301 = vmatprep.subr.mxu0 0.0
      %9302 = vmatpush1.msra.mxu0 0.0
      %9303 = vmatprep.subr.mxu0 0.0
      %9304 = vmatpush1.msra.mxu0 0.0
      %9305 = vmatprep.subr.mxu0 0.0
      %9306 = vmatpush1.msra.mxu0 0.0
      %9307 = vmatprep.subr.mxu0 0.0
      %9308 = vmatpush1.msra.mxu0 0.0
      %9309 = vmatprep.subr.mxu0 0.0
      %9310 = vmatpush1.msra.mxu0 0.0
      %9311 = vmatprep.subr.mxu0 0.0
      %9312 = vmatpush1.msra.mxu0 0.0
      %9313 = vmatprep.subr.mxu0 0.0
      %9314 = vmatpush1.msra.mxu0 0.0
      %9315 = vmatprep.subr.mxu0 0.0
      %9316 = vmatpush1.msra.mxu0 0.0
      %9317 = vmatprep.subr.mxu0 0.0
      %9318 = vmatpush1.msra.mxu0 0.0
      %9319 = vmatprep.subr.mxu0 0.0
      %9320 = vmatpush1.msra.mxu0 0.0
      %9321 = vmatprep.subr.mxu0 0.0
      %9322 = vmatpush1.msra.mxu0 0.0
      %9323 = vmatprep.mubr.f32.mxu0 0.0
      %9324 = vmatmul.mubr.f32.gmra.mrb[0].mxu0 %v9257
      %v9325 = vpop.f32.mrb[0].mxu0
      %v9326 = vadd.f32 0.0, %v9325
      %v9327 = vpop.f32.mrb[0].mxu0
      %9328 = vdwg.mxu0
      %v9329 = vadd.f32 %v9326, 1e-20
      %v9330 = vrcp.pop %v9329
      %9332 = vset.pattern.permute.xlu0 64
      %9333 = vperm.xlu0 %9332, %v9330
      %v9334 = vpop.permute.xlu0 %9333
      %v9336 = vmul.f32 %v9326, %v9334
      %v9337 = vpack.c.bf16 %v9336, %v9336
      %v9338 = vpack.c.bf16 %v8831, %v8831
      %v9339 = vld [vmem:[%s6] sm:$0xf]
      %v9340 = vld [vmem:[%s6 + $0x4] sm:$0xf]
      %v9341 = vld [vmem:[%s6 + $0x8] sm:$0xf]
      %v9342 = vld [vmem:[%s6 + $0xc] sm:$0xf]
      %v9343 = vld [vmem:[%s6 + $0x10] sm:$0xf]
      %v9344 = vld [vmem:[%s6 + $0x14] sm:$0xf]
      %v9345 = vld [vmem:[%s6 + $0x18] sm:$0xf]
      %v9346 = vld [vmem:[%s6 + $0x1c] sm:$0xf]
      %v9347 = vld [vmem:[%s6 + $0x20] sm:$0xf]
      %v9348 = vld [vmem:[%s6 + $0x24] sm:$0xf]
      %v9349 = vld [vmem:[%s6 + $0x28] sm:$0xf]
      %v9350 = vld [vmem:[%s6 + $0x2c] sm:$0xf]
      %v9351 = vld [vmem:[%s6 + $0x30] sm:$0xf]
      %v9352 = vld [vmem:[%s6 + $0x34] sm:$0xf]
      %v9353 = vld [vmem:[%s6 + $0x38] sm:$0xf]
      %v9354 = vld [vmem:[%s6 + $0x3c] sm:$0xf]
      %v9355 = vld [vmem:[%s6 + $0x40] sm:$0xf]
      %v9356 = vld [vmem:[%s6 + $0x44] sm:$0xf]
      %v9357 = vld [vmem:[%s6 + $0x48] sm:$0xf]
      %v9358 = vld [vmem:[%s6 + $0x4c] sm:$0xf]
      %v9359 = vld [vmem:[%s6 + $0x50] sm:$0xf]
      %v9360 = vld [vmem:[%s6 + $0x54] sm:$0xf]
      %v9361 = vld [vmem:[%s6 + $0x58] sm:$0xf]
      %v9362 = vld [vmem:[%s6 + $0x5c] sm:$0xf]
      %v9363 = vld [vmem:[%s6 + $0x60] sm:$0xf]
      %v9364 = vld [vmem:[%s6 + $0x64] sm:$0xf]
      %v9365 = vld [vmem:[%s6 + $0x68] sm:$0xf]
      %v9366 = vld [vmem:[%s6 + $0x6c] sm:$0xf]
      %v9367 = vld [vmem:[%s6 + $0x70] sm:$0xf]
      %v9368 = vld [vmem:[%s6 + $0x74] sm:$0xf]
      %v9369 = vld [vmem:[%s6 + $0x78] sm:$0xf]
      %v9370 = vld [vmem:[%s6 + $0x7c] sm:$0xf]
      %v9371 = vlaneseq
      %v9372 = vshrl.u32 %v9371, 7
      %v9373 = vsub.s32 0, %v9372
      %v9374 = vrot.slane %v311, %v9373
      %v9407 = vunpack.c.l.b16 %v9339
      %v9408 = vunpack.c.l.b16 %v9340
      %v9409 = vunpack.c.l.b16 %v9341
      %v9410 = vunpack.c.l.b16 %v9342
      %v9411 = vunpack.c.l.b16 %v9343
      %v9412 = vunpack.c.l.b16 %v9344
      %v9413 = vunpack.c.l.b16 %v9345
      %v9414 = vunpack.c.l.b16 %v9346
      %v9415 = vunpack.c.l.b16 %v9347
      %v9416 = vunpack.c.l.b16 %v9348
      %v9417 = vunpack.c.l.b16 %v9349
      %v9418 = vunpack.c.l.b16 %v9350
      %v9419 = vunpack.c.l.b16 %v9351
      %v9420 = vunpack.c.l.b16 %v9352
      %v9421 = vunpack.c.l.b16 %v9353
      %v9422 = vunpack.c.l.b16 %v9354
      %v9423 = vunpack.c.l.b16 %v9355
      %v9424 = vunpack.c.l.b16 %v9356
      %v9425 = vunpack.c.l.b16 %v9357
      %v9426 = vunpack.c.l.b16 %v9358
      %v9427 = vunpack.c.l.b16 %v9359
      %v9428 = vunpack.c.l.b16 %v9360
      %v9429 = vunpack.c.l.b16 %v9361
      %v9430 = vunpack.c.l.b16 %v9362
      %v9431 = vunpack.c.l.b16 %v9363
      %v9432 = vunpack.c.l.b16 %v9364
      %v9433 = vunpack.c.l.b16 %v9365
      %v9434 = vunpack.c.l.b16 %v9366
      %v9435 = vunpack.c.l.b16 %v9367
      %v9436 = vunpack.c.l.b16 %v9368
      %v9437 = vunpack.c.l.b16 %v9369
      %v9438 = vunpack.c.l.b16 %v9370
      %v9439 = vpack.c.b16 %v9408, %v9407
      %v9440 = vpack.c.b16 %v9410, %v9409
      %v9441 = vpack.c.b16 %v9412, %v9411
      %v9442 = vpack.c.b16 %v9414, %v9413
      %v9443 = vpack.c.b16 %v9416, %v9415
      %v9444 = vpack.c.b16 %v9418, %v9417
      %v9445 = vpack.c.b16 %v9420, %v9419
      %v9446 = vpack.c.b16 %v9422, %v9421
      %v9447 = vpack.c.b16 %v9424, %v9423
      %v9448 = vpack.c.b16 %v9426, %v9425
      %v9449 = vpack.c.b16 %v9428, %v9427
      %v9450 = vpack.c.b16 %v9430, %v9429
      %v9451 = vpack.c.b16 %v9432, %v9431
      %v9452 = vpack.c.b16 %v9434, %v9433
      %v9453 = vpack.c.b16 %v9436, %v9435
      %v9454 = vpack.c.b16 %v9438, %v9437
      %9471 = vmatprep.subr.bf16.mxu0 0
      %9472 = vmatpush1.bf16.msra.mxu0 %v9439
      %9473 = vmatprep.subr.bf16.mxu0 0
      %9474 = vmatpush1.bf16.msra.mxu0 %v9440
      %9475 = vmatprep.subr.bf16.mxu0 0
      %9476 = vmatpush1.bf16.msra.mxu0 %v9441
      %9477 = vmatprep.subr.bf16.mxu0 0
      %9478 = vmatpush1.bf16.msra.mxu0 %v9442
      %9479 = vmatprep.subr.bf16.mxu0 0
      %9480 = vmatpush1.bf16.msra.mxu0 %v9443
      %9481 = vmatprep.subr.bf16.mxu0 0
      %9482 = vmatpush1.bf16.msra.mxu0 %v9444
      %9483 = vmatprep.subr.bf16.mxu0 0
      %9484 = vmatpush1.bf16.msra.mxu0 %v9445
      %9485 = vmatprep.subr.bf16.mxu0 0
      %9486 = vmatpush1.bf16.msra.mxu0 %v9446
      %9487 = vmatprep.subr.bf16.mxu0 0
      %9488 = vmatpush1.bf16.msra.mxu0 %v9447
      %9489 = vmatprep.subr.bf16.mxu0 0
      %9490 = vmatpush1.bf16.msra.mxu0 %v9448
      %9491 = vmatprep.subr.bf16.mxu0 0
      %9492 = vmatpush1.bf16.msra.mxu0 %v9449
      %9493 = vmatprep.subr.bf16.mxu0 0
      %9494 = vmatpush1.bf16.msra.mxu0 %v9450
      %9495 = vmatprep.subr.bf16.mxu0 0
      %9496 = vmatpush1.bf16.msra.mxu0 %v9451
      %9497 = vmatprep.subr.bf16.mxu0 0
      %9498 = vmatpush1.bf16.msra.mxu0 %v9452
      %9499 = vmatprep.subr.bf16.mxu0 0
      %9500 = vmatpush1.bf16.msra.mxu0 %v9453
      %9501 = vmatprep.subr.bf16.mxu0 0
      %9502 = vmatpush1.bf16.msra.mxu0 %v9454
      %9503 = vmatprep.mubr.bf16.mxu0 %v9338
      %9504 = vmatmul.mubr.bf16.gmra.mrb[0].mxu0 %v9337
      %v9505 = vpop.f32.mrb[0].mxu0
      %v9506 = vadd.f32 %v9374, %v9505
      %v9507 = vpop.f32.mrb[0].mxu0
      %v9508 = vpop.f32.mrb[0].mxu0
      %v9509 = vpop.f32.mrb[0].mxu0
      %9510 = vdwg.mxu0
      %9511 = vst [vmem:[%s305] sm:$0xff] %v9506
      %p9512 = scmp.lt.s32.totalorder %s19, 1
      %s9513 = scalar_select %p9512, %s19, 1
      %s9514 = smul.addr %s9513, 8
      %s9515 = scalar_lea.vmem %s8, %s9514
      // Predicated region
      $region53: #{baseline_forward.1} parent=51 // pred_check
        %p9516 = pneg %p210
      $region54: #{baseline_forward.1} parent=51 // pred_check_branch
        %9518 = sbr.rel (%p9516) target = $region56
      $region55: #{baseline_forward.1} parent=51 // pred_region
        _
      $region56: #{baseline_forward.1} parent=51 // pred_fallthru
        _
    $region52: #{baseline_forward.1} parent=5 // pred_fallthru
      _
    %p9519 = scmp.le.s32.totalorder 2, %s14
    // Predicated region
    $region57: #{baseline_forward.1} parent=5 // pred_check
      %p9520 = pneg %p9519
    $region58: #{baseline_forward.1} parent=5 // pred_check_branch
      %9522 = sbr.rel (%p9520) target = $region60
    $region59: #{baseline_forward.1} parent=5 // pred_region
      %s9523 = ssub.s32 %s14, 2
      // Predicated region
      $region61: #{baseline_forward.1} parent=59 // pred_check
        %p9524 = pneg %p216
      $region62: #{baseline_forward.1} parent=59 // pred_check_branch
        %9526 = sbr.rel (%p9524) target = $region64
      $region63: #{baseline_forward.1} parent=59 // pred_region
        %p9527 = scmp.lt.s32.totalorder %s20, 1
        %s9528 = scalar_select %p9527, %s20, 1
        %s9529 = smul.addr %s9528, 8
        %s9530 = scalar_lea.vmem %s8, %s9529
      $region64: #{baseline_forward.1} parent=59 // pred_fallthru
        _
    $region60: #{baseline_forward.1} parent=5 // pred_fallthru
      _
  $region6: #{baseline_forward.1} parent=0 // loop_footer
    %s18 = sadd.s32 1, %s14
  $region7: #{baseline_forward.1} parent=0 // loop_footer_branch
    %13 = sbr.rel target = $region3
  $region8: #{baseline_forward.1} parent=0 // loop_exit
    _

</llo_original>
